<compile_context>
chip_gen: v6e
topology: v6e:2x2x1
jax: 0.10.0
libtpu: 0.0.40
codegen_flags: <defaults>
</compile_context>

<pallas_src>
import jax
import jax.numpy as jnp
from jax import lax
from jax.experimental import pallas as pl
from jax.experimental.pallas import tpu as pltpu

NEG_SLOPE = 0.2   # ConvNormRelu uses LeakyReLU(negative_slope=0.2) when leaky=True
BN_EPS = 1e-5
LANE = 128


def _round_up(v, m):
    return (v + m - 1) // m * m


def _build_operands(params, t_seq, cin):
    """Per-layer bf16 lane-stacked weights + static shift configs (dilated-time scheme).

    A layer whose exact input has length T_d and cumulative stride (dilation) s_d reads, for
    tap k, the row at offset off = s_d*(k - pad) and masks rows whose source position falls
    outside [0, s_d*T_d).  Valid outputs live on a coarser (dilated) row grid; in-between rows
    hold garbage that is never read by later valid rows, so stride-2 downsampling never needs
    a subsampling/strided load.
    """
    weights, cfgs, b_rows = [], [], []
    cout_max = max(_round_up(p["w"].shape[2], LANE) for p in params)
    t_exact, s_cum = t_seq, 1
    for li, p in enumerate(params):
        w, b = p["w"], p["b"]                       # (K, cin_l, cout) BN-folded, (cout,)
        ksize, cin_l, cout = w.shape
        stride, pad = (2, 1) if p["down"] else (1, 1)
        assert ksize == (4 if p["down"] else 3)
        t_out = (t_exact + 2 * pad - ksize) // stride + 1
        assert t_out >= 1, f"sequence too short at layer {li} (t_in={t_exact})"
        cout_pad = _round_up(cout, LANE)
        extent = s_cum * t_exact                    # valid dilated time extent of this layer's input

        if li == 0:
            # Layer 0 (k=3, s=1, p=1): taps are im2col-packed into lanes by the wrapper ->
            # single dense matmul, (128, 256) weight tile instead of a mostly-zero slab.
            assert not p["down"]
            cin_pad = _round_up(ksize * cin_l, LANE)
            wp = jnp.zeros((cin_pad, cout_pad), jnp.float32)
            for k in range(ksize):
                wp = wp.at[k * cin_l:(k + 1) * cin_l, :cout].set(w[k])
            offsets = (0,)
        else:
            cin_pad = _round_up(cin_l, LANE)
            offs_all = [s_cum * (k - pad) for k in range(ksize)]
            kept = [(k, o) for k, o in enumerate(offs_all) if -extent < o < extent]  # drop dead taps
            wp = jnp.zeros((cin_pad, len(kept) * cout_pad), jnp.float32)
            for j, (k, _) in enumerate(kept):
                wp = wp.at[:cin_l, j * cout_pad:j * cout_pad + cout].set(w[k])
            offsets = tuple(o for _, o in kept)

        weights.append(wp.astype(jnp.bfloat16))     # bf16: native MXU input, halves weight DMA
        b_rows.append(jnp.zeros((cout_max,), jnp.float32).at[:cout].set(b))
        cfgs.append(dict(cin_pad=cin_pad, cout_pad=cout_pad, offsets=offsets, extent=extent))
        t_exact, s_cum = t_out, s_cum * stride
    b_all = jnp.stack(b_rows)                       # (n_layers, cout_max) f32
    return weights, b_all, cfgs


def _make_kernel(cfgs, t_seq, bt, pad_rows):
    n = len(cfgs)

    def kernel(*refs):
        x_ref, b_ref = refs[0], refs[1]
        w_hbm = refs[2:2 + n]                       # HBM-resident bf16 weights (pl.ANY)
        out_ref = refs[2 + n]
        w_vmem = refs[3 + n:3 + 2 * n]              # per-layer VMEM weight buffers
        p_scr = refs[3 + 2 * n]                     # zero-padded shift scratch
        sem = refs[4 + 2 * n]                       # (n,) DMA semaphores

        # Issue every layer's weight DMA up front: layer l's HBM->VMEM copy overlaps the compute
        # of layers < l (the weight stream is the binding resource).
        copies = []
        for i in range(n):
            cp = pltpu.make_async_copy(w_hbm[i], w_vmem[i], sem.at[i])
            cp.start()
            copies.append(cp)

        # Zero the shift scratch once: its first/last pad_rows rows stay zero forever and provide
        # the conv zero-padding at the ends of the flat (B*T) row range.
        p_scr[...] = jnp.zeros(p_scr.shape, p_scr.dtype)

        # Row index modulo T (hoisted): masks taps that cross a batch / sequence edge.
        tmod = lax.broadcasted_iota(jnp.int32, (bt, 1), 0) % t_seq

        h = x_ref[...]                                           # (B*T, cin0_pad) f32
        for li, cfg in enumerate(cfgs):                          # static loop over the 7 layers
            copies[li].wait()
            cout_pad, extent = cfg["cout_pad"], cfg["extent"]
            # One wide-N MXU matmul per layer: all taps' outputs at once (no activation concat,
            # no per-tap selection matmuls).  bf16 x bf16 -> f32 accumulate.
            p = jnp.dot(h.astype(jnp.bfloat16), w_vmem[li][...],
                        preferred_element_type=jnp.float32)      # (B*T, n_taps*cout_pad) f32
            y = b_ref[li:li + 1, :cout_pad]                      # folded BN bias, broadcasts over rows
            if cfg["offsets"] == (0,):                           # layer 0: taps pre-packed into lanes
                y = y + p
            else:
                p_scr[pad_rows:pad_rows + bt, :p.shape[1]] = p
                for j, off in enumerate(cfg["offsets"]):
                    if off == 0:
                        y = y + p[:, j * cout_pad:(j + 1) * cout_pad]
                    else:
                        tap = p_scr[pad_rows + off:pad_rows + off + bt,
                                    j * cout_pad:(j + 1) * cout_pad]
                        valid = (tmod + off >= 0) & (tmod + off < extent)
                        y = y + jnp.where(valid, tap, 0.0)
            h = jnp.where(y >= 0.0, y, NEG_SLOPE * y)            # LeakyReLU(0.2), f32 on the VPU

        out_ref[...] = h.astype(out_ref.dtype)                   # lane-dense (B*T, 128) slab
    return kernel


def pose_seq_encoder(x, params):
    """x: [B, T, NUM_LANDMARKS, 2]  (PyTorch: reshape -> [B,T,2L] -> permute -> [B,2L,T])."""
    batch, t_seq = x.shape[:2]
    h = x.reshape(batch, t_seq, -1).astype(jnp.float32)          # [B, T, C]
    cin = h.shape[-1]
    bt = batch * t_seq

    weights, b_all, cfgs = _build_operands(params, t_seq, cin)
    n = len(cfgs)
    c_last = params[-1]["w"].shape[2]                            # 2 * code_dim
    cout_last_pad = cfgs[-1]["cout_pad"]
    cin0_pad = cfgs[0]["cin_pad"]

    # Layer-0 im2col packing (k=3,s=1,p=1): lanes = [x[t-1] | x[t] | x[t+1] | zeros] per row,
    # with per-batch zero padding at the time edges (so no in-kernel masking for layer 0).
    x_prev = jnp.pad(h, ((0, 0), (1, 0), (0, 0)))[:, :t_seq, :]
    x_next = jnp.pad(h, ((0, 0), (0, 1), (0, 0)))[:, 1:, :]
    packed = jnp.concatenate([x_prev, h, x_next], axis=-1)       # [B, T, 3*C]
    packed = jnp.pad(packed, ((0, 0), (0, 0), (0, cin0_pad - 3 * cin)))
    x_flat = packed.reshape(bt, cin0_pad)

    pad_rows = max([abs(o) for cfg in cfgs for o in cfg["offsets"]] + [8])
    scratch_cols = max(w.shape[1] for w in weights)

    out = pl.pallas_call(
        _make_kernel(cfgs, t_seq, bt, pad_rows),
        out_shape=jax.ShapeDtypeStruct((bt, cout_last_pad), jnp.float32),
        in_specs=[pl.BlockSpec(x_flat.shape, lambda: (0, 0)),            # packed input -> VMEM
                  pl.BlockSpec(b_all.shape, lambda: (0, 0))]             # folded biases -> VMEM
                 + [pl.BlockSpec(memory_space=pl.ANY)] * n,              # weights stay in HBM
        out_specs=pl.BlockSpec((bt, cout_last_pad), lambda: (0, 0)),
        scratch_shapes=[pltpu.VMEM(w.shape, jnp.bfloat16) for w in weights]
                       + [pltpu.VMEM((bt + 2 * pad_rows, scratch_cols), jnp.float32),
                          pltpu.SemaphoreType.DMA((n,))],
        # Footprint ~3 MiB (bf16 weights + shift scratch + IO); 32 MiB is safe on v5e/v6e/v7x.
        compiler_params=pltpu.CompilerParams(vmem_limit_bytes=32 * 1024 * 1024),
    )(x_flat, b_all, *weights)

    # F.interpolate(x, 1) (nearest) == take output time index 0 -> row b*T of the flat result.
    code = out.reshape(batch, t_seq, cout_last_pad)[:, 0, :c_last]
    return code[:, 0::2], code[:, 1::2]


def init_params(key, in_channels, code_dim):
    """Deterministic synthetic parameters (conv + eval-mode BatchNorm, folded)."""
    layer_cfg = [
        (in_channels, 256, False),
        (256, 256, False),
        (256, 256, True),
        (256, 256, True),
        (256, 256, True),
        (256, 256, True),
        (256, 2 * code_dim, True),
    ]
    params = []
    for i, (cin, cout, down) in enumerate(layer_cfg):
        k = 4 if down else 3
        keys = jax.random.split(jax.random.fold_in(key, i), 6)
        w = jax.random.normal(keys[0], (k, cin, cout), jnp.float32) / jnp.sqrt(float(cin * k))
        b = 0.01 * jax.random.normal(keys[1], (cout,), jnp.float32)
        gamma = 1.0 + 0.1 * jax.random.normal(keys[2], (cout,), jnp.float32)
        beta = 0.1 * jax.random.normal(keys[3], (cout,), jnp.float32)
        run_mean = 0.1 * jax.random.normal(keys[4], (cout,), jnp.float32)
        run_var = 1.0 + 0.1 * jax.random.uniform(keys[5], (cout,), jnp.float32)
        # Fold eval-mode BatchNorm1d into the conv:  act( (conv(x)+b - mean)*scale + beta )
        scale = gamma / jnp.sqrt(run_var + BN_EPS)
        params.append({
            "w": w * scale[None, None, :],
            "b": (b - run_mean) * scale + beta,
            "down": down,
            # raw pieces kept only for the pure-JAX reference check
            "w_raw": w, "b_raw": b, "scale": scale, "shift": beta - run_mean * scale,
        })
    return params


def reference(x, params):
    """Pure-JAX f32 reference of the same forward pass (numerical sanity check)."""
    B, T = x.shape[:2]
    h = jnp.transpose(x.reshape(B, T, -1), (0, 2, 1))            # NCL, like PyTorch
    for p in params:
        ksize, stride, pad = (4, 2, 1) if p["down"] else (3, 1, 1)
        w_oik = jnp.transpose(p["w_raw"], (2, 1, 0))             # [Cout, Cin, K]
        h = lax.conv_general_dilated(h, w_oik, (stride,), [(pad, pad)],
                                     dimension_numbers=("NCH", "OIH", "NCH"))
        h = h + p["b_raw"][None, :, None]
        h = h * p["scale"][None, :, None] + p["shift"][None, :, None]
        h = jnp.where(h >= 0, h, NEG_SLOPE * h)
    code = h[:, :, 0]                                            # F.interpolate(x,1) nearest
    return code[:, 0::2], code[:, 1::2]


if __name__ == "__main__":
    key = jax.random.PRNGKey(0)
    B, T, NUM_LANDMARKS = 2, 32, 2          # in_channels = 2*L = 4
    CODE_DIM = 16                           # out_channels = 2*CODE_DIM = 32
    # T=32 survives the 5 stride-2 downsamples: 32->16->8->4->2->1

    x = jax.random.normal(jax.random.fold_in(key, 100), (B, T, NUM_LANDMARKS, 2), jnp.float32)
    params = init_params(jax.random.fold_in(key, 200),
                         in_channels=2 * NUM_LANDMARKS, code_dim=CODE_DIM)

    fwd = jax.jit(lambda xx: pose_seq_encoder(xx, params))
    mu, logvar = fwd(x)
    jax.block_until_ready((mu, logvar))

    assert mu.shape == (B, CODE_DIM) and logvar.shape == (B, CODE_DIM)
    mu_ref, lv_ref = reference(x, params)
    # bf16 weights/activations are fed to the MXU (single-pass) -> slightly looser tolerance than
    # the pure-f32 (multi-pass) version; structural errors would be O(1), so this still validates.
    err = max(float(jnp.max(jnp.abs(mu - mu_ref))), float(jnp.max(jnp.abs(logvar - lv_ref))))
    assert jnp.allclose(mu, mu_ref, atol=5e-2, rtol=5e-2), err
    assert jnp.allclose(logvar, lv_ref, atol=5e-2, rtol=5e-2), err

    print("KERNEL_OK")
</pallas_src>

<mosaic_0001>
module attributes {stable_mosaic.version = 11 : i64} {
  func.func @kernel(%arg0: memref<64x128xf32, #tpu.memory_space<vmem>>, %arg1: memref<7x256xf32, #tpu.memory_space<vmem>>, %arg2: memref<128x256xbf16, #tpu.memory_space<any>>, %arg3: memref<256x768xbf16, #tpu.memory_space<any>>, %arg4: memref<256x1024xbf16, #tpu.memory_space<any>>, %arg5: memref<256x1024xbf16, #tpu.memory_space<any>>, %arg6: memref<256x1024xbf16, #tpu.memory_space<any>>, %arg7: memref<256x1024xbf16, #tpu.memory_space<any>>, %arg8: memref<256x384xbf16, #tpu.memory_space<any>>, %arg9: memref<64x128xf32, #tpu.memory_space<vmem>>, %arg10: memref<128x256xbf16, #tpu.memory_space<vmem>>, %arg11: memref<256x768xbf16, #tpu.memory_space<vmem>>, %arg12: memref<256x1024xbf16, #tpu.memory_space<vmem>>, %arg13: memref<256x1024xbf16, #tpu.memory_space<vmem>>, %arg14: memref<256x1024xbf16, #tpu.memory_space<vmem>>, %arg15: memref<256x1024xbf16, #tpu.memory_space<vmem>>, %arg16: memref<256x384xbf16, #tpu.memory_space<vmem>>, %arg17: memref<96x1024xf32, #tpu.memory_space<vmem>>, %arg18: memref<7x!tpu.dma_semaphore, #tpu.memory_space<semaphore_mem>>) attributes {dimension_semantics = [], scalar_prefetch = 0 : i64, scratch_operands = 9 : i64, tpu.core_type = #tpu.core_type<tc>} {
    %c0_i32 = arith.constant 0 : i32
    %0 = tpu.memref_slice %arg18[%c0_i32] : memref<7x!tpu.dma_semaphore, #tpu.memory_space<semaphore_mem>> -> memref<1x!tpu.dma_semaphore, #tpu.memory_space<semaphore_mem>>
    %1 = tpu.memref_squeeze %0 : memref<1x!tpu.dma_semaphore, #tpu.memory_space<semaphore_mem>> -> memref<!tpu.dma_semaphore, #tpu.memory_space<semaphore_mem>>
    tpu.enqueue_dma source(%arg2 : memref<128x256xbf16, #tpu.memory_space<any>>) target(%arg10 : memref<128x256xbf16, #tpu.memory_space<vmem>>) target_semaphore(%1 : memref<!tpu.dma_semaphore, #tpu.memory_space<semaphore_mem>>)
    %c1_i32 = arith.constant 1 : i32
    %2 = tpu.memref_slice %arg18[%c1_i32] : memref<7x!tpu.dma_semaphore, #tpu.memory_space<semaphore_mem>> -> memref<1x!tpu.dma_semaphore, #tpu.memory_space<semaphore_mem>>
    %3 = tpu.memref_squeeze %2 : memref<1x!tpu.dma_semaphore, #tpu.memory_space<semaphore_mem>> -> memref<!tpu.dma_semaphore, #tpu.memory_space<semaphore_mem>>
    tpu.enqueue_dma source(%arg3 : memref<256x768xbf16, #tpu.memory_space<any>>) target(%arg11 : memref<256x768xbf16, #tpu.memory_space<vmem>>) target_semaphore(%3 : memref<!tpu.dma_semaphore, #tpu.memory_space<semaphore_mem>>)
    %c2_i32 = arith.constant 2 : i32
    %4 = tpu.memref_slice %arg18[%c2_i32] : memref<7x!tpu.dma_semaphore, #tpu.memory_space<semaphore_mem>> -> memref<1x!tpu.dma_semaphore, #tpu.memory_space<semaphore_mem>>
    %5 = tpu.memref_squeeze %4 : memref<1x!tpu.dma_semaphore, #tpu.memory_space<semaphore_mem>> -> memref<!tpu.dma_semaphore, #tpu.memory_space<semaphore_mem>>
    tpu.enqueue_dma source(%arg4 : memref<256x1024xbf16, #tpu.memory_space<any>>) target(%arg12 : memref<256x1024xbf16, #tpu.memory_space<vmem>>) target_semaphore(%5 : memref<!tpu.dma_semaphore, #tpu.memory_space<semaphore_mem>>)
    %c3_i32 = arith.constant 3 : i32
    %6 = tpu.memref_slice %arg18[%c3_i32] : memref<7x!tpu.dma_semaphore, #tpu.memory_space<semaphore_mem>> -> memref<1x!tpu.dma_semaphore, #tpu.memory_space<semaphore_mem>>
    %7 = tpu.memref_squeeze %6 : memref<1x!tpu.dma_semaphore, #tpu.memory_space<semaphore_mem>> -> memref<!tpu.dma_semaphore, #tpu.memory_space<semaphore_mem>>
    tpu.enqueue_dma source(%arg5 : memref<256x1024xbf16, #tpu.memory_space<any>>) target(%arg13 : memref<256x1024xbf16, #tpu.memory_space<vmem>>) target_semaphore(%7 : memref<!tpu.dma_semaphore, #tpu.memory_space<semaphore_mem>>)
    %c4_i32 = arith.constant 4 : i32
    %8 = tpu.memref_slice %arg18[%c4_i32] : memref<7x!tpu.dma_semaphore, #tpu.memory_space<semaphore_mem>> -> memref<1x!tpu.dma_semaphore, #tpu.memory_space<semaphore_mem>>
    %9 = tpu.memref_squeeze %8 : memref<1x!tpu.dma_semaphore, #tpu.memory_space<semaphore_mem>> -> memref<!tpu.dma_semaphore, #tpu.memory_space<semaphore_mem>>
    tpu.enqueue_dma source(%arg6 : memref<256x1024xbf16, #tpu.memory_space<any>>) target(%arg14 : memref<256x1024xbf16, #tpu.memory_space<vmem>>) target_semaphore(%9 : memref<!tpu.dma_semaphore, #tpu.memory_space<semaphore_mem>>)
    %c5_i32 = arith.constant 5 : i32
    %10 = tpu.memref_slice %arg18[%c5_i32] : memref<7x!tpu.dma_semaphore, #tpu.memory_space<semaphore_mem>> -> memref<1x!tpu.dma_semaphore, #tpu.memory_space<semaphore_mem>>
    %11 = tpu.memref_squeeze %10 : memref<1x!tpu.dma_semaphore, #tpu.memory_space<semaphore_mem>> -> memref<!tpu.dma_semaphore, #tpu.memory_space<semaphore_mem>>
    tpu.enqueue_dma source(%arg7 : memref<256x1024xbf16, #tpu.memory_space<any>>) target(%arg15 : memref<256x1024xbf16, #tpu.memory_space<vmem>>) target_semaphore(%11 : memref<!tpu.dma_semaphore, #tpu.memory_space<semaphore_mem>>)
    %c6_i32 = arith.constant 6 : i32
    %12 = tpu.memref_slice %arg18[%c6_i32] : memref<7x!tpu.dma_semaphore, #tpu.memory_space<semaphore_mem>> -> memref<1x!tpu.dma_semaphore, #tpu.memory_space<semaphore_mem>>
    %13 = tpu.memref_squeeze %12 : memref<1x!tpu.dma_semaphore, #tpu.memory_space<semaphore_mem>> -> memref<!tpu.dma_semaphore, #tpu.memory_space<semaphore_mem>>
    tpu.enqueue_dma source(%arg8 : memref<256x384xbf16, #tpu.memory_space<any>>) target(%arg16 : memref<256x384xbf16, #tpu.memory_space<vmem>>) target_semaphore(%13 : memref<!tpu.dma_semaphore, #tpu.memory_space<semaphore_mem>>)
    %cst = arith.constant 0.000000e+00 : f32
    %14 = vector.broadcast %cst : f32 to vector<96x1024xf32>
    %c0 = arith.constant 0 : index
    %c0_0 = arith.constant 0 : index
    %15 = vector.load %arg17[%c0, %c0_0] : memref<96x1024xf32, #tpu.memory_space<vmem>>, vector<96x1024xf32>
    tpu.vector_store %arg17[%c0, %c0_0], %14 {strides = array<i32>} : memref<96x1024xf32, #tpu.memory_space<vmem>>, vector<96x1024xf32>,
    %16 = tpu.iota {dimensions = array<i32: 0>} : vector<64x1xi32>
    %c32_i32 = arith.constant 32 : i32
    %c0_i32_1 = arith.constant 0 : i32
    %17 = arith.cmpi eq, %c32_i32, %c0_i32_1 : i32
    %c1_i32_2 = arith.constant 1 : i32
    %18 = arith.select %17, %c1_i32_2, %c32_i32 : i32
    %19 = vector.broadcast %18 : i32 to vector<64x1xi32>
    %20 = arith.remsi %16, %19 : vector<64x1xi32>
    %c0_i32_3 = arith.constant 0 : i32
    %21 = vector.broadcast %c0_i32_3 : i32 to vector<64x1xi32>
    %22 = arith.cmpi ne, %20, %21 : vector<64x1xi32>
    %c0_i32_4 = arith.constant 0 : i32
    %23 = vector.broadcast %c0_i32_4 : i32 to vector<64x1xi32>
    %24 = arith.cmpi slt, %20, %23 : vector<64x1xi32>
    %c0_i32_5 = arith.constant 0 : i32
    %25 = arith.cmpi slt, %18, %c0_i32_5 : i32
    %26 = vector.broadcast %25 : i1 to vector<64x1xi1>
    %27 = vector.broadcast %26 : vector<64x1xi1> to vector<64x1xi1>
    %28 = arith.xori %24, %27 : vector<64x1xi1>
    %29 = arith.andi %28, %22 : vector<64x1xi1>
    %30 = vector.broadcast %18 : i32 to vector<64x1xi32>
    %31 = arith.addi %20, %30 : vector<64x1xi32>
    %32 = arith.select %29, %31, %20 : vector<64x1xi1>, vector<64x1xi32>
    %c0_6 = arith.constant 0 : index
    %c0_7 = arith.constant 0 : index
    %33 = vector.load %arg0[%c0_6, %c0_7] : memref<64x128xf32, #tpu.memory_space<vmem>>, vector<64x128xf32>
    %c0_i32_8 = arith.constant 0 : i32
    %34 = tpu.memref_slice %arg18[%c0_i32_8] : memref<7x!tpu.dma_semaphore, #tpu.memory_space<semaphore_mem>> -> memref<1x!tpu.dma_semaphore, #tpu.memory_space<semaphore_mem>>
    %35 = tpu.memref_squeeze %34 : memref<1x!tpu.dma_semaphore, #tpu.memory_space<semaphore_mem>> -> memref<!tpu.dma_semaphore, #tpu.memory_space<semaphore_mem>>
    tpu.wait_dma2 semaphore(%35 : memref<!tpu.dma_semaphore, #tpu.memory_space<semaphore_mem>>) src(%arg2 : memref<128x256xbf16, #tpu.memory_space<any>>) dst(%arg10 : memref<128x256xbf16, #tpu.memory_space<vmem>>)
    %36 = arith.truncf %33 : vector<64x128xf32> to vector<64x128xbf16>
    %c0_9 = arith.constant 0 : index
    %c0_10 = arith.constant 0 : index
    %37 = vector.load %arg10[%c0_9, %c0_10] : memref<128x256xbf16, #tpu.memory_space<vmem>>, vector<128x256xbf16>
    %cst_11 = arith.constant dense<0.000000e+00> : vector<64x256xf32>
    %38 = tpu.matmul %36, %37, %cst_11 {dimension_numbers = #tpu.dot_dimension_numbers<[1], [0], [0], [1], [0, 0, 1, 1], [], []>} : vector<64x128xbf16>, vector<128x256xbf16>, vector<64x256xf32> -> vector<64x256xf32>
    %c0_12 = arith.constant 0 : index
    %c0_13 = arith.constant 0 : index
    %39 = vector.load %arg1[%c0_12, %c0_13] : memref<7x256xf32, #tpu.memory_space<vmem>>, vector<1x256xf32>
    %40 = vector.broadcast %39 : vector<1x256xf32> to vector<64x256xf32>
    %41 = arith.addf %40, %38 : vector<64x256xf32>
    %cst_14 = arith.constant 0.000000e+00 : f32
    %42 = vector.broadcast %cst_14 : f32 to vector<64x256xf32>
    %43 = arith.cmpf oge, %41, %42 : vector<64x256xf32>
    %cst_15 = arith.constant 2.000000e-01 : f32
    %44 = vector.broadcast %cst_15 : f32 to vector<64x256xf32>
    %45 = arith.mulf %44, %41 : vector<64x256xf32>
    %46 = arith.select %43, %41, %45 : vector<64x256xi1>, vector<64x256xf32>
    %c1_i32_16 = arith.constant 1 : i32
    %47 = tpu.memref_slice %arg18[%c1_i32_16] : memref<7x!tpu.dma_semaphore, #tpu.memory_space<semaphore_mem>> -> memref<1x!tpu.dma_semaphore, #tpu.memory_space<semaphore_mem>>
    %48 = tpu.memref_squeeze %47 : memref<1x!tpu.dma_semaphore, #tpu.memory_space<semaphore_mem>> -> memref<!tpu.dma_semaphore, #tpu.memory_space<semaphore_mem>>
    tpu.wait_dma2 semaphore(%48 : memref<!tpu.dma_semaphore, #tpu.memory_space<semaphore_mem>>) src(%arg3 : memref<256x768xbf16, #tpu.memory_space<any>>) dst(%arg11 : memref<256x768xbf16, #tpu.memory_space<vmem>>)
    %49 = arith.truncf %46 : vector<64x256xf32> to vector<64x256xbf16>
    %c0_17 = arith.constant 0 : index
    %c0_18 = arith.constant 0 : index
    %50 = vector.load %arg11[%c0_17, %c0_18] : memref<256x768xbf16, #tpu.memory_space<vmem>>, vector<256x768xbf16>
    %cst_19 = arith.constant dense<0.000000e+00> : vector<64x768xf32>
    %51 = tpu.matmul %49, %50, %cst_19 {dimension_numbers = #tpu.dot_dimension_numbers<[1], [0], [0], [1], [0, 0, 1, 1], [], []>} : vector<64x256xbf16>, vector<256x768xbf16>, vector<64x768xf32> -> vector<64x768xf32>
    %c1 = arith.constant 1 : index
    %c0_20 = arith.constant 0 : index
    %52 = vector.load %arg1[%c1, %c0_20] : memref<7x256xf32, #tpu.memory_space<vmem>>, vector<1x256xf32>
    %c16 = arith.constant 16 : index
    %c0_21 = arith.constant 0 : index
    %53 = vector.load %arg17[%c16, %c0_21] : memref<96x1024xf32, #tpu.memory_space<vmem>>, vector<64x768xf32>
    tpu.vector_store %arg17[%c16, %c0_21], %51 {strides = array<i32>} : memref<96x1024xf32, #tpu.memory_space<vmem>>, vector<64x768xf32>,
    %c15 = arith.constant 15 : index
    %c0_22 = arith.constant 0 : index
    %54 = vector.load %arg17[%c15, %c0_22] : memref<96x1024xf32, #tpu.memory_space<vmem>>, vector<64x256xf32>
    %c-1_i32 = arith.constant -1 : i32
    %55 = vector.broadcast %c-1_i32 : i32 to vector<64x1xi32>
    %56 = arith.addi %32, %55 : vector<64x1xi32>
    %c0_i32_23 = arith.constant 0 : i32
    %57 = vector.broadcast %c0_i32_23 : i32 to vector<64x1xi32>
    %58 = arith.cmpi sge, %56, %57 : vector<64x1xi32>
    %c-1_i32_24 = arith.constant -1 : i32
    %59 = vector.broadcast %c-1_i32_24 : i32 to vector<64x1xi32>
    %60 = arith.addi %32, %59 : vector<64x1xi32>
    %c32_i32_25 = arith.constant 32 : i32
    %61 = vector.broadcast %c32_i32_25 : i32 to vector<64x1xi32>
    %62 = arith.cmpi slt, %60, %61 : vector<64x1xi32>
    %63 = arith.andi %58, %62 : vector<64x1xi1>
    %cst_26 = arith.constant 0.000000e+00 : f32
    %64 = vector.shape_cast %63 : vector<64x1xi1> to vector<64x1xi1>
    %65 = vector.broadcast %64 : vector<64x1xi1> to vector<64x256xi1>
    %66 = vector.broadcast %cst_26 : f32 to vector<64x256xf32>
    %67 = arith.select %65, %54, %66 : vector<64x256xi1>, vector<64x256xf32>
    %68 = vector.broadcast %52 : vector<1x256xf32> to vector<64x256xf32>
    %69 = arith.addf %68, %67 : vector<64x256xf32>
    %70 = vector.extract_strided_slice %51 {offsets = [0, 256], sizes = [64, 256], strides = [1, 1]} : vector<64x768xf32> to vector<64x256xf32>
    %71 = arith.addf %69, %70 : vector<64x256xf32>
    %c17 = arith.constant 17 : index
    %c512 = arith.constant 512 : index
    %72 = vector.load %arg17[%c17, %c512] : memref<96x1024xf32, #tpu.memory_space<vmem>>, vector<64x256xf32>
    %c1_i32_27 = arith.constant 1 : i32
    %73 = vector.broadcast %c1_i32_27 : i32 to vector<64x1xi32>
    %74 = arith.addi %32, %73 : vector<64x1xi32>
    %c0_i32_28 = arith.constant 0 : i32
    %75 = vector.broadcast %c0_i32_28 : i32 to vector<64x1xi32>
    %76 = arith.cmpi sge, %74, %75 : vector<64x1xi32>
    %c1_i32_29 = arith.constant 1 : i32
    %77 = vector.broadcast %c1_i32_29 : i32 to vector<64x1xi32>
    %78 = arith.addi %32, %77 : vector<64x1xi32>
    %c32_i32_30 = arith.constant 32 : i32
    %79 = vector.broadcast %c32_i32_30 : i32 to vector<64x1xi32>
    %80 = arith.cmpi slt, %78, %79 : vector<64x1xi32>
    %81 = arith.andi %76, %80 : vector<64x1xi1>
    %cst_31 = arith.constant 0.000000e+00 : f32
    %82 = vector.shape_cast %81 : vector<64x1xi1> to vector<64x1xi1>
    %83 = vector.broadcast %82 : vector<64x1xi1> to vector<64x256xi1>
    %84 = vector.broadcast %cst_31 : f32 to vector<64x256xf32>
    %85 = arith.select %83, %72, %84 : vector<64x256xi1>, vector<64x256xf32>
    %86 = arith.addf %71, %85 : vector<64x256xf32>
    %cst_32 = arith.constant 0.000000e+00 : f32
    %87 = vector.broadcast %cst_32 : f32 to vector<64x256xf32>
    %88 = arith.cmpf oge, %86, %87 : vector<64x256xf32>
    %cst_33 = arith.constant 2.000000e-01 : f32
    %89 = vector.broadcast %cst_33 : f32 to vector<64x256xf32>
    %90 = arith.mulf %89, %86 : vector<64x256xf32>
    %91 = arith.select %88, %86, %90 : vector<64x256xi1>, vector<64x256xf32>
    %c2_i32_34 = arith.constant 2 : i32
    %92 = tpu.memref_slice %arg18[%c2_i32_34] : memref<7x!tpu.dma_semaphore, #tpu.memory_space<semaphore_mem>> -> memref<1x!tpu.dma_semaphore, #tpu.memory_space<semaphore_mem>>
    %93 = tpu.memref_squeeze %92 : memref<1x!tpu.dma_semaphore, #tpu.memory_space<semaphore_mem>> -> memref<!tpu.dma_semaphore, #tpu.memory_space<semaphore_mem>>
    tpu.wait_dma2 semaphore(%93 : memref<!tpu.dma_semaphore, #tpu.memory_space<semaphore_mem>>) src(%arg4 : memref<256x1024xbf16, #tpu.memory_space<any>>) dst(%arg12 : memref<256x1024xbf16, #tpu.memory_space<vmem>>)
    %94 = arith.truncf %91 : vector<64x256xf32> to vector<64x256xbf16>
    %c0_35 = arith.constant 0 : index
    %c0_36 = arith.constant 0 : index
    %95 = vector.load %arg12[%c0_35, %c0_36] : memref<256x1024xbf16, #tpu.memory_space<vmem>>, vector<256x1024xbf16>
    %cst_37 = arith.constant dense<0.000000e+00> : vector<64x1024xf32>
    %96 = tpu.matmul %94, %95, %cst_37 {dimension_numbers = #tpu.dot_dimension_numbers<[1], [0], [0], [1], [0, 0, 1, 1], [], []>} : vector<64x256xbf16>, vector<256x1024xbf16>, vector<64x1024xf32> -> vector<64x1024xf32>
    %c2 = arith.constant 2 : index
    %c0_38 = arith.constant 0 : index
    %97 = vector.load %arg1[%c2, %c0_38] : memref<7x256xf32, #tpu.memory_space<vmem>>, vector<1x256xf32>
    %c16_39 = arith.constant 16 : index
    %c0_40 = arith.constant 0 : index
    %98 = vector.load %arg17[%c16_39, %c0_40] : memref<96x1024xf32, #tpu.memory_space<vmem>>, vector<64x1024xf32>
    tpu.vector_store %arg17[%c16_39, %c0_40], %96 {strides = array<i32>} : memref<96x1024xf32, #tpu.memory_space<vmem>>, vector<64x1024xf32>,
    %c15_41 = arith.constant 15 : index
    %c0_42 = arith.constant 0 : index
    %99 = vector.load %arg17[%c15_41, %c0_42] : memref<96x1024xf32, #tpu.memory_space<vmem>>, vector<64x256xf32>
    %c-1_i32_43 = arith.constant -1 : i32
    %100 = vector.broadcast %c-1_i32_43 : i32 to vector<64x1xi32>
    %101 = arith.addi %32, %100 : vector<64x1xi32>
    %c0_i32_44 = arith.constant 0 : i32
    %102 = vector.broadcast %c0_i32_44 : i32 to vector<64x1xi32>
    %103 = arith.cmpi sge, %101, %102 : vector<64x1xi32>
    %c-1_i32_45 = arith.constant -1 : i32
    %104 = vector.broadcast %c-1_i32_45 : i32 to vector<64x1xi32>
    %105 = arith.addi %32, %104 : vector<64x1xi32>
    %c32_i32_46 = arith.constant 32 : i32
    %106 = vector.broadcast %c32_i32_46 : i32 to vector<64x1xi32>
    %107 = arith.cmpi slt, %105, %106 : vector<64x1xi32>
    %108 = arith.andi %103, %107 : vector<64x1xi1>
    %cst_47 = arith.constant 0.000000e+00 : f32
    %109 = vector.shape_cast %108 : vector<64x1xi1> to vector<64x1xi1>
    %110 = vector.broadcast %109 : vector<64x1xi1> to vector<64x256xi1>
    %111 = vector.broadcast %cst_47 : f32 to vector<64x256xf32>
    %112 = arith.select %110, %99, %111 : vector<64x256xi1>, vector<64x256xf32>
    %113 = vector.broadcast %97 : vector<1x256xf32> to vector<64x256xf32>
    %114 = arith.addf %113, %112 : vector<64x256xf32>
    %115 = vector.extract_strided_slice %96 {offsets = [0, 256], sizes = [64, 256], strides = [1, 1]} : vector<64x1024xf32> to vector<64x256xf32>
    %116 = arith.addf %114, %115 : vector<64x256xf32>
    %c17_48 = arith.constant 17 : index
    %c512_49 = arith.constant 512 : index
    %117 = vector.load %arg17[%c17_48, %c512_49] : memref<96x1024xf32, #tpu.memory_space<vmem>>, vector<64x256xf32>
    %c1_i32_50 = arith.constant 1 : i32
    %118 = vector.broadcast %c1_i32_50 : i32 to vector<64x1xi32>
    %119 = arith.addi %32, %118 : vector<64x1xi32>
    %c0_i32_51 = arith.constant 0 : i32
    %120 = vector.broadcast %c0_i32_51 : i32 to vector<64x1xi32>
    %121 = arith.cmpi sge, %119, %120 : vector<64x1xi32>
    %c1_i32_52 = arith.constant 1 : i32
    %122 = vector.broadcast %c1_i32_52 : i32 to vector<64x1xi32>
    %123 = arith.addi %32, %122 : vector<64x1xi32>
    %c32_i32_53 = arith.constant 32 : i32
    %124 = vector.broadcast %c32_i32_53 : i32 to vector<64x1xi32>
    %125 = arith.cmpi slt, %123, %124 : vector<64x1xi32>
    %126 = arith.andi %121, %125 : vector<64x1xi1>
    %cst_54 = arith.constant 0.000000e+00 : f32
    %127 = vector.shape_cast %126 : vector<64x1xi1> to vector<64x1xi1>
    %128 = vector.broadcast %127 : vector<64x1xi1> to vector<64x256xi1>
    %129 = vector.broadcast %cst_54 : f32 to vector<64x256xf32>
    %130 = arith.select %128, %117, %129 : vector<64x256xi1>, vector<64x256xf32>
    %131 = arith.addf %116, %130 : vector<64x256xf32>
    %c18 = arith.constant 18 : index
    %c768 = arith.constant 768 : index
    %132 = vector.load %arg17[%c18, %c768] : memref<96x1024xf32, #tpu.memory_space<vmem>>, vector<64x256xf32>
    %c2_i32_55 = arith.constant 2 : i32
    %133 = vector.broadcast %c2_i32_55 : i32 to vector<64x1xi32>
    %134 = arith.addi %32, %133 : vector<64x1xi32>
    %c0_i32_56 = arith.constant 0 : i32
    %135 = vector.broadcast %c0_i32_56 : i32 to vector<64x1xi32>
    %136 = arith.cmpi sge, %134, %135 : vector<64x1xi32>
    %c2_i32_57 = arith.constant 2 : i32
    %137 = vector.broadcast %c2_i32_57 : i32 to vector<64x1xi32>
    %138 = arith.addi %32, %137 : vector<64x1xi32>
    %c32_i32_58 = arith.constant 32 : i32
    %139 = vector.broadcast %c32_i32_58 : i32 to vector<64x1xi32>
    %140 = arith.cmpi slt, %138, %139 : vector<64x1xi32>
    %141 = arith.andi %136, %140 : vector<64x1xi1>
    %cst_59 = arith.constant 0.000000e+00 : f32
    %142 = vector.shape_cast %141 : vector<64x1xi1> to vector<64x1xi1>
    %143 = vector.broadcast %142 : vector<64x1xi1> to vector<64x256xi1>
    %144 = vector.broadcast %cst_59 : f32 to vector<64x256xf32>
    %145 = arith.select %143, %132, %144 : vector<64x256xi1>, vector<64x256xf32>
    %146 = arith.addf %131, %145 : vector<64x256xf32>
    %cst_60 = arith.constant 0.000000e+00 : f32
    %147 = vector.broadcast %cst_60 : f32 to vector<64x256xf32>
    %148 = arith.cmpf oge, %146, %147 : vector<64x256xf32>
    %cst_61 = arith.constant 2.000000e-01 : f32
    %149 = vector.broadcast %cst_61 : f32 to vector<64x256xf32>
    %150 = arith.mulf %149, %146 : vector<64x256xf32>
    %151 = arith.select %148, %146, %150 : vector<64x256xi1>, vector<64x256xf32>
    %c3_i32_62 = arith.constant 3 : i32
    %152 = tpu.memref_slice %arg18[%c3_i32_62] : memref<7x!tpu.dma_semaphore, #tpu.memory_space<semaphore_mem>> -> memref<1x!tpu.dma_semaphore, #tpu.memory_space<semaphore_mem>>
    %153 = tpu.memref_squeeze %152 : memref<1x!tpu.dma_semaphore, #tpu.memory_space<semaphore_mem>> -> memref<!tpu.dma_semaphore, #tpu.memory_space<semaphore_mem>>
    tpu.wait_dma2 semaphore(%153 : memref<!tpu.dma_semaphore, #tpu.memory_space<semaphore_mem>>) src(%arg5 : memref<256x1024xbf16, #tpu.memory_space<any>>) dst(%arg13 : memref<256x1024xbf16, #tpu.memory_space<vmem>>)
    %154 = arith.truncf %151 : vector<64x256xf32> to vector<64x256xbf16>
    %c0_63 = arith.constant 0 : index
    %c0_64 = arith.constant 0 : index
    %155 = vector.load %arg13[%c0_63, %c0_64] : memref<256x1024xbf16, #tpu.memory_space<vmem>>, vector<256x1024xbf16>
    %cst_65 = arith.constant dense<0.000000e+00> : vector<64x1024xf32>
    %156 = tpu.matmul %154, %155, %cst_65 {dimension_numbers = #tpu.dot_dimension_numbers<[1], [0], [0], [1], [0, 0, 1, 1], [], []>} : vector<64x256xbf16>, vector<256x1024xbf16>, vector<64x1024xf32> -> vector<64x1024xf32>
    %c3 = arith.constant 3 : index
    %c0_66 = arith.constant 0 : index
    %157 = vector.load %arg1[%c3, %c0_66] : memref<7x256xf32, #tpu.memory_space<vmem>>, vector<1x256xf32>
    %c16_67 = arith.constant 16 : index
    %c0_68 = arith.constant 0 : index
    %158 = vector.load %arg17[%c16_67, %c0_68] : memref<96x1024xf32, #tpu.memory_space<vmem>>, vector<64x1024xf32>
    tpu.vector_store %arg17[%c16_67, %c0_68], %156 {strides = array<i32>} : memref<96x1024xf32, #tpu.memory_space<vmem>>, vector<64x1024xf32>,
    %c14 = arith.constant 14 : index
    %c0_69 = arith.constant 0 : index
    %159 = vector.load %arg17[%c14, %c0_69] : memref<96x1024xf32, #tpu.memory_space<vmem>>, vector<64x256xf32>
    %c-2_i32 = arith.constant -2 : i32
    %160 = vector.broadcast %c-2_i32 : i32 to vector<64x1xi32>
    %161 = arith.addi %32, %160 : vector<64x1xi32>
    %c0_i32_70 = arith.constant 0 : i32
    %162 = vector.broadcast %c0_i32_70 : i32 to vector<64x1xi32>
    %163 = arith.cmpi sge, %161, %162 : vector<64x1xi32>
    %c-2_i32_71 = arith.constant -2 : i32
    %164 = vector.broadcast %c-2_i32_71 : i32 to vector<64x1xi32>
    %165 = arith.addi %32, %164 : vector<64x1xi32>
    %c32_i32_72 = arith.constant 32 : i32
    %166 = vector.broadcast %c32_i32_72 : i32 to vector<64x1xi32>
    %167 = arith.cmpi slt, %165, %166 : vector<64x1xi32>
    %168 = arith.andi %163, %167 : vector<64x1xi1>
    %cst_73 = arith.constant 0.000000e+00 : f32
    %169 = vector.shape_cast %168 : vector<64x1xi1> to vector<64x1xi1>
    %170 = vector.broadcast %169 : vector<64x1xi1> to vector<64x256xi1>
    %171 = vector.broadcast %cst_73 : f32 to vector<64x256xf32>
    %172 = arith.select %170, %159, %171 : vector<64x256xi1>, vector<64x256xf32>
    %173 = vector.broadcast %157 : vector<1x256xf32> to vector<64x256xf32>
    %174 = arith.addf %173, %172 : vector<64x256xf32>
    %175 = vector.extract_strided_slice %156 {offsets = [0, 256], sizes = [64, 256], strides = [1, 1]} : vector<64x1024xf32> to vector<64x256xf32>
    %176 = arith.addf %174, %175 : vector<64x256xf32>
    %c18_74 = arith.constant 18 : index
    %c512_75 = arith.constant 512 : index
    %177 = vector.load %arg17[%c18_74, %c512_75] : memref<96x1024xf32, #tpu.memory_space<vmem>>, vector<64x256xf32>
    %c2_i32_76 = arith.constant 2 : i32
    %178 = vector.broadcast %c2_i32_76 : i32 to vector<64x1xi32>
    %179 = arith.addi %32, %178 : vector<64x1xi32>
    %c0_i32_77 = arith.constant 0 : i32
    %180 = vector.broadcast %c0_i32_77 : i32 to vector<64x1xi32>
    %181 = arith.cmpi sge, %179, %180 : vector<64x1xi32>
    %c2_i32_78 = arith.constant 2 : i32
    %182 = vector.broadcast %c2_i32_78 : i32 to vector<64x1xi32>
    %183 = arith.addi %32, %182 : vector<64x1xi32>
    %c32_i32_79 = arith.constant 32 : i32
    %184 = vector.broadcast %c32_i32_79 : i32 to vector<64x1xi32>
    %185 = arith.cmpi slt, %183, %184 : vector<64x1xi32>
    %186 = arith.andi %181, %185 : vector<64x1xi1>
    %cst_80 = arith.constant 0.000000e+00 : f32
    %187 = vector.shape_cast %186 : vector<64x1xi1> to vector<64x1xi1>
    %188 = vector.broadcast %187 : vector<64x1xi1> to vector<64x256xi1>
    %189 = vector.broadcast %cst_80 : f32 to vector<64x256xf32>
    %190 = arith.select %188, %177, %189 : vector<64x256xi1>, vector<64x256xf32>
    %191 = arith.addf %176, %190 : vector<64x256xf32>
    %c20 = arith.constant 20 : index
    %c768_81 = arith.constant 768 : index
    %192 = vector.load %arg17[%c20, %c768_81] : memref<96x1024xf32, #tpu.memory_space<vmem>>, vector<64x256xf32>
    %c4_i32_82 = arith.constant 4 : i32
    %193 = vector.broadcast %c4_i32_82 : i32 to vector<64x1xi32>
    %194 = arith.addi %32, %193 : vector<64x1xi32>
    %c0_i32_83 = arith.constant 0 : i32
    %195 = vector.broadcast %c0_i32_83 : i32 to vector<64x1xi32>
    %196 = arith.cmpi sge, %194, %195 : vector<64x1xi32>
    %c4_i32_84 = arith.constant 4 : i32
    %197 = vector.broadcast %c4_i32_84 : i32 to vector<64x1xi32>
    %198 = arith.addi %32, %197 : vector<64x1xi32>
    %c32_i32_85 = arith.constant 32 : i32
    %199 = vector.broadcast %c32_i32_85 : i32 to vector<64x1xi32>
    %200 = arith.cmpi slt, %198, %199 : vector<64x1xi32>
    %201 = arith.andi %196, %200 : vector<64x1xi1>
    %cst_86 = arith.constant 0.000000e+00 : f32
    %202 = vector.shape_cast %201 : vector<64x1xi1> to vector<64x1xi1>
    %203 = vector.broadcast %202 : vector<64x1xi1> to vector<64x256xi1>
    %204 = vector.broadcast %cst_86 : f32 to vector<64x256xf32>
    %205 = arith.select %203, %192, %204 : vector<64x256xi1>, vector<64x256xf32>
    %206 = arith.addf %191, %205 : vector<64x256xf32>
    %cst_87 = arith.constant 0.000000e+00 : f32
    %207 = vector.broadcast %cst_87 : f32 to vector<64x256xf32>
    %208 = arith.cmpf oge, %206, %207 : vector<64x256xf32>
    %cst_88 = arith.constant 2.000000e-01 : f32
    %209 = vector.broadcast %cst_88 : f32 to vector<64x256xf32>
    %210 = arith.mulf %209, %206 : vector<64x256xf32>
    %211 = arith.select %208, %206, %210 : vector<64x256xi1>, vector<64x256xf32>
    %c4_i32_89 = arith.constant 4 : i32
    %212 = tpu.memref_slice %arg18[%c4_i32_89] : memref<7x!tpu.dma_semaphore, #tpu.memory_space<semaphore_mem>> -> memref<1x!tpu.dma_semaphore, #tpu.memory_space<semaphore_mem>>
    %213 = tpu.memref_squeeze %212 : memref<1x!tpu.dma_semaphore, #tpu.memory_space<semaphore_mem>> -> memref<!tpu.dma_semaphore, #tpu.memory_space<semaphore_mem>>
    tpu.wait_dma2 semaphore(%213 : memref<!tpu.dma_semaphore, #tpu.memory_space<semaphore_mem>>) src(%arg6 : memref<256x1024xbf16, #tpu.memory_space<any>>) dst(%arg14 : memref<256x1024xbf16, #tpu.memory_space<vmem>>)
    %214 = arith.truncf %211 : vector<64x256xf32> to vector<64x256xbf16>
    %c0_90 = arith.constant 0 : index
    %c0_91 = arith.constant 0 : index
    %215 = vector.load %arg14[%c0_90, %c0_91] : memref<256x1024xbf16, #tpu.memory_space<vmem>>, vector<256x1024xbf16>
    %cst_92 = arith.constant dense<0.000000e+00> : vector<64x1024xf32>
    %216 = tpu.matmul %214, %215, %cst_92 {dimension_numbers = #tpu.dot_dimension_numbers<[1], [0], [0], [1], [0, 0, 1, 1], [], []>} : vector<64x256xbf16>, vector<256x1024xbf16>, vector<64x1024xf32> -> vector<64x1024xf32>
    %c4 = arith.constant 4 : index
    %c0_93 = arith.constant 0 : index
    %217 = vector.load %arg1[%c4, %c0_93] : memref<7x256xf32, #tpu.memory_space<vmem>>, vector<1x256xf32>
    %c16_94 = arith.constant 16 : index
    %c0_95 = arith.constant 0 : index
    %218 = vector.load %arg17[%c16_94, %c0_95] : memref<96x1024xf32, #tpu.memory_space<vmem>>, vector<64x1024xf32>
    tpu.vector_store %arg17[%c16_94, %c0_95], %216 {strides = array<i32>} : memref<96x1024xf32, #tpu.memory_space<vmem>>, vector<64x1024xf32>,
    %c12 = arith.constant 12 : index
    %c0_96 = arith.constant 0 : index
    %219 = vector.load %arg17[%c12, %c0_96] : memref<96x1024xf32, #tpu.memory_space<vmem>>, vector<64x256xf32>
    %c-4_i32 = arith.constant -4 : i32
    %220 = vector.broadcast %c-4_i32 : i32 to vector<64x1xi32>
    %221 = arith.addi %32, %220 : vector<64x1xi32>
    %c0_i32_97 = arith.constant 0 : i32
    %222 = vector.broadcast %c0_i32_97 : i32 to vector<64x1xi32>
    %223 = arith.cmpi sge, %221, %222 : vector<64x1xi32>
    %c-4_i32_98 = arith.constant -4 : i32
    %224 = vector.broadcast %c-4_i32_98 : i32 to vector<64x1xi32>
    %225 = arith.addi %32, %224 : vector<64x1xi32>
    %c32_i32_99 = arith.constant 32 : i32
    %226 = vector.broadcast %c32_i32_99 : i32 to vector<64x1xi32>
    %227 = arith.cmpi slt, %225, %226 : vector<64x1xi32>
    %228 = arith.andi %223, %227 : vector<64x1xi1>
    %cst_100 = arith.constant 0.000000e+00 : f32
    %229 = vector.shape_cast %228 : vector<64x1xi1> to vector<64x1xi1>
    %230 = vector.broadcast %229 : vector<64x1xi1> to vector<64x256xi1>
    %231 = vector.broadcast %cst_100 : f32 to vector<64x256xf32>
    %232 = arith.select %230, %219, %231 : vector<64x256xi1>, vector<64x256xf32>
    %233 = vector.broadcast %217 : vector<1x256xf32> to vector<64x256xf32>
    %234 = arith.addf %233, %232 : vector<64x256xf32>
    %235 = vector.extract_strided_slice %216 {offsets = [0, 256], sizes = [64, 256], strides = [1, 1]} : vector<64x1024xf32> to vector<64x256xf32>
    %236 = arith.addf %234, %235 : vector<64x256xf32>
    %c20_101 = arith.constant 20 : index
    %c512_102 = arith.constant 512 : index
    %237 = vector.load %arg17[%c20_101, %c512_102] : memref<96x1024xf32, #tpu.memory_space<vmem>>, vector<64x256xf32>
    %c4_i32_103 = arith.constant 4 : i32
    %238 = vector.broadcast %c4_i32_103 : i32 to vector<64x1xi32>
    %239 = arith.addi %32, %238 : vector<64x1xi32>
    %c0_i32_104 = arith.constant 0 : i32
    %240 = vector.broadcast %c0_i32_104 : i32 to vector<64x1xi32>
    %241 = arith.cmpi sge, %239, %240 : vector<64x1xi32>
    %c4_i32_105 = arith.constant 4 : i32
    %242 = vector.broadcast %c4_i32_105 : i32 to vector<64x1xi32>
    %243 = arith.addi %32, %242 : vector<64x1xi32>
    %c32_i32_106 = arith.constant 32 : i32
    %244 = vector.broadcast %c32_i32_106 : i32 to vector<64x1xi32>
    %245 = arith.cmpi slt, %243, %244 : vector<64x1xi32>
    %246 = arith.andi %241, %245 : vector<64x1xi1>
    %cst_107 = arith.constant 0.000000e+00 : f32
    %247 = vector.shape_cast %246 : vector<64x1xi1> to vector<64x1xi1>
    %248 = vector.broadcast %247 : vector<64x1xi1> to vector<64x256xi1>
    %249 = vector.broadcast %cst_107 : f32 to vector<64x256xf32>
    %250 = arith.select %248, %237, %249 : vector<64x256xi1>, vector<64x256xf32>
    %251 = arith.addf %236, %250 : vector<64x256xf32>
    %c24 = arith.constant 24 : index
    %c768_108 = arith.constant 768 : index
    %252 = vector.load %arg17[%c24, %c768_108] : memref<96x1024xf32, #tpu.memory_space<vmem>>, vector<64x256xf32>
    %c8_i32 = arith.constant 8 : i32
    %253 = vector.broadcast %c8_i32 : i32 to vector<64x1xi32>
    %254 = arith.addi %32, %253 : vector<64x1xi32>
    %c0_i32_109 = arith.constant 0 : i32
    %255 = vector.broadcast %c0_i32_109 : i32 to vector<64x1xi32>
    %256 = arith.cmpi sge, %254, %255 : vector<64x1xi32>
    %c8_i32_110 = arith.constant 8 : i32
    %257 = vector.broadcast %c8_i32_110 : i32 to vector<64x1xi32>
    %258 = arith.addi %32, %257 : vector<64x1xi32>
    %c32_i32_111 = arith.constant 32 : i32
    %259 = vector.broadcast %c32_i32_111 : i32 to vector<64x1xi32>
    %260 = arith.cmpi slt, %258, %259 : vector<64x1xi32>
    %261 = arith.andi %256, %260 : vector<64x1xi1>
    %cst_112 = arith.constant 0.000000e+00 : f32
    %262 = vector.shape_cast %261 : vector<64x1xi1> to vector<64x1xi1>
    %263 = vector.broadcast %262 : vector<64x1xi1> to vector<64x256xi1>
    %264 = vector.broadcast %cst_112 : f32 to vector<64x256xf32>
    %265 = arith.select %263, %252, %264 : vector<64x256xi1>, vector<64x256xf32>
    %266 = arith.addf %251, %265 : vector<64x256xf32>
    %cst_113 = arith.constant 0.000000e+00 : f32
    %267 = vector.broadcast %cst_113 : f32 to vector<64x256xf32>
    %268 = arith.cmpf oge, %266, %267 : vector<64x256xf32>
    %cst_114 = arith.constant 2.000000e-01 : f32
    %269 = vector.broadcast %cst_114 : f32 to vector<64x256xf32>
    %270 = arith.mulf %269, %266 : vector<64x256xf32>
    %271 = arith.select %268, %266, %270 : vector<64x256xi1>, vector<64x256xf32>
    %c5_i32_115 = arith.constant 5 : i32
    %272 = tpu.memref_slice %arg18[%c5_i32_115] : memref<7x!tpu.dma_semaphore, #tpu.memory_space<semaphore_mem>> -> memref<1x!tpu.dma_semaphore, #tpu.memory_space<semaphore_mem>>
    %273 = tpu.memref_squeeze %272 : memref<1x!tpu.dma_semaphore, #tpu.memory_space<semaphore_mem>> -> memref<!tpu.dma_semaphore, #tpu.memory_space<semaphore_mem>>
    tpu.wait_dma2 semaphore(%273 : memref<!tpu.dma_semaphore, #tpu.memory_space<semaphore_mem>>) src(%arg7 : memref<256x1024xbf16, #tpu.memory_space<any>>) dst(%arg15 : memref<256x1024xbf16, #tpu.memory_space<vmem>>)
    %274 = arith.truncf %271 : vector<64x256xf32> to vector<64x256xbf16>
    %c0_116 = arith.constant 0 : index
    %c0_117 = arith.constant 0 : index
    %275 = vector.load %arg15[%c0_116, %c0_117] : memref<256x1024xbf16, #tpu.memory_space<vmem>>, vector<256x1024xbf16>
    %cst_118 = arith.constant dense<0.000000e+00> : vector<64x1024xf32>
    %276 = tpu.matmul %274, %275, %cst_118 {dimension_numbers = #tpu.dot_dimension_numbers<[1], [0], [0], [1], [0, 0, 1, 1], [], []>} : vector<64x256xbf16>, vector<256x1024xbf16>, vector<64x1024xf32> -> vector<64x1024xf32>
    %c5 = arith.constant 5 : index
    %c0_119 = arith.constant 0 : index
    %277 = vector.load %arg1[%c5, %c0_119] : memref<7x256xf32, #tpu.memory_space<vmem>>, vector<1x256xf32>
    %c16_120 = arith.constant 16 : index
    %c0_121 = arith.constant 0 : index
    %278 = vector.load %arg17[%c16_120, %c0_121] : memref<96x1024xf32, #tpu.memory_space<vmem>>, vector<64x1024xf32>
    tpu.vector_store %arg17[%c16_120, %c0_121], %276 {strides = array<i32>} : memref<96x1024xf32, #tpu.memory_space<vmem>>, vector<64x1024xf32>,
    %c8 = arith.constant 8 : index
    %c0_122 = arith.constant 0 : index
    %279 = vector.load %arg17[%c8, %c0_122] : memref<96x1024xf32, #tpu.memory_space<vmem>>, vector<64x256xf32>
    %c-8_i32 = arith.constant -8 : i32
    %280 = vector.broadcast %c-8_i32 : i32 to vector<64x1xi32>
    %281 = arith.addi %32, %280 : vector<64x1xi32>
    %c0_i32_123 = arith.constant 0 : i32
    %282 = vector.broadcast %c0_i32_123 : i32 to vector<64x1xi32>
    %283 = arith.cmpi sge, %281, %282 : vector<64x1xi32>
    %c-8_i32_124 = arith.constant -8 : i32
    %284 = vector.broadcast %c-8_i32_124 : i32 to vector<64x1xi32>
    %285 = arith.addi %32, %284 : vector<64x1xi32>
    %c32_i32_125 = arith.constant 32 : i32
    %286 = vector.broadcast %c32_i32_125 : i32 to vector<64x1xi32>
    %287 = arith.cmpi slt, %285, %286 : vector<64x1xi32>
    %288 = arith.andi %283, %287 : vector<64x1xi1>
    %cst_126 = arith.constant 0.000000e+00 : f32
    %289 = vector.shape_cast %288 : vector<64x1xi1> to vector<64x1xi1>
    %290 = vector.broadcast %289 : vector<64x1xi1> to vector<64x256xi1>
    %291 = vector.broadcast %cst_126 : f32 to vector<64x256xf32>
    %292 = arith.select %290, %279, %291 : vector<64x256xi1>, vector<64x256xf32>
    %293 = vector.broadcast %277 : vector<1x256xf32> to vector<64x256xf32>
    %294 = arith.addf %293, %292 : vector<64x256xf32>
    %295 = vector.extract_strided_slice %276 {offsets = [0, 256], sizes = [64, 256], strides = [1, 1]} : vector<64x1024xf32> to vector<64x256xf32>
    %296 = arith.addf %294, %295 : vector<64x256xf32>
    %c24_127 = arith.constant 24 : index
    %c512_128 = arith.constant 512 : index
    %297 = vector.load %arg17[%c24_127, %c512_128] : memref<96x1024xf32, #tpu.memory_space<vmem>>, vector<64x256xf32>
    %c8_i32_129 = arith.constant 8 : i32
    %298 = vector.broadcast %c8_i32_129 : i32 to vector<64x1xi32>
    %299 = arith.addi %32, %298 : vector<64x1xi32>
    %c0_i32_130 = arith.constant 0 : i32
    %300 = vector.broadcast %c0_i32_130 : i32 to vector<64x1xi32>
    %301 = arith.cmpi sge, %299, %300 : vector<64x1xi32>
    %c8_i32_131 = arith.constant 8 : i32
    %302 = vector.broadcast %c8_i32_131 : i32 to vector<64x1xi32>
    %303 = arith.addi %32, %302 : vector<64x1xi32>
    %c32_i32_132 = arith.constant 32 : i32
    %304 = vector.broadcast %c32_i32_132 : i32 to vector<64x1xi32>
    %305 = arith.cmpi slt, %303, %304 : vector<64x1xi32>
    %306 = arith.andi %301, %305 : vector<64x1xi1>
    %cst_133 = arith.constant 0.000000e+00 : f32
    %307 = vector.shape_cast %306 : vector<64x1xi1> to vector<64x1xi1>
    %308 = vector.broadcast %307 : vector<64x1xi1> to vector<64x256xi1>
    %309 = vector.broadcast %cst_133 : f32 to vector<64x256xf32>
    %310 = arith.select %308, %297, %309 : vector<64x256xi1>, vector<64x256xf32>
    %311 = arith.addf %296, %310 : vector<64x256xf32>
    %c32 = arith.constant 32 : index
    %c768_134 = arith.constant 768 : index
    %312 = vector.load %arg17[%c32, %c768_134] : memref<96x1024xf32, #tpu.memory_space<vmem>>, vector<64x256xf32>
    %c16_i32 = arith.constant 16 : i32
    %313 = vector.broadcast %c16_i32 : i32 to vector<64x1xi32>
    %314 = arith.addi %32, %313 : vector<64x1xi32>
    %c0_i32_135 = arith.constant 0 : i32
    %315 = vector.broadcast %c0_i32_135 : i32 to vector<64x1xi32>
    %316 = arith.cmpi sge, %314, %315 : vector<64x1xi32>
    %c16_i32_136 = arith.constant 16 : i32
    %317 = vector.broadcast %c16_i32_136 : i32 to vector<64x1xi32>
    %318 = arith.addi %32, %317 : vector<64x1xi32>
    %c32_i32_137 = arith.constant 32 : i32
    %319 = vector.broadcast %c32_i32_137 : i32 to vector<64x1xi32>
    %320 = arith.cmpi slt, %318, %319 : vector<64x1xi32>
    %321 = arith.andi %316, %320 : vector<64x1xi1>
    %cst_138 = arith.constant 0.000000e+00 : f32
    %322 = vector.shape_cast %321 : vector<64x1xi1> to vector<64x1xi1>
    %323 = vector.broadcast %322 : vector<64x1xi1> to vector<64x256xi1>
    %324 = vector.broadcast %cst_138 : f32 to vector<64x256xf32>
    %325 = arith.select %323, %312, %324 : vector<64x256xi1>, vector<64x256xf32>
    %326 = arith.addf %311, %325 : vector<64x256xf32>
    %cst_139 = arith.constant 0.000000e+00 : f32
    %327 = vector.broadcast %cst_139 : f32 to vector<64x256xf32>
    %328 = arith.cmpf oge, %326, %327 : vector<64x256xf32>
    %cst_140 = arith.constant 2.000000e-01 : f32
    %329 = vector.broadcast %cst_140 : f32 to vector<64x256xf32>
    %330 = arith.mulf %329, %326 : vector<64x256xf32>
    %331 = arith.select %328, %326, %330 : vector<64x256xi1>, vector<64x256xf32>
    %c6_i32_141 = arith.constant 6 : i32
    %332 = tpu.memref_slice %arg18[%c6_i32_141] : memref<7x!tpu.dma_semaphore, #tpu.memory_space<semaphore_mem>> -> memref<1x!tpu.dma_semaphore, #tpu.memory_space<semaphore_mem>>
    %333 = tpu.memref_squeeze %332 : memref<1x!tpu.dma_semaphore, #tpu.memory_space<semaphore_mem>> -> memref<!tpu.dma_semaphore, #tpu.memory_space<semaphore_mem>>
    tpu.wait_dma2 semaphore(%333 : memref<!tpu.dma_semaphore, #tpu.memory_space<semaphore_mem>>) src(%arg8 : memref<256x384xbf16, #tpu.memory_space<any>>) dst(%arg16 : memref<256x384xbf16, #tpu.memory_space<vmem>>)
    %334 = arith.truncf %331 : vector<64x256xf32> to vector<64x256xbf16>
    %c0_142 = arith.constant 0 : index
    %c0_143 = arith.constant 0 : index
    %335 = vector.load %arg16[%c0_142, %c0_143] : memref<256x384xbf16, #tpu.memory_space<vmem>>, vector<256x384xbf16>
    %cst_144 = arith.constant dense<0.000000e+00> : vector<64x384xf32>
    %336 = tpu.matmul %334, %335, %cst_144 {dimension_numbers = #tpu.dot_dimension_numbers<[1], [0], [0], [1], [0, 0, 1, 1], [], []>} : vector<64x256xbf16>, vector<256x384xbf16>, vector<64x384xf32> -> vector<64x384xf32>
    %c6 = arith.constant 6 : index
    %c0_145 = arith.constant 0 : index
    %337 = vector.load %arg1[%c6, %c0_145] : memref<7x256xf32, #tpu.memory_space<vmem>>, vector<1x128xf32>
    %c16_146 = arith.constant 16 : index
    %c0_147 = arith.constant 0 : index
    %338 = vector.load %arg17[%c16_146, %c0_147] : memref<96x1024xf32, #tpu.memory_space<vmem>>, vector<64x384xf32>
    tpu.vector_store %arg17[%c16_146, %c0_147], %336 {strides = array<i32>} : memref<96x1024xf32, #tpu.memory_space<vmem>>, vector<64x384xf32>,
    %c0_148 = arith.constant 0 : index
    %c0_149 = arith.constant 0 : index
    %339 = vector.load %arg17[%c0_148, %c0_149] : memref<96x1024xf32, #tpu.memory_space<vmem>>, vector<64x128xf32>
    %c-16_i32 = arith.constant -16 : i32
    %340 = vector.broadcast %c-16_i32 : i32 to vector<64x1xi32>
    %341 = arith.addi %32, %340 : vector<64x1xi32>
    %c0_i32_150 = arith.constant 0 : i32
    %342 = vector.broadcast %c0_i32_150 : i32 to vector<64x1xi32>
    %343 = arith.cmpi sge, %341, %342 : vector<64x1xi32>
    %c-16_i32_151 = arith.constant -16 : i32
    %344 = vector.broadcast %c-16_i32_151 : i32 to vector<64x1xi32>
    %345 = arith.addi %32, %344 : vector<64x1xi32>
    %c32_i32_152 = arith.constant 32 : i32
    %346 = vector.broadcast %c32_i32_152 : i32 to vector<64x1xi32>
    %347 = arith.cmpi slt, %345, %346 : vector<64x1xi32>
    %348 = arith.andi %343, %347 : vector<64x1xi1>
    %cst_153 = arith.constant 0.000000e+00 : f32
    %349 = vector.shape_cast %348 : vector<64x1xi1> to vector<64x1xi1>
    %350 = vector.broadcast %349 : vector<64x1xi1> to vector<64x128xi1>
    %351 = vector.broadcast %cst_153 : f32 to vector<64x128xf32>
    %352 = arith.select %350, %339, %351 : vector<64x128xi1>, vector<64x128xf32>
    %353 = vector.broadcast %337 : vector<1x128xf32> to vector<64x128xf32>
    %354 = arith.addf %353, %352 : vector<64x128xf32>
    %355 = vector.extract_strided_slice %336 {offsets = [0, 128], sizes = [64, 128], strides = [1, 1]} : vector<64x384xf32> to vector<64x128xf32>
    %356 = arith.addf %354, %355 : vector<64x128xf32>
    %c32_154 = arith.constant 32 : index
    %c256 = arith.constant 256 : index
    %357 = vector.load %arg17[%c32_154, %c256] : memref<96x1024xf32, #tpu.memory_space<vmem>>, vector<64x128xf32>
    %c16_i32_155 = arith.constant 16 : i32
    %358 = vector.broadcast %c16_i32_155 : i32 to vector<64x1xi32>
    %359 = arith.addi %32, %358 : vector<64x1xi32>
    %c0_i32_156 = arith.constant 0 : i32
    %360 = vector.broadcast %c0_i32_156 : i32 to vector<64x1xi32>
    %361 = arith.cmpi sge, %359, %360 : vector<64x1xi32>
    %c16_i32_157 = arith.constant 16 : i32
    %362 = vector.broadcast %c16_i32_157 : i32 to vector<64x1xi32>
    %363 = arith.addi %32, %362 : vector<64x1xi32>
    %c32_i32_158 = arith.constant 32 : i32
    %364 = vector.broadcast %c32_i32_158 : i32 to vector<64x1xi32>
    %365 = arith.cmpi slt, %363, %364 : vector<64x1xi32>
    %366 = arith.andi %361, %365 : vector<64x1xi1>
    %cst_159 = arith.constant 0.000000e+00 : f32
    %367 = vector.shape_cast %366 : vector<64x1xi1> to vector<64x1xi1>
    %368 = vector.broadcast %367 : vector<64x1xi1> to vector<64x128xi1>
    %369 = vector.broadcast %cst_159 : f32 to vector<64x128xf32>
    %370 = arith.select %368, %357, %369 : vector<64x128xi1>, vector<64x128xf32>
    %371 = arith.addf %356, %370 : vector<64x128xf32>
    %cst_160 = arith.constant 0.000000e+00 : f32
    %372 = vector.broadcast %cst_160 : f32 to vector<64x128xf32>
    %373 = arith.cmpf oge, %371, %372 : vector<64x128xf32>
    %cst_161 = arith.constant 2.000000e-01 : f32
    %374 = vector.broadcast %cst_161 : f32 to vector<64x128xf32>
    %375 = arith.mulf %374, %371 : vector<64x128xf32>
    %376 = arith.select %373, %371, %375 : vector<64x128xi1>, vector<64x128xf32>
    %c0_162 = arith.constant 0 : index
    %c0_163 = arith.constant 0 : index
    %377 = vector.load %arg9[%c0_162, %c0_163] : memref<64x128xf32, #tpu.memory_space<vmem>>, vector<64x128xf32>
    tpu.vector_store %arg9[%c0_162, %c0_163], %376 {strides = array<i32>} : memref<64x128xf32, #tpu.memory_space<vmem>>, vector<64x128xf32>,
    return
  }
}

</mosaic_0001>

<llo_original>
// kernel: _lambda_.1
$region0: #{_lambda_.1}
  #allocation0 [shape = 'u32[]', space=smem, size = 0x4, offset = 0x4, fixed_abs, tag = 'smem constant byte address 0x4 - core index']
  #allocation1 [shape = 'u32[144,128]{1,0:T(1,128)}', space=vmem, size = 0x12000, scoped, tag = 'internal scratch']
  #allocation2 [shape = 'bf16[128,256]{1,0:T(8,128)(2,1)}', space=vmem, size = 0x10000, scoped, tag = 'scratch operand']
  #allocation3 [shape = 'bf16[256,768]{1,0:T(8,128)(2,1)}', space=vmem, size = 0x60000, scoped, tag = 'scratch operand']
  #allocation4 [shape = 'bf16[256,1024]{1,0:T(8,128)(2,1)}', space=vmem, size = 0x80000, scoped, tag = 'scratch operand']
  #allocation5 [shape = 'bf16[256,1024]{1,0:T(8,128)(2,1)}', space=vmem, size = 0x80000, scoped, tag = 'scratch operand']
  #allocation6 [shape = 'bf16[256,1024]{1,0:T(8,128)(2,1)}', space=vmem, size = 0x80000, scoped, tag = 'scratch operand']
  #allocation7 [shape = 'bf16[256,1024]{1,0:T(8,128)(2,1)}', space=vmem, size = 0x80000, scoped, tag = 'scratch operand']
  #allocation8 [shape = 'bf16[256,384]{1,0:T(8,128)(2,1)}', space=vmem, size = 0x30000, scoped, tag = 'scratch operand']
  #allocation9 [shape = 'f32[96,1024]{1,0:T(8,128)}', space=vmem, size = 0x60000, scoped, tag = 'scratch operand']
  #allocation10 [shape = 's32[7]{0}', space=sflag, size = 0x1c, scoped, tag = 'scratch operand']
  #allocation11 [shape = 's32[]', space=sflag, size = 0x4, offset = 0, fixed_abs, tag = 'sflag constant byte address 0x0 - dummy sync flag']
  #allocation12 [shape = 's32[]', space=sflag, size = 0x4, offset = 0, fixed_abs, tag = 'sflag constant byte address 0x0 - dummy sync flag']
  #allocation13 [shape = 's32[]', space=sflag, size = 0x4, offset = 0, fixed_abs, tag = 'sflag constant byte address 0x0 - dummy sync flag']
  #allocation14 [shape = 's32[]', space=sflag, size = 0x4, offset = 0, fixed_abs, tag = 'sflag constant byte address 0x0 - dummy sync flag']
  #allocation15 [shape = 's32[]', space=sflag, size = 0x4, offset = 0, fixed_abs, tag = 'sflag constant byte address 0x0 - dummy sync flag']
  #allocation16 [shape = 's32[]', space=sflag, size = 0x4, offset = 0, fixed_abs, tag = 'sflag constant byte address 0x0 - dummy sync flag']
  #allocation17 [shape = 's32[]', space=sflag, size = 0x4, offset = 0, fixed_abs, tag = 'sflag constant byte address 0x0 - dummy sync flag']
  %s0 = inlined_call_operand.vmem [shape: f32[64,128], index: 0, kind: input, shape index: {}]
  %s1 = inlined_call_operand.vmem [shape: f32[7,256], index: 1, kind: input, shape index: {}]
  %s2 = inlined_call_operand.vmem [shape: bf16[128,256], index: 2, kind: input, shape index: {}]
  %s3 = inlined_call_operand.vmem [shape: bf16[256,768], index: 3, kind: input, shape index: {}]
  %s4 = inlined_call_operand.vmem [shape: bf16[256,1024], index: 4, kind: input, shape index: {}]
  %s5 = inlined_call_operand.vmem [shape: bf16[256,1024], index: 5, kind: input, shape index: {}]
  %s6 = inlined_call_operand.vmem [shape: bf16[256,1024], index: 6, kind: input, shape index: {}]
  %s7 = inlined_call_operand.vmem [shape: bf16[256,1024], index: 7, kind: input, shape index: {}]
  %s8 = inlined_call_operand.vmem [shape: bf16[256,384], index: 8, kind: input, shape index: {}]
  %s9 = inlined_call_operand.vmem [shape: f32[64,128], index: 9, kind: output, shape index: {}]
  %s10 = sld [smem:[#allocation0]]
  $region256: #{_lambda_.1} parent=0
    _
  %s12 = ssub.s32 1, %s10
  %s13 = scalar_select 0, %s12, %s10
  // Predicated region
  $region2: #{_lambda_.1} parent=0 // pred_check
    _
  $region3: #{_lambda_.1} parent=0 // pred_check_branch
    %15 = sbr.rel (0) target = $region5
  $region4: #{_lambda_.1} parent=0 // pred_region
    _
  $region5: #{_lambda_.1} parent=0 // pred_fallthru
    _
  // Predicated region
  $region6: #{_lambda_.1} parent=0 // pred_check
    _
  $region7: #{_lambda_.1} parent=0 // pred_check_branch
    %17 = sbr.rel (0) target = $region9
  $region8: #{_lambda_.1} parent=0 // pred_region
    _
  $region9: #{_lambda_.1} parent=0 // pred_fallthru
    _
  %p20 = scmp.lt.u32.totalorder 128, 8
  %p21 = pneg %p20
  // Predicated region
  $region10: #{_lambda_.1} parent=0 // pred_check
    _
  $region11: #{_lambda_.1} parent=0 // pred_check_branch
    %23 = sbr.rel (%p20) target = $region13
  $region12: #{_lambda_.1} parent=0 // pred_region
    %s39 = sand.u32 128, 7
    %p40 = scmp.eq.s32.totalorder %s39, 0
    // Predicated region
    $region25: #{_lambda_.1} parent=12 // pred_check
      %p41 = pneg %p40
    $region26: #{_lambda_.1} parent=12 // pred_check_branch
      %43 = sbr.rel (%p41) target = $region28
    $region27: #{_lambda_.1} parent=12 // pred_region
      loop: start=0, step=1, limit=1
      $region29: #{_lambda_.1} parent=27 // loop_pre_header
        _
      $region30: #{_lambda_.1} parent=27 // loop_header
        %s45 = sphi 0, %s49
        %p46 = scmp.ge.s32.totalorder %s45, 1
        %s50 = sphi %s2, %s2
        %s51 = sphi [#allocation2], [#allocation2]
      $region31: #{_lambda_.1} parent=27 // loop_header_branch
        %48 = sbr.rel (%p46) target = $region35
      $region32: #{_lambda_.1} parent=27 // loop_body
        %v52 = vld [vmem:[%s50] sm:$0xff]
        %53 = vst [vmem:[%s51] sm:$0xff] %v52
        %v54 = vld [vmem:[%s50 + $0x8] sm:$0xff]
        %55 = vst [vmem:[%s51 + $0x8] sm:$0xff] %v54
        %v56 = vld [vmem:[%s50 + $0x10] sm:$0xff]
        %57 = vst [vmem:[%s51 + $0x10] sm:$0xff] %v56
        %v58 = vld [vmem:[%s50 + $0x18] sm:$0xff]
        %59 = vst [vmem:[%s51 + $0x18] sm:$0xff] %v58
        %v60 = vld [vmem:[%s50 + $0x20] sm:$0xff]
        %61 = vst [vmem:[%s51 + $0x20] sm:$0xff] %v60
        %v62 = vld [vmem:[%s50 + $0x28] sm:$0xff]
        %63 = vst [vmem:[%s51 + $0x28] sm:$0xff] %v62
        %v64 = vld [vmem:[%s50 + $0x30] sm:$0xff]
        %65 = vst [vmem:[%s51 + $0x30] sm:$0xff] %v64
        %v66 = vld [vmem:[%s50 + $0x38] sm:$0xff]
        %67 = vst [vmem:[%s51 + $0x38] sm:$0xff] %v66
        %v68 = vld [vmem:[%s50 + $0x40] sm:$0xff]
        %69 = vst [vmem:[%s51 + $0x40] sm:$0xff] %v68
        %v70 = vld [vmem:[%s50 + $0x48] sm:$0xff]
        %71 = vst [vmem:[%s51 + $0x48] sm:$0xff] %v70
        %v72 = vld [vmem:[%s50 + $0x50] sm:$0xff]
        %73 = vst [vmem:[%s51 + $0x50] sm:$0xff] %v72
        %v74 = vld [vmem:[%s50 + $0x58] sm:$0xff]
        %75 = vst [vmem:[%s51 + $0x58] sm:$0xff] %v74
        %v76 = vld [vmem:[%s50 + $0x60] sm:$0xff]
        %77 = vst [vmem:[%s51 + $0x60] sm:$0xff] %v76
        %v78 = vld [vmem:[%s50 + $0x68] sm:$0xff]
        %79 = vst [vmem:[%s51 + $0x68] sm:$0xff] %v78
        %v80 = vld [vmem:[%s50 + $0x70] sm:$0xff]
        %81 = vst [vmem:[%s51 + $0x70] sm:$0xff] %v80
        %v82 = vld [vmem:[%s50 + $0x78] sm:$0xff]
        %83 = vst [vmem:[%s51 + $0x78] sm:$0xff] %v82
      $region33: #{_lambda_.1} parent=27 // loop_footer
        %s49 = sadd.s32 1, %s45
      $region34: #{_lambda_.1} parent=27 // loop_footer_branch
        %44 = sbr.rel target = $region30
      $region35: #{_lambda_.1} parent=27 // loop_exit
        _
    $region28: #{_lambda_.1} parent=12 // pred_fallthru
      _
    %p84 = pneg %p40
    // Predicated region
    $region36: #{_lambda_.1} parent=12 // pred_check
      _
    $region37: #{_lambda_.1} parent=12 // pred_check_branch
      %86 = sbr.rel (%p40) target = $region39
    $region38: #{_lambda_.1} parent=12 // pred_region
      %s87 = sand.u32 128, 7
    $region39: #{_lambda_.1} parent=12 // pred_fallthru
      _
  $region13: #{_lambda_.1} parent=0 // pred_fallthru
    _
  // Predicated region
  $region14: #{_lambda_.1} parent=0 // pred_check
    %p24 = pneg %p20
  $region15: #{_lambda_.1} parent=0 // pred_check_branch
    %26 = sbr.rel (%p24) target = $region17
  $region16: #{_lambda_.1} parent=0 // pred_region
    %s27 = sshll.u32 1, 128
    %s28 = ssub.s32 %s27, 1
    loop: start=0, step=1, limit=1
    $region18: #{_lambda_.1} parent=16 // loop_pre_header
      _
    $region19: #{_lambda_.1} parent=16 // loop_header
      %s30 = sphi 0, %s34
      %p31 = scmp.ge.s32.totalorder %s30, 1
      %s35 = sphi %s2, %s2
      %s36 = sphi [#allocation2], [#allocation2]
    $region20: #{_lambda_.1} parent=16 // loop_header_branch
      %33 = sbr.rel (%p31) target = $region24
    $region21: #{_lambda_.1} parent=16 // loop_body
      %v37 = vld [vmem:[%s35] sm:%s28]
      %38 = vst [vmem:[%s36] sm:%s28] %v37
    $region22: #{_lambda_.1} parent=16 // loop_footer
      %s34 = sadd.s32 1, %s30
    $region23: #{_lambda_.1} parent=16 // loop_footer_branch
      %29 = sbr.rel target = $region19
    $region24: #{_lambda_.1} parent=16 // loop_exit
      _
  $region17: #{_lambda_.1} parent=0 // pred_fallthru
    _
  // Predicated region
  $region40: #{_lambda_.1} parent=0 // pred_check
    _
  $region41: #{_lambda_.1} parent=0 // pred_check_branch
    %90 = sbr.rel (0) target = $region43
  $region42: #{_lambda_.1} parent=0 // pred_region
    %91 = vsyncadd [#allocation10], 2048
  $region43: #{_lambda_.1} parent=0 // pred_fallthru
    _
  %s92 = scalar_lea.sflag [#allocation10], 1
  %p94 = scmp.lt.u32.totalorder 768, 8
  %p95 = pneg %p94
  // Predicated region
  $region44: #{_lambda_.1} parent=0 // pred_check
    _
  $region45: #{_lambda_.1} parent=0 // pred_check_branch
    %97 = sbr.rel (%p94) target = $region47
  $region46: #{_lambda_.1} parent=0 // pred_region
    %s113 = sand.u32 768, 7
    %p114 = scmp.eq.s32.totalorder %s113, 0
    // Predicated region
    $region59: #{_lambda_.1} parent=46 // pred_check
      %p115 = pneg %p114
    $region60: #{_lambda_.1} parent=46 // pred_check_branch
      %117 = sbr.rel (%p115) target = $region62
    $region61: #{_lambda_.1} parent=46 // pred_region
      loop: start=0, step=1, limit=1
      $region63: #{_lambda_.1} parent=61 // loop_pre_header
        _
      $region64: #{_lambda_.1} parent=61 // loop_header
        %s119 = sphi 0, %s123
        %p120 = scmp.ge.s32.totalorder %s119, 1
        %s124 = sphi %s3, %s3
        %s125 = sphi [#allocation3], [#allocation3]
      $region65: #{_lambda_.1} parent=61 // loop_header_branch
        %122 = sbr.rel (%p120) target = $region69
      $region66: #{_lambda_.1} parent=61 // loop_body
        %v126 = vld [vmem:[%s124] sm:$0xff]
        %127 = vst [vmem:[%s125] sm:$0xff] %v126
        %v128 = vld [vmem:[%s124 + $0x8] sm:$0xff]
        %129 = vst [vmem:[%s125 + $0x8] sm:$0xff] %v128
        %v130 = vld [vmem:[%s124 + $0x10] sm:$0xff]
        %131 = vst [vmem:[%s125 + $0x10] sm:$0xff] %v130
        %v132 = vld [vmem:[%s124 + $0x18] sm:$0xff]
        %133 = vst [vmem:[%s125 + $0x18] sm:$0xff] %v132
        %v134 = vld [vmem:[%s124 + $0x20] sm:$0xff]
        %135 = vst [vmem:[%s125 + $0x20] sm:$0xff] %v134
        %v136 = vld [vmem:[%s124 + $0x28] sm:$0xff]
        %137 = vst [vmem:[%s125 + $0x28] sm:$0xff] %v136
        %v138 = vld [vmem:[%s124 + $0x30] sm:$0xff]
        %139 = vst [vmem:[%s125 + $0x30] sm:$0xff] %v138
        %v140 = vld [vmem:[%s124 + $0x38] sm:$0xff]
        %141 = vst [vmem:[%s125 + $0x38] sm:$0xff] %v140
        %v142 = vld [vmem:[%s124 + $0x40] sm:$0xff]
        %143 = vst [vmem:[%s125 + $0x40] sm:$0xff] %v142
        %v144 = vld [vmem:[%s124 + $0x48] sm:$0xff]
        %145 = vst [vmem:[%s125 + $0x48] sm:$0xff] %v144
        %v146 = vld [vmem:[%s124 + $0x50] sm:$0xff]
        %147 = vst [vmem:[%s125 + $0x50] sm:$0xff] %v146
        %v148 = vld [vmem:[%s124 + $0x58] sm:$0xff]
        %149 = vst [vmem:[%s125 + $0x58] sm:$0xff] %v148
        %v150 = vld [vmem:[%s124 + $0x60] sm:$0xff]
        %151 = vst [vmem:[%s125 + $0x60] sm:$0xff] %v150
        %v152 = vld [vmem:[%s124 + $0x68] sm:$0xff]
        %153 = vst [vmem:[%s125 + $0x68] sm:$0xff] %v152
        %v154 = vld [vmem:[%s124 + $0x70] sm:$0xff]
        %155 = vst [vmem:[%s125 + $0x70] sm:$0xff] %v154
        %v156 = vld [vmem:[%s124 + $0x78] sm:$0xff]
        %157 = vst [vmem:[%s125 + $0x78] sm:$0xff] %v156
        %v158 = vld [vmem:[%s124 + $0x80] sm:$0xff]
        %159 = vst [vmem:[%s125 + $0x80] sm:$0xff] %v158
        %v160 = vld [vmem:[%s124 + $0x88] sm:$0xff]
        %161 = vst [vmem:[%s125 + $0x88] sm:$0xff] %v160
        %v162 = vld [vmem:[%s124 + $0x90] sm:$0xff]
        %163 = vst [vmem:[%s125 + $0x90] sm:$0xff] %v162
        %v164 = vld [vmem:[%s124 + $0x98] sm:$0xff]
        %165 = vst [vmem:[%s125 + $0x98] sm:$0xff] %v164
        %v166 = vld [vmem:[%s124 + $0xa0] sm:$0xff]
        %167 = vst [vmem:[%s125 + $0xa0] sm:$0xff] %v166
        %v168 = vld [vmem:[%s124 + $0xa8] sm:$0xff]
        %169 = vst [vmem:[%s125 + $0xa8] sm:$0xff] %v168
        %v170 = vld [vmem:[%s124 + $0xb0] sm:$0xff]
        %171 = vst [vmem:[%s125 + $0xb0] sm:$0xff] %v170
        %v172 = vld [vmem:[%s124 + $0xb8] sm:$0xff]
        %173 = vst [vmem:[%s125 + $0xb8] sm:$0xff] %v172
        %v174 = vld [vmem:[%s124 + $0xc0] sm:$0xff]
        %175 = vst [vmem:[%s125 + $0xc0] sm:$0xff] %v174
        %v176 = vld [vmem:[%s124 + $0xc8] sm:$0xff]
        %177 = vst [vmem:[%s125 + $0xc8] sm:$0xff] %v176
        %v178 = vld [vmem:[%s124 + $0xd0] sm:$0xff]
        %179 = vst [vmem:[%s125 + $0xd0] sm:$0xff] %v178
        %v180 = vld [vmem:[%s124 + $0xd8] sm:$0xff]
        %181 = vst [vmem:[%s125 + $0xd8] sm:$0xff] %v180
        %v182 = vld [vmem:[%s124 + $0xe0] sm:$0xff]
        %183 = vst [vmem:[%s125 + $0xe0] sm:$0xff] %v182
        %v184 = vld [vmem:[%s124 + $0xe8] sm:$0xff]
        %185 = vst [vmem:[%s125 + $0xe8] sm:$0xff] %v184
        %v186 = vld [vmem:[%s124 + $0xf0] sm:$0xff]
        %187 = vst [vmem:[%s125 + $0xf0] sm:$0xff] %v186
        %v188 = vld [vmem:[%s124 + $0xf8] sm:$0xff]
        %189 = vst [vmem:[%s125 + $0xf8] sm:$0xff] %v188
        %v190 = vld [vmem:[%s124 + $0x100] sm:$0xff]
        %191 = vst [vmem:[%s125 + $0x100] sm:$0xff] %v190
        %v192 = vld [vmem:[%s124 + $0x108] sm:$0xff]
        %193 = vst [vmem:[%s125 + $0x108] sm:$0xff] %v192
        %v194 = vld [vmem:[%s124 + $0x110] sm:$0xff]
        %195 = vst [vmem:[%s125 + $0x110] sm:$0xff] %v194
        %v196 = vld [vmem:[%s124 + $0x118] sm:$0xff]
        %197 = vst [vmem:[%s125 + $0x118] sm:$0xff] %v196
        %v198 = vld [vmem:[%s124 + $0x120] sm:$0xff]
        %199 = vst [vmem:[%s125 + $0x120] sm:$0xff] %v198
        %v200 = vld [vmem:[%s124 + $0x128] sm:$0xff]
        %201 = vst [vmem:[%s125 + $0x128] sm:$0xff] %v200
        %v202 = vld [vmem:[%s124 + $0x130] sm:$0xff]
        %203 = vst [vmem:[%s125 + $0x130] sm:$0xff] %v202
        %v204 = vld [vmem:[%s124 + $0x138] sm:$0xff]
        %205 = vst [vmem:[%s125 + $0x138] sm:$0xff] %v204
        %v206 = vld [vmem:[%s124 + $0x140] sm:$0xff]
        %207 = vst [vmem:[%s125 + $0x140] sm:$0xff] %v206
        %v208 = vld [vmem:[%s124 + $0x148] sm:$0xff]
        %209 = vst [vmem:[%s125 + $0x148] sm:$0xff] %v208
        %v210 = vld [vmem:[%s124 + $0x150] sm:$0xff]
        %211 = vst [vmem:[%s125 + $0x150] sm:$0xff] %v210
        %v212 = vld [vmem:[%s124 + $0x158] sm:$0xff]
        %213 = vst [vmem:[%s125 + $0x158] sm:$0xff] %v212
        %v214 = vld [vmem:[%s124 + $0x160] sm:$0xff]
        %215 = vst [vmem:[%s125 + $0x160] sm:$0xff] %v214
        %v216 = vld [vmem:[%s124 + $0x168] sm:$0xff]
        %217 = vst [vmem:[%s125 + $0x168] sm:$0xff] %v216
        %v218 = vld [vmem:[%s124 + $0x170] sm:$0xff]
        %219 = vst [vmem:[%s125 + $0x170] sm:$0xff] %v218
        %v220 = vld [vmem:[%s124 + $0x178] sm:$0xff]
        %221 = vst [vmem:[%s125 + $0x178] sm:$0xff] %v220
        %v222 = vld [vmem:[%s124 + $0x180] sm:$0xff]
        %223 = vst [vmem:[%s125 + $0x180] sm:$0xff] %v222
        %v224 = vld [vmem:[%s124 + $0x188] sm:$0xff]
        %225 = vst [vmem:[%s125 + $0x188] sm:$0xff] %v224
        %v226 = vld [vmem:[%s124 + $0x190] sm:$0xff]
        %227 = vst [vmem:[%s125 + $0x190] sm:$0xff] %v226
        %v228 = vld [vmem:[%s124 + $0x198] sm:$0xff]
        %229 = vst [vmem:[%s125 + $0x198] sm:$0xff] %v228
        %v230 = vld [vmem:[%s124 + $0x1a0] sm:$0xff]
        %231 = vst [vmem:[%s125 + $0x1a0] sm:$0xff] %v230
        %v232 = vld [vmem:[%s124 + $0x1a8] sm:$0xff]
        %233 = vst [vmem:[%s125 + $0x1a8] sm:$0xff] %v232
        %v234 = vld [vmem:[%s124 + $0x1b0] sm:$0xff]
        %235 = vst [vmem:[%s125 + $0x1b0] sm:$0xff] %v234
        %v236 = vld [vmem:[%s124 + $0x1b8] sm:$0xff]
        %237 = vst [vmem:[%s125 + $0x1b8] sm:$0xff] %v236
        %v238 = vld [vmem:[%s124 + $0x1c0] sm:$0xff]
        %239 = vst [vmem:[%s125 + $0x1c0] sm:$0xff] %v238
        %v240 = vld [vmem:[%s124 + $0x1c8] sm:$0xff]
        %241 = vst [vmem:[%s125 + $0x1c8] sm:$0xff] %v240
        %v242 = vld [vmem:[%s124 + $0x1d0] sm:$0xff]
        %243 = vst [vmem:[%s125 + $0x1d0] sm:$0xff] %v242
        %v244 = vld [vmem:[%s124 + $0x1d8] sm:$0xff]
        %245 = vst [vmem:[%s125 + $0x1d8] sm:$0xff] %v244
        %v246 = vld [vmem:[%s124 + $0x1e0] sm:$0xff]
        %247 = vst [vmem:[%s125 + $0x1e0] sm:$0xff] %v246
        %v248 = vld [vmem:[%s124 + $0x1e8] sm:$0xff]
        %249 = vst [vmem:[%s125 + $0x1e8] sm:$0xff] %v248
        %v250 = vld [vmem:[%s124 + $0x1f0] sm:$0xff]
        %251 = vst [vmem:[%s125 + $0x1f0] sm:$0xff] %v250
        %v252 = vld [vmem:[%s124 + $0x1f8] sm:$0xff]
        %253 = vst [vmem:[%s125 + $0x1f8] sm:$0xff] %v252
        %v254 = vld [vmem:[%s124 + $0x200] sm:$0xff]
        %255 = vst [vmem:[%s125 + $0x200] sm:$0xff] %v254
        %v256 = vld [vmem:[%s124 + $0x208] sm:$0xff]
        %257 = vst [vmem:[%s125 + $0x208] sm:$0xff] %v256
        %v258 = vld [vmem:[%s124 + $0x210] sm:$0xff]
        %259 = vst [vmem:[%s125 + $0x210] sm:$0xff] %v258
        %v260 = vld [vmem:[%s124 + $0x218] sm:$0xff]
        %261 = vst [vmem:[%s125 + $0x218] sm:$0xff] %v260
        %v262 = vld [vmem:[%s124 + $0x220] sm:$0xff]
        %263 = vst [vmem:[%s125 + $0x220] sm:$0xff] %v262
        %v264 = vld [vmem:[%s124 + $0x228] sm:$0xff]
        %265 = vst [vmem:[%s125 + $0x228] sm:$0xff] %v264
        %v266 = vld [vmem:[%s124 + $0x230] sm:$0xff]
        %267 = vst [vmem:[%s125 + $0x230] sm:$0xff] %v266
        %v268 = vld [vmem:[%s124 + $0x238] sm:$0xff]
        %269 = vst [vmem:[%s125 + $0x238] sm:$0xff] %v268
        %v270 = vld [vmem:[%s124 + $0x240] sm:$0xff]
        %271 = vst [vmem:[%s125 + $0x240] sm:$0xff] %v270
        %v272 = vld [vmem:[%s124 + $0x248] sm:$0xff]
        %273 = vst [vmem:[%s125 + $0x248] sm:$0xff] %v272
        %v274 = vld [vmem:[%s124 + $0x250] sm:$0xff]
        %275 = vst [vmem:[%s125 + $0x250] sm:$0xff] %v274
        %v276 = vld [vmem:[%s124 + $0x258] sm:$0xff]
        %277 = vst [vmem:[%s125 + $0x258] sm:$0xff] %v276
        %v278 = vld [vmem:[%s124 + $0x260] sm:$0xff]
        %279 = vst [vmem:[%s125 + $0x260] sm:$0xff] %v278
        %v280 = vld [vmem:[%s124 + $0x268] sm:$0xff]
        %281 = vst [vmem:[%s125 + $0x268] sm:$0xff] %v280
        %v282 = vld [vmem:[%s124 + $0x270] sm:$0xff]
        %283 = vst [vmem:[%s125 + $0x270] sm:$0xff] %v282
        %v284 = vld [vmem:[%s124 + $0x278] sm:$0xff]
        %285 = vst [vmem:[%s125 + $0x278] sm:$0xff] %v284
        %v286 = vld [vmem:[%s124 + $0x280] sm:$0xff]
        %287 = vst [vmem:[%s125 + $0x280] sm:$0xff] %v286
        %v288 = vld [vmem:[%s124 + $0x288] sm:$0xff]
        %289 = vst [vmem:[%s125 + $0x288] sm:$0xff] %v288
        %v290 = vld [vmem:[%s124 + $0x290] sm:$0xff]
        %291 = vst [vmem:[%s125 + $0x290] sm:$0xff] %v290
        %v292 = vld [vmem:[%s124 + $0x298] sm:$0xff]
        %293 = vst [vmem:[%s125 + $0x298] sm:$0xff] %v292
        %v294 = vld [vmem:[%s124 + $0x2a0] sm:$0xff]
        %295 = vst [vmem:[%s125 + $0x2a0] sm:$0xff] %v294
        %v296 = vld [vmem:[%s124 + $0x2a8] sm:$0xff]
        %297 = vst [vmem:[%s125 + $0x2a8] sm:$0xff] %v296
        %v298 = vld [vmem:[%s124 + $0x2b0] sm:$0xff]
        %299 = vst [vmem:[%s125 + $0x2b0] sm:$0xff] %v298
        %v300 = vld [vmem:[%s124 + $0x2b8] sm:$0xff]
        %301 = vst [vmem:[%s125 + $0x2b8] sm:$0xff] %v300
        %v302 = vld [vmem:[%s124 + $0x2c0] sm:$0xff]
        %303 = vst [vmem:[%s125 + $0x2c0] sm:$0xff] %v302
        %v304 = vld [vmem:[%s124 + $0x2c8] sm:$0xff]
        %305 = vst [vmem:[%s125 + $0x2c8] sm:$0xff] %v304
        %v306 = vld [vmem:[%s124 + $0x2d0] sm:$0xff]
        %307 = vst [vmem:[%s125 + $0x2d0] sm:$0xff] %v306
        %v308 = vld [vmem:[%s124 + $0x2d8] sm:$0xff]
        %309 = vst [vmem:[%s125 + $0x2d8] sm:$0xff] %v308
        %v310 = vld [vmem:[%s124 + $0x2e0] sm:$0xff]
        %311 = vst [vmem:[%s125 + $0x2e0] sm:$0xff] %v310
        %v312 = vld [vmem:[%s124 + $0x2e8] sm:$0xff]
        %313 = vst [vmem:[%s125 + $0x2e8] sm:$0xff] %v312
        %v314 = vld [vmem:[%s124 + $0x2f0] sm:$0xff]
        %315 = vst [vmem:[%s125 + $0x2f0] sm:$0xff] %v314
        %v316 = vld [vmem:[%s124 + $0x2f8] sm:$0xff]
        %317 = vst [vmem:[%s125 + $0x2f8] sm:$0xff] %v316
      $region67: #{_lambda_.1} parent=61 // loop_footer
        %s123 = sadd.s32 1, %s119
      $region68: #{_lambda_.1} parent=61 // loop_footer_branch
        %118 = sbr.rel target = $region64
      $region69: #{_lambda_.1} parent=61 // loop_exit
        _
    $region62: #{_lambda_.1} parent=46 // pred_fallthru
      _
    %p318 = pneg %p114
    // Predicated region
    $region70: #{_lambda_.1} parent=46 // pred_check
      _
    $region71: #{_lambda_.1} parent=46 // pred_check_branch
      %320 = sbr.rel (%p114) target = $region73
    $region72: #{_lambda_.1} parent=46 // pred_region
      %s321 = sand.u32 768, 7
    $region73: #{_lambda_.1} parent=46 // pred_fallthru
      _
  $region47: #{_lambda_.1} parent=0 // pred_fallthru
    _
  // Predicated region
  $region48: #{_lambda_.1} parent=0 // pred_check
    %p98 = pneg %p94
  $region49: #{_lambda_.1} parent=0 // pred_check_branch
    %100 = sbr.rel (%p98) target = $region51
  $region50: #{_lambda_.1} parent=0 // pred_region
    %s101 = sshll.u32 1, 768
    %s102 = ssub.s32 %s101, 1
    loop: start=0, step=1, limit=1
    $region52: #{_lambda_.1} parent=50 // loop_pre_header
      _
    $region53: #{_lambda_.1} parent=50 // loop_header
      %s104 = sphi 0, %s108
      %p105 = scmp.ge.s32.totalorder %s104, 1
      %s109 = sphi %s3, %s3
      %s110 = sphi [#allocation3], [#allocation3]
    $region54: #{_lambda_.1} parent=50 // loop_header_branch
      %107 = sbr.rel (%p105) target = $region58
    $region55: #{_lambda_.1} parent=50 // loop_body
      %v111 = vld [vmem:[%s109] sm:%s102]
      %112 = vst [vmem:[%s110] sm:%s102] %v111
    $region56: #{_lambda_.1} parent=50 // loop_footer
      %s108 = sadd.s32 1, %s104
    $region57: #{_lambda_.1} parent=50 // loop_footer_branch
      %103 = sbr.rel target = $region53
    $region58: #{_lambda_.1} parent=50 // loop_exit
      _
  $region51: #{_lambda_.1} parent=0 // pred_fallthru
    _
  // Predicated region
  $region74: #{_lambda_.1} parent=0 // pred_check
    _
  $region75: #{_lambda_.1} parent=0 // pred_check_branch
    %324 = sbr.rel (0) target = $region77
  $region76: #{_lambda_.1} parent=0 // pred_region
    %325 = vsyncadd %s92, 12288
  $region77: #{_lambda_.1} parent=0 // pred_fallthru
    _
  %s326 = scalar_lea.sflag [#allocation10], 2
  %p328 = scmp.lt.u32.totalorder 1024, 8
  %p329 = pneg %p328
  // Predicated region
  $region78: #{_lambda_.1} parent=0 // pred_check
    _
  $region79: #{_lambda_.1} parent=0 // pred_check_branch
    %331 = sbr.rel (%p328) target = $region81
  $region80: #{_lambda_.1} parent=0 // pred_region
    %s347 = sand.u32 1024, 7
    %p348 = scmp.eq.s32.totalorder %s347, 0
    // Predicated region
    $region93: #{_lambda_.1} parent=80 // pred_check
      %p349 = pneg %p348
    $region94: #{_lambda_.1} parent=80 // pred_check_branch
      %351 = sbr.rel (%p349) target = $region96
    $region95: #{_lambda_.1} parent=80 // pred_region
      loop: start=0, step=1, limit=1
      $region97: #{_lambda_.1} parent=95 // loop_pre_header
        _
      $region98: #{_lambda_.1} parent=95 // loop_header
        %s353 = sphi 0, %s357
        %p354 = scmp.ge.s32.totalorder %s353, 1
        %s358 = sphi %s4, %s4
        %s359 = sphi [#allocation4], [#allocation4]
      $region99: #{_lambda_.1} parent=95 // loop_header_branch
        %356 = sbr.rel (%p354) target = $region103
      $region100: #{_lambda_.1} parent=95 // loop_body
        %v360 = vld [vmem:[%s358] sm:$0xff]
        %361 = vst [vmem:[%s359] sm:$0xff] %v360
        %v362 = vld [vmem:[%s358 + $0x8] sm:$0xff]
        %363 = vst [vmem:[%s359 + $0x8] sm:$0xff] %v362
        %v364 = vld [vmem:[%s358 + $0x10] sm:$0xff]
        %365 = vst [vmem:[%s359 + $0x10] sm:$0xff] %v364
        %v366 = vld [vmem:[%s358 + $0x18] sm:$0xff]
        %367 = vst [vmem:[%s359 + $0x18] sm:$0xff] %v366
        %v368 = vld [vmem:[%s358 + $0x20] sm:$0xff]
        %369 = vst [vmem:[%s359 + $0x20] sm:$0xff] %v368
        %v370 = vld [vmem:[%s358 + $0x28] sm:$0xff]
        %371 = vst [vmem:[%s359 + $0x28] sm:$0xff] %v370
        %v372 = vld [vmem:[%s358 + $0x30] sm:$0xff]
        %373 = vst [vmem:[%s359 + $0x30] sm:$0xff] %v372
        %v374 = vld [vmem:[%s358 + $0x38] sm:$0xff]
        %375 = vst [vmem:[%s359 + $0x38] sm:$0xff] %v374
        %v376 = vld [vmem:[%s358 + $0x40] sm:$0xff]
        %377 = vst [vmem:[%s359 + $0x40] sm:$0xff] %v376
        %v378 = vld [vmem:[%s358 + $0x48] sm:$0xff]
        %379 = vst [vmem:[%s359 + $0x48] sm:$0xff] %v378
        %v380 = vld [vmem:[%s358 + $0x50] sm:$0xff]
        %381 = vst [vmem:[%s359 + $0x50] sm:$0xff] %v380
        %v382 = vld [vmem:[%s358 + $0x58] sm:$0xff]
        %383 = vst [vmem:[%s359 + $0x58] sm:$0xff] %v382
        %v384 = vld [vmem:[%s358 + $0x60] sm:$0xff]
        %385 = vst [vmem:[%s359 + $0x60] sm:$0xff] %v384
        %v386 = vld [vmem:[%s358 + $0x68] sm:$0xff]
        %387 = vst [vmem:[%s359 + $0x68] sm:$0xff] %v386
        %v388 = vld [vmem:[%s358 + $0x70] sm:$0xff]
        %389 = vst [vmem:[%s359 + $0x70] sm:$0xff] %v388
        %v390 = vld [vmem:[%s358 + $0x78] sm:$0xff]
        %391 = vst [vmem:[%s359 + $0x78] sm:$0xff] %v390
        %v392 = vld [vmem:[%s358 + $0x80] sm:$0xff]
        %393 = vst [vmem:[%s359 + $0x80] sm:$0xff] %v392
        %v394 = vld [vmem:[%s358 + $0x88] sm:$0xff]
        %395 = vst [vmem:[%s359 + $0x88] sm:$0xff] %v394
        %v396 = vld [vmem:[%s358 + $0x90] sm:$0xff]
        %397 = vst [vmem:[%s359 + $0x90] sm:$0xff] %v396
        %v398 = vld [vmem:[%s358 + $0x98] sm:$0xff]
        %399 = vst [vmem:[%s359 + $0x98] sm:$0xff] %v398
        %v400 = vld [vmem:[%s358 + $0xa0] sm:$0xff]
        %401 = vst [vmem:[%s359 + $0xa0] sm:$0xff] %v400
        %v402 = vld [vmem:[%s358 + $0xa8] sm:$0xff]
        %403 = vst [vmem:[%s359 + $0xa8] sm:$0xff] %v402
        %v404 = vld [vmem:[%s358 + $0xb0] sm:$0xff]
        %405 = vst [vmem:[%s359 + $0xb0] sm:$0xff] %v404
        %v406 = vld [vmem:[%s358 + $0xb8] sm:$0xff]
        %407 = vst [vmem:[%s359 + $0xb8] sm:$0xff] %v406
        %v408 = vld [vmem:[%s358 + $0xc0] sm:$0xff]
        %409 = vst [vmem:[%s359 + $0xc0] sm:$0xff] %v408
        %v410 = vld [vmem:[%s358 + $0xc8] sm:$0xff]
        %411 = vst [vmem:[%s359 + $0xc8] sm:$0xff] %v410
        %v412 = vld [vmem:[%s358 + $0xd0] sm:$0xff]
        %413 = vst [vmem:[%s359 + $0xd0] sm:$0xff] %v412
        %v414 = vld [vmem:[%s358 + $0xd8] sm:$0xff]
        %415 = vst [vmem:[%s359 + $0xd8] sm:$0xff] %v414
        %v416 = vld [vmem:[%s358 + $0xe0] sm:$0xff]
        %417 = vst [vmem:[%s359 + $0xe0] sm:$0xff] %v416
        %v418 = vld [vmem:[%s358 + $0xe8] sm:$0xff]
        %419 = vst [vmem:[%s359 + $0xe8] sm:$0xff] %v418
        %v420 = vld [vmem:[%s358 + $0xf0] sm:$0xff]
        %421 = vst [vmem:[%s359 + $0xf0] sm:$0xff] %v420
        %v422 = vld [vmem:[%s358 + $0xf8] sm:$0xff]
        %423 = vst [vmem:[%s359 + $0xf8] sm:$0xff] %v422
        %v424 = vld [vmem:[%s358 + $0x100] sm:$0xff]
        %425 = vst [vmem:[%s359 + $0x100] sm:$0xff] %v424
        %v426 = vld [vmem:[%s358 + $0x108] sm:$0xff]
        %427 = vst [vmem:[%s359 + $0x108] sm:$0xff] %v426
        %v428 = vld [vmem:[%s358 + $0x110] sm:$0xff]
        %429 = vst [vmem:[%s359 + $0x110] sm:$0xff] %v428
        %v430 = vld [vmem:[%s358 + $0x118] sm:$0xff]
        %431 = vst [vmem:[%s359 + $0x118] sm:$0xff] %v430
        %v432 = vld [vmem:[%s358 + $0x120] sm:$0xff]
        %433 = vst [vmem:[%s359 + $0x120] sm:$0xff] %v432
        %v434 = vld [vmem:[%s358 + $0x128] sm:$0xff]
        %435 = vst [vmem:[%s359 + $0x128] sm:$0xff] %v434
        %v436 = vld [vmem:[%s358 + $0x130] sm:$0xff]
        %437 = vst [vmem:[%s359 + $0x130] sm:$0xff] %v436
        %v438 = vld [vmem:[%s358 + $0x138] sm:$0xff]
        %439 = vst [vmem:[%s359 + $0x138] sm:$0xff] %v438
        %v440 = vld [vmem:[%s358 + $0x140] sm:$0xff]
        %441 = vst [vmem:[%s359 + $0x140] sm:$0xff] %v440
        %v442 = vld [vmem:[%s358 + $0x148] sm:$0xff]
        %443 = vst [vmem:[%s359 + $0x148] sm:$0xff] %v442
        %v444 = vld [vmem:[%s358 + $0x150] sm:$0xff]
        %445 = vst [vmem:[%s359 + $0x150] sm:$0xff] %v444
        %v446 = vld [vmem:[%s358 + $0x158] sm:$0xff]
        %447 = vst [vmem:[%s359 + $0x158] sm:$0xff] %v446
        %v448 = vld [vmem:[%s358 + $0x160] sm:$0xff]
        %449 = vst [vmem:[%s359 + $0x160] sm:$0xff] %v448
        %v450 = vld [vmem:[%s358 + $0x168] sm:$0xff]
        %451 = vst [vmem:[%s359 + $0x168] sm:$0xff] %v450
        %v452 = vld [vmem:[%s358 + $0x170] sm:$0xff]
        %453 = vst [vmem:[%s359 + $0x170] sm:$0xff] %v452
        %v454 = vld [vmem:[%s358 + $0x178] sm:$0xff]
        %455 = vst [vmem:[%s359 + $0x178] sm:$0xff] %v454
        %v456 = vld [vmem:[%s358 + $0x180] sm:$0xff]
        %457 = vst [vmem:[%s359 + $0x180] sm:$0xff] %v456
        %v458 = vld [vmem:[%s358 + $0x188] sm:$0xff]
        %459 = vst [vmem:[%s359 + $0x188] sm:$0xff] %v458
        %v460 = vld [vmem:[%s358 + $0x190] sm:$0xff]
        %461 = vst [vmem:[%s359 + $0x190] sm:$0xff] %v460
        %v462 = vld [vmem:[%s358 + $0x198] sm:$0xff]
        %463 = vst [vmem:[%s359 + $0x198] sm:$0xff] %v462
        %v464 = vld [vmem:[%s358 + $0x1a0] sm:$0xff]
        %465 = vst [vmem:[%s359 + $0x1a0] sm:$0xff] %v464
        %v466 = vld [vmem:[%s358 + $0x1a8] sm:$0xff]
        %467 = vst [vmem:[%s359 + $0x1a8] sm:$0xff] %v466
        %v468 = vld [vmem:[%s358 + $0x1b0] sm:$0xff]
        %469 = vst [vmem:[%s359 + $0x1b0] sm:$0xff] %v468
        %v470 = vld [vmem:[%s358 + $0x1b8] sm:$0xff]
        %471 = vst [vmem:[%s359 + $0x1b8] sm:$0xff] %v470
        %v472 = vld [vmem:[%s358 + $0x1c0] sm:$0xff]
        %473 = vst [vmem:[%s359 + $0x1c0] sm:$0xff] %v472
        %v474 = vld [vmem:[%s358 + $0x1c8] sm:$0xff]
        %475 = vst [vmem:[%s359 + $0x1c8] sm:$0xff] %v474
        %v476 = vld [vmem:[%s358 + $0x1d0] sm:$0xff]
        %477 = vst [vmem:[%s359 + $0x1d0] sm:$0xff] %v476
        %v478 = vld [vmem:[%s358 + $0x1d8] sm:$0xff]
        %479 = vst [vmem:[%s359 + $0x1d8] sm:$0xff] %v478
        %v480 = vld [vmem:[%s358 + $0x1e0] sm:$0xff]
        %481 = vst [vmem:[%s359 + $0x1e0] sm:$0xff] %v480
        %v482 = vld [vmem:[%s358 + $0x1e8] sm:$0xff]
        %483 = vst [vmem:[%s359 + $0x1e8] sm:$0xff] %v482
        %v484 = vld [vmem:[%s358 + $0x1f0] sm:$0xff]
        %485 = vst [vmem:[%s359 + $0x1f0] sm:$0xff] %v484
        %v486 = vld [vmem:[%s358 + $0x1f8] sm:$0xff]
        %487 = vst [vmem:[%s359 + $0x1f8] sm:$0xff] %v486
        %v488 = vld [vmem:[%s358 + $0x200] sm:$0xff]
        %489 = vst [vmem:[%s359 + $0x200] sm:$0xff] %v488
        %v490 = vld [vmem:[%s358 + $0x208] sm:$0xff]
        %491 = vst [vmem:[%s359 + $0x208] sm:$0xff] %v490
        %v492 = vld [vmem:[%s358 + $0x210] sm:$0xff]
        %493 = vst [vmem:[%s359 + $0x210] sm:$0xff] %v492
        %v494 = vld [vmem:[%s358 + $0x218] sm:$0xff]
        %495 = vst [vmem:[%s359 + $0x218] sm:$0xff] %v494
        %v496 = vld [vmem:[%s358 + $0x220] sm:$0xff]
        %497 = vst [vmem:[%s359 + $0x220] sm:$0xff] %v496
        %v498 = vld [vmem:[%s358 + $0x228] sm:$0xff]
        %499 = vst [vmem:[%s359 + $0x228] sm:$0xff] %v498
        %v500 = vld [vmem:[%s358 + $0x230] sm:$0xff]
        %501 = vst [vmem:[%s359 + $0x230] sm:$0xff] %v500
        %v502 = vld [vmem:[%s358 + $0x238] sm:$0xff]
        %503 = vst [vmem:[%s359 + $0x238] sm:$0xff] %v502
        %v504 = vld [vmem:[%s358 + $0x240] sm:$0xff]
        %505 = vst [vmem:[%s359 + $0x240] sm:$0xff] %v504
        %v506 = vld [vmem:[%s358 + $0x248] sm:$0xff]
        %507 = vst [vmem:[%s359 + $0x248] sm:$0xff] %v506
        %v508 = vld [vmem:[%s358 + $0x250] sm:$0xff]
        %509 = vst [vmem:[%s359 + $0x250] sm:$0xff] %v508
        %v510 = vld [vmem:[%s358 + $0x258] sm:$0xff]
        %511 = vst [vmem:[%s359 + $0x258] sm:$0xff] %v510
        %v512 = vld [vmem:[%s358 + $0x260] sm:$0xff]
        %513 = vst [vmem:[%s359 + $0x260] sm:$0xff] %v512
        %v514 = vld [vmem:[%s358 + $0x268] sm:$0xff]
        %515 = vst [vmem:[%s359 + $0x268] sm:$0xff] %v514
        %v516 = vld [vmem:[%s358 + $0x270] sm:$0xff]
        %517 = vst [vmem:[%s359 + $0x270] sm:$0xff] %v516
        %v518 = vld [vmem:[%s358 + $0x278] sm:$0xff]
        %519 = vst [vmem:[%s359 + $0x278] sm:$0xff] %v518
        %v520 = vld [vmem:[%s358 + $0x280] sm:$0xff]
        %521 = vst [vmem:[%s359 + $0x280] sm:$0xff] %v520
        %v522 = vld [vmem:[%s358 + $0x288] sm:$0xff]
        %523 = vst [vmem:[%s359 + $0x288] sm:$0xff] %v522
        %v524 = vld [vmem:[%s358 + $0x290] sm:$0xff]
        %525 = vst [vmem:[%s359 + $0x290] sm:$0xff] %v524
        %v526 = vld [vmem:[%s358 + $0x298] sm:$0xff]
        %527 = vst [vmem:[%s359 + $0x298] sm:$0xff] %v526
        %v528 = vld [vmem:[%s358 + $0x2a0] sm:$0xff]
        %529 = vst [vmem:[%s359 + $0x2a0] sm:$0xff] %v528
        %v530 = vld [vmem:[%s358 + $0x2a8] sm:$0xff]
        %531 = vst [vmem:[%s359 + $0x2a8] sm:$0xff] %v530
        %v532 = vld [vmem:[%s358 + $0x2b0] sm:$0xff]
        %533 = vst [vmem:[%s359 + $0x2b0] sm:$0xff] %v532
        %v534 = vld [vmem:[%s358 + $0x2b8] sm:$0xff]
        %535 = vst [vmem:[%s359 + $0x2b8] sm:$0xff] %v534
        %v536 = vld [vmem:[%s358 + $0x2c0] sm:$0xff]
        %537 = vst [vmem:[%s359 + $0x2c0] sm:$0xff] %v536
        %v538 = vld [vmem:[%s358 + $0x2c8] sm:$0xff]
        %539 = vst [vmem:[%s359 + $0x2c8] sm:$0xff] %v538
        %v540 = vld [vmem:[%s358 + $0x2d0] sm:$0xff]
        %541 = vst [vmem:[%s359 + $0x2d0] sm:$0xff] %v540
        %v542 = vld [vmem:[%s358 + $0x2d8] sm:$0xff]
        %543 = vst [vmem:[%s359 + $0x2d8] sm:$0xff] %v542
        %v544 = vld [vmem:[%s358 + $0x2e0] sm:$0xff]
        %545 = vst [vmem:[%s359 + $0x2e0] sm:$0xff] %v544
        %v546 = vld [vmem:[%s358 + $0x2e8] sm:$0xff]
        %547 = vst [vmem:[%s359 + $0x2e8] sm:$0xff] %v546
        %v548 = vld [vmem:[%s358 + $0x2f0] sm:$0xff]
        %549 = vst [vmem:[%s359 + $0x2f0] sm:$0xff] %v548
        %v550 = vld [vmem:[%s358 + $0x2f8] sm:$0xff]
        %551 = vst [vmem:[%s359 + $0x2f8] sm:$0xff] %v550
        %v552 = vld [vmem:[%s358 + $0x300] sm:$0xff]
        %553 = vst [vmem:[%s359 + $0x300] sm:$0xff] %v552
        %v554 = vld [vmem:[%s358 + $0x308] sm:$0xff]
        %555 = vst [vmem:[%s359 + $0x308] sm:$0xff] %v554
        %v556 = vld [vmem:[%s358 + $0x310] sm:$0xff]
        %557 = vst [vmem:[%s359 + $0x310] sm:$0xff] %v556
        %v558 = vld [vmem:[%s358 + $0x318] sm:$0xff]
        %559 = vst [vmem:[%s359 + $0x318] sm:$0xff] %v558
        %v560 = vld [vmem:[%s358 + $0x320] sm:$0xff]
        %561 = vst [vmem:[%s359 + $0x320] sm:$0xff] %v560
        %v562 = vld [vmem:[%s358 + $0x328] sm:$0xff]
        %563 = vst [vmem:[%s359 + $0x328] sm:$0xff] %v562
        %v564 = vld [vmem:[%s358 + $0x330] sm:$0xff]
        %565 = vst [vmem:[%s359 + $0x330] sm:$0xff] %v564
        %v566 = vld [vmem:[%s358 + $0x338] sm:$0xff]
        %567 = vst [vmem:[%s359 + $0x338] sm:$0xff] %v566
        %v568 = vld [vmem:[%s358 + $0x340] sm:$0xff]
        %569 = vst [vmem:[%s359 + $0x340] sm:$0xff] %v568
        %v570 = vld [vmem:[%s358 + $0x348] sm:$0xff]
        %571 = vst [vmem:[%s359 + $0x348] sm:$0xff] %v570
        %v572 = vld [vmem:[%s358 + $0x350] sm:$0xff]
        %573 = vst [vmem:[%s359 + $0x350] sm:$0xff] %v572
        %v574 = vld [vmem:[%s358 + $0x358] sm:$0xff]
        %575 = vst [vmem:[%s359 + $0x358] sm:$0xff] %v574
        %v576 = vld [vmem:[%s358 + $0x360] sm:$0xff]
        %577 = vst [vmem:[%s359 + $0x360] sm:$0xff] %v576
        %v578 = vld [vmem:[%s358 + $0x368] sm:$0xff]
        %579 = vst [vmem:[%s359 + $0x368] sm:$0xff] %v578
        %v580 = vld [vmem:[%s358 + $0x370] sm:$0xff]
        %581 = vst [vmem:[%s359 + $0x370] sm:$0xff] %v580
        %v582 = vld [vmem:[%s358 + $0x378] sm:$0xff]
        %583 = vst [vmem:[%s359 + $0x378] sm:$0xff] %v582
        %v584 = vld [vmem:[%s358 + $0x380] sm:$0xff]
        %585 = vst [vmem:[%s359 + $0x380] sm:$0xff] %v584
        %v586 = vld [vmem:[%s358 + $0x388] sm:$0xff]
        %587 = vst [vmem:[%s359 + $0x388] sm:$0xff] %v586
        %v588 = vld [vmem:[%s358 + $0x390] sm:$0xff]
        %589 = vst [vmem:[%s359 + $0x390] sm:$0xff] %v588
        %v590 = vld [vmem:[%s358 + $0x398] sm:$0xff]
        %591 = vst [vmem:[%s359 + $0x398] sm:$0xff] %v590
        %v592 = vld [vmem:[%s358 + $0x3a0] sm:$0xff]
        %593 = vst [vmem:[%s359 + $0x3a0] sm:$0xff] %v592
        %v594 = vld [vmem:[%s358 + $0x3a8] sm:$0xff]
        %595 = vst [vmem:[%s359 + $0x3a8] sm:$0xff] %v594
        %v596 = vld [vmem:[%s358 + $0x3b0] sm:$0xff]
        %597 = vst [vmem:[%s359 + $0x3b0] sm:$0xff] %v596
        %v598 = vld [vmem:[%s358 + $0x3b8] sm:$0xff]
        %599 = vst [vmem:[%s359 + $0x3b8] sm:$0xff] %v598
        %v600 = vld [vmem:[%s358 + $0x3c0] sm:$0xff]
        %601 = vst [vmem:[%s359 + $0x3c0] sm:$0xff] %v600
        %v602 = vld [vmem:[%s358 + $0x3c8] sm:$0xff]
        %603 = vst [vmem:[%s359 + $0x3c8] sm:$0xff] %v602
        %v604 = vld [vmem:[%s358 + $0x3d0] sm:$0xff]
        %605 = vst [vmem:[%s359 + $0x3d0] sm:$0xff] %v604
        %v606 = vld [vmem:[%s358 + $0x3d8] sm:$0xff]
        %607 = vst [vmem:[%s359 + $0x3d8] sm:$0xff] %v606
        %v608 = vld [vmem:[%s358 + $0x3e0] sm:$0xff]
        %609 = vst [vmem:[%s359 + $0x3e0] sm:$0xff] %v608
        %v610 = vld [vmem:[%s358 + $0x3e8] sm:$0xff]
        %611 = vst [vmem:[%s359 + $0x3e8] sm:$0xff] %v610
        %v612 = vld [vmem:[%s358 + $0x3f0] sm:$0xff]
        %613 = vst [vmem:[%s359 + $0x3f0] sm:$0xff] %v612
        %v614 = vld [vmem:[%s358 + $0x3f8] sm:$0xff]
        %615 = vst [vmem:[%s359 + $0x3f8] sm:$0xff] %v614
      $region101: #{_lambda_.1} parent=95 // loop_footer
        %s357 = sadd.s32 1, %s353
      $region102: #{_lambda_.1} parent=95 // loop_footer_branch
        %352 = sbr.rel target = $region98
      $region103: #{_lambda_.1} parent=95 // loop_exit
        _
    $region96: #{_lambda_.1} parent=80 // pred_fallthru
      _
    %p616 = pneg %p348
    // Predicated region
    $region104: #{_lambda_.1} parent=80 // pred_check
      _
    $region105: #{_lambda_.1} parent=80 // pred_check_branch
      %618 = sbr.rel (%p348) target = $region107
    $region106: #{_lambda_.1} parent=80 // pred_region
      %s619 = sand.u32 1024, 7
    $region107: #{_lambda_.1} parent=80 // pred_fallthru
      _
  $region81: #{_lambda_.1} parent=0 // pred_fallthru
    _
  // Predicated region
  $region82: #{_lambda_.1} parent=0 // pred_check
    %p332 = pneg %p328
  $region83: #{_lambda_.1} parent=0 // pred_check_branch
    %334 = sbr.rel (%p332) target = $region85
  $region84: #{_lambda_.1} parent=0 // pred_region
    %s335 = sshll.u32 1, 1024
    %s336 = ssub.s32 %s335, 1
    loop: start=0, step=1, limit=1
    $region86: #{_lambda_.1} parent=84 // loop_pre_header
      _
    $region87: #{_lambda_.1} parent=84 // loop_header
      %s338 = sphi 0, %s342
      %p339 = scmp.ge.s32.totalorder %s338, 1
      %s343 = sphi %s4, %s4
      %s344 = sphi [#allocation4], [#allocation4]
    $region88: #{_lambda_.1} parent=84 // loop_header_branch
      %341 = sbr.rel (%p339) target = $region92
    $region89: #{_lambda_.1} parent=84 // loop_body
      %v345 = vld [vmem:[%s343] sm:%s336]
      %346 = vst [vmem:[%s344] sm:%s336] %v345
    $region90: #{_lambda_.1} parent=84 // loop_footer
      %s342 = sadd.s32 1, %s338
    $region91: #{_lambda_.1} parent=84 // loop_footer_branch
      %337 = sbr.rel target = $region87
    $region92: #{_lambda_.1} parent=84 // loop_exit
      _
  $region85: #{_lambda_.1} parent=0 // pred_fallthru
    _
  // Predicated region
  $region108: #{_lambda_.1} parent=0 // pred_check
    _
  $region109: #{_lambda_.1} parent=0 // pred_check_branch
    %622 = sbr.rel (0) target = $region111
  $region110: #{_lambda_.1} parent=0 // pred_region
    %623 = vsyncadd %s326, 16384
  $region111: #{_lambda_.1} parent=0 // pred_fallthru
    _
  %s624 = scalar_lea.sflag [#allocation10], 3
  %p626 = scmp.lt.u32.totalorder 1024, 8
  %p627 = pneg %p626
  // Predicated region
  $region112: #{_lambda_.1} parent=0 // pred_check
    _
  $region113: #{_lambda_.1} parent=0 // pred_check_branch
    %629 = sbr.rel (%p626) target = $region115
  $region114: #{_lambda_.1} parent=0 // pred_region
    %s645 = sand.u32 1024, 7
    %p646 = scmp.eq.s32.totalorder %s645, 0
    // Predicated region
    $region127: #{_lambda_.1} parent=114 // pred_check
      %p647 = pneg %p646
    $region128: #{_lambda_.1} parent=114 // pred_check_branch
      %649 = sbr.rel (%p647) target = $region130
    $region129: #{_lambda_.1} parent=114 // pred_region
      loop: start=0, step=1, limit=1
      $region131: #{_lambda_.1} parent=129 // loop_pre_header
        _
      $region132: #{_lambda_.1} parent=129 // loop_header
        %s651 = sphi 0, %s655
        %p652 = scmp.ge.s32.totalorder %s651, 1
        %s656 = sphi %s5, %s5
        %s657 = sphi [#allocation5], [#allocation5]
      $region133: #{_lambda_.1} parent=129 // loop_header_branch
        %654 = sbr.rel (%p652) target = $region137
      $region134: #{_lambda_.1} parent=129 // loop_body
        %v658 = vld [vmem:[%s656] sm:$0xff]
        %659 = vst [vmem:[%s657] sm:$0xff] %v658
        %v660 = vld [vmem:[%s656 + $0x8] sm:$0xff]
        %661 = vst [vmem:[%s657 + $0x8] sm:$0xff] %v660
        %v662 = vld [vmem:[%s656 + $0x10] sm:$0xff]
        %663 = vst [vmem:[%s657 + $0x10] sm:$0xff] %v662
        %v664 = vld [vmem:[%s656 + $0x18] sm:$0xff]
        %665 = vst [vmem:[%s657 + $0x18] sm:$0xff] %v664
        %v666 = vld [vmem:[%s656 + $0x20] sm:$0xff]
        %667 = vst [vmem:[%s657 + $0x20] sm:$0xff] %v666
        %v668 = vld [vmem:[%s656 + $0x28] sm:$0xff]
        %669 = vst [vmem:[%s657 + $0x28] sm:$0xff] %v668
        %v670 = vld [vmem:[%s656 + $0x30] sm:$0xff]
        %671 = vst [vmem:[%s657 + $0x30] sm:$0xff] %v670
        %v672 = vld [vmem:[%s656 + $0x38] sm:$0xff]
        %673 = vst [vmem:[%s657 + $0x38] sm:$0xff] %v672
        %v674 = vld [vmem:[%s656 + $0x40] sm:$0xff]
        %675 = vst [vmem:[%s657 + $0x40] sm:$0xff] %v674
        %v676 = vld [vmem:[%s656 + $0x48] sm:$0xff]
        %677 = vst [vmem:[%s657 + $0x48] sm:$0xff] %v676
        %v678 = vld [vmem:[%s656 + $0x50] sm:$0xff]
        %679 = vst [vmem:[%s657 + $0x50] sm:$0xff] %v678
        %v680 = vld [vmem:[%s656 + $0x58] sm:$0xff]
        %681 = vst [vmem:[%s657 + $0x58] sm:$0xff] %v680
        %v682 = vld [vmem:[%s656 + $0x60] sm:$0xff]
        %683 = vst [vmem:[%s657 + $0x60] sm:$0xff] %v682
        %v684 = vld [vmem:[%s656 + $0x68] sm:$0xff]
        %685 = vst [vmem:[%s657 + $0x68] sm:$0xff] %v684
        %v686 = vld [vmem:[%s656 + $0x70] sm:$0xff]
        %687 = vst [vmem:[%s657 + $0x70] sm:$0xff] %v686
        %v688 = vld [vmem:[%s656 + $0x78] sm:$0xff]
        %689 = vst [vmem:[%s657 + $0x78] sm:$0xff] %v688
        %v690 = vld [vmem:[%s656 + $0x80] sm:$0xff]
        %691 = vst [vmem:[%s657 + $0x80] sm:$0xff] %v690
        %v692 = vld [vmem:[%s656 + $0x88] sm:$0xff]
        %693 = vst [vmem:[%s657 + $0x88] sm:$0xff] %v692
        %v694 = vld [vmem:[%s656 + $0x90] sm:$0xff]
        %695 = vst [vmem:[%s657 + $0x90] sm:$0xff] %v694
        %v696 = vld [vmem:[%s656 + $0x98] sm:$0xff]
        %697 = vst [vmem:[%s657 + $0x98] sm:$0xff] %v696
        %v698 = vld [vmem:[%s656 + $0xa0] sm:$0xff]
        %699 = vst [vmem:[%s657 + $0xa0] sm:$0xff] %v698
        %v700 = vld [vmem:[%s656 + $0xa8] sm:$0xff]
        %701 = vst [vmem:[%s657 + $0xa8] sm:$0xff] %v700
        %v702 = vld [vmem:[%s656 + $0xb0] sm:$0xff]
        %703 = vst [vmem:[%s657 + $0xb0] sm:$0xff] %v702
        %v704 = vld [vmem:[%s656 + $0xb8] sm:$0xff]
        %705 = vst [vmem:[%s657 + $0xb8] sm:$0xff] %v704
        %v706 = vld [vmem:[%s656 + $0xc0] sm:$0xff]
        %707 = vst [vmem:[%s657 + $0xc0] sm:$0xff] %v706
        %v708 = vld [vmem:[%s656 + $0xc8] sm:$0xff]
        %709 = vst [vmem:[%s657 + $0xc8] sm:$0xff] %v708
        %v710 = vld [vmem:[%s656 + $0xd0] sm:$0xff]
        %711 = vst [vmem:[%s657 + $0xd0] sm:$0xff] %v710
        %v712 = vld [vmem:[%s656 + $0xd8] sm:$0xff]
        %713 = vst [vmem:[%s657 + $0xd8] sm:$0xff] %v712
        %v714 = vld [vmem:[%s656 + $0xe0] sm:$0xff]
        %715 = vst [vmem:[%s657 + $0xe0] sm:$0xff] %v714
        %v716 = vld [vmem:[%s656 + $0xe8] sm:$0xff]
        %717 = vst [vmem:[%s657 + $0xe8] sm:$0xff] %v716
        %v718 = vld [vmem:[%s656 + $0xf0] sm:$0xff]
        %719 = vst [vmem:[%s657 + $0xf0] sm:$0xff] %v718
        %v720 = vld [vmem:[%s656 + $0xf8] sm:$0xff]
        %721 = vst [vmem:[%s657 + $0xf8] sm:$0xff] %v720
        %v722 = vld [vmem:[%s656 + $0x100] sm:$0xff]
        %723 = vst [vmem:[%s657 + $0x100] sm:$0xff] %v722
        %v724 = vld [vmem:[%s656 + $0x108] sm:$0xff]
        %725 = vst [vmem:[%s657 + $0x108] sm:$0xff] %v724
        %v726 = vld [vmem:[%s656 + $0x110] sm:$0xff]
        %727 = vst [vmem:[%s657 + $0x110] sm:$0xff] %v726
        %v728 = vld [vmem:[%s656 + $0x118] sm:$0xff]
        %729 = vst [vmem:[%s657 + $0x118] sm:$0xff] %v728
        %v730 = vld [vmem:[%s656 + $0x120] sm:$0xff]
        %731 = vst [vmem:[%s657 + $0x120] sm:$0xff] %v730
        %v732 = vld [vmem:[%s656 + $0x128] sm:$0xff]
        %733 = vst [vmem:[%s657 + $0x128] sm:$0xff] %v732
        %v734 = vld [vmem:[%s656 + $0x130] sm:$0xff]
        %735 = vst [vmem:[%s657 + $0x130] sm:$0xff] %v734
        %v736 = vld [vmem:[%s656 + $0x138] sm:$0xff]
        %737 = vst [vmem:[%s657 + $0x138] sm:$0xff] %v736
        %v738 = vld [vmem:[%s656 + $0x140] sm:$0xff]
        %739 = vst [vmem:[%s657 + $0x140] sm:$0xff] %v738
        %v740 = vld [vmem:[%s656 + $0x148] sm:$0xff]
        %741 = vst [vmem:[%s657 + $0x148] sm:$0xff] %v740
        %v742 = vld [vmem:[%s656 + $0x150] sm:$0xff]
        %743 = vst [vmem:[%s657 + $0x150] sm:$0xff] %v742
        %v744 = vld [vmem:[%s656 + $0x158] sm:$0xff]
        %745 = vst [vmem:[%s657 + $0x158] sm:$0xff] %v744
        %v746 = vld [vmem:[%s656 + $0x160] sm:$0xff]
        %747 = vst [vmem:[%s657 + $0x160] sm:$0xff] %v746
        %v748 = vld [vmem:[%s656 + $0x168] sm:$0xff]
        %749 = vst [vmem:[%s657 + $0x168] sm:$0xff] %v748
        %v750 = vld [vmem:[%s656 + $0x170] sm:$0xff]
        %751 = vst [vmem:[%s657 + $0x170] sm:$0xff] %v750
        %v752 = vld [vmem:[%s656 + $0x178] sm:$0xff]
        %753 = vst [vmem:[%s657 + $0x178] sm:$0xff] %v752
        %v754 = vld [vmem:[%s656 + $0x180] sm:$0xff]
        %755 = vst [vmem:[%s657 + $0x180] sm:$0xff] %v754
        %v756 = vld [vmem:[%s656 + $0x188] sm:$0xff]
        %757 = vst [vmem:[%s657 + $0x188] sm:$0xff] %v756
        %v758 = vld [vmem:[%s656 + $0x190] sm:$0xff]
        %759 = vst [vmem:[%s657 + $0x190] sm:$0xff] %v758
        %v760 = vld [vmem:[%s656 + $0x198] sm:$0xff]
        %761 = vst [vmem:[%s657 + $0x198] sm:$0xff] %v760
        %v762 = vld [vmem:[%s656 + $0x1a0] sm:$0xff]
        %763 = vst [vmem:[%s657 + $0x1a0] sm:$0xff] %v762
        %v764 = vld [vmem:[%s656 + $0x1a8] sm:$0xff]
        %765 = vst [vmem:[%s657 + $0x1a8] sm:$0xff] %v764
        %v766 = vld [vmem:[%s656 + $0x1b0] sm:$0xff]
        %767 = vst [vmem:[%s657 + $0x1b0] sm:$0xff] %v766
        %v768 = vld [vmem:[%s656 + $0x1b8] sm:$0xff]
        %769 = vst [vmem:[%s657 + $0x1b8] sm:$0xff] %v768
        %v770 = vld [vmem:[%s656 + $0x1c0] sm:$0xff]
        %771 = vst [vmem:[%s657 + $0x1c0] sm:$0xff] %v770
        %v772 = vld [vmem:[%s656 + $0x1c8] sm:$0xff]
        %773 = vst [vmem:[%s657 + $0x1c8] sm:$0xff] %v772
        %v774 = vld [vmem:[%s656 + $0x1d0] sm:$0xff]
        %775 = vst [vmem:[%s657 + $0x1d0] sm:$0xff] %v774
        %v776 = vld [vmem:[%s656 + $0x1d8] sm:$0xff]
        %777 = vst [vmem:[%s657 + $0x1d8] sm:$0xff] %v776
        %v778 = vld [vmem:[%s656 + $0x1e0] sm:$0xff]
        %779 = vst [vmem:[%s657 + $0x1e0] sm:$0xff] %v778
        %v780 = vld [vmem:[%s656 + $0x1e8] sm:$0xff]
        %781 = vst [vmem:[%s657 + $0x1e8] sm:$0xff] %v780
        %v782 = vld [vmem:[%s656 + $0x1f0] sm:$0xff]
        %783 = vst [vmem:[%s657 + $0x1f0] sm:$0xff] %v782
        %v784 = vld [vmem:[%s656 + $0x1f8] sm:$0xff]
        %785 = vst [vmem:[%s657 + $0x1f8] sm:$0xff] %v784
        %v786 = vld [vmem:[%s656 + $0x200] sm:$0xff]
        %787 = vst [vmem:[%s657 + $0x200] sm:$0xff] %v786
        %v788 = vld [vmem:[%s656 + $0x208] sm:$0xff]
        %789 = vst [vmem:[%s657 + $0x208] sm:$0xff] %v788
        %v790 = vld [vmem:[%s656 + $0x210] sm:$0xff]
        %791 = vst [vmem:[%s657 + $0x210] sm:$0xff] %v790
        %v792 = vld [vmem:[%s656 + $0x218] sm:$0xff]
        %793 = vst [vmem:[%s657 + $0x218] sm:$0xff] %v792
        %v794 = vld [vmem:[%s656 + $0x220] sm:$0xff]
        %795 = vst [vmem:[%s657 + $0x220] sm:$0xff] %v794
        %v796 = vld [vmem:[%s656 + $0x228] sm:$0xff]
        %797 = vst [vmem:[%s657 + $0x228] sm:$0xff] %v796
        %v798 = vld [vmem:[%s656 + $0x230] sm:$0xff]
        %799 = vst [vmem:[%s657 + $0x230] sm:$0xff] %v798
        %v800 = vld [vmem:[%s656 + $0x238] sm:$0xff]
        %801 = vst [vmem:[%s657 + $0x238] sm:$0xff] %v800
        %v802 = vld [vmem:[%s656 + $0x240] sm:$0xff]
        %803 = vst [vmem:[%s657 + $0x240] sm:$0xff] %v802
        %v804 = vld [vmem:[%s656 + $0x248] sm:$0xff]
        %805 = vst [vmem:[%s657 + $0x248] sm:$0xff] %v804
        %v806 = vld [vmem:[%s656 + $0x250] sm:$0xff]
        %807 = vst [vmem:[%s657 + $0x250] sm:$0xff] %v806
        %v808 = vld [vmem:[%s656 + $0x258] sm:$0xff]
        %809 = vst [vmem:[%s657 + $0x258] sm:$0xff] %v808
        %v810 = vld [vmem:[%s656 + $0x260] sm:$0xff]
        %811 = vst [vmem:[%s657 + $0x260] sm:$0xff] %v810
        %v812 = vld [vmem:[%s656 + $0x268] sm:$0xff]
        %813 = vst [vmem:[%s657 + $0x268] sm:$0xff] %v812
        %v814 = vld [vmem:[%s656 + $0x270] sm:$0xff]
        %815 = vst [vmem:[%s657 + $0x270] sm:$0xff] %v814
        %v816 = vld [vmem:[%s656 + $0x278] sm:$0xff]
        %817 = vst [vmem:[%s657 + $0x278] sm:$0xff] %v816
        %v818 = vld [vmem:[%s656 + $0x280] sm:$0xff]
        %819 = vst [vmem:[%s657 + $0x280] sm:$0xff] %v818
        %v820 = vld [vmem:[%s656 + $0x288] sm:$0xff]
        %821 = vst [vmem:[%s657 + $0x288] sm:$0xff] %v820
        %v822 = vld [vmem:[%s656 + $0x290] sm:$0xff]
        %823 = vst [vmem:[%s657 + $0x290] sm:$0xff] %v822
        %v824 = vld [vmem:[%s656 + $0x298] sm:$0xff]
        %825 = vst [vmem:[%s657 + $0x298] sm:$0xff] %v824
        %v826 = vld [vmem:[%s656 + $0x2a0] sm:$0xff]
        %827 = vst [vmem:[%s657 + $0x2a0] sm:$0xff] %v826
        %v828 = vld [vmem:[%s656 + $0x2a8] sm:$0xff]
        %829 = vst [vmem:[%s657 + $0x2a8] sm:$0xff] %v828
        %v830 = vld [vmem:[%s656 + $0x2b0] sm:$0xff]
        %831 = vst [vmem:[%s657 + $0x2b0] sm:$0xff] %v830
        %v832 = vld [vmem:[%s656 + $0x2b8] sm:$0xff]
        %833 = vst [vmem:[%s657 + $0x2b8] sm:$0xff] %v832
        %v834 = vld [vmem:[%s656 + $0x2c0] sm:$0xff]
        %835 = vst [vmem:[%s657 + $0x2c0] sm:$0xff] %v834
        %v836 = vld [vmem:[%s656 + $0x2c8] sm:$0xff]
        %837 = vst [vmem:[%s657 + $0x2c8] sm:$0xff] %v836
        %v838 = vld [vmem:[%s656 + $0x2d0] sm:$0xff]
        %839 = vst [vmem:[%s657 + $0x2d0] sm:$0xff] %v838
        %v840 = vld [vmem:[%s656 + $0x2d8] sm:$0xff]
        %841 = vst [vmem:[%s657 + $0x2d8] sm:$0xff] %v840
        %v842 = vld [vmem:[%s656 + $0x2e0] sm:$0xff]
        %843 = vst [vmem:[%s657 + $0x2e0] sm:$0xff] %v842
        %v844 = vld [vmem:[%s656 + $0x2e8] sm:$0xff]
        %845 = vst [vmem:[%s657 + $0x2e8] sm:$0xff] %v844
        %v846 = vld [vmem:[%s656 + $0x2f0] sm:$0xff]
        %847 = vst [vmem:[%s657 + $0x2f0] sm:$0xff] %v846
        %v848 = vld [vmem:[%s656 + $0x2f8] sm:$0xff]
        %849 = vst [vmem:[%s657 + $0x2f8] sm:$0xff] %v848
        %v850 = vld [vmem:[%s656 + $0x300] sm:$0xff]
        %851 = vst [vmem:[%s657 + $0x300] sm:$0xff] %v850
        %v852 = vld [vmem:[%s656 + $0x308] sm:$0xff]
        %853 = vst [vmem:[%s657 + $0x308] sm:$0xff] %v852
        %v854 = vld [vmem:[%s656 + $0x310] sm:$0xff]
        %855 = vst [vmem:[%s657 + $0x310] sm:$0xff] %v854
        %v856 = vld [vmem:[%s656 + $0x318] sm:$0xff]
        %857 = vst [vmem:[%s657 + $0x318] sm:$0xff] %v856
        %v858 = vld [vmem:[%s656 + $0x320] sm:$0xff]
        %859 = vst [vmem:[%s657 + $0x320] sm:$0xff] %v858
        %v860 = vld [vmem:[%s656 + $0x328] sm:$0xff]
        %861 = vst [vmem:[%s657 + $0x328] sm:$0xff] %v860
        %v862 = vld [vmem:[%s656 + $0x330] sm:$0xff]
        %863 = vst [vmem:[%s657 + $0x330] sm:$0xff] %v862
        %v864 = vld [vmem:[%s656 + $0x338] sm:$0xff]
        %865 = vst [vmem:[%s657 + $0x338] sm:$0xff] %v864
        %v866 = vld [vmem:[%s656 + $0x340] sm:$0xff]
        %867 = vst [vmem:[%s657 + $0x340] sm:$0xff] %v866
        %v868 = vld [vmem:[%s656 + $0x348] sm:$0xff]
        %869 = vst [vmem:[%s657 + $0x348] sm:$0xff] %v868
        %v870 = vld [vmem:[%s656 + $0x350] sm:$0xff]
        %871 = vst [vmem:[%s657 + $0x350] sm:$0xff] %v870
        %v872 = vld [vmem:[%s656 + $0x358] sm:$0xff]
        %873 = vst [vmem:[%s657 + $0x358] sm:$0xff] %v872
        %v874 = vld [vmem:[%s656 + $0x360] sm:$0xff]
        %875 = vst [vmem:[%s657 + $0x360] sm:$0xff] %v874
        %v876 = vld [vmem:[%s656 + $0x368] sm:$0xff]
        %877 = vst [vmem:[%s657 + $0x368] sm:$0xff] %v876
        %v878 = vld [vmem:[%s656 + $0x370] sm:$0xff]
        %879 = vst [vmem:[%s657 + $0x370] sm:$0xff] %v878
        %v880 = vld [vmem:[%s656 + $0x378] sm:$0xff]
        %881 = vst [vmem:[%s657 + $0x378] sm:$0xff] %v880
        %v882 = vld [vmem:[%s656 + $0x380] sm:$0xff]
        %883 = vst [vmem:[%s657 + $0x380] sm:$0xff] %v882
        %v884 = vld [vmem:[%s656 + $0x388] sm:$0xff]
        %885 = vst [vmem:[%s657 + $0x388] sm:$0xff] %v884
        %v886 = vld [vmem:[%s656 + $0x390] sm:$0xff]
        %887 = vst [vmem:[%s657 + $0x390] sm:$0xff] %v886
        %v888 = vld [vmem:[%s656 + $0x398] sm:$0xff]
        %889 = vst [vmem:[%s657 + $0x398] sm:$0xff] %v888
        %v890 = vld [vmem:[%s656 + $0x3a0] sm:$0xff]
        %891 = vst [vmem:[%s657 + $0x3a0] sm:$0xff] %v890
        %v892 = vld [vmem:[%s656 + $0x3a8] sm:$0xff]
        %893 = vst [vmem:[%s657 + $0x3a8] sm:$0xff] %v892
        %v894 = vld [vmem:[%s656 + $0x3b0] sm:$0xff]
        %895 = vst [vmem:[%s657 + $0x3b0] sm:$0xff] %v894
        %v896 = vld [vmem:[%s656 + $0x3b8] sm:$0xff]
        %897 = vst [vmem:[%s657 + $0x3b8] sm:$0xff] %v896
        %v898 = vld [vmem:[%s656 + $0x3c0] sm:$0xff]
        %899 = vst [vmem:[%s657 + $0x3c0] sm:$0xff] %v898
        %v900 = vld [vmem:[%s656 + $0x3c8] sm:$0xff]
        %901 = vst [vmem:[%s657 + $0x3c8] sm:$0xff] %v900
        %v902 = vld [vmem:[%s656 + $0x3d0] sm:$0xff]
        %903 = vst [vmem:[%s657 + $0x3d0] sm:$0xff] %v902
        %v904 = vld [vmem:[%s656 + $0x3d8] sm:$0xff]
        %905 = vst [vmem:[%s657 + $0x3d8] sm:$0xff] %v904
        %v906 = vld [vmem:[%s656 + $0x3e0] sm:$0xff]
        %907 = vst [vmem:[%s657 + $0x3e0] sm:$0xff] %v906
        %v908 = vld [vmem:[%s656 + $0x3e8] sm:$0xff]
        %909 = vst [vmem:[%s657 + $0x3e8] sm:$0xff] %v908
        %v910 = vld [vmem:[%s656 + $0x3f0] sm:$0xff]
        %911 = vst [vmem:[%s657 + $0x3f0] sm:$0xff] %v910
        %v912 = vld [vmem:[%s656 + $0x3f8] sm:$0xff]
        %913 = vst [vmem:[%s657 + $0x3f8] sm:$0xff] %v912
      $region135: #{_lambda_.1} parent=129 // loop_footer
        %s655 = sadd.s32 1, %s651
      $region136: #{_lambda_.1} parent=129 // loop_footer_branch
        %650 = sbr.rel target = $region132
      $region137: #{_lambda_.1} parent=129 // loop_exit
        _
    $region130: #{_lambda_.1} parent=114 // pred_fallthru
      _
    %p914 = pneg %p646
    // Predicated region
    $region138: #{_lambda_.1} parent=114 // pred_check
      _
    $region139: #{_lambda_.1} parent=114 // pred_check_branch
      %916 = sbr.rel (%p646) target = $region141
    $region140: #{_lambda_.1} parent=114 // pred_region
      %s917 = sand.u32 1024, 7
    $region141: #{_lambda_.1} parent=114 // pred_fallthru
      _
  $region115: #{_lambda_.1} parent=0 // pred_fallthru
    _
  // Predicated region
  $region116: #{_lambda_.1} parent=0 // pred_check
    %p630 = pneg %p626
  $region117: #{_lambda_.1} parent=0 // pred_check_branch
    %632 = sbr.rel (%p630) target = $region119
  $region118: #{_lambda_.1} parent=0 // pred_region
    %s633 = sshll.u32 1, 1024
    %s634 = ssub.s32 %s633, 1
    loop: start=0, step=1, limit=1
    $region120: #{_lambda_.1} parent=118 // loop_pre_header
      _
    $region121: #{_lambda_.1} parent=118 // loop_header
      %s636 = sphi 0, %s640
      %p637 = scmp.ge.s32.totalorder %s636, 1
      %s641 = sphi %s5, %s5
      %s642 = sphi [#allocation5], [#allocation5]
    $region122: #{_lambda_.1} parent=118 // loop_header_branch
      %639 = sbr.rel (%p637) target = $region126
    $region123: #{_lambda_.1} parent=118 // loop_body
      %v643 = vld [vmem:[%s641] sm:%s634]
      %644 = vst [vmem:[%s642] sm:%s634] %v643
    $region124: #{_lambda_.1} parent=118 // loop_footer
      %s640 = sadd.s32 1, %s636
    $region125: #{_lambda_.1} parent=118 // loop_footer_branch
      %635 = sbr.rel target = $region121
    $region126: #{_lambda_.1} parent=118 // loop_exit
      _
  $region119: #{_lambda_.1} parent=0 // pred_fallthru
    _
  // Predicated region
  $region142: #{_lambda_.1} parent=0 // pred_check
    _
  $region143: #{_lambda_.1} parent=0 // pred_check_branch
    %920 = sbr.rel (0) target = $region145
  $region144: #{_lambda_.1} parent=0 // pred_region
    %921 = vsyncadd %s624, 16384
  $region145: #{_lambda_.1} parent=0 // pred_fallthru
    _
  %s922 = scalar_lea.sflag [#allocation10], 4
  %p924 = scmp.lt.u32.totalorder 1024, 8
  %p925 = pneg %p924
  // Predicated region
  $region146: #{_lambda_.1} parent=0 // pred_check
    _
  $region147: #{_lambda_.1} parent=0 // pred_check_branch
    %927 = sbr.rel (%p924) target = $region149
  $region148: #{_lambda_.1} parent=0 // pred_region
    %s943 = sand.u32 1024, 7
    %p944 = scmp.eq.s32.totalorder %s943, 0
    // Predicated region
    $region161: #{_lambda_.1} parent=148 // pred_check
      %p945 = pneg %p944
    $region162: #{_lambda_.1} parent=148 // pred_check_branch
      %947 = sbr.rel (%p945) target = $region164
    $region163: #{_lambda_.1} parent=148 // pred_region
      loop: start=0, step=1, limit=1
      $region165: #{_lambda_.1} parent=163 // loop_pre_header
        _
      $region166: #{_lambda_.1} parent=163 // loop_header
        %s949 = sphi 0, %s953
        %p950 = scmp.ge.s32.totalorder %s949, 1
        %s954 = sphi %s6, %s6
        %s955 = sphi [#allocation6], [#allocation6]
      $region167: #{_lambda_.1} parent=163 // loop_header_branch
        %952 = sbr.rel (%p950) target = $region171
      $region168: #{_lambda_.1} parent=163 // loop_body
        %v956 = vld [vmem:[%s954] sm:$0xff]
        %957 = vst [vmem:[%s955] sm:$0xff] %v956
        %v958 = vld [vmem:[%s954 + $0x8] sm:$0xff]
        %959 = vst [vmem:[%s955 + $0x8] sm:$0xff] %v958
        %v960 = vld [vmem:[%s954 + $0x10] sm:$0xff]
        %961 = vst [vmem:[%s955 + $0x10] sm:$0xff] %v960
        %v962 = vld [vmem:[%s954 + $0x18] sm:$0xff]
        %963 = vst [vmem:[%s955 + $0x18] sm:$0xff] %v962
        %v964 = vld [vmem:[%s954 + $0x20] sm:$0xff]
        %965 = vst [vmem:[%s955 + $0x20] sm:$0xff] %v964
        %v966 = vld [vmem:[%s954 + $0x28] sm:$0xff]
        %967 = vst [vmem:[%s955 + $0x28] sm:$0xff] %v966
        %v968 = vld [vmem:[%s954 + $0x30] sm:$0xff]
        %969 = vst [vmem:[%s955 + $0x30] sm:$0xff] %v968
        %v970 = vld [vmem:[%s954 + $0x38] sm:$0xff]
        %971 = vst [vmem:[%s955 + $0x38] sm:$0xff] %v970
        %v972 = vld [vmem:[%s954 + $0x40] sm:$0xff]
        %973 = vst [vmem:[%s955 + $0x40] sm:$0xff] %v972
        %v974 = vld [vmem:[%s954 + $0x48] sm:$0xff]
        %975 = vst [vmem:[%s955 + $0x48] sm:$0xff] %v974
        %v976 = vld [vmem:[%s954 + $0x50] sm:$0xff]
        %977 = vst [vmem:[%s955 + $0x50] sm:$0xff] %v976
        %v978 = vld [vmem:[%s954 + $0x58] sm:$0xff]
        %979 = vst [vmem:[%s955 + $0x58] sm:$0xff] %v978
        %v980 = vld [vmem:[%s954 + $0x60] sm:$0xff]
        %981 = vst [vmem:[%s955 + $0x60] sm:$0xff] %v980
        %v982 = vld [vmem:[%s954 + $0x68] sm:$0xff]
        %983 = vst [vmem:[%s955 + $0x68] sm:$0xff] %v982
        %v984 = vld [vmem:[%s954 + $0x70] sm:$0xff]
        %985 = vst [vmem:[%s955 + $0x70] sm:$0xff] %v984
        %v986 = vld [vmem:[%s954 + $0x78] sm:$0xff]
        %987 = vst [vmem:[%s955 + $0x78] sm:$0xff] %v986
        %v988 = vld [vmem:[%s954 + $0x80] sm:$0xff]
        %989 = vst [vmem:[%s955 + $0x80] sm:$0xff] %v988
        %v990 = vld [vmem:[%s954 + $0x88] sm:$0xff]
        %991 = vst [vmem:[%s955 + $0x88] sm:$0xff] %v990
        %v992 = vld [vmem:[%s954 + $0x90] sm:$0xff]
        %993 = vst [vmem:[%s955 + $0x90] sm:$0xff] %v992
        %v994 = vld [vmem:[%s954 + $0x98] sm:$0xff]
        %995 = vst [vmem:[%s955 + $0x98] sm:$0xff] %v994
        %v996 = vld [vmem:[%s954 + $0xa0] sm:$0xff]
        %997 = vst [vmem:[%s955 + $0xa0] sm:$0xff] %v996
        %v998 = vld [vmem:[%s954 + $0xa8] sm:$0xff]
        %999 = vst [vmem:[%s955 + $0xa8] sm:$0xff] %v998
        %v1000 = vld [vmem:[%s954 + $0xb0] sm:$0xff]
        %1001 = vst [vmem:[%s955 + $0xb0] sm:$0xff] %v1000
        %v1002 = vld [vmem:[%s954 + $0xb8] sm:$0xff]
        %1003 = vst [vmem:[%s955 + $0xb8] sm:$0xff] %v1002
        %v1004 = vld [vmem:[%s954 + $0xc0] sm:$0xff]
        %1005 = vst [vmem:[%s955 + $0xc0] sm:$0xff] %v1004
        %v1006 = vld [vmem:[%s954 + $0xc8] sm:$0xff]
        %1007 = vst [vmem:[%s955 + $0xc8] sm:$0xff] %v1006
        %v1008 = vld [vmem:[%s954 + $0xd0] sm:$0xff]
        %1009 = vst [vmem:[%s955 + $0xd0] sm:$0xff] %v1008
        %v1010 = vld [vmem:[%s954 + $0xd8] sm:$0xff]
        %1011 = vst [vmem:[%s955 + $0xd8] sm:$0xff] %v1010
        %v1012 = vld [vmem:[%s954 + $0xe0] sm:$0xff]
        %1013 = vst [vmem:[%s955 + $0xe0] sm:$0xff] %v1012
        %v1014 = vld [vmem:[%s954 + $0xe8] sm:$0xff]
        %1015 = vst [vmem:[%s955 + $0xe8] sm:$0xff] %v1014
        %v1016 = vld [vmem:[%s954 + $0xf0] sm:$0xff]
        %1017 = vst [vmem:[%s955 + $0xf0] sm:$0xff] %v1016
        %v1018 = vld [vmem:[%s954 + $0xf8] sm:$0xff]
        %1019 = vst [vmem:[%s955 + $0xf8] sm:$0xff] %v1018
        %v1020 = vld [vmem:[%s954 + $0x100] sm:$0xff]
        %1021 = vst [vmem:[%s955 + $0x100] sm:$0xff] %v1020
        %v1022 = vld [vmem:[%s954 + $0x108] sm:$0xff]
        %1023 = vst [vmem:[%s955 + $0x108] sm:$0xff] %v1022
        %v1024 = vld [vmem:[%s954 + $0x110] sm:$0xff]
        %1025 = vst [vmem:[%s955 + $0x110] sm:$0xff] %v1024
        %v1026 = vld [vmem:[%s954 + $0x118] sm:$0xff]
        %1027 = vst [vmem:[%s955 + $0x118] sm:$0xff] %v1026
        %v1028 = vld [vmem:[%s954 + $0x120] sm:$0xff]
        %1029 = vst [vmem:[%s955 + $0x120] sm:$0xff] %v1028
        %v1030 = vld [vmem:[%s954 + $0x128] sm:$0xff]
        %1031 = vst [vmem:[%s955 + $0x128] sm:$0xff] %v1030
        %v1032 = vld [vmem:[%s954 + $0x130] sm:$0xff]
        %1033 = vst [vmem:[%s955 + $0x130] sm:$0xff] %v1032
        %v1034 = vld [vmem:[%s954 + $0x138] sm:$0xff]
        %1035 = vst [vmem:[%s955 + $0x138] sm:$0xff] %v1034
        %v1036 = vld [vmem:[%s954 + $0x140] sm:$0xff]
        %1037 = vst [vmem:[%s955 + $0x140] sm:$0xff] %v1036
        %v1038 = vld [vmem:[%s954 + $0x148] sm:$0xff]
        %1039 = vst [vmem:[%s955 + $0x148] sm:$0xff] %v1038
        %v1040 = vld [vmem:[%s954 + $0x150] sm:$0xff]
        %1041 = vst [vmem:[%s955 + $0x150] sm:$0xff] %v1040
        %v1042 = vld [vmem:[%s954 + $0x158] sm:$0xff]
        %1043 = vst [vmem:[%s955 + $0x158] sm:$0xff] %v1042
        %v1044 = vld [vmem:[%s954 + $0x160] sm:$0xff]
        %1045 = vst [vmem:[%s955 + $0x160] sm:$0xff] %v1044
        %v1046 = vld [vmem:[%s954 + $0x168] sm:$0xff]
        %1047 = vst [vmem:[%s955 + $0x168] sm:$0xff] %v1046
        %v1048 = vld [vmem:[%s954 + $0x170] sm:$0xff]
        %1049 = vst [vmem:[%s955 + $0x170] sm:$0xff] %v1048
        %v1050 = vld [vmem:[%s954 + $0x178] sm:$0xff]
        %1051 = vst [vmem:[%s955 + $0x178] sm:$0xff] %v1050
        %v1052 = vld [vmem:[%s954 + $0x180] sm:$0xff]
        %1053 = vst [vmem:[%s955 + $0x180] sm:$0xff] %v1052
        %v1054 = vld [vmem:[%s954 + $0x188] sm:$0xff]
        %1055 = vst [vmem:[%s955 + $0x188] sm:$0xff] %v1054
        %v1056 = vld [vmem:[%s954 + $0x190] sm:$0xff]
        %1057 = vst [vmem:[%s955 + $0x190] sm:$0xff] %v1056
        %v1058 = vld [vmem:[%s954 + $0x198] sm:$0xff]
        %1059 = vst [vmem:[%s955 + $0x198] sm:$0xff] %v1058
        %v1060 = vld [vmem:[%s954 + $0x1a0] sm:$0xff]
        %1061 = vst [vmem:[%s955 + $0x1a0] sm:$0xff] %v1060
        %v1062 = vld [vmem:[%s954 + $0x1a8] sm:$0xff]
        %1063 = vst [vmem:[%s955 + $0x1a8] sm:$0xff] %v1062
        %v1064 = vld [vmem:[%s954 + $0x1b0] sm:$0xff]
        %1065 = vst [vmem:[%s955 + $0x1b0] sm:$0xff] %v1064
        %v1066 = vld [vmem:[%s954 + $0x1b8] sm:$0xff]
        %1067 = vst [vmem:[%s955 + $0x1b8] sm:$0xff] %v1066
        %v1068 = vld [vmem:[%s954 + $0x1c0] sm:$0xff]
        %1069 = vst [vmem:[%s955 + $0x1c0] sm:$0xff] %v1068
        %v1070 = vld [vmem:[%s954 + $0x1c8] sm:$0xff]
        %1071 = vst [vmem:[%s955 + $0x1c8] sm:$0xff] %v1070
        %v1072 = vld [vmem:[%s954 + $0x1d0] sm:$0xff]
        %1073 = vst [vmem:[%s955 + $0x1d0] sm:$0xff] %v1072
        %v1074 = vld [vmem:[%s954 + $0x1d8] sm:$0xff]
        %1075 = vst [vmem:[%s955 + $0x1d8] sm:$0xff] %v1074
        %v1076 = vld [vmem:[%s954 + $0x1e0] sm:$0xff]
        %1077 = vst [vmem:[%s955 + $0x1e0] sm:$0xff] %v1076
        %v1078 = vld [vmem:[%s954 + $0x1e8] sm:$0xff]
        %1079 = vst [vmem:[%s955 + $0x1e8] sm:$0xff] %v1078
        %v1080 = vld [vmem:[%s954 + $0x1f0] sm:$0xff]
        %1081 = vst [vmem:[%s955 + $0x1f0] sm:$0xff] %v1080
        %v1082 = vld [vmem:[%s954 + $0x1f8] sm:$0xff]
        %1083 = vst [vmem:[%s955 + $0x1f8] sm:$0xff] %v1082
        %v1084 = vld [vmem:[%s954 + $0x200] sm:$0xff]
        %1085 = vst [vmem:[%s955 + $0x200] sm:$0xff] %v1084
        %v1086 = vld [vmem:[%s954 + $0x208] sm:$0xff]
        %1087 = vst [vmem:[%s955 + $0x208] sm:$0xff] %v1086
        %v1088 = vld [vmem:[%s954 + $0x210] sm:$0xff]
        %1089 = vst [vmem:[%s955 + $0x210] sm:$0xff] %v1088
        %v1090 = vld [vmem:[%s954 + $0x218] sm:$0xff]
        %1091 = vst [vmem:[%s955 + $0x218] sm:$0xff] %v1090
        %v1092 = vld [vmem:[%s954 + $0x220] sm:$0xff]
        %1093 = vst [vmem:[%s955 + $0x220] sm:$0xff] %v1092
        %v1094 = vld [vmem:[%s954 + $0x228] sm:$0xff]
        %1095 = vst [vmem:[%s955 + $0x228] sm:$0xff] %v1094
        %v1096 = vld [vmem:[%s954 + $0x230] sm:$0xff]
        %1097 = vst [vmem:[%s955 + $0x230] sm:$0xff] %v1096
        %v1098 = vld [vmem:[%s954 + $0x238] sm:$0xff]
        %1099 = vst [vmem:[%s955 + $0x238] sm:$0xff] %v1098
        %v1100 = vld [vmem:[%s954 + $0x240] sm:$0xff]
        %1101 = vst [vmem:[%s955 + $0x240] sm:$0xff] %v1100
        %v1102 = vld [vmem:[%s954 + $0x248] sm:$0xff]
        %1103 = vst [vmem:[%s955 + $0x248] sm:$0xff] %v1102
        %v1104 = vld [vmem:[%s954 + $0x250] sm:$0xff]
        %1105 = vst [vmem:[%s955 + $0x250] sm:$0xff] %v1104
        %v1106 = vld [vmem:[%s954 + $0x258] sm:$0xff]
        %1107 = vst [vmem:[%s955 + $0x258] sm:$0xff] %v1106
        %v1108 = vld [vmem:[%s954 + $0x260] sm:$0xff]
        %1109 = vst [vmem:[%s955 + $0x260] sm:$0xff] %v1108
        %v1110 = vld [vmem:[%s954 + $0x268] sm:$0xff]
        %1111 = vst [vmem:[%s955 + $0x268] sm:$0xff] %v1110
        %v1112 = vld [vmem:[%s954 + $0x270] sm:$0xff]
        %1113 = vst [vmem:[%s955 + $0x270] sm:$0xff] %v1112
        %v1114 = vld [vmem:[%s954 + $0x278] sm:$0xff]
        %1115 = vst [vmem:[%s955 + $0x278] sm:$0xff] %v1114
        %v1116 = vld [vmem:[%s954 + $0x280] sm:$0xff]
        %1117 = vst [vmem:[%s955 + $0x280] sm:$0xff] %v1116
        %v1118 = vld [vmem:[%s954 + $0x288] sm:$0xff]
        %1119 = vst [vmem:[%s955 + $0x288] sm:$0xff] %v1118
        %v1120 = vld [vmem:[%s954 + $0x290] sm:$0xff]
        %1121 = vst [vmem:[%s955 + $0x290] sm:$0xff] %v1120
        %v1122 = vld [vmem:[%s954 + $0x298] sm:$0xff]
        %1123 = vst [vmem:[%s955 + $0x298] sm:$0xff] %v1122
        %v1124 = vld [vmem:[%s954 + $0x2a0] sm:$0xff]
        %1125 = vst [vmem:[%s955 + $0x2a0] sm:$0xff] %v1124
        %v1126 = vld [vmem:[%s954 + $0x2a8] sm:$0xff]
        %1127 = vst [vmem:[%s955 + $0x2a8] sm:$0xff] %v1126
        %v1128 = vld [vmem:[%s954 + $0x2b0] sm:$0xff]
        %1129 = vst [vmem:[%s955 + $0x2b0] sm:$0xff] %v1128
        %v1130 = vld [vmem:[%s954 + $0x2b8] sm:$0xff]
        %1131 = vst [vmem:[%s955 + $0x2b8] sm:$0xff] %v1130
        %v1132 = vld [vmem:[%s954 + $0x2c0] sm:$0xff]
        %1133 = vst [vmem:[%s955 + $0x2c0] sm:$0xff] %v1132
        %v1134 = vld [vmem:[%s954 + $0x2c8] sm:$0xff]
        %1135 = vst [vmem:[%s955 + $0x2c8] sm:$0xff] %v1134
        %v1136 = vld [vmem:[%s954 + $0x2d0] sm:$0xff]
        %1137 = vst [vmem:[%s955 + $0x2d0] sm:$0xff] %v1136
        %v1138 = vld [vmem:[%s954 + $0x2d8] sm:$0xff]
        %1139 = vst [vmem:[%s955 + $0x2d8] sm:$0xff] %v1138
        %v1140 = vld [vmem:[%s954 + $0x2e0] sm:$0xff]
        %1141 = vst [vmem:[%s955 + $0x2e0] sm:$0xff] %v1140
        %v1142 = vld [vmem:[%s954 + $0x2e8] sm:$0xff]
        %1143 = vst [vmem:[%s955 + $0x2e8] sm:$0xff] %v1142
        %v1144 = vld [vmem:[%s954 + $0x2f0] sm:$0xff]
        %1145 = vst [vmem:[%s955 + $0x2f0] sm:$0xff] %v1144
        %v1146 = vld [vmem:[%s954 + $0x2f8] sm:$0xff]
        %1147 = vst [vmem:[%s955 + $0x2f8] sm:$0xff] %v1146
        %v1148 = vld [vmem:[%s954 + $0x300] sm:$0xff]
        %1149 = vst [vmem:[%s955 + $0x300] sm:$0xff] %v1148
        %v1150 = vld [vmem:[%s954 + $0x308] sm:$0xff]
        %1151 = vst [vmem:[%s955 + $0x308] sm:$0xff] %v1150
        %v1152 = vld [vmem:[%s954 + $0x310] sm:$0xff]
        %1153 = vst [vmem:[%s955 + $0x310] sm:$0xff] %v1152
        %v1154 = vld [vmem:[%s954 + $0x318] sm:$0xff]
        %1155 = vst [vmem:[%s955 + $0x318] sm:$0xff] %v1154
        %v1156 = vld [vmem:[%s954 + $0x320] sm:$0xff]
        %1157 = vst [vmem:[%s955 + $0x320] sm:$0xff] %v1156
        %v1158 = vld [vmem:[%s954 + $0x328] sm:$0xff]
        %1159 = vst [vmem:[%s955 + $0x328] sm:$0xff] %v1158
        %v1160 = vld [vmem:[%s954 + $0x330] sm:$0xff]
        %1161 = vst [vmem:[%s955 + $0x330] sm:$0xff] %v1160
        %v1162 = vld [vmem:[%s954 + $0x338] sm:$0xff]
        %1163 = vst [vmem:[%s955 + $0x338] sm:$0xff] %v1162
        %v1164 = vld [vmem:[%s954 + $0x340] sm:$0xff]
        %1165 = vst [vmem:[%s955 + $0x340] sm:$0xff] %v1164
        %v1166 = vld [vmem:[%s954 + $0x348] sm:$0xff]
        %1167 = vst [vmem:[%s955 + $0x348] sm:$0xff] %v1166
        %v1168 = vld [vmem:[%s954 + $0x350] sm:$0xff]
        %1169 = vst [vmem:[%s955 + $0x350] sm:$0xff] %v1168
        %v1170 = vld [vmem:[%s954 + $0x358] sm:$0xff]
        %1171 = vst [vmem:[%s955 + $0x358] sm:$0xff] %v1170
        %v1172 = vld [vmem:[%s954 + $0x360] sm:$0xff]
        %1173 = vst [vmem:[%s955 + $0x360] sm:$0xff] %v1172
        %v1174 = vld [vmem:[%s954 + $0x368] sm:$0xff]
        %1175 = vst [vmem:[%s955 + $0x368] sm:$0xff] %v1174
        %v1176 = vld [vmem:[%s954 + $0x370] sm:$0xff]
        %1177 = vst [vmem:[%s955 + $0x370] sm:$0xff] %v1176
        %v1178 = vld [vmem:[%s954 + $0x378] sm:$0xff]
        %1179 = vst [vmem:[%s955 + $0x378] sm:$0xff] %v1178
        %v1180 = vld [vmem:[%s954 + $0x380] sm:$0xff]
        %1181 = vst [vmem:[%s955 + $0x380] sm:$0xff] %v1180
        %v1182 = vld [vmem:[%s954 + $0x388] sm:$0xff]
        %1183 = vst [vmem:[%s955 + $0x388] sm:$0xff] %v1182
        %v1184 = vld [vmem:[%s954 + $0x390] sm:$0xff]
        %1185 = vst [vmem:[%s955 + $0x390] sm:$0xff] %v1184
        %v1186 = vld [vmem:[%s954 + $0x398] sm:$0xff]
        %1187 = vst [vmem:[%s955 + $0x398] sm:$0xff] %v1186
        %v1188 = vld [vmem:[%s954 + $0x3a0] sm:$0xff]
        %1189 = vst [vmem:[%s955 + $0x3a0] sm:$0xff] %v1188
        %v1190 = vld [vmem:[%s954 + $0x3a8] sm:$0xff]
        %1191 = vst [vmem:[%s955 + $0x3a8] sm:$0xff] %v1190
        %v1192 = vld [vmem:[%s954 + $0x3b0] sm:$0xff]
        %1193 = vst [vmem:[%s955 + $0x3b0] sm:$0xff] %v1192
        %v1194 = vld [vmem:[%s954 + $0x3b8] sm:$0xff]
        %1195 = vst [vmem:[%s955 + $0x3b8] sm:$0xff] %v1194
        %v1196 = vld [vmem:[%s954 + $0x3c0] sm:$0xff]
        %1197 = vst [vmem:[%s955 + $0x3c0] sm:$0xff] %v1196
        %v1198 = vld [vmem:[%s954 + $0x3c8] sm:$0xff]
        %1199 = vst [vmem:[%s955 + $0x3c8] sm:$0xff] %v1198
        %v1200 = vld [vmem:[%s954 + $0x3d0] sm:$0xff]
        %1201 = vst [vmem:[%s955 + $0x3d0] sm:$0xff] %v1200
        %v1202 = vld [vmem:[%s954 + $0x3d8] sm:$0xff]
        %1203 = vst [vmem:[%s955 + $0x3d8] sm:$0xff] %v1202
        %v1204 = vld [vmem:[%s954 + $0x3e0] sm:$0xff]
        %1205 = vst [vmem:[%s955 + $0x3e0] sm:$0xff] %v1204
        %v1206 = vld [vmem:[%s954 + $0x3e8] sm:$0xff]
        %1207 = vst [vmem:[%s955 + $0x3e8] sm:$0xff] %v1206
        %v1208 = vld [vmem:[%s954 + $0x3f0] sm:$0xff]
        %1209 = vst [vmem:[%s955 + $0x3f0] sm:$0xff] %v1208
        %v1210 = vld [vmem:[%s954 + $0x3f8] sm:$0xff]
        %1211 = vst [vmem:[%s955 + $0x3f8] sm:$0xff] %v1210
      $region169: #{_lambda_.1} parent=163 // loop_footer
        %s953 = sadd.s32 1, %s949
      $region170: #{_lambda_.1} parent=163 // loop_footer_branch
        %948 = sbr.rel target = $region166
      $region171: #{_lambda_.1} parent=163 // loop_exit
        _
    $region164: #{_lambda_.1} parent=148 // pred_fallthru
      _
    %p1212 = pneg %p944
    // Predicated region
    $region172: #{_lambda_.1} parent=148 // pred_check
      _
    $region173: #{_lambda_.1} parent=148 // pred_check_branch
      %1214 = sbr.rel (%p944) target = $region175
    $region174: #{_lambda_.1} parent=148 // pred_region
      %s1215 = sand.u32 1024, 7
    $region175: #{_lambda_.1} parent=148 // pred_fallthru
      _
  $region149: #{_lambda_.1} parent=0 // pred_fallthru
    _
  // Predicated region
  $region150: #{_lambda_.1} parent=0 // pred_check
    %p928 = pneg %p924
  $region151: #{_lambda_.1} parent=0 // pred_check_branch
    %930 = sbr.rel (%p928) target = $region153
  $region152: #{_lambda_.1} parent=0 // pred_region
    %s931 = sshll.u32 1, 1024
    %s932 = ssub.s32 %s931, 1
    loop: start=0, step=1, limit=1
    $region154: #{_lambda_.1} parent=152 // loop_pre_header
      _
    $region155: #{_lambda_.1} parent=152 // loop_header
      %s934 = sphi 0, %s938
      %p935 = scmp.ge.s32.totalorder %s934, 1
      %s939 = sphi %s6, %s6
      %s940 = sphi [#allocation6], [#allocation6]
    $region156: #{_lambda_.1} parent=152 // loop_header_branch
      %937 = sbr.rel (%p935) target = $region160
    $region157: #{_lambda_.1} parent=152 // loop_body
      %v941 = vld [vmem:[%s939] sm:%s932]
      %942 = vst [vmem:[%s940] sm:%s932] %v941
    $region158: #{_lambda_.1} parent=152 // loop_footer
      %s938 = sadd.s32 1, %s934
    $region159: #{_lambda_.1} parent=152 // loop_footer_branch
      %933 = sbr.rel target = $region155
    $region160: #{_lambda_.1} parent=152 // loop_exit
      _
  $region153: #{_lambda_.1} parent=0 // pred_fallthru
    _
  // Predicated region
  $region176: #{_lambda_.1} parent=0 // pred_check
    _
  $region177: #{_lambda_.1} parent=0 // pred_check_branch
    %1218 = sbr.rel (0) target = $region179
  $region178: #{_lambda_.1} parent=0 // pred_region
    %1219 = vsyncadd %s922, 16384
  $region179: #{_lambda_.1} parent=0 // pred_fallthru
    _
  %s1220 = scalar_lea.sflag [#allocation10], 5
  %p1222 = scmp.lt.u32.totalorder 1024, 8
  %p1223 = pneg %p1222
  // Predicated region
  $region180: #{_lambda_.1} parent=0 // pred_check
    _
  $region181: #{_lambda_.1} parent=0 // pred_check_branch
    %1225 = sbr.rel (%p1222) target = $region183
  $region182: #{_lambda_.1} parent=0 // pred_region
    %s1241 = sand.u32 1024, 7
    %p1242 = scmp.eq.s32.totalorder %s1241, 0
    // Predicated region
    $region195: #{_lambda_.1} parent=182 // pred_check
      %p1243 = pneg %p1242
    $region196: #{_lambda_.1} parent=182 // pred_check_branch
      %1245 = sbr.rel (%p1243) target = $region198
    $region197: #{_lambda_.1} parent=182 // pred_region
      loop: start=0, step=1, limit=1
      $region199: #{_lambda_.1} parent=197 // loop_pre_header
        _
      $region200: #{_lambda_.1} parent=197 // loop_header
        %s1247 = sphi 0, %s1251
        %p1248 = scmp.ge.s32.totalorder %s1247, 1
        %s1252 = sphi %s7, %s7
        %s1253 = sphi [#allocation7], [#allocation7]
      $region201: #{_lambda_.1} parent=197 // loop_header_branch
        %1250 = sbr.rel (%p1248) target = $region205
      $region202: #{_lambda_.1} parent=197 // loop_body
        %v1254 = vld [vmem:[%s1252] sm:$0xff]
        %1255 = vst [vmem:[%s1253] sm:$0xff] %v1254
        %v1256 = vld [vmem:[%s1252 + $0x8] sm:$0xff]
        %1257 = vst [vmem:[%s1253 + $0x8] sm:$0xff] %v1256
        %v1258 = vld [vmem:[%s1252 + $0x10] sm:$0xff]
        %1259 = vst [vmem:[%s1253 + $0x10] sm:$0xff] %v1258
        %v1260 = vld [vmem:[%s1252 + $0x18] sm:$0xff]
        %1261 = vst [vmem:[%s1253 + $0x18] sm:$0xff] %v1260
        %v1262 = vld [vmem:[%s1252 + $0x20] sm:$0xff]
        %1263 = vst [vmem:[%s1253 + $0x20] sm:$0xff] %v1262
        %v1264 = vld [vmem:[%s1252 + $0x28] sm:$0xff]
        %1265 = vst [vmem:[%s1253 + $0x28] sm:$0xff] %v1264
        %v1266 = vld [vmem:[%s1252 + $0x30] sm:$0xff]
        %1267 = vst [vmem:[%s1253 + $0x30] sm:$0xff] %v1266
        %v1268 = vld [vmem:[%s1252 + $0x38] sm:$0xff]
        %1269 = vst [vmem:[%s1253 + $0x38] sm:$0xff] %v1268
        %v1270 = vld [vmem:[%s1252 + $0x40] sm:$0xff]
        %1271 = vst [vmem:[%s1253 + $0x40] sm:$0xff] %v1270
        %v1272 = vld [vmem:[%s1252 + $0x48] sm:$0xff]
        %1273 = vst [vmem:[%s1253 + $0x48] sm:$0xff] %v1272
        %v1274 = vld [vmem:[%s1252 + $0x50] sm:$0xff]
        %1275 = vst [vmem:[%s1253 + $0x50] sm:$0xff] %v1274
        %v1276 = vld [vmem:[%s1252 + $0x58] sm:$0xff]
        %1277 = vst [vmem:[%s1253 + $0x58] sm:$0xff] %v1276
        %v1278 = vld [vmem:[%s1252 + $0x60] sm:$0xff]
        %1279 = vst [vmem:[%s1253 + $0x60] sm:$0xff] %v1278
        %v1280 = vld [vmem:[%s1252 + $0x68] sm:$0xff]
        %1281 = vst [vmem:[%s1253 + $0x68] sm:$0xff] %v1280
        %v1282 = vld [vmem:[%s1252 + $0x70] sm:$0xff]
        %1283 = vst [vmem:[%s1253 + $0x70] sm:$0xff] %v1282
        %v1284 = vld [vmem:[%s1252 + $0x78] sm:$0xff]
        %1285 = vst [vmem:[%s1253 + $0x78] sm:$0xff] %v1284
        %v1286 = vld [vmem:[%s1252 + $0x80] sm:$0xff]
        %1287 = vst [vmem:[%s1253 + $0x80] sm:$0xff] %v1286
        %v1288 = vld [vmem:[%s1252 + $0x88] sm:$0xff]
        %1289 = vst [vmem:[%s1253 + $0x88] sm:$0xff] %v1288
        %v1290 = vld [vmem:[%s1252 + $0x90] sm:$0xff]
        %1291 = vst [vmem:[%s1253 + $0x90] sm:$0xff] %v1290
        %v1292 = vld [vmem:[%s1252 + $0x98] sm:$0xff]
        %1293 = vst [vmem:[%s1253 + $0x98] sm:$0xff] %v1292
        %v1294 = vld [vmem:[%s1252 + $0xa0] sm:$0xff]
        %1295 = vst [vmem:[%s1253 + $0xa0] sm:$0xff] %v1294
        %v1296 = vld [vmem:[%s1252 + $0xa8] sm:$0xff]
        %1297 = vst [vmem:[%s1253 + $0xa8] sm:$0xff] %v1296
        %v1298 = vld [vmem:[%s1252 + $0xb0] sm:$0xff]
        %1299 = vst [vmem:[%s1253 + $0xb0] sm:$0xff] %v1298
        %v1300 = vld [vmem:[%s1252 + $0xb8] sm:$0xff]
        %1301 = vst [vmem:[%s1253 + $0xb8] sm:$0xff] %v1300
        %v1302 = vld [vmem:[%s1252 + $0xc0] sm:$0xff]
        %1303 = vst [vmem:[%s1253 + $0xc0] sm:$0xff] %v1302
        %v1304 = vld [vmem:[%s1252 + $0xc8] sm:$0xff]
        %1305 = vst [vmem:[%s1253 + $0xc8] sm:$0xff] %v1304
        %v1306 = vld [vmem:[%s1252 + $0xd0] sm:$0xff]
        %1307 = vst [vmem:[%s1253 + $0xd0] sm:$0xff] %v1306
        %v1308 = vld [vmem:[%s1252 + $0xd8] sm:$0xff]
        %1309 = vst [vmem:[%s1253 + $0xd8] sm:$0xff] %v1308
        %v1310 = vld [vmem:[%s1252 + $0xe0] sm:$0xff]
        %1311 = vst [vmem:[%s1253 + $0xe0] sm:$0xff] %v1310
        %v1312 = vld [vmem:[%s1252 + $0xe8] sm:$0xff]
        %1313 = vst [vmem:[%s1253 + $0xe8] sm:$0xff] %v1312
        %v1314 = vld [vmem:[%s1252 + $0xf0] sm:$0xff]
        %1315 = vst [vmem:[%s1253 + $0xf0] sm:$0xff] %v1314
        %v1316 = vld [vmem:[%s1252 + $0xf8] sm:$0xff]
        %1317 = vst [vmem:[%s1253 + $0xf8] sm:$0xff] %v1316
        %v1318 = vld [vmem:[%s1252 + $0x100] sm:$0xff]
        %1319 = vst [vmem:[%s1253 + $0x100] sm:$0xff] %v1318
        %v1320 = vld [vmem:[%s1252 + $0x108] sm:$0xff]
        %1321 = vst [vmem:[%s1253 + $0x108] sm:$0xff] %v1320
        %v1322 = vld [vmem:[%s1252 + $0x110] sm:$0xff]
        %1323 = vst [vmem:[%s1253 + $0x110] sm:$0xff] %v1322
        %v1324 = vld [vmem:[%s1252 + $0x118] sm:$0xff]
        %1325 = vst [vmem:[%s1253 + $0x118] sm:$0xff] %v1324
        %v1326 = vld [vmem:[%s1252 + $0x120] sm:$0xff]
        %1327 = vst [vmem:[%s1253 + $0x120] sm:$0xff] %v1326
        %v1328 = vld [vmem:[%s1252 + $0x128] sm:$0xff]
        %1329 = vst [vmem:[%s1253 + $0x128] sm:$0xff] %v1328
        %v1330 = vld [vmem:[%s1252 + $0x130] sm:$0xff]
        %1331 = vst [vmem:[%s1253 + $0x130] sm:$0xff] %v1330
        %v1332 = vld [vmem:[%s1252 + $0x138] sm:$0xff]
        %1333 = vst [vmem:[%s1253 + $0x138] sm:$0xff] %v1332
        %v1334 = vld [vmem:[%s1252 + $0x140] sm:$0xff]
        %1335 = vst [vmem:[%s1253 + $0x140] sm:$0xff] %v1334
        %v1336 = vld [vmem:[%s1252 + $0x148] sm:$0xff]
        %1337 = vst [vmem:[%s1253 + $0x148] sm:$0xff] %v1336
        %v1338 = vld [vmem:[%s1252 + $0x150] sm:$0xff]
        %1339 = vst [vmem:[%s1253 + $0x150] sm:$0xff] %v1338
        %v1340 = vld [vmem:[%s1252 + $0x158] sm:$0xff]
        %1341 = vst [vmem:[%s1253 + $0x158] sm:$0xff] %v1340
        %v1342 = vld [vmem:[%s1252 + $0x160] sm:$0xff]
        %1343 = vst [vmem:[%s1253 + $0x160] sm:$0xff] %v1342
        %v1344 = vld [vmem:[%s1252 + $0x168] sm:$0xff]
        %1345 = vst [vmem:[%s1253 + $0x168] sm:$0xff] %v1344
        %v1346 = vld [vmem:[%s1252 + $0x170] sm:$0xff]
        %1347 = vst [vmem:[%s1253 + $0x170] sm:$0xff] %v1346
        %v1348 = vld [vmem:[%s1252 + $0x178] sm:$0xff]
        %1349 = vst [vmem:[%s1253 + $0x178] sm:$0xff] %v1348
        %v1350 = vld [vmem:[%s1252 + $0x180] sm:$0xff]
        %1351 = vst [vmem:[%s1253 + $0x180] sm:$0xff] %v1350
        %v1352 = vld [vmem:[%s1252 + $0x188] sm:$0xff]
        %1353 = vst [vmem:[%s1253 + $0x188] sm:$0xff] %v1352
        %v1354 = vld [vmem:[%s1252 + $0x190] sm:$0xff]
        %1355 = vst [vmem:[%s1253 + $0x190] sm:$0xff] %v1354
        %v1356 = vld [vmem:[%s1252 + $0x198] sm:$0xff]
        %1357 = vst [vmem:[%s1253 + $0x198] sm:$0xff] %v1356
        %v1358 = vld [vmem:[%s1252 + $0x1a0] sm:$0xff]
        %1359 = vst [vmem:[%s1253 + $0x1a0] sm:$0xff] %v1358
        %v1360 = vld [vmem:[%s1252 + $0x1a8] sm:$0xff]
        %1361 = vst [vmem:[%s1253 + $0x1a8] sm:$0xff] %v1360
        %v1362 = vld [vmem:[%s1252 + $0x1b0] sm:$0xff]
        %1363 = vst [vmem:[%s1253 + $0x1b0] sm:$0xff] %v1362
        %v1364 = vld [vmem:[%s1252 + $0x1b8] sm:$0xff]
        %1365 = vst [vmem:[%s1253 + $0x1b8] sm:$0xff] %v1364
        %v1366 = vld [vmem:[%s1252 + $0x1c0] sm:$0xff]
        %1367 = vst [vmem:[%s1253 + $0x1c0] sm:$0xff] %v1366
        %v1368 = vld [vmem:[%s1252 + $0x1c8] sm:$0xff]
        %1369 = vst [vmem:[%s1253 + $0x1c8] sm:$0xff] %v1368
        %v1370 = vld [vmem:[%s1252 + $0x1d0] sm:$0xff]
        %1371 = vst [vmem:[%s1253 + $0x1d0] sm:$0xff] %v1370
        %v1372 = vld [vmem:[%s1252 + $0x1d8] sm:$0xff]
        %1373 = vst [vmem:[%s1253 + $0x1d8] sm:$0xff] %v1372
        %v1374 = vld [vmem:[%s1252 + $0x1e0] sm:$0xff]
        %1375 = vst [vmem:[%s1253 + $0x1e0] sm:$0xff] %v1374
        %v1376 = vld [vmem:[%s1252 + $0x1e8] sm:$0xff]
        %1377 = vst [vmem:[%s1253 + $0x1e8] sm:$0xff] %v1376
        %v1378 = vld [vmem:[%s1252 + $0x1f0] sm:$0xff]
        %1379 = vst [vmem:[%s1253 + $0x1f0] sm:$0xff] %v1378
        %v1380 = vld [vmem:[%s1252 + $0x1f8] sm:$0xff]
        %1381 = vst [vmem:[%s1253 + $0x1f8] sm:$0xff] %v1380
        %v1382 = vld [vmem:[%s1252 + $0x200] sm:$0xff]
        %1383 = vst [vmem:[%s1253 + $0x200] sm:$0xff] %v1382
        %v1384 = vld [vmem:[%s1252 + $0x208] sm:$0xff]
        %1385 = vst [vmem:[%s1253 + $0x208] sm:$0xff] %v1384
        %v1386 = vld [vmem:[%s1252 + $0x210] sm:$0xff]
        %1387 = vst [vmem:[%s1253 + $0x210] sm:$0xff] %v1386
        %v1388 = vld [vmem:[%s1252 + $0x218] sm:$0xff]
        %1389 = vst [vmem:[%s1253 + $0x218] sm:$0xff] %v1388
        %v1390 = vld [vmem:[%s1252 + $0x220] sm:$0xff]
        %1391 = vst [vmem:[%s1253 + $0x220] sm:$0xff] %v1390
        %v1392 = vld [vmem:[%s1252 + $0x228] sm:$0xff]
        %1393 = vst [vmem:[%s1253 + $0x228] sm:$0xff] %v1392
        %v1394 = vld [vmem:[%s1252 + $0x230] sm:$0xff]
        %1395 = vst [vmem:[%s1253 + $0x230] sm:$0xff] %v1394
        %v1396 = vld [vmem:[%s1252 + $0x238] sm:$0xff]
        %1397 = vst [vmem:[%s1253 + $0x238] sm:$0xff] %v1396
        %v1398 = vld [vmem:[%s1252 + $0x240] sm:$0xff]
        %1399 = vst [vmem:[%s1253 + $0x240] sm:$0xff] %v1398
        %v1400 = vld [vmem:[%s1252 + $0x248] sm:$0xff]
        %1401 = vst [vmem:[%s1253 + $0x248] sm:$0xff] %v1400
        %v1402 = vld [vmem:[%s1252 + $0x250] sm:$0xff]
        %1403 = vst [vmem:[%s1253 + $0x250] sm:$0xff] %v1402
        %v1404 = vld [vmem:[%s1252 + $0x258] sm:$0xff]
        %1405 = vst [vmem:[%s1253 + $0x258] sm:$0xff] %v1404
        %v1406 = vld [vmem:[%s1252 + $0x260] sm:$0xff]
        %1407 = vst [vmem:[%s1253 + $0x260] sm:$0xff] %v1406
        %v1408 = vld [vmem:[%s1252 + $0x268] sm:$0xff]
        %1409 = vst [vmem:[%s1253 + $0x268] sm:$0xff] %v1408
        %v1410 = vld [vmem:[%s1252 + $0x270] sm:$0xff]
        %1411 = vst [vmem:[%s1253 + $0x270] sm:$0xff] %v1410
        %v1412 = vld [vmem:[%s1252 + $0x278] sm:$0xff]
        %1413 = vst [vmem:[%s1253 + $0x278] sm:$0xff] %v1412
        %v1414 = vld [vmem:[%s1252 + $0x280] sm:$0xff]
        %1415 = vst [vmem:[%s1253 + $0x280] sm:$0xff] %v1414
        %v1416 = vld [vmem:[%s1252 + $0x288] sm:$0xff]
        %1417 = vst [vmem:[%s1253 + $0x288] sm:$0xff] %v1416
        %v1418 = vld [vmem:[%s1252 + $0x290] sm:$0xff]
        %1419 = vst [vmem:[%s1253 + $0x290] sm:$0xff] %v1418
        %v1420 = vld [vmem:[%s1252 + $0x298] sm:$0xff]
        %1421 = vst [vmem:[%s1253 + $0x298] sm:$0xff] %v1420
        %v1422 = vld [vmem:[%s1252 + $0x2a0] sm:$0xff]
        %1423 = vst [vmem:[%s1253 + $0x2a0] sm:$0xff] %v1422
        %v1424 = vld [vmem:[%s1252 + $0x2a8] sm:$0xff]
        %1425 = vst [vmem:[%s1253 + $0x2a8] sm:$0xff] %v1424
        %v1426 = vld [vmem:[%s1252 + $0x2b0] sm:$0xff]
        %1427 = vst [vmem:[%s1253 + $0x2b0] sm:$0xff] %v1426
        %v1428 = vld [vmem:[%s1252 + $0x2b8] sm:$0xff]
        %1429 = vst [vmem:[%s1253 + $0x2b8] sm:$0xff] %v1428
        %v1430 = vld [vmem:[%s1252 + $0x2c0] sm:$0xff]
        %1431 = vst [vmem:[%s1253 + $0x2c0] sm:$0xff] %v1430
        %v1432 = vld [vmem:[%s1252 + $0x2c8] sm:$0xff]
        %1433 = vst [vmem:[%s1253 + $0x2c8] sm:$0xff] %v1432
        %v1434 = vld [vmem:[%s1252 + $0x2d0] sm:$0xff]
        %1435 = vst [vmem:[%s1253 + $0x2d0] sm:$0xff] %v1434
        %v1436 = vld [vmem:[%s1252 + $0x2d8] sm:$0xff]
        %1437 = vst [vmem:[%s1253 + $0x2d8] sm:$0xff] %v1436
        %v1438 = vld [vmem:[%s1252 + $0x2e0] sm:$0xff]
        %1439 = vst [vmem:[%s1253 + $0x2e0] sm:$0xff] %v1438
        %v1440 = vld [vmem:[%s1252 + $0x2e8] sm:$0xff]
        %1441 = vst [vmem:[%s1253 + $0x2e8] sm:$0xff] %v1440
        %v1442 = vld [vmem:[%s1252 + $0x2f0] sm:$0xff]
        %1443 = vst [vmem:[%s1253 + $0x2f0] sm:$0xff] %v1442
        %v1444 = vld [vmem:[%s1252 + $0x2f8] sm:$0xff]
        %1445 = vst [vmem:[%s1253 + $0x2f8] sm:$0xff] %v1444
        %v1446 = vld [vmem:[%s1252 + $0x300] sm:$0xff]
        %1447 = vst [vmem:[%s1253 + $0x300] sm:$0xff] %v1446
        %v1448 = vld [vmem:[%s1252 + $0x308] sm:$0xff]
        %1449 = vst [vmem:[%s1253 + $0x308] sm:$0xff] %v1448
        %v1450 = vld [vmem:[%s1252 + $0x310] sm:$0xff]
        %1451 = vst [vmem:[%s1253 + $0x310] sm:$0xff] %v1450
        %v1452 = vld [vmem:[%s1252 + $0x318] sm:$0xff]
        %1453 = vst [vmem:[%s1253 + $0x318] sm:$0xff] %v1452
        %v1454 = vld [vmem:[%s1252 + $0x320] sm:$0xff]
        %1455 = vst [vmem:[%s1253 + $0x320] sm:$0xff] %v1454
        %v1456 = vld [vmem:[%s1252 + $0x328] sm:$0xff]
        %1457 = vst [vmem:[%s1253 + $0x328] sm:$0xff] %v1456
        %v1458 = vld [vmem:[%s1252 + $0x330] sm:$0xff]
        %1459 = vst [vmem:[%s1253 + $0x330] sm:$0xff] %v1458
        %v1460 = vld [vmem:[%s1252 + $0x338] sm:$0xff]
        %1461 = vst [vmem:[%s1253 + $0x338] sm:$0xff] %v1460
        %v1462 = vld [vmem:[%s1252 + $0x340] sm:$0xff]
        %1463 = vst [vmem:[%s1253 + $0x340] sm:$0xff] %v1462
        %v1464 = vld [vmem:[%s1252 + $0x348] sm:$0xff]
        %1465 = vst [vmem:[%s1253 + $0x348] sm:$0xff] %v1464
        %v1466 = vld [vmem:[%s1252 + $0x350] sm:$0xff]
        %1467 = vst [vmem:[%s1253 + $0x350] sm:$0xff] %v1466
        %v1468 = vld [vmem:[%s1252 + $0x358] sm:$0xff]
        %1469 = vst [vmem:[%s1253 + $0x358] sm:$0xff] %v1468
        %v1470 = vld [vmem:[%s1252 + $0x360] sm:$0xff]
        %1471 = vst [vmem:[%s1253 + $0x360] sm:$0xff] %v1470
        %v1472 = vld [vmem:[%s1252 + $0x368] sm:$0xff]
        %1473 = vst [vmem:[%s1253 + $0x368] sm:$0xff] %v1472
        %v1474 = vld [vmem:[%s1252 + $0x370] sm:$0xff]
        %1475 = vst [vmem:[%s1253 + $0x370] sm:$0xff] %v1474
        %v1476 = vld [vmem:[%s1252 + $0x378] sm:$0xff]
        %1477 = vst [vmem:[%s1253 + $0x378] sm:$0xff] %v1476
        %v1478 = vld [vmem:[%s1252 + $0x380] sm:$0xff]
        %1479 = vst [vmem:[%s1253 + $0x380] sm:$0xff] %v1478
        %v1480 = vld [vmem:[%s1252 + $0x388] sm:$0xff]
        %1481 = vst [vmem:[%s1253 + $0x388] sm:$0xff] %v1480
        %v1482 = vld [vmem:[%s1252 + $0x390] sm:$0xff]
        %1483 = vst [vmem:[%s1253 + $0x390] sm:$0xff] %v1482
        %v1484 = vld [vmem:[%s1252 + $0x398] sm:$0xff]
        %1485 = vst [vmem:[%s1253 + $0x398] sm:$0xff] %v1484
        %v1486 = vld [vmem:[%s1252 + $0x3a0] sm:$0xff]
        %1487 = vst [vmem:[%s1253 + $0x3a0] sm:$0xff] %v1486
        %v1488 = vld [vmem:[%s1252 + $0x3a8] sm:$0xff]
        %1489 = vst [vmem:[%s1253 + $0x3a8] sm:$0xff] %v1488
        %v1490 = vld [vmem:[%s1252 + $0x3b0] sm:$0xff]
        %1491 = vst [vmem:[%s1253 + $0x3b0] sm:$0xff] %v1490
        %v1492 = vld [vmem:[%s1252 + $0x3b8] sm:$0xff]
        %1493 = vst [vmem:[%s1253 + $0x3b8] sm:$0xff] %v1492
        %v1494 = vld [vmem:[%s1252 + $0x3c0] sm:$0xff]
        %1495 = vst [vmem:[%s1253 + $0x3c0] sm:$0xff] %v1494
        %v1496 = vld [vmem:[%s1252 + $0x3c8] sm:$0xff]
        %1497 = vst [vmem:[%s1253 + $0x3c8] sm:$0xff] %v1496
        %v1498 = vld [vmem:[%s1252 + $0x3d0] sm:$0xff]
        %1499 = vst [vmem:[%s1253 + $0x3d0] sm:$0xff] %v1498
        %v1500 = vld [vmem:[%s1252 + $0x3d8] sm:$0xff]
        %1501 = vst [vmem:[%s1253 + $0x3d8] sm:$0xff] %v1500
        %v1502 = vld [vmem:[%s1252 + $0x3e0] sm:$0xff]
        %1503 = vst [vmem:[%s1253 + $0x3e0] sm:$0xff] %v1502
        %v1504 = vld [vmem:[%s1252 + $0x3e8] sm:$0xff]
        %1505 = vst [vmem:[%s1253 + $0x3e8] sm:$0xff] %v1504
        %v1506 = vld [vmem:[%s1252 + $0x3f0] sm:$0xff]
        %1507 = vst [vmem:[%s1253 + $0x3f0] sm:$0xff] %v1506
        %v1508 = vld [vmem:[%s1252 + $0x3f8] sm:$0xff]
        %1509 = vst [vmem:[%s1253 + $0x3f8] sm:$0xff] %v1508
      $region203: #{_lambda_.1} parent=197 // loop_footer
        %s1251 = sadd.s32 1, %s1247
      $region204: #{_lambda_.1} parent=197 // loop_footer_branch
        %1246 = sbr.rel target = $region200
      $region205: #{_lambda_.1} parent=197 // loop_exit
        _
    $region198: #{_lambda_.1} parent=182 // pred_fallthru
      _
    %p1510 = pneg %p1242
    // Predicated region
    $region206: #{_lambda_.1} parent=182 // pred_check
      _
    $region207: #{_lambda_.1} parent=182 // pred_check_branch
      %1512 = sbr.rel (%p1242) target = $region209
    $region208: #{_lambda_.1} parent=182 // pred_region
      %s1513 = sand.u32 1024, 7
    $region209: #{_lambda_.1} parent=182 // pred_fallthru
      _
  $region183: #{_lambda_.1} parent=0 // pred_fallthru
    _
  // Predicated region
  $region184: #{_lambda_.1} parent=0 // pred_check
    %p1226 = pneg %p1222
  $region185: #{_lambda_.1} parent=0 // pred_check_branch
    %1228 = sbr.rel (%p1226) target = $region187
  $region186: #{_lambda_.1} parent=0 // pred_region
    %s1229 = sshll.u32 1, 1024
    %s1230 = ssub.s32 %s1229, 1
    loop: start=0, step=1, limit=1
    $region188: #{_lambda_.1} parent=186 // loop_pre_header
      _
    $region189: #{_lambda_.1} parent=186 // loop_header
      %s1232 = sphi 0, %s1236
      %p1233 = scmp.ge.s32.totalorder %s1232, 1
      %s1237 = sphi %s7, %s7
      %s1238 = sphi [#allocation7], [#allocation7]
    $region190: #{_lambda_.1} parent=186 // loop_header_branch
      %1235 = sbr.rel (%p1233) target = $region194
    $region191: #{_lambda_.1} parent=186 // loop_body
      %v1239 = vld [vmem:[%s1237] sm:%s1230]
      %1240 = vst [vmem:[%s1238] sm:%s1230] %v1239
    $region192: #{_lambda_.1} parent=186 // loop_footer
      %s1236 = sadd.s32 1, %s1232
    $region193: #{_lambda_.1} parent=186 // loop_footer_branch
      %1231 = sbr.rel target = $region189
    $region194: #{_lambda_.1} parent=186 // loop_exit
      _
  $region187: #{_lambda_.1} parent=0 // pred_fallthru
    _
  // Predicated region
  $region210: #{_lambda_.1} parent=0 // pred_check
    _
  $region211: #{_lambda_.1} parent=0 // pred_check_branch
    %1516 = sbr.rel (0) target = $region213
  $region212: #{_lambda_.1} parent=0 // pred_region
    %1517 = vsyncadd %s1220, 16384
  $region213: #{_lambda_.1} parent=0 // pred_fallthru
    _
  %s1518 = scalar_lea.sflag [#allocation10], 6
  %p1520 = scmp.lt.u32.totalorder 384, 8
  %p1521 = pneg %p1520
  // Predicated region
  $region214: #{_lambda_.1} parent=0 // pred_check
    _
  $region215: #{_lambda_.1} parent=0 // pred_check_branch
    %1523 = sbr.rel (%p1520) target = $region217
  $region216: #{_lambda_.1} parent=0 // pred_region
    %s1539 = sand.u32 384, 7
    %p1540 = scmp.eq.s32.totalorder %s1539, 0
    // Predicated region
    $region229: #{_lambda_.1} parent=216 // pred_check
      %p1541 = pneg %p1540
    $region230: #{_lambda_.1} parent=216 // pred_check_branch
      %1543 = sbr.rel (%p1541) target = $region232
    $region231: #{_lambda_.1} parent=216 // pred_region
      loop: start=0, step=1, limit=1
      $region233: #{_lambda_.1} parent=231 // loop_pre_header
        _
      $region234: #{_lambda_.1} parent=231 // loop_header
        %s1545 = sphi 0, %s1549
        %p1546 = scmp.ge.s32.totalorder %s1545, 1
        %s1550 = sphi %s8, %s8
        %s1551 = sphi [#allocation8], [#allocation8]
      $region235: #{_lambda_.1} parent=231 // loop_header_branch
        %1548 = sbr.rel (%p1546) target = $region239
      $region236: #{_lambda_.1} parent=231 // loop_body
        %v1552 = vld [vmem:[%s1550] sm:$0xff]
        %1553 = vst [vmem:[%s1551] sm:$0xff] %v1552
        %v1554 = vld [vmem:[%s1550 + $0x8] sm:$0xff]
        %1555 = vst [vmem:[%s1551 + $0x8] sm:$0xff] %v1554
        %v1556 = vld [vmem:[%s1550 + $0x10] sm:$0xff]
        %1557 = vst [vmem:[%s1551 + $0x10] sm:$0xff] %v1556
        %v1558 = vld [vmem:[%s1550 + $0x18] sm:$0xff]
        %1559 = vst [vmem:[%s1551 + $0x18] sm:$0xff] %v1558
        %v1560 = vld [vmem:[%s1550 + $0x20] sm:$0xff]
        %1561 = vst [vmem:[%s1551 + $0x20] sm:$0xff] %v1560
        %v1562 = vld [vmem:[%s1550 + $0x28] sm:$0xff]
        %1563 = vst [vmem:[%s1551 + $0x28] sm:$0xff] %v1562
        %v1564 = vld [vmem:[%s1550 + $0x30] sm:$0xff]
        %1565 = vst [vmem:[%s1551 + $0x30] sm:$0xff] %v1564
        %v1566 = vld [vmem:[%s1550 + $0x38] sm:$0xff]
        %1567 = vst [vmem:[%s1551 + $0x38] sm:$0xff] %v1566
        %v1568 = vld [vmem:[%s1550 + $0x40] sm:$0xff]
        %1569 = vst [vmem:[%s1551 + $0x40] sm:$0xff] %v1568
        %v1570 = vld [vmem:[%s1550 + $0x48] sm:$0xff]
        %1571 = vst [vmem:[%s1551 + $0x48] sm:$0xff] %v1570
        %v1572 = vld [vmem:[%s1550 + $0x50] sm:$0xff]
        %1573 = vst [vmem:[%s1551 + $0x50] sm:$0xff] %v1572
        %v1574 = vld [vmem:[%s1550 + $0x58] sm:$0xff]
        %1575 = vst [vmem:[%s1551 + $0x58] sm:$0xff] %v1574
        %v1576 = vld [vmem:[%s1550 + $0x60] sm:$0xff]
        %1577 = vst [vmem:[%s1551 + $0x60] sm:$0xff] %v1576
        %v1578 = vld [vmem:[%s1550 + $0x68] sm:$0xff]
        %1579 = vst [vmem:[%s1551 + $0x68] sm:$0xff] %v1578
        %v1580 = vld [vmem:[%s1550 + $0x70] sm:$0xff]
        %1581 = vst [vmem:[%s1551 + $0x70] sm:$0xff] %v1580
        %v1582 = vld [vmem:[%s1550 + $0x78] sm:$0xff]
        %1583 = vst [vmem:[%s1551 + $0x78] sm:$0xff] %v1582
        %v1584 = vld [vmem:[%s1550 + $0x80] sm:$0xff]
        %1585 = vst [vmem:[%s1551 + $0x80] sm:$0xff] %v1584
        %v1586 = vld [vmem:[%s1550 + $0x88] sm:$0xff]
        %1587 = vst [vmem:[%s1551 + $0x88] sm:$0xff] %v1586
        %v1588 = vld [vmem:[%s1550 + $0x90] sm:$0xff]
        %1589 = vst [vmem:[%s1551 + $0x90] sm:$0xff] %v1588
        %v1590 = vld [vmem:[%s1550 + $0x98] sm:$0xff]
        %1591 = vst [vmem:[%s1551 + $0x98] sm:$0xff] %v1590
        %v1592 = vld [vmem:[%s1550 + $0xa0] sm:$0xff]
        %1593 = vst [vmem:[%s1551 + $0xa0] sm:$0xff] %v1592
        %v1594 = vld [vmem:[%s1550 + $0xa8] sm:$0xff]
        %1595 = vst [vmem:[%s1551 + $0xa8] sm:$0xff] %v1594
        %v1596 = vld [vmem:[%s1550 + $0xb0] sm:$0xff]
        %1597 = vst [vmem:[%s1551 + $0xb0] sm:$0xff] %v1596
        %v1598 = vld [vmem:[%s1550 + $0xb8] sm:$0xff]
        %1599 = vst [vmem:[%s1551 + $0xb8] sm:$0xff] %v1598
        %v1600 = vld [vmem:[%s1550 + $0xc0] sm:$0xff]
        %1601 = vst [vmem:[%s1551 + $0xc0] sm:$0xff] %v1600
        %v1602 = vld [vmem:[%s1550 + $0xc8] sm:$0xff]
        %1603 = vst [vmem:[%s1551 + $0xc8] sm:$0xff] %v1602
        %v1604 = vld [vmem:[%s1550 + $0xd0] sm:$0xff]
        %1605 = vst [vmem:[%s1551 + $0xd0] sm:$0xff] %v1604
        %v1606 = vld [vmem:[%s1550 + $0xd8] sm:$0xff]
        %1607 = vst [vmem:[%s1551 + $0xd8] sm:$0xff] %v1606
        %v1608 = vld [vmem:[%s1550 + $0xe0] sm:$0xff]
        %1609 = vst [vmem:[%s1551 + $0xe0] sm:$0xff] %v1608
        %v1610 = vld [vmem:[%s1550 + $0xe8] sm:$0xff]
        %1611 = vst [vmem:[%s1551 + $0xe8] sm:$0xff] %v1610
        %v1612 = vld [vmem:[%s1550 + $0xf0] sm:$0xff]
        %1613 = vst [vmem:[%s1551 + $0xf0] sm:$0xff] %v1612
        %v1614 = vld [vmem:[%s1550 + $0xf8] sm:$0xff]
        %1615 = vst [vmem:[%s1551 + $0xf8] sm:$0xff] %v1614
        %v1616 = vld [vmem:[%s1550 + $0x100] sm:$0xff]
        %1617 = vst [vmem:[%s1551 + $0x100] sm:$0xff] %v1616
        %v1618 = vld [vmem:[%s1550 + $0x108] sm:$0xff]
        %1619 = vst [vmem:[%s1551 + $0x108] sm:$0xff] %v1618
        %v1620 = vld [vmem:[%s1550 + $0x110] sm:$0xff]
        %1621 = vst [vmem:[%s1551 + $0x110] sm:$0xff] %v1620
        %v1622 = vld [vmem:[%s1550 + $0x118] sm:$0xff]
        %1623 = vst [vmem:[%s1551 + $0x118] sm:$0xff] %v1622
        %v1624 = vld [vmem:[%s1550 + $0x120] sm:$0xff]
        %1625 = vst [vmem:[%s1551 + $0x120] sm:$0xff] %v1624
        %v1626 = vld [vmem:[%s1550 + $0x128] sm:$0xff]
        %1627 = vst [vmem:[%s1551 + $0x128] sm:$0xff] %v1626
        %v1628 = vld [vmem:[%s1550 + $0x130] sm:$0xff]
        %1629 = vst [vmem:[%s1551 + $0x130] sm:$0xff] %v1628
        %v1630 = vld [vmem:[%s1550 + $0x138] sm:$0xff]
        %1631 = vst [vmem:[%s1551 + $0x138] sm:$0xff] %v1630
        %v1632 = vld [vmem:[%s1550 + $0x140] sm:$0xff]
        %1633 = vst [vmem:[%s1551 + $0x140] sm:$0xff] %v1632
        %v1634 = vld [vmem:[%s1550 + $0x148] sm:$0xff]
        %1635 = vst [vmem:[%s1551 + $0x148] sm:$0xff] %v1634
        %v1636 = vld [vmem:[%s1550 + $0x150] sm:$0xff]
        %1637 = vst [vmem:[%s1551 + $0x150] sm:$0xff] %v1636
        %v1638 = vld [vmem:[%s1550 + $0x158] sm:$0xff]
        %1639 = vst [vmem:[%s1551 + $0x158] sm:$0xff] %v1638
        %v1640 = vld [vmem:[%s1550 + $0x160] sm:$0xff]
        %1641 = vst [vmem:[%s1551 + $0x160] sm:$0xff] %v1640
        %v1642 = vld [vmem:[%s1550 + $0x168] sm:$0xff]
        %1643 = vst [vmem:[%s1551 + $0x168] sm:$0xff] %v1642
        %v1644 = vld [vmem:[%s1550 + $0x170] sm:$0xff]
        %1645 = vst [vmem:[%s1551 + $0x170] sm:$0xff] %v1644
        %v1646 = vld [vmem:[%s1550 + $0x178] sm:$0xff]
        %1647 = vst [vmem:[%s1551 + $0x178] sm:$0xff] %v1646
      $region237: #{_lambda_.1} parent=231 // loop_footer
        %s1549 = sadd.s32 1, %s1545
      $region238: #{_lambda_.1} parent=231 // loop_footer_branch
        %1544 = sbr.rel target = $region234
      $region239: #{_lambda_.1} parent=231 // loop_exit
        _
    $region232: #{_lambda_.1} parent=216 // pred_fallthru
      _
    %p1648 = pneg %p1540
    // Predicated region
    $region240: #{_lambda_.1} parent=216 // pred_check
      _
    $region241: #{_lambda_.1} parent=216 // pred_check_branch
      %1650 = sbr.rel (%p1540) target = $region243
    $region242: #{_lambda_.1} parent=216 // pred_region
      %s1651 = sand.u32 384, 7
    $region243: #{_lambda_.1} parent=216 // pred_fallthru
      _
  $region217: #{_lambda_.1} parent=0 // pred_fallthru
    _
  // Predicated region
  $region218: #{_lambda_.1} parent=0 // pred_check
    %p1524 = pneg %p1520
  $region219: #{_lambda_.1} parent=0 // pred_check_branch
    %1526 = sbr.rel (%p1524) target = $region221
  $region220: #{_lambda_.1} parent=0 // pred_region
    %s1527 = sshll.u32 1, 384
    %s1528 = ssub.s32 %s1527, 1
    loop: start=0, step=1, limit=1
    $region222: #{_lambda_.1} parent=220 // loop_pre_header
      _
    $region223: #{_lambda_.1} parent=220 // loop_header
      %s1530 = sphi 0, %s1534
      %p1531 = scmp.ge.s32.totalorder %s1530, 1
      %s1535 = sphi %s8, %s8
      %s1536 = sphi [#allocation8], [#allocation8]
    $region224: #{_lambda_.1} parent=220 // loop_header_branch
      %1533 = sbr.rel (%p1531) target = $region228
    $region225: #{_lambda_.1} parent=220 // loop_body
      %v1537 = vld [vmem:[%s1535] sm:%s1528]
      %1538 = vst [vmem:[%s1536] sm:%s1528] %v1537
    $region226: #{_lambda_.1} parent=220 // loop_footer
      %s1534 = sadd.s32 1, %s1530
    $region227: #{_lambda_.1} parent=220 // loop_footer_branch
      %1529 = sbr.rel target = $region223
    $region228: #{_lambda_.1} parent=220 // loop_exit
      _
  $region221: #{_lambda_.1} parent=0 // pred_fallthru
    _
  // Predicated region
  $region244: #{_lambda_.1} parent=0 // pred_check
    _
  $region245: #{_lambda_.1} parent=0 // pred_check_branch
    %1654 = sbr.rel (0) target = $region247
  $region246: #{_lambda_.1} parent=0 // pred_region
    %1655 = vsyncadd %s1518, 6144
  $region247: #{_lambda_.1} parent=0 // pred_fallthru
    _
  %1656 = vst [vmem:[#allocation9] sm:$0xff] 0.0
  %1657 = vst [vmem:[#allocation9 + $0x8] sm:$0xff] 0.0
  %1658 = vst [vmem:[#allocation9 + $0x10] sm:$0xff] 0.0
  %1659 = vst [vmem:[#allocation9 + $0x18] sm:$0xff] 0.0
  %1660 = vst [vmem:[#allocation9 + $0x20] sm:$0xff] 0.0
  %1661 = vst [vmem:[#allocation9 + $0x28] sm:$0xff] 0.0
  %1662 = vst [vmem:[#allocation9 + $0x30] sm:$0xff] 0.0
  %1663 = vst [vmem:[#allocation9 + $0x38] sm:$0xff] 0.0
  %1664 = vst [vmem:[#allocation9 + $0x40] sm:$0xff] 0.0
  %1665 = vst [vmem:[#allocation9 + $0x48] sm:$0xff] 0.0
  %1666 = vst [vmem:[#allocation9 + $0x50] sm:$0xff] 0.0
  %1667 = vst [vmem:[#allocation9 + $0x58] sm:$0xff] 0.0
  %1668 = vst [vmem:[#allocation9 + $0x60] sm:$0xff] 0.0
  %1669 = vst [vmem:[#allocation9 + $0x68] sm:$0xff] 0.0
  %1670 = vst [vmem:[#allocation9 + $0x70] sm:$0xff] 0.0
  %1671 = vst [vmem:[#allocation9 + $0x78] sm:$0xff] 0.0
  %1672 = vst [vmem:[#allocation9 + $0x80] sm:$0xff] 0.0
  %1673 = vst [vmem:[#allocation9 + $0x88] sm:$0xff] 0.0
  %1674 = vst [vmem:[#allocation9 + $0x90] sm:$0xff] 0.0
  %1675 = vst [vmem:[#allocation9 + $0x98] sm:$0xff] 0.0
  %1676 = vst [vmem:[#allocation9 + $0xa0] sm:$0xff] 0.0
  %1677 = vst [vmem:[#allocation9 + $0xa8] sm:$0xff] 0.0
  %1678 = vst [vmem:[#allocation9 + $0xb0] sm:$0xff] 0.0
  %1679 = vst [vmem:[#allocation9 + $0xb8] sm:$0xff] 0.0
  %1680 = vst [vmem:[#allocation9 + $0xc0] sm:$0xff] 0.0
  %1681 = vst [vmem:[#allocation9 + $0xc8] sm:$0xff] 0.0
  %1682 = vst [vmem:[#allocation9 + $0xd0] sm:$0xff] 0.0
  %1683 = vst [vmem:[#allocation9 + $0xd8] sm:$0xff] 0.0
  %1684 = vst [vmem:[#allocation9 + $0xe0] sm:$0xff] 0.0
  %1685 = vst [vmem:[#allocation9 + $0xe8] sm:$0xff] 0.0
  %1686 = vst [vmem:[#allocation9 + $0xf0] sm:$0xff] 0.0
  %1687 = vst [vmem:[#allocation9 + $0xf8] sm:$0xff] 0.0
  %1688 = vst [vmem:[#allocation9 + $0x100] sm:$0xff] 0.0
  %1689 = vst [vmem:[#allocation9 + $0x108] sm:$0xff] 0.0
  %1690 = vst [vmem:[#allocation9 + $0x110] sm:$0xff] 0.0
  %1691 = vst [vmem:[#allocation9 + $0x118] sm:$0xff] 0.0
  %1692 = vst [vmem:[#allocation9 + $0x120] sm:$0xff] 0.0
  %1693 = vst [vmem:[#allocation9 + $0x128] sm:$0xff] 0.0
  %1694 = vst [vmem:[#allocation9 + $0x130] sm:$0xff] 0.0
  %1695 = vst [vmem:[#allocation9 + $0x138] sm:$0xff] 0.0
  %1696 = vst [vmem:[#allocation9 + $0x140] sm:$0xff] 0.0
  %1697 = vst [vmem:[#allocation9 + $0x148] sm:$0xff] 0.0
  %1698 = vst [vmem:[#allocation9 + $0x150] sm:$0xff] 0.0
  %1699 = vst [vmem:[#allocation9 + $0x158] sm:$0xff] 0.0
  %1700 = vst [vmem:[#allocation9 + $0x160] sm:$0xff] 0.0
  %1701 = vst [vmem:[#allocation9 + $0x168] sm:$0xff] 0.0
  %1702 = vst [vmem:[#allocation9 + $0x170] sm:$0xff] 0.0
  %1703 = vst [vmem:[#allocation9 + $0x178] sm:$0xff] 0.0
  %1704 = vst [vmem:[#allocation9 + $0x180] sm:$0xff] 0.0
  %1705 = vst [vmem:[#allocation9 + $0x188] sm:$0xff] 0.0
  %1706 = vst [vmem:[#allocation9 + $0x190] sm:$0xff] 0.0
  %1707 = vst [vmem:[#allocation9 + $0x198] sm:$0xff] 0.0
  %1708 = vst [vmem:[#allocation9 + $0x1a0] sm:$0xff] 0.0
  %1709 = vst [vmem:[#allocation9 + $0x1a8] sm:$0xff] 0.0
  %1710 = vst [vmem:[#allocation9 + $0x1b0] sm:$0xff] 0.0
  %1711 = vst [vmem:[#allocation9 + $0x1b8] sm:$0xff] 0.0
  %1712 = vst [vmem:[#allocation9 + $0x1c0] sm:$0xff] 0.0
  %1713 = vst [vmem:[#allocation9 + $0x1c8] sm:$0xff] 0.0
  %1714 = vst [vmem:[#allocation9 + $0x1d0] sm:$0xff] 0.0
  %1715 = vst [vmem:[#allocation9 + $0x1d8] sm:$0xff] 0.0
  %1716 = vst [vmem:[#allocation9 + $0x1e0] sm:$0xff] 0.0
  %1717 = vst [vmem:[#allocation9 + $0x1e8] sm:$0xff] 0.0
  %1718 = vst [vmem:[#allocation9 + $0x1f0] sm:$0xff] 0.0
  %1719 = vst [vmem:[#allocation9 + $0x1f8] sm:$0xff] 0.0
  %1720 = vst [vmem:[#allocation9 + $0x200] sm:$0xff] 0.0
  %1721 = vst [vmem:[#allocation9 + $0x208] sm:$0xff] 0.0
  %1722 = vst [vmem:[#allocation9 + $0x210] sm:$0xff] 0.0
  %1723 = vst [vmem:[#allocation9 + $0x218] sm:$0xff] 0.0
  %1724 = vst [vmem:[#allocation9 + $0x220] sm:$0xff] 0.0
  %1725 = vst [vmem:[#allocation9 + $0x228] sm:$0xff] 0.0
  %1726 = vst [vmem:[#allocation9 + $0x230] sm:$0xff] 0.0
  %1727 = vst [vmem:[#allocation9 + $0x238] sm:$0xff] 0.0
  %1728 = vst [vmem:[#allocation9 + $0x240] sm:$0xff] 0.0
  %1729 = vst [vmem:[#allocation9 + $0x248] sm:$0xff] 0.0
  %1730 = vst [vmem:[#allocation9 + $0x250] sm:$0xff] 0.0
  %1731 = vst [vmem:[#allocation9 + $0x258] sm:$0xff] 0.0
  %1732 = vst [vmem:[#allocation9 + $0x260] sm:$0xff] 0.0
  %1733 = vst [vmem:[#allocation9 + $0x268] sm:$0xff] 0.0
  %1734 = vst [vmem:[#allocation9 + $0x270] sm:$0xff] 0.0
  %1735 = vst [vmem:[#allocation9 + $0x278] sm:$0xff] 0.0
  %1736 = vst [vmem:[#allocation9 + $0x280] sm:$0xff] 0.0
  %1737 = vst [vmem:[#allocation9 + $0x288] sm:$0xff] 0.0
  %1738 = vst [vmem:[#allocation9 + $0x290] sm:$0xff] 0.0
  %1739 = vst [vmem:[#allocation9 + $0x298] sm:$0xff] 0.0
  %1740 = vst [vmem:[#allocation9 + $0x2a0] sm:$0xff] 0.0
  %1741 = vst [vmem:[#allocation9 + $0x2a8] sm:$0xff] 0.0
  %1742 = vst [vmem:[#allocation9 + $0x2b0] sm:$0xff] 0.0
  %1743 = vst [vmem:[#allocation9 + $0x2b8] sm:$0xff] 0.0
  %1744 = vst [vmem:[#allocation9 + $0x2c0] sm:$0xff] 0.0
  %1745 = vst [vmem:[#allocation9 + $0x2c8] sm:$0xff] 0.0
  %1746 = vst [vmem:[#allocation9 + $0x2d0] sm:$0xff] 0.0
  %1747 = vst [vmem:[#allocation9 + $0x2d8] sm:$0xff] 0.0
  %1748 = vst [vmem:[#allocation9 + $0x2e0] sm:$0xff] 0.0
  %1749 = vst [vmem:[#allocation9 + $0x2e8] sm:$0xff] 0.0
  %1750 = vst [vmem:[#allocation9 + $0x2f0] sm:$0xff] 0.0
  %1751 = vst [vmem:[#allocation9 + $0x2f8] sm:$0xff] 0.0
  %v1752 = vlaneseq
  %v1753 = vshrl.u32 %v1752, 7
  %v1754 = vadd.s32 %v1753, 8
  %v1755 = vadd.s32 %v1753, 16
  %v1756 = vadd.s32 %v1753, 24
  %v1757 = vadd.s32 %v1753, 32
  %v1758 = vadd.s32 %v1753, 40
  %v1759 = vadd.s32 %v1753, 48
  %v1760 = vadd.s32 %v1753, 56
  %vm1761 = vcmp.lt.s32.totalorder %v1753, 0
  %v1762 = vsub.s32 0, %v1753
  %v1763 = vsel %vm1761, %v1762, %v1753
  %v1764 = vshrl.u32 %v1763, 5
  %v1765 = vand.u32 %v1763, 31
  %v1766 = vsub.s32 0, %v1765
  %v1767 = vsel %vm1761, %v1766, %v1765
  %vm1768 = vcmp.lt.s32.totalorder %v1754, 0
  %v1769 = vsub.s32 0, %v1754
  %v1770 = vsel %vm1768, %v1769, %v1754
  %v1771 = vshrl.u32 %v1770, 5
  %v1772 = vand.u32 %v1770, 31
  %v1773 = vsub.s32 0, %v1772
  %v1774 = vsel %vm1768, %v1773, %v1772
  %vm1775 = vcmp.lt.s32.totalorder %v1755, 0
  %v1776 = vsub.s32 0, %v1755
  %v1777 = vsel %vm1775, %v1776, %v1755
  %v1778 = vshrl.u32 %v1777, 5
  %v1779 = vand.u32 %v1777, 31
  %v1780 = vsub.s32 0, %v1779
  %v1781 = vsel %vm1775, %v1780, %v1779
  %vm1782 = vcmp.lt.s32.totalorder %v1756, 0
  %v1783 = vsub.s32 0, %v1756
  %v1784 = vsel %vm1782, %v1783, %v1756
  %v1785 = vshrl.u32 %v1784, 5
  %v1786 = vand.u32 %v1784, 31
  %v1787 = vsub.s32 0, %v1786
  %v1788 = vsel %vm1782, %v1787, %v1786
  %vm1789 = vcmp.lt.s32.totalorder %v1757, 0
  %v1790 = vsub.s32 0, %v1757
  %v1791 = vsel %vm1789, %v1790, %v1757
  %v1792 = vshrl.u32 %v1791, 5
  %v1793 = vand.u32 %v1791, 31
  %v1794 = vsub.s32 0, %v1793
  %v1795 = vsel %vm1789, %v1794, %v1793
  %vm1796 = vcmp.lt.s32.totalorder %v1758, 0
  %v1797 = vsub.s32 0, %v1758
  %v1798 = vsel %vm1796, %v1797, %v1758
  %v1799 = vshrl.u32 %v1798, 5
  %v1800 = vand.u32 %v1798, 31
  %v1801 = vsub.s32 0, %v1800
  %v1802 = vsel %vm1796, %v1801, %v1800
  %vm1803 = vcmp.lt.s32.totalorder %v1759, 0
  %v1804 = vsub.s32 0, %v1759
  %v1805 = vsel %vm1803, %v1804, %v1759
  %v1806 = vshrl.u32 %v1805, 5
  %v1807 = vand.u32 %v1805, 31
  %v1808 = vsub.s32 0, %v1807
  %v1809 = vsel %vm1803, %v1808, %v1807
  %vm1810 = vcmp.lt.s32.totalorder %v1760, 0
  %v1811 = vsub.s32 0, %v1760
  %v1812 = vsel %vm1810, %v1811, %v1760
  %v1813 = vshrl.u32 %v1812, 5
  %v1814 = vand.u32 %v1812, 31
  %v1815 = vsub.s32 0, %v1814
  %v1816 = vsel %vm1810, %v1815, %v1814
  %vm1817 = vcmp.ne.s32.totalorder %v1767, 0
  %vm1818 = vcmp.ne.s32.totalorder %v1774, 0
  %vm1819 = vcmp.ne.s32.totalorder %v1781, 0
  %vm1820 = vcmp.ne.s32.totalorder %v1788, 0
  %vm1821 = vcmp.ne.s32.totalorder %v1795, 0
  %vm1822 = vcmp.ne.s32.totalorder %v1802, 0
  %vm1823 = vcmp.ne.s32.totalorder %v1809, 0
  %vm1824 = vcmp.ne.s32.totalorder %v1816, 0
  %vm1825 = vcmp.lt.s32.totalorder %v1767, 0
  %vm1826 = vcmp.lt.s32.totalorder %v1774, 0
  %vm1827 = vcmp.lt.s32.totalorder %v1781, 0
  %vm1828 = vcmp.lt.s32.totalorder %v1788, 0
  %vm1829 = vcmp.lt.s32.totalorder %v1795, 0
  %vm1830 = vcmp.lt.s32.totalorder %v1802, 0
  %vm1831 = vcmp.lt.s32.totalorder %v1809, 0
  %vm1832 = vcmp.lt.s32.totalorder %v1816, 0
  %vm1833 = vmand %vm1825, %vm1817
  %vm1834 = vmand %vm1826, %vm1818
  %vm1835 = vmand %vm1827, %vm1819
  %vm1836 = vmand %vm1828, %vm1820
  %vm1837 = vmand %vm1829, %vm1821
  %vm1838 = vmand %vm1830, %vm1822
  %vm1839 = vmand %vm1831, %vm1823
  %vm1840 = vmand %vm1832, %vm1824
  %v1841 = vadd.s32 %v1767, 32
  %v1842 = vadd.s32 %v1774, 32
  %v1843 = vadd.s32 %v1781, 32
  %v1844 = vadd.s32 %v1788, 32
  %v1845 = vadd.s32 %v1795, 32
  %v1846 = vadd.s32 %v1802, 32
  %v1847 = vadd.s32 %v1809, 32
  %v1848 = vadd.s32 %v1816, 32
  %v1849 = vsel %vm1833, %v1841, %v1767
  %v1850 = vsel %vm1834, %v1842, %v1774
  %v1851 = vsel %vm1835, %v1843, %v1781
  %v1852 = vsel %vm1836, %v1844, %v1788
  %v1853 = vsel %vm1837, %v1845, %v1795
  %v1854 = vsel %vm1838, %v1846, %v1802
  %v1855 = vsel %vm1839, %v1847, %v1809
  %v1856 = vsel %vm1840, %v1848, %v1816
  %v1857 = vld [vmem:[%s0] sm:$0xff]
  %v1858 = vld [vmem:[%s0 + $0x8] sm:$0xff]
  %v1859 = vld [vmem:[%s0 + $0x10] sm:$0xff]
  %v1860 = vld [vmem:[%s0 + $0x18] sm:$0xff]
  %v1861 = vld [vmem:[%s0 + $0x20] sm:$0xff]
  %v1862 = vld [vmem:[%s0 + $0x28] sm:$0xff]
  %v1863 = vld [vmem:[%s0 + $0x30] sm:$0xff]
  %v1864 = vld [vmem:[%s0 + $0x38] sm:$0xff]
  %s1865 = smul.u32 4, 16
  %s1866 = smul.u32 %s1865, 2
  %s1867 = sshll.u32 %s1866, 4
  %1868 = dma.done [#allocation10], %s1867
  %v1869 = vpack.c.bf16 %v1858, %v1857
  %v1870 = vpack.c.bf16 %v1860, %v1859
  %v1871 = vpack.c.bf16 %v1862, %v1861
  %v1872 = vpack.c.bf16 %v1864, %v1863
  %v1873 = vld [vmem:[#allocation2] sm:$0xff]
  %v1874 = vld [vmem:[#allocation2 + $0x8] sm:$0xff]
  %v1875 = vld [vmem:[#allocation2 + $0x10] sm:$0xff]
  %v1876 = vld [vmem:[#allocation2 + $0x18] sm:$0xff]
  %v1877 = vld [vmem:[#allocation2 + $0x20] sm:$0xff]
  %v1878 = vld [vmem:[#allocation2 + $0x28] sm:$0xff]
  %v1879 = vld [vmem:[#allocation2 + $0x30] sm:$0xff]
  %v1880 = vld [vmem:[#allocation2 + $0x38] sm:$0xff]
  %v1881 = vld [vmem:[#allocation2 + $0x40] sm:$0xff]
  %v1882 = vld [vmem:[#allocation2 + $0x48] sm:$0xff]
  %v1883 = vld [vmem:[#allocation2 + $0x50] sm:$0xff]
  %v1884 = vld [vmem:[#allocation2 + $0x58] sm:$0xff]
  %v1885 = vld [vmem:[#allocation2 + $0x60] sm:$0xff]
  %v1886 = vld [vmem:[#allocation2 + $0x68] sm:$0xff]
  %v1887 = vld [vmem:[#allocation2 + $0x70] sm:$0xff]
  %v1888 = vld [vmem:[#allocation2 + $0x78] sm:$0xff]
  %v1905 = vunpack.c.l.b16 %v1873
  %v1906 = vunpack.c.h.b16 %v1873
  %v1907 = vunpack.c.l.b16 %v1874
  %v1908 = vunpack.c.h.b16 %v1874
  %v1909 = vunpack.c.l.b16 %v1875
  %v1910 = vunpack.c.h.b16 %v1875
  %v1911 = vunpack.c.l.b16 %v1876
  %v1912 = vunpack.c.h.b16 %v1876
  %v1913 = vunpack.c.l.b16 %v1877
  %v1914 = vunpack.c.h.b16 %v1877
  %v1915 = vunpack.c.l.b16 %v1878
  %v1916 = vunpack.c.h.b16 %v1878
  %v1917 = vunpack.c.l.b16 %v1879
  %v1918 = vunpack.c.h.b16 %v1879
  %v1919 = vunpack.c.l.b16 %v1880
  %v1920 = vunpack.c.h.b16 %v1880
  %v1921 = vunpack.c.l.b16 %v1881
  %v1922 = vunpack.c.h.b16 %v1881
  %v1923 = vunpack.c.l.b16 %v1882
  %v1924 = vunpack.c.h.b16 %v1882
  %v1925 = vunpack.c.l.b16 %v1883
  %v1926 = vunpack.c.h.b16 %v1883
  %v1927 = vunpack.c.l.b16 %v1884
  %v1928 = vunpack.c.h.b16 %v1884
  %v1929 = vunpack.c.l.b16 %v1885
  %v1930 = vunpack.c.h.b16 %v1885
  %v1931 = vunpack.c.l.b16 %v1886
  %v1932 = vunpack.c.h.b16 %v1886
  %v1933 = vunpack.c.l.b16 %v1887
  %v1934 = vunpack.c.h.b16 %v1887
  %v1935 = vunpack.c.l.b16 %v1888
  %v1936 = vunpack.c.h.b16 %v1888
  %v1937 = vpack.c.b16 %v1907, %v1905
  %v1938 = vpack.c.b16 %v1908, %v1906
  %v1939 = vpack.c.b16 %v1911, %v1909
  %v1940 = vpack.c.b16 %v1912, %v1910
  %v1941 = vpack.c.b16 %v1915, %v1913
  %v1942 = vpack.c.b16 %v1916, %v1914
  %v1943 = vpack.c.b16 %v1919, %v1917
  %v1944 = vpack.c.b16 %v1920, %v1918
  %v1945 = vpack.c.b16 %v1923, %v1921
  %v1946 = vpack.c.b16 %v1924, %v1922
  %v1947 = vpack.c.b16 %v1927, %v1925
  %v1948 = vpack.c.b16 %v1928, %v1926
  %v1949 = vpack.c.b16 %v1931, %v1929
  %v1950 = vpack.c.b16 %v1932, %v1930
  %v1951 = vpack.c.b16 %v1935, %v1933
  %v1952 = vpack.c.b16 %v1936, %v1934
  %1969 = vmatprep.subr.bf16.mxu0 %v1952
  %1970 = vmatpush1.bf16.msra.mxu0 %v1951
  %1971 = vmatprep.subr.bf16.mxu0 %v1950
  %1972 = vmatpush1.bf16.msra.mxu0 %v1949
  %1973 = vmatprep.subr.bf16.mxu0 %v1948
  %1974 = vmatpush1.bf16.msra.mxu0 %v1947
  %1975 = vmatprep.subr.bf16.mxu0 %v1946
  %1976 = vmatpush1.bf16.msra.mxu0 %v1945
  %1977 = vmatprep.subr.bf16.mxu0 %v1944
  %1978 = vmatpush1.bf16.msra.mxu0 %v1943
  %1979 = vmatprep.subr.bf16.mxu0 %v1942
  %1980 = vmatpush1.bf16.msra.mxu0 %v1941
  %1981 = vmatprep.subr.bf16.mxu0 %v1940
  %1982 = vmatpush1.bf16.msra.mxu0 %v1939
  %1983 = vmatprep.subr.bf16.mxu0 %v1938
  %1984 = vmatpush1.bf16.msra.mxu0 %v1937
  %1985 = vmatprep.subr.bf16.mxu0 0
  %1986 = vmatpush2.bf16.msra.mxu0 0
  %1987 = vmatprep.subr.bf16.mxu0 0
  %1988 = vmatpush2.bf16.msra.mxu0 0
  %1989 = vmatprep.subr.bf16.mxu0 0
  %1990 = vmatpush2.bf16.msra.mxu0 0
  %1991 = vmatprep.subr.bf16.mxu0 0
  %1992 = vmatpush2.bf16.msra.mxu0 0
  %1993 = vmatprep.subr.bf16.mxu0 0
  %1994 = vmatpush2.bf16.msra.mxu0 0
  %1995 = vmatprep.subr.bf16.mxu0 0
  %1996 = vmatpush2.bf16.msra.mxu0 0
  %1997 = vmatprep.subr.bf16.mxu0 0
  %1998 = vmatpush2.bf16.msra.mxu0 0
  %1999 = vmatprep.subr.bf16.mxu0 0
  %2000 = vmatpush2.bf16.msra.mxu0 0
  %2001 = vmatprep.mubr.bf16.mxu0 0
  %2002 = vmatmul.mubr.bf16.gmra.mxu0 %v1869
  %v2003 = vpop.f32.mrf.mxu0
  %v2004 = vadd.f32 0.0, %v2003
  %v2005 = vpop.f32.mrf.mxu0
  %v2006 = vadd.f32 0.0, %v2005
  %v2007 = vpop.f32.mrf.mxu0
  %v2008 = vadd.f32 0.0, %v2007
  %v2009 = vpop.f32.mrf.mxu0
  %v2010 = vadd.f32 0.0, %v2009
  %2011 = vmatprep.mubr.bf16.mxu0 0
  %2012 = vmatmul.mubr.bf16.gmra.mxu0 %v1870
  %v2013 = vpop.f32.mrf.mxu0
  %v2014 = vadd.f32 0.0, %v2013
  %v2015 = vpop.f32.mrf.mxu0
  %v2016 = vadd.f32 0.0, %v2015
  %v2017 = vpop.f32.mrf.mxu0
  %v2018 = vadd.f32 0.0, %v2017
  %v2019 = vpop.f32.mrf.mxu0
  %v2020 = vadd.f32 0.0, %v2019
  %2021 = vmatprep.mubr.bf16.mxu0 0
  %2022 = vmatmul.mubr.bf16.gmra.mxu0 %v1871
  %v2023 = vpop.f32.mrf.mxu0
  %v2024 = vadd.f32 0.0, %v2023
  %v2025 = vpop.f32.mrf.mxu0
  %v2026 = vadd.f32 0.0, %v2025
  %v2027 = vpop.f32.mrf.mxu0
  %v2028 = vadd.f32 0.0, %v2027
  %v2029 = vpop.f32.mrf.mxu0
  %v2030 = vadd.f32 0.0, %v2029
  %2031 = vmatprep.mubr.bf16.mxu0 0
  %2032 = vmatmul.mubr.bf16.gmra.mxu0 %v1872
  %v2033 = vpop.f32.mrf.mxu0
  %v2034 = vadd.f32 0.0, %v2033
  %v2035 = vpop.f32.mrf.mxu0
  %v2036 = vadd.f32 0.0, %v2035
  %v2037 = vpop.f32.mrf.mxu0
  %v2038 = vadd.f32 0.0, %v2037
  %v2039 = vpop.f32.mrf.mxu0
  %v2040 = vadd.f32 0.0, %v2039
  %2041 = vdwg.mxu0
  %v2042 = vld [vmem:[%s1] ss:$8 sm:$0x3]
  %v2044 = vlaneseq
  %v2045 = vshrl.u32 %v2044, 7
  %v2046 = vsub.s32 0, %v2045
  %v2047 = vrot.slane %v2042, %v2046
  %v2048 = vlaneseq
  %v2049 = vshrl.u32 %v2048, 7
  %v2050 = vsub.s32 1, %v2049
  %v2051 = vrot.slane %v2042, %v2050
  %v2054 = vadd.f32 %v2047, %v2004
  %v2055 = vadd.f32 %v2051, %v2006
  %v2056 = vadd.f32 %v2047, %v2008
  %v2057 = vadd.f32 %v2051, %v2010
  %v2058 = vadd.f32 %v2047, %v2014
  %v2059 = vadd.f32 %v2051, %v2016
  %v2060 = vadd.f32 %v2047, %v2018
  %v2061 = vadd.f32 %v2051, %v2020
  %v2062 = vadd.f32 %v2047, %v2024
  %v2063 = vadd.f32 %v2051, %v2026
  %v2064 = vadd.f32 %v2047, %v2028
  %v2065 = vadd.f32 %v2051, %v2030
  %v2066 = vadd.f32 %v2047, %v2034
  %v2067 = vadd.f32 %v2051, %v2036
  %v2068 = vadd.f32 %v2047, %v2038
  %v2069 = vadd.f32 %v2051, %v2040
  %vm2070 = vcmp.ge.f32.partialorder %v2054, 0.0
  %vm2071 = vcmp.ge.f32.partialorder %v2055, 0.0
  %vm2072 = vcmp.ge.f32.partialorder %v2056, 0.0
  %vm2073 = vcmp.ge.f32.partialorder %v2057, 0.0
  %vm2074 = vcmp.ge.f32.partialorder %v2058, 0.0
  %vm2075 = vcmp.ge.f32.partialorder %v2059, 0.0
  %vm2076 = vcmp.ge.f32.partialorder %v2060, 0.0
  %vm2077 = vcmp.ge.f32.partialorder %v2061, 0.0
  %vm2078 = vcmp.ge.f32.partialorder %v2062, 0.0
  %vm2079 = vcmp.ge.f32.partialorder %v2063, 0.0
  %vm2080 = vcmp.ge.f32.partialorder %v2064, 0.0
  %vm2081 = vcmp.ge.f32.partialorder %v2065, 0.0
  %vm2082 = vcmp.ge.f32.partialorder %v2066, 0.0
  %vm2083 = vcmp.ge.f32.partialorder %v2067, 0.0
  %vm2084 = vcmp.ge.f32.partialorder %v2068, 0.0
  %vm2085 = vcmp.ge.f32.partialorder %v2069, 0.0
  %v2086 = vmul.f32 %v2054, 0.2
  %v2087 = vmul.f32 %v2055, 0.2
  %v2088 = vmul.f32 %v2056, 0.2
  %v2089 = vmul.f32 %v2057, 0.2
  %v2090 = vmul.f32 %v2058, 0.2
  %v2091 = vmul.f32 %v2059, 0.2
  %v2092 = vmul.f32 %v2060, 0.2
  %v2093 = vmul.f32 %v2061, 0.2
  %v2094 = vmul.f32 %v2062, 0.2
  %v2095 = vmul.f32 %v2063, 0.2
  %v2096 = vmul.f32 %v2064, 0.2
  %v2097 = vmul.f32 %v2065, 0.2
  %v2098 = vmul.f32 %v2066, 0.2
  %v2099 = vmul.f32 %v2067, 0.2
  %v2100 = vmul.f32 %v2068, 0.2
  %v2101 = vmul.f32 %v2069, 0.2
  %v2102 = vsel %vm2070, %v2054, %v2086
  %v2103 = vsel %vm2071, %v2055, %v2087
  %v2104 = vsel %vm2072, %v2056, %v2088
  %v2105 = vsel %vm2073, %v2057, %v2089
  %v2106 = vsel %vm2074, %v2058, %v2090
  %v2107 = vsel %vm2075, %v2059, %v2091
  %v2108 = vsel %vm2076, %v2060, %v2092
  %v2109 = vsel %vm2077, %v2061, %v2093
  %v2110 = vsel %vm2078, %v2062, %v2094
  %v2111 = vsel %vm2079, %v2063, %v2095
  %v2112 = vsel %vm2080, %v2064, %v2096
  %v2113 = vsel %vm2081, %v2065, %v2097
  %v2114 = vsel %vm2082, %v2066, %v2098
  %v2115 = vsel %vm2083, %v2067, %v2099
  %v2116 = vsel %vm2084, %v2068, %v2100
  %v2117 = vsel %vm2085, %v2069, %v2101
  %s2118 = smul.u32 4, 32
  %s2119 = smul.u32 %s2118, 6
  %s2120 = sshll.u32 %s2119, 4
  %2121 = dma.done %s92, %s2120
  %v2122 = vpack.c.bf16 %v2104, %v2102
  %v2123 = vpack.c.bf16 %v2105, %v2103
  %v2124 = vpack.c.bf16 %v2108, %v2106
  %v2125 = vpack.c.bf16 %v2109, %v2107
  %v2126 = vpack.c.bf16 %v2112, %v2110
  %v2127 = vpack.c.bf16 %v2113, %v2111
  %v2128 = vpack.c.bf16 %v2116, %v2114
  %v2129 = vpack.c.bf16 %v2117, %v2115
  %v2130 = vld [vmem:[#allocation3] sm:$0xff]
  %v2131 = vld [vmem:[#allocation3 + $0x8] sm:$0xff]
  %v2132 = vld [vmem:[#allocation3 + $0x10] sm:$0xff]
  %v2133 = vld [vmem:[#allocation3 + $0x18] sm:$0xff]
  %v2134 = vld [vmem:[#allocation3 + $0x20] sm:$0xff]
  %v2135 = vld [vmem:[#allocation3 + $0x28] sm:$0xff]
  %v2136 = vld [vmem:[#allocation3 + $0x30] sm:$0xff]
  %v2137 = vld [vmem:[#allocation3 + $0x38] sm:$0xff]
  %v2138 = vld [vmem:[#allocation3 + $0x40] sm:$0xff]
  %v2139 = vld [vmem:[#allocation3 + $0x48] sm:$0xff]
  %v2140 = vld [vmem:[#allocation3 + $0x50] sm:$0xff]
  %v2141 = vld [vmem:[#allocation3 + $0x58] sm:$0xff]
  %v2142 = vld [vmem:[#allocation3 + $0x60] sm:$0xff]
  %v2143 = vld [vmem:[#allocation3 + $0x68] sm:$0xff]
  %v2144 = vld [vmem:[#allocation3 + $0x70] sm:$0xff]
  %v2145 = vld [vmem:[#allocation3 + $0x78] sm:$0xff]
  %v2146 = vld [vmem:[#allocation3 + $0x80] sm:$0xff]
  %v2147 = vld [vmem:[#allocation3 + $0x88] sm:$0xff]
  %v2148 = vld [vmem:[#allocation3 + $0x90] sm:$0xff]
  %v2149 = vld [vmem:[#allocation3 + $0x98] sm:$0xff]
  %v2150 = vld [vmem:[#allocation3 + $0xa0] sm:$0xff]
  %v2151 = vld [vmem:[#allocation3 + $0xa8] sm:$0xff]
  %v2152 = vld [vmem:[#allocation3 + $0xb0] sm:$0xff]
  %v2153 = vld [vmem:[#allocation3 + $0xb8] sm:$0xff]
  %v2154 = vld [vmem:[#allocation3 + $0xc0] sm:$0xff]
  %v2155 = vld [vmem:[#allocation3 + $0xc8] sm:$0xff]
  %v2156 = vld [vmem:[#allocation3 + $0xd0] sm:$0xff]
  %v2157 = vld [vmem:[#allocation3 + $0xd8] sm:$0xff]
  %v2158 = vld [vmem:[#allocation3 + $0xe0] sm:$0xff]
  %v2159 = vld [vmem:[#allocation3 + $0xe8] sm:$0xff]
  %v2160 = vld [vmem:[#allocation3 + $0xf0] sm:$0xff]
  %v2161 = vld [vmem:[#allocation3 + $0xf8] sm:$0xff]
  %v2162 = vld [vmem:[#allocation3 + $0x100] sm:$0xff]
  %v2163 = vld [vmem:[#allocation3 + $0x108] sm:$0xff]
  %v2164 = vld [vmem:[#allocation3 + $0x110] sm:$0xff]
  %v2165 = vld [vmem:[#allocation3 + $0x118] sm:$0xff]
  %v2166 = vld [vmem:[#allocation3 + $0x120] sm:$0xff]
  %v2167 = vld [vmem:[#allocation3 + $0x128] sm:$0xff]
  %v2168 = vld [vmem:[#allocation3 + $0x130] sm:$0xff]
  %v2169 = vld [vmem:[#allocation3 + $0x138] sm:$0xff]
  %v2170 = vld [vmem:[#allocation3 + $0x140] sm:$0xff]
  %v2171 = vld [vmem:[#allocation3 + $0x148] sm:$0xff]
  %v2172 = vld [vmem:[#allocation3 + $0x150] sm:$0xff]
  %v2173 = vld [vmem:[#allocation3 + $0x158] sm:$0xff]
  %v2174 = vld [vmem:[#allocation3 + $0x160] sm:$0xff]
  %v2175 = vld [vmem:[#allocation3 + $0x168] sm:$0xff]
  %v2176 = vld [vmem:[#allocation3 + $0x170] sm:$0xff]
  %v2177 = vld [vmem:[#allocation3 + $0x178] sm:$0xff]
  %v2178 = vld [vmem:[#allocation3 + $0x180] sm:$0xff]
  %v2179 = vld [vmem:[#allocation3 + $0x188] sm:$0xff]
  %v2180 = vld [vmem:[#allocation3 + $0x190] sm:$0xff]
  %v2181 = vld [vmem:[#allocation3 + $0x198] sm:$0xff]
  %v2182 = vld [vmem:[#allocation3 + $0x1a0] sm:$0xff]
  %v2183 = vld [vmem:[#allocation3 + $0x1a8] sm:$0xff]
  %v2184 = vld [vmem:[#allocation3 + $0x1b0] sm:$0xff]
  %v2185 = vld [vmem:[#allocation3 + $0x1b8] sm:$0xff]
  %v2186 = vld [vmem:[#allocation3 + $0x1c0] sm:$0xff]
  %v2187 = vld [vmem:[#allocation3 + $0x1c8] sm:$0xff]
  %v2188 = vld [vmem:[#allocation3 + $0x1d0] sm:$0xff]
  %v2189 = vld [vmem:[#allocation3 + $0x1d8] sm:$0xff]
  %v2190 = vld [vmem:[#allocation3 + $0x1e0] sm:$0xff]
  %v2191 = vld [vmem:[#allocation3 + $0x1e8] sm:$0xff]
  %v2192 = vld [vmem:[#allocation3 + $0x1f0] sm:$0xff]
  %v2193 = vld [vmem:[#allocation3 + $0x1f8] sm:$0xff]
  %v2194 = vld [vmem:[#allocation3 + $0x200] sm:$0xff]
  %v2195 = vld [vmem:[#allocation3 + $0x208] sm:$0xff]
  %v2196 = vld [vmem:[#allocation3 + $0x210] sm:$0xff]
  %v2197 = vld [vmem:[#allocation3 + $0x218] sm:$0xff]
  %v2198 = vld [vmem:[#allocation3 + $0x220] sm:$0xff]
  %v2199 = vld [vmem:[#allocation3 + $0x228] sm:$0xff]
  %v2200 = vld [vmem:[#allocation3 + $0x230] sm:$0xff]
  %v2201 = vld [vmem:[#allocation3 + $0x238] sm:$0xff]
  %v2202 = vld [vmem:[#allocation3 + $0x240] sm:$0xff]
  %v2203 = vld [vmem:[#allocation3 + $0x248] sm:$0xff]
  %v2204 = vld [vmem:[#allocation3 + $0x250] sm:$0xff]
  %v2205 = vld [vmem:[#allocation3 + $0x258] sm:$0xff]
  %v2206 = vld [vmem:[#allocation3 + $0x260] sm:$0xff]
  %v2207 = vld [vmem:[#allocation3 + $0x268] sm:$0xff]
  %v2208 = vld [vmem:[#allocation3 + $0x270] sm:$0xff]
  %v2209 = vld [vmem:[#allocation3 + $0x278] sm:$0xff]
  %v2210 = vld [vmem:[#allocation3 + $0x280] sm:$0xff]
  %v2211 = vld [vmem:[#allocation3 + $0x288] sm:$0xff]
  %v2212 = vld [vmem:[#allocation3 + $0x290] sm:$0xff]
  %v2213 = vld [vmem:[#allocation3 + $0x298] sm:$0xff]
  %v2214 = vld [vmem:[#allocation3 + $0x2a0] sm:$0xff]
  %v2215 = vld [vmem:[#allocation3 + $0x2a8] sm:$0xff]
  %v2216 = vld [vmem:[#allocation3 + $0x2b0] sm:$0xff]
  %v2217 = vld [vmem:[#allocation3 + $0x2b8] sm:$0xff]
  %v2218 = vld [vmem:[#allocation3 + $0x2c0] sm:$0xff]
  %v2219 = vld [vmem:[#allocation3 + $0x2c8] sm:$0xff]
  %v2220 = vld [vmem:[#allocation3 + $0x2d0] sm:$0xff]
  %v2221 = vld [vmem:[#allocation3 + $0x2d8] sm:$0xff]
  %v2222 = vld [vmem:[#allocation3 + $0x2e0] sm:$0xff]
  %v2223 = vld [vmem:[#allocation3 + $0x2e8] sm:$0xff]
  %v2224 = vld [vmem:[#allocation3 + $0x2f0] sm:$0xff]
  %v2225 = vld [vmem:[#allocation3 + $0x2f8] sm:$0xff]
  %v2322 = vunpack.c.l.b16 %v2130
  %v2323 = vunpack.c.h.b16 %v2130
  %v2324 = vunpack.c.l.b16 %v2131
  %v2325 = vunpack.c.h.b16 %v2131
  %v2326 = vunpack.c.l.b16 %v2132
  %v2327 = vunpack.c.h.b16 %v2132
  %v2328 = vunpack.c.l.b16 %v2133
  %v2329 = vunpack.c.h.b16 %v2133
  %v2330 = vunpack.c.l.b16 %v2134
  %v2331 = vunpack.c.h.b16 %v2134
  %v2332 = vunpack.c.l.b16 %v2135
  %v2333 = vunpack.c.h.b16 %v2135
  %v2334 = vunpack.c.l.b16 %v2136
  %v2335 = vunpack.c.h.b16 %v2136
  %v2336 = vunpack.c.l.b16 %v2137
  %v2337 = vunpack.c.h.b16 %v2137
  %v2338 = vunpack.c.l.b16 %v2138
  %v2339 = vunpack.c.h.b16 %v2138
  %v2340 = vunpack.c.l.b16 %v2139
  %v2341 = vunpack.c.h.b16 %v2139
  %v2342 = vunpack.c.l.b16 %v2140
  %v2343 = vunpack.c.h.b16 %v2140
  %v2344 = vunpack.c.l.b16 %v2141
  %v2345 = vunpack.c.h.b16 %v2141
  %v2346 = vunpack.c.l.b16 %v2142
  %v2347 = vunpack.c.h.b16 %v2142
  %v2348 = vunpack.c.l.b16 %v2143
  %v2349 = vunpack.c.h.b16 %v2143
  %v2350 = vunpack.c.l.b16 %v2144
  %v2351 = vunpack.c.h.b16 %v2144
  %v2352 = vunpack.c.l.b16 %v2145
  %v2353 = vunpack.c.h.b16 %v2145
  %v2354 = vunpack.c.l.b16 %v2146
  %v2355 = vunpack.c.h.b16 %v2146
  %v2356 = vunpack.c.l.b16 %v2147
  %v2357 = vunpack.c.h.b16 %v2147
  %v2358 = vunpack.c.l.b16 %v2148
  %v2359 = vunpack.c.h.b16 %v2148
  %v2360 = vunpack.c.l.b16 %v2149
  %v2361 = vunpack.c.h.b16 %v2149
  %v2362 = vunpack.c.l.b16 %v2150
  %v2363 = vunpack.c.h.b16 %v2150
  %v2364 = vunpack.c.l.b16 %v2151
  %v2365 = vunpack.c.h.b16 %v2151
  %v2366 = vunpack.c.l.b16 %v2152
  %v2367 = vunpack.c.h.b16 %v2152
  %v2368 = vunpack.c.l.b16 %v2153
  %v2369 = vunpack.c.h.b16 %v2153
  %v2370 = vunpack.c.l.b16 %v2154
  %v2371 = vunpack.c.h.b16 %v2154
  %v2372 = vunpack.c.l.b16 %v2155
  %v2373 = vunpack.c.h.b16 %v2155
  %v2374 = vunpack.c.l.b16 %v2156
  %v2375 = vunpack.c.h.b16 %v2156
  %v2376 = vunpack.c.l.b16 %v2157
  %v2377 = vunpack.c.h.b16 %v2157
  %v2378 = vunpack.c.l.b16 %v2158
  %v2379 = vunpack.c.h.b16 %v2158
  %v2380 = vunpack.c.l.b16 %v2159
  %v2381 = vunpack.c.h.b16 %v2159
  %v2382 = vunpack.c.l.b16 %v2160
  %v2383 = vunpack.c.h.b16 %v2160
  %v2384 = vunpack.c.l.b16 %v2161
  %v2385 = vunpack.c.h.b16 %v2161
  %v2386 = vunpack.c.l.b16 %v2162
  %v2387 = vunpack.c.h.b16 %v2162
  %v2388 = vunpack.c.l.b16 %v2163
  %v2389 = vunpack.c.h.b16 %v2163
  %v2390 = vunpack.c.l.b16 %v2164
  %v2391 = vunpack.c.h.b16 %v2164
  %v2392 = vunpack.c.l.b16 %v2165
  %v2393 = vunpack.c.h.b16 %v2165
  %v2394 = vunpack.c.l.b16 %v2166
  %v2395 = vunpack.c.h.b16 %v2166
  %v2396 = vunpack.c.l.b16 %v2167
  %v2397 = vunpack.c.h.b16 %v2167
  %v2398 = vunpack.c.l.b16 %v2168
  %v2399 = vunpack.c.h.b16 %v2168
  %v2400 = vunpack.c.l.b16 %v2169
  %v2401 = vunpack.c.h.b16 %v2169
  %v2402 = vunpack.c.l.b16 %v2170
  %v2403 = vunpack.c.h.b16 %v2170
  %v2404 = vunpack.c.l.b16 %v2171
  %v2405 = vunpack.c.h.b16 %v2171
  %v2406 = vunpack.c.l.b16 %v2172
  %v2407 = vunpack.c.h.b16 %v2172
  %v2408 = vunpack.c.l.b16 %v2173
  %v2409 = vunpack.c.h.b16 %v2173
  %v2410 = vunpack.c.l.b16 %v2174
  %v2411 = vunpack.c.h.b16 %v2174
  %v2412 = vunpack.c.l.b16 %v2175
  %v2413 = vunpack.c.h.b16 %v2175
  %v2414 = vunpack.c.l.b16 %v2176
  %v2415 = vunpack.c.h.b16 %v2176
  %v2416 = vunpack.c.l.b16 %v2177
  %v2417 = vunpack.c.h.b16 %v2177
  %v2418 = vunpack.c.l.b16 %v2178
  %v2419 = vunpack.c.h.b16 %v2178
  %v2420 = vunpack.c.l.b16 %v2179
  %v2421 = vunpack.c.h.b16 %v2179
  %v2422 = vunpack.c.l.b16 %v2180
  %v2423 = vunpack.c.h.b16 %v2180
  %v2424 = vunpack.c.l.b16 %v2181
  %v2425 = vunpack.c.h.b16 %v2181
  %v2426 = vunpack.c.l.b16 %v2182
  %v2427 = vunpack.c.h.b16 %v2182
  %v2428 = vunpack.c.l.b16 %v2183
  %v2429 = vunpack.c.h.b16 %v2183
  %v2430 = vunpack.c.l.b16 %v2184
  %v2431 = vunpack.c.h.b16 %v2184
  %v2432 = vunpack.c.l.b16 %v2185
  %v2433 = vunpack.c.h.b16 %v2185
  %v2434 = vunpack.c.l.b16 %v2186
  %v2435 = vunpack.c.h.b16 %v2186
  %v2436 = vunpack.c.l.b16 %v2187
  %v2437 = vunpack.c.h.b16 %v2187
  %v2438 = vunpack.c.l.b16 %v2188
  %v2439 = vunpack.c.h.b16 %v2188
  %v2440 = vunpack.c.l.b16 %v2189
  %v2441 = vunpack.c.h.b16 %v2189
  %v2442 = vunpack.c.l.b16 %v2190
  %v2443 = vunpack.c.h.b16 %v2190
  %v2444 = vunpack.c.l.b16 %v2191
  %v2445 = vunpack.c.h.b16 %v2191
  %v2446 = vunpack.c.l.b16 %v2192
  %v2447 = vunpack.c.h.b16 %v2192
  %v2448 = vunpack.c.l.b16 %v2193
  %v2449 = vunpack.c.h.b16 %v2193
  %v2450 = vunpack.c.l.b16 %v2194
  %v2451 = vunpack.c.h.b16 %v2194
  %v2452 = vunpack.c.l.b16 %v2195
  %v2453 = vunpack.c.h.b16 %v2195
  %v2454 = vunpack.c.l.b16 %v2196
  %v2455 = vunpack.c.h.b16 %v2196
  %v2456 = vunpack.c.l.b16 %v2197
  %v2457 = vunpack.c.h.b16 %v2197
  %v2458 = vunpack.c.l.b16 %v2198
  %v2459 = vunpack.c.h.b16 %v2198
  %v2460 = vunpack.c.l.b16 %v2199
  %v2461 = vunpack.c.h.b16 %v2199
  %v2462 = vunpack.c.l.b16 %v2200
  %v2463 = vunpack.c.h.b16 %v2200
  %v2464 = vunpack.c.l.b16 %v2201
  %v2465 = vunpack.c.h.b16 %v2201
  %v2466 = vunpack.c.l.b16 %v2202
  %v2467 = vunpack.c.h.b16 %v2202
  %v2468 = vunpack.c.l.b16 %v2203
  %v2469 = vunpack.c.h.b16 %v2203
  %v2470 = vunpack.c.l.b16 %v2204
  %v2471 = vunpack.c.h.b16 %v2204
  %v2472 = vunpack.c.l.b16 %v2205
  %v2473 = vunpack.c.h.b16 %v2205
  %v2474 = vunpack.c.l.b16 %v2206
  %v2475 = vunpack.c.h.b16 %v2206
  %v2476 = vunpack.c.l.b16 %v2207
  %v2477 = vunpack.c.h.b16 %v2207
  %v2478 = vunpack.c.l.b16 %v2208
  %v2479 = vunpack.c.h.b16 %v2208
  %v2480 = vunpack.c.l.b16 %v2209
  %v2481 = vunpack.c.h.b16 %v2209
  %v2482 = vunpack.c.l.b16 %v2210
  %v2483 = vunpack.c.h.b16 %v2210
  %v2484 = vunpack.c.l.b16 %v2211
  %v2485 = vunpack.c.h.b16 %v2211
  %v2486 = vunpack.c.l.b16 %v2212
  %v2487 = vunpack.c.h.b16 %v2212
  %v2488 = vunpack.c.l.b16 %v2213
  %v2489 = vunpack.c.h.b16 %v2213
  %v2490 = vunpack.c.l.b16 %v2214
  %v2491 = vunpack.c.h.b16 %v2214
  %v2492 = vunpack.c.l.b16 %v2215
  %v2493 = vunpack.c.h.b16 %v2215
  %v2494 = vunpack.c.l.b16 %v2216
  %v2495 = vunpack.c.h.b16 %v2216
  %v2496 = vunpack.c.l.b16 %v2217
  %v2497 = vunpack.c.h.b16 %v2217
  %v2498 = vunpack.c.l.b16 %v2218
  %v2499 = vunpack.c.h.b16 %v2218
  %v2500 = vunpack.c.l.b16 %v2219
  %v2501 = vunpack.c.h.b16 %v2219
  %v2502 = vunpack.c.l.b16 %v2220
  %v2503 = vunpack.c.h.b16 %v2220
  %v2504 = vunpack.c.l.b16 %v2221
  %v2505 = vunpack.c.h.b16 %v2221
  %v2506 = vunpack.c.l.b16 %v2222
  %v2507 = vunpack.c.h.b16 %v2222
  %v2508 = vunpack.c.l.b16 %v2223
  %v2509 = vunpack.c.h.b16 %v2223
  %v2510 = vunpack.c.l.b16 %v2224
  %v2511 = vunpack.c.h.b16 %v2224
  %v2512 = vunpack.c.l.b16 %v2225
  %v2513 = vunpack.c.h.b16 %v2225
  %v2514 = vpack.c.b16 %v2328, %v2322
  %v2515 = vpack.c.b16 %v2329, %v2323
  %v2516 = vpack.c.b16 %v2330, %v2324
  %v2517 = vpack.c.b16 %v2331, %v2325
  %v2518 = vpack.c.b16 %v2332, %v2326
  %v2519 = vpack.c.b16 %v2333, %v2327
  %v2520 = vpack.c.b16 %v2340, %v2334
  %v2521 = vpack.c.b16 %v2341, %v2335
  %v2522 = vpack.c.b16 %v2342, %v2336
  %v2523 = vpack.c.b16 %v2343, %v2337
  %v2524 = vpack.c.b16 %v2344, %v2338
  %v2525 = vpack.c.b16 %v2345, %v2339
  %v2526 = vpack.c.b16 %v2352, %v2346
  %v2527 = vpack.c.b16 %v2353, %v2347
  %v2528 = vpack.c.b16 %v2354, %v2348
  %v2529 = vpack.c.b16 %v2355, %v2349
  %v2530 = vpack.c.b16 %v2356, %v2350
  %v2531 = vpack.c.b16 %v2357, %v2351
  %v2532 = vpack.c.b16 %v2364, %v2358
  %v2533 = vpack.c.b16 %v2365, %v2359
  %v2534 = vpack.c.b16 %v2366, %v2360
  %v2535 = vpack.c.b16 %v2367, %v2361
  %v2536 = vpack.c.b16 %v2368, %v2362
  %v2537 = vpack.c.b16 %v2369, %v2363
  %v2538 = vpack.c.b16 %v2376, %v2370
  %v2539 = vpack.c.b16 %v2377, %v2371
  %v2540 = vpack.c.b16 %v2378, %v2372
  %v2541 = vpack.c.b16 %v2379, %v2373
  %v2542 = vpack.c.b16 %v2380, %v2374
  %v2543 = vpack.c.b16 %v2381, %v2375
  %v2544 = vpack.c.b16 %v2388, %v2382
  %v2545 = vpack.c.b16 %v2389, %v2383
  %v2546 = vpack.c.b16 %v2390, %v2384
  %v2547 = vpack.c.b16 %v2391, %v2385
  %v2548 = vpack.c.b16 %v2392, %v2386
  %v2549 = vpack.c.b16 %v2393, %v2387
  %v2550 = vpack.c.b16 %v2400, %v2394
  %v2551 = vpack.c.b16 %v2401, %v2395
  %v2552 = vpack.c.b16 %v2402, %v2396
  %v2553 = vpack.c.b16 %v2403, %v2397
  %v2554 = vpack.c.b16 %v2404, %v2398
  %v2555 = vpack.c.b16 %v2405, %v2399
  %v2556 = vpack.c.b16 %v2412, %v2406
  %v2557 = vpack.c.b16 %v2413, %v2407
  %v2558 = vpack.c.b16 %v2414, %v2408
  %v2559 = vpack.c.b16 %v2415, %v2409
  %v2560 = vpack.c.b16 %v2416, %v2410
  %v2561 = vpack.c.b16 %v2417, %v2411
  %v2562 = vpack.c.b16 %v2424, %v2418
  %v2563 = vpack.c.b16 %v2425, %v2419
  %v2564 = vpack.c.b16 %v2426, %v2420
  %v2565 = vpack.c.b16 %v2427, %v2421
  %v2566 = vpack.c.b16 %v2428, %v2422
  %v2567 = vpack.c.b16 %v2429, %v2423
  %v2568 = vpack.c.b16 %v2436, %v2430
  %v2569 = vpack.c.b16 %v2437, %v2431
  %v2570 = vpack.c.b16 %v2438, %v2432
  %v2571 = vpack.c.b16 %v2439, %v2433
  %v2572 = vpack.c.b16 %v2440, %v2434
  %v2573 = vpack.c.b16 %v2441, %v2435
  %v2574 = vpack.c.b16 %v2448, %v2442
  %v2575 = vpack.c.b16 %v2449, %v2443
  %v2576 = vpack.c.b16 %v2450, %v2444
  %v2577 = vpack.c.b16 %v2451, %v2445
  %v2578 = vpack.c.b16 %v2452, %v2446
  %v2579 = vpack.c.b16 %v2453, %v2447
  %v2580 = vpack.c.b16 %v2460, %v2454
  %v2581 = vpack.c.b16 %v2461, %v2455
  %v2582 = vpack.c.b16 %v2462, %v2456
  %v2583 = vpack.c.b16 %v2463, %v2457
  %v2584 = vpack.c.b16 %v2464, %v2458
  %v2585 = vpack.c.b16 %v2465, %v2459
  %v2586 = vpack.c.b16 %v2472, %v2466
  %v2587 = vpack.c.b16 %v2473, %v2467
  %v2588 = vpack.c.b16 %v2474, %v2468
  %v2589 = vpack.c.b16 %v2475, %v2469
  %v2590 = vpack.c.b16 %v2476, %v2470
  %v2591 = vpack.c.b16 %v2477, %v2471
  %v2592 = vpack.c.b16 %v2484, %v2478
  %v2593 = vpack.c.b16 %v2485, %v2479
  %v2594 = vpack.c.b16 %v2486, %v2480
  %v2595 = vpack.c.b16 %v2487, %v2481
  %v2596 = vpack.c.b16 %v2488, %v2482
  %v2597 = vpack.c.b16 %v2489, %v2483
  %v2598 = vpack.c.b16 %v2496, %v2490
  %v2599 = vpack.c.b16 %v2497, %v2491
  %v2600 = vpack.c.b16 %v2498, %v2492
  %v2601 = vpack.c.b16 %v2499, %v2493
  %v2602 = vpack.c.b16 %v2500, %v2494
  %v2603 = vpack.c.b16 %v2501, %v2495
  %v2604 = vpack.c.b16 %v2508, %v2502
  %v2605 = vpack.c.b16 %v2509, %v2503
  %v2606 = vpack.c.b16 %v2510, %v2504
  %v2607 = vpack.c.b16 %v2511, %v2505
  %v2608 = vpack.c.b16 %v2512, %v2506
  %v2609 = vpack.c.b16 %v2513, %v2507
  %2706 = vmatprep.subr.bf16.mxu0 %v2557
  %2707 = vmatpush1.bf16.msra.mxu0 %v2556
  %2708 = vmatprep.subr.bf16.mxu0 %v2551
  %2709 = vmatpush1.bf16.msra.mxu0 %v2550
  %2710 = vmatprep.subr.bf16.mxu0 %v2545
  %2711 = vmatpush1.bf16.msra.mxu0 %v2544
  %2712 = vmatprep.subr.bf16.mxu0 %v2539
  %2713 = vmatpush1.bf16.msra.mxu0 %v2538
  %2714 = vmatprep.subr.bf16.mxu0 %v2533
  %2715 = vmatpush1.bf16.msra.mxu0 %v2532
  %2716 = vmatprep.subr.bf16.mxu0 %v2527
  %2717 = vmatpush1.bf16.msra.mxu0 %v2526
  %2718 = vmatprep.subr.bf16.mxu0 %v2521
  %2719 = vmatpush1.bf16.msra.mxu0 %v2520
  %2720 = vmatprep.subr.bf16.mxu0 %v2515
  %2721 = vmatpush1.bf16.msra.mxu0 %v2514
  %2722 = vmatprep.subr.bf16.mxu0 %v2605
  %2723 = vmatpush2.bf16.msra.mxu0 %v2604
  %2724 = vmatprep.subr.bf16.mxu0 %v2599
  %2725 = vmatpush2.bf16.msra.mxu0 %v2598
  %2726 = vmatprep.subr.bf16.mxu0 %v2593
  %2727 = vmatpush2.bf16.msra.mxu0 %v2592
  %2728 = vmatprep.subr.bf16.mxu0 %v2587
  %2729 = vmatpush2.bf16.msra.mxu0 %v2586
  %2730 = vmatprep.subr.bf16.mxu0 %v2581
  %2731 = vmatpush2.bf16.msra.mxu0 %v2580
  %2732 = vmatprep.subr.bf16.mxu0 %v2575
  %2733 = vmatpush2.bf16.msra.mxu0 %v2574
  %2734 = vmatprep.subr.bf16.mxu0 %v2569
  %2735 = vmatpush2.bf16.msra.mxu0 %v2568
  %2736 = vmatprep.subr.bf16.mxu0 %v2563
  %2737 = vmatpush2.bf16.msra.mxu0 %v2562
  %2738 = vmatprep.mubr.bf16.mxu0 %v2123
  %2739 = vmatmul.mubr.bf16.gmra.mxu0 %v2122
  %v2740 = vpop.f32.mrf.mxu0
  %v2741 = vadd.f32 0.0, %v2740
  %v2742 = vpop.f32.mrf.mxu0
  %v2743 = vadd.f32 0.0, %v2742
  %v2744 = vpop.f32.mrf.mxu0
  %v2745 = vadd.f32 0.0, %v2744
  %v2746 = vpop.f32.mrf.mxu0
  %v2747 = vadd.f32 0.0, %v2746
  %2748 = vmatprep.mubr.bf16.mxu0 %v2125
  %2749 = vmatmul.mubr.bf16.gmra.mxu0 %v2124
  %v2750 = vpop.f32.mrf.mxu0
  %v2751 = vadd.f32 0.0, %v2750
  %v2752 = vpop.f32.mrf.mxu0
  %v2753 = vadd.f32 0.0, %v2752
  %v2754 = vpop.f32.mrf.mxu0
  %v2755 = vadd.f32 0.0, %v2754
  %v2756 = vpop.f32.mrf.mxu0
  %v2757 = vadd.f32 0.0, %v2756
  %2758 = vmatprep.mubr.bf16.mxu0 %v2127
  %2759 = vmatmul.mubr.bf16.gmra.mxu0 %v2126
  %v2760 = vpop.f32.mrf.mxu0
  %v2761 = vadd.f32 0.0, %v2760
  %v2762 = vpop.f32.mrf.mxu0
  %v2763 = vadd.f32 0.0, %v2762
  %v2764 = vpop.f32.mrf.mxu0
  %v2765 = vadd.f32 0.0, %v2764
  %v2766 = vpop.f32.mrf.mxu0
  %v2767 = vadd.f32 0.0, %v2766
  %2768 = vmatprep.mubr.bf16.mxu0 %v2129
  %2769 = vmatmul.mubr.bf16.gmra.mxu0 %v2128
  %v2770 = vpop.f32.mrf.mxu0
  %v2771 = vadd.f32 0.0, %v2770
  %v2772 = vpop.f32.mrf.mxu0
  %v2773 = vadd.f32 0.0, %v2772
  %v2774 = vpop.f32.mrf.mxu0
  %v2775 = vadd.f32 0.0, %v2774
  %v2776 = vpop.f32.mrf.mxu0
  %v2777 = vadd.f32 0.0, %v2776
  %2778 = vdwg.mxu0
  %2779 = vmatprep.subr.bf16.mxu0 %v2559
  %2780 = vmatpush1.bf16.msra.mxu0 %v2558
  %2781 = vmatprep.subr.bf16.mxu0 %v2553
  %2782 = vmatpush1.bf16.msra.mxu0 %v2552
  %2783 = vmatprep.subr.bf16.mxu0 %v2547
  %2784 = vmatpush1.bf16.msra.mxu0 %v2546
  %2785 = vmatprep.subr.bf16.mxu0 %v2541
  %2786 = vmatpush1.bf16.msra.mxu0 %v2540
  %2787 = vmatprep.subr.bf16.mxu0 %v2535
  %2788 = vmatpush1.bf16.msra.mxu0 %v2534
  %2789 = vmatprep.subr.bf16.mxu0 %v2529
  %2790 = vmatpush1.bf16.msra.mxu0 %v2528
  %2791 = vmatprep.subr.bf16.mxu0 %v2523
  %2792 = vmatpush1.bf16.msra.mxu0 %v2522
  %2793 = vmatprep.subr.bf16.mxu0 %v2517
  %2794 = vmatpush1.bf16.msra.mxu0 %v2516
  %2795 = vmatprep.subr.bf16.mxu0 %v2607
  %2796 = vmatpush2.bf16.msra.mxu0 %v2606
  %2797 = vmatprep.subr.bf16.mxu0 %v2601
  %2798 = vmatpush2.bf16.msra.mxu0 %v2600
  %2799 = vmatprep.subr.bf16.mxu0 %v2595
  %2800 = vmatpush2.bf16.msra.mxu0 %v2594
  %2801 = vmatprep.subr.bf16.mxu0 %v2589
  %2802 = vmatpush2.bf16.msra.mxu0 %v2588
  %2803 = vmatprep.subr.bf16.mxu0 %v2583
  %2804 = vmatpush2.bf16.msra.mxu0 %v2582
  %2805 = vmatprep.subr.bf16.mxu0 %v2577
  %2806 = vmatpush2.bf16.msra.mxu0 %v2576
  %2807 = vmatprep.subr.bf16.mxu0 %v2571
  %2808 = vmatpush2.bf16.msra.mxu0 %v2570
  %2809 = vmatprep.subr.bf16.mxu0 %v2565
  %2810 = vmatpush2.bf16.msra.mxu0 %v2564
  %2811 = vmatprep.mubr.bf16.mxu0 %v2123
  %2812 = vmatmul.mubr.bf16.gmra.mxu0 %v2122
  %v2813 = vpop.f32.mrf.mxu0
  %v2814 = vadd.f32 0.0, %v2813
  %v2815 = vpop.f32.mrf.mxu0
  %v2816 = vadd.f32 0.0, %v2815
  %v2817 = vpop.f32.mrf.mxu0
  %v2818 = vadd.f32 0.0, %v2817
  %v2819 = vpop.f32.mrf.mxu0
  %v2820 = vadd.f32 0.0, %v2819
  %2821 = vmatprep.mubr.bf16.mxu0 %v2125
  %2822 = vmatmul.mubr.bf16.gmra.mxu0 %v2124
  %v2823 = vpop.f32.mrf.mxu0
  %v2824 = vadd.f32 0.0, %v2823
  %v2825 = vpop.f32.mrf.mxu0
  %v2826 = vadd.f32 0.0, %v2825
  %v2827 = vpop.f32.mrf.mxu0
  %v2828 = vadd.f32 0.0, %v2827
  %v2829 = vpop.f32.mrf.mxu0
  %v2830 = vadd.f32 0.0, %v2829
  %2831 = vmatprep.mubr.bf16.mxu0 %v2127
  %2832 = vmatmul.mubr.bf16.gmra.mxu0 %v2126
  %v2833 = vpop.f32.mrf.mxu0
  %v2834 = vadd.f32 0.0, %v2833
  %v2835 = vpop.f32.mrf.mxu0
  %v2836 = vadd.f32 0.0, %v2835
  %v2837 = vpop.f32.mrf.mxu0
  %v2838 = vadd.f32 0.0, %v2837
  %v2839 = vpop.f32.mrf.mxu0
  %v2840 = vadd.f32 0.0, %v2839
  %2841 = vmatprep.mubr.bf16.mxu0 %v2129
  %2842 = vmatmul.mubr.bf16.gmra.mxu0 %v2128
  %v2843 = vpop.f32.mrf.mxu0
  %v2844 = vadd.f32 0.0, %v2843
  %v2845 = vpop.f32.mrf.mxu0
  %v2846 = vadd.f32 0.0, %v2845
  %v2847 = vpop.f32.mrf.mxu0
  %v2848 = vadd.f32 0.0, %v2847
  %v2849 = vpop.f32.mrf.mxu0
  %v2850 = vadd.f32 0.0, %v2849
  %2851 = vdwg.mxu0
  %2852 = vmatprep.subr.bf16.mxu0 %v2561
  %2853 = vmatpush1.bf16.msra.mxu0 %v2560
  %2854 = vmatprep.subr.bf16.mxu0 %v2555
  %2855 = vmatpush1.bf16.msra.mxu0 %v2554
  %2856 = vmatprep.subr.bf16.mxu0 %v2549
  %2857 = vmatpush1.bf16.msra.mxu0 %v2548
  %2858 = vmatprep.subr.bf16.mxu0 %v2543
  %2859 = vmatpush1.bf16.msra.mxu0 %v2542
  %2860 = vmatprep.subr.bf16.mxu0 %v2537
  %2861 = vmatpush1.bf16.msra.mxu0 %v2536
  %2862 = vmatprep.subr.bf16.mxu0 %v2531
  %2863 = vmatpush1.bf16.msra.mxu0 %v2530
  %2864 = vmatprep.subr.bf16.mxu0 %v2525
  %2865 = vmatpush1.bf16.msra.mxu0 %v2524
  %2866 = vmatprep.subr.bf16.mxu0 %v2519
  %2867 = vmatpush1.bf16.msra.mxu0 %v2518
  %2868 = vmatprep.subr.bf16.mxu0 %v2609
  %2869 = vmatpush2.bf16.msra.mxu0 %v2608
  %2870 = vmatprep.subr.bf16.mxu0 %v2603
  %2871 = vmatpush2.bf16.msra.mxu0 %v2602
  %2872 = vmatprep.subr.bf16.mxu0 %v2597
  %2873 = vmatpush2.bf16.msra.mxu0 %v2596
  %2874 = vmatprep.subr.bf16.mxu0 %v2591
  %2875 = vmatpush2.bf16.msra.mxu0 %v2590
  %2876 = vmatprep.subr.bf16.mxu0 %v2585
  %2877 = vmatpush2.bf16.msra.mxu0 %v2584
  %2878 = vmatprep.subr.bf16.mxu0 %v2579
  %2879 = vmatpush2.bf16.msra.mxu0 %v2578
  %2880 = vmatprep.subr.bf16.mxu0 %v2573
  %2881 = vmatpush2.bf16.msra.mxu0 %v2572
  %2882 = vmatprep.subr.bf16.mxu0 %v2567
  %2883 = vmatpush2.bf16.msra.mxu0 %v2566
  %2884 = vmatprep.mubr.bf16.mxu0 %v2123
  %2885 = vmatmul.mubr.bf16.gmra.mxu0 %v2122
  %v2886 = vpop.f32.mrf.mxu0
  %v2887 = vadd.f32 0.0, %v2886
  %v2888 = vpop.f32.mrf.mxu0
  %v2889 = vadd.f32 0.0, %v2888
  %v2890 = vpop.f32.mrf.mxu0
  %v2891 = vadd.f32 0.0, %v2890
  %v2892 = vpop.f32.mrf.mxu0
  %v2893 = vadd.f32 0.0, %v2892
  %2894 = vmatprep.mubr.bf16.mxu0 %v2125
  %2895 = vmatmul.mubr.bf16.gmra.mxu0 %v2124
  %v2896 = vpop.f32.mrf.mxu0
  %v2897 = vadd.f32 0.0, %v2896
  %v2898 = vpop.f32.mrf.mxu0
  %v2899 = vadd.f32 0.0, %v2898
  %v2900 = vpop.f32.mrf.mxu0
  %v2901 = vadd.f32 0.0, %v2900
  %v2902 = vpop.f32.mrf.mxu0
  %v2903 = vadd.f32 0.0, %v2902
  %2904 = vmatprep.mubr.bf16.mxu0 %v2127
  %2905 = vmatmul.mubr.bf16.gmra.mxu0 %v2126
  %v2906 = vpop.f32.mrf.mxu0
  %v2907 = vadd.f32 0.0, %v2906
  %v2908 = vpop.f32.mrf.mxu0
  %v2909 = vadd.f32 0.0, %v2908
  %v2910 = vpop.f32.mrf.mxu0
  %v2911 = vadd.f32 0.0, %v2910
  %v2912 = vpop.f32.mrf.mxu0
  %v2913 = vadd.f32 0.0, %v2912
  %2914 = vmatprep.mubr.bf16.mxu0 %v2129
  %2915 = vmatmul.mubr.bf16.gmra.mxu0 %v2128
  %v2916 = vpop.f32.mrf.mxu0
  %v2917 = vadd.f32 0.0, %v2916
  %v2918 = vpop.f32.mrf.mxu0
  %v2919 = vadd.f32 0.0, %v2918
  %v2920 = vpop.f32.mrf.mxu0
  %v2921 = vadd.f32 0.0, %v2920
  %v2922 = vpop.f32.mrf.mxu0
  %v2923 = vadd.f32 0.0, %v2922
  %2924 = vdwg.mxu0
  %s2925 = scalar_lea.vmem %s1, 1
  %v2926 = vld [vmem:[%s2925] ss:$8 sm:$0x3]
  %2927 = vst [vmem:[#allocation9 + $0x80] sm:$0xff] %v2741
  %2928 = vst [vmem:[#allocation9 + $0x88] sm:$0xff] %v2743
  %2929 = vst [vmem:[#allocation9 + $0x90] sm:$0xff] %v2814
  %2930 = vst [vmem:[#allocation9 + $0x98] sm:$0xff] %v2816
  %2931 = vst [vmem:[#allocation9 + $0xa0] sm:$0xff] %v2887
  %2932 = vst [vmem:[#allocation9 + $0xa8] sm:$0xff] %v2889
  %2933 = vst [vmem:[#allocation9 + $0xc0] sm:$0xff] %v2745
  %2934 = vst [vmem:[#allocation9 + $0xc8] sm:$0xff] %v2747
  %2935 = vst [vmem:[#allocation9 + $0xd0] sm:$0xff] %v2818
  %2936 = vst [vmem:[#allocation9 + $0xd8] sm:$0xff] %v2820
  %2937 = vst [vmem:[#allocation9 + $0xe0] sm:$0xff] %v2891
  %2938 = vst [vmem:[#allocation9 + $0xe8] sm:$0xff] %v2893
  %2939 = vst [vmem:[#allocation9 + $0x100] sm:$0xff] %v2751
  %2940 = vst [vmem:[#allocation9 + $0x108] sm:$0xff] %v2753
  %2941 = vst [vmem:[#allocation9 + $0x110] sm:$0xff] %v2824
  %2942 = vst [vmem:[#allocation9 + $0x118] sm:$0xff] %v2826
  %2943 = vst [vmem:[#allocation9 + $0x120] sm:$0xff] %v2897
  %2944 = vst [vmem:[#allocation9 + $0x128] sm:$0xff] %v2899
  %2945 = vst [vmem:[#allocation9 + $0x140] sm:$0xff] %v2755
  %2946 = vst [vmem:[#allocation9 + $0x148] sm:$0xff] %v2757
  %2947 = vst [vmem:[#allocation9 + $0x150] sm:$0xff] %v2828
  %2948 = vst [vmem:[#allocation9 + $0x158] sm:$0xff] %v2830
  %2949 = vst [vmem:[#allocation9 + $0x160] sm:$0xff] %v2901
  %2950 = vst [vmem:[#allocation9 + $0x168] sm:$0xff] %v2903
  %2951 = vst [vmem:[#allocation9 + $0x180] sm:$0xff] %v2761
  %2952 = vst [vmem:[#allocation9 + $0x188] sm:$0xff] %v2763
  %2953 = vst [vmem:[#allocation9 + $0x190] sm:$0xff] %v2834
  %2954 = vst [vmem:[#allocation9 + $0x198] sm:$0xff] %v2836
  %2955 = vst [vmem:[#allocation9 + $0x1a0] sm:$0xff] %v2907
  %2956 = vst [vmem:[#allocation9 + $0x1a8] sm:$0xff] %v2909
  %2957 = vst [vmem:[#allocation9 + $0x1c0] sm:$0xff] %v2765
  %2958 = vst [vmem:[#allocation9 + $0x1c8] sm:$0xff] %v2767
  %2959 = vst [vmem:[#allocation9 + $0x1d0] sm:$0xff] %v2838
  %2960 = vst [vmem:[#allocation9 + $0x1d8] sm:$0xff] %v2840
  %2961 = vst [vmem:[#allocation9 + $0x1e0] sm:$0xff] %v2911
  %2962 = vst [vmem:[#allocation9 + $0x1e8] sm:$0xff] %v2913
  %2963 = vst [vmem:[#allocation9 + $0x200] sm:$0xff] %v2771
  %2964 = vst [vmem:[#allocation9 + $0x208] sm:$0xff] %v2773
  %2965 = vst [vmem:[#allocation9 + $0x210] sm:$0xff] %v2844
  %2966 = vst [vmem:[#allocation9 + $0x218] sm:$0xff] %v2846
  %2967 = vst [vmem:[#allocation9 + $0x220] sm:$0xff] %v2917
  %2968 = vst [vmem:[#allocation9 + $0x228] sm:$0xff] %v2919
  %2969 = vst [vmem:[#allocation9 + $0x240] sm:$0xff] %v2775
  %2970 = vst [vmem:[#allocation9 + $0x248] sm:$0xff] %v2777
  %2971 = vst [vmem:[#allocation9 + $0x250] sm:$0xff] %v2848
  %2972 = vst [vmem:[#allocation9 + $0x258] sm:$0xff] %v2850
  %2973 = vst [vmem:[#allocation9 + $0x260] sm:$0xff] %v2921
  %2974 = vst [vmem:[#allocation9 + $0x268] sm:$0xff] %v2923
  %v2975 = vld [vmem:[#allocation9 + $0x40] sm:$0x80]
  %v2976 = vld [vmem:[#allocation9 + $0x48] sm:$0x80]
  %v2977 = vld [vmem:[#allocation9 + $0x80] sm:$0xff]
  %v2978 = vld [vmem:[#allocation9 + $0x88] sm:$0xff]
  %v2979 = vld [vmem:[#allocation9 + $0xc0] sm:$0xff]
  %v2980 = vld [vmem:[#allocation9 + $0xc8] sm:$0xff]
  %v2981 = vld [vmem:[#allocation9 + $0x100] sm:$0xff]
  %v2982 = vld [vmem:[#allocation9 + $0x108] sm:$0xff]
  %v2983 = vld [vmem:[#allocation9 + $0x140] sm:$0xff]
  %v2984 = vld [vmem:[#allocation9 + $0x148] sm:$0xff]
  %v2985 = vld [vmem:[#allocation9 + $0x180] sm:$0xff]
  %v2986 = vld [vmem:[#allocation9 + $0x188] sm:$0xff]
  %v2987 = vld [vmem:[#allocation9 + $0x1c0] sm:$0xff]
  %v2988 = vld [vmem:[#allocation9 + $0x1c8] sm:$0xff]
  %v2989 = vld [vmem:[#allocation9 + $0x200] sm:$0xff]
  %v2990 = vld [vmem:[#allocation9 + $0x208] sm:$0xff]
  %v2991 = vld [vmem:[#allocation9 + $0x240] sm:$0x7f]
  %v2992 = vld [vmem:[#allocation9 + $0x248] sm:$0x7f]
  %v2993 = vadd.s32 %v1849, 4294967295
  %v2994 = vadd.s32 %v1850, 4294967295
  %v2995 = vadd.s32 %v1851, 4294967295
  %v2996 = vadd.s32 %v1852, 4294967295
  %v2997 = vadd.s32 %v1853, 4294967295
  %v2998 = vadd.s32 %v1854, 4294967295
  %v2999 = vadd.s32 %v1855, 4294967295
  %v3000 = vadd.s32 %v1856, 4294967295
  %vm3001 = vcmp.ge.s32.totalorder %v2993, 0
  %vm3002 = vcmp.ge.s32.totalorder %v2994, 0
  %vm3003 = vcmp.ge.s32.totalorder %v2995, 0
  %vm3004 = vcmp.ge.s32.totalorder %v2996, 0
  %vm3005 = vcmp.ge.s32.totalorder %v2997, 0
  %vm3006 = vcmp.ge.s32.totalorder %v2998, 0
  %vm3007 = vcmp.ge.s32.totalorder %v2999, 0
  %vm3008 = vcmp.ge.s32.totalorder %v3000, 0
  %vm3009 = vcmp.lt.s32.totalorder %v2993, 32
  %vm3010 = vcmp.lt.s32.totalorder %v2994, 32
  %vm3011 = vcmp.lt.s32.totalorder %v2995, 32
  %vm3012 = vcmp.lt.s32.totalorder %v2996, 32
  %vm3013 = vcmp.lt.s32.totalorder %v2997, 32
  %vm3014 = vcmp.lt.s32.totalorder %v2998, 32
  %vm3015 = vcmp.lt.s32.totalorder %v2999, 32
  %vm3016 = vcmp.lt.s32.totalorder %v3000, 32
  %vm3017 = vmand %vm3001, %vm3009
  %vm3018 = vmand %vm3002, %vm3010
  %vm3019 = vmand %vm3003, %vm3011
  %vm3020 = vmand %vm3004, %vm3012
  %vm3021 = vmand %vm3005, %vm3013
  %vm3022 = vmand %vm3006, %vm3014
  %vm3023 = vmand %vm3007, %vm3015
  %vm3024 = vmand %vm3008, %vm3016
  %v3025 = vsel %vm3017, 1, 0
  %v3026 = vsel %vm3018, 1, 0
  %v3027 = vsel %vm3019, 1, 0
  %v3028 = vsel %vm3020, 1, 0
  %v3029 = vsel %vm3021, 1, 0
  %v3030 = vsel %vm3022, 1, 0
  %v3031 = vsel %vm3023, 1, 0
  %v3032 = vsel %vm3024, 1, 0
  %vm3033 = vcmp.eq.s32.totalorder %v3025, 1
  %vm3034 = vcmp.eq.s32.totalorder %v3026, 1
  %vm3035 = vcmp.eq.s32.totalorder %v3027, 1
  %vm3036 = vcmp.eq.s32.totalorder %v3028, 1
  %vm3037 = vcmp.eq.s32.totalorder %v3029, 1
  %vm3038 = vcmp.eq.s32.totalorder %v3030, 1
  %vm3039 = vcmp.eq.s32.totalorder %v3031, 1
  %vm3040 = vcmp.eq.s32.totalorder %v3032, 1
  %vm3059 = vcmask 1040384
  %v3060 = vrot.slane %v2975, 7
  %v3061 = vrot.slane %v2977, 7
  %v3062 = vsel %vm3059, %v3060, %v3061
  %v3063 = vrot.slane %v2976, 7
  %v3064 = vrot.slane %v2978, 7
  %v3065 = vsel %vm3059, %v3063, %v3064
  %v3066 = vrot.slane %v2979, 7
  %v3067 = vsel %vm3059, %v3061, %v3066
  %v3068 = vrot.slane %v2980, 7
  %v3069 = vsel %vm3059, %v3064, %v3068
  %v3070 = vrot.slane %v2981, 7
  %v3071 = vsel %vm3059, %v3066, %v3070
  %v3072 = vrot.slane %v2982, 7
  %v3073 = vsel %vm3059, %v3068, %v3072
  %v3074 = vrot.slane %v2983, 7
  %v3075 = vsel %vm3059, %v3070, %v3074
  %v3076 = vrot.slane %v2984, 7
  %v3077 = vsel %vm3059, %v3072, %v3076
  %v3078 = vrot.slane %v2985, 7
  %v3079 = vsel %vm3059, %v3074, %v3078
  %v3080 = vrot.slane %v2986, 7
  %v3081 = vsel %vm3059, %v3076, %v3080
  %v3082 = vrot.slane %v2987, 7
  %v3083 = vsel %vm3059, %v3078, %v3082
  %v3084 = vrot.slane %v2988, 7
  %v3085 = vsel %vm3059, %v3080, %v3084
  %v3086 = vrot.slane %v2989, 7
  %v3087 = vsel %vm3059, %v3082, %v3086
  %v3088 = vrot.slane %v2990, 7
  %v3089 = vsel %vm3059, %v3084, %v3088
  %v3090 = vrot.slane %v2991, 7
  %v3091 = vsel %vm3059, %v3086, %v3090
  %v3092 = vrot.slane %v2992, 7
  %v3093 = vsel %vm3059, %v3088, %v3092
  %v3110 = vsel %vm3033, %v3062, 0.0
  %v3111 = vsel %vm3033, %v3065, 0.0
  %v3112 = vsel %vm3034, %v3067, 0.0
  %v3113 = vsel %vm3034, %v3069, 0.0
  %v3114 = vsel %vm3035, %v3071, 0.0
  %v3115 = vsel %vm3035, %v3073, 0.0
  %v3116 = vsel %vm3036, %v3075, 0.0
  %v3117 = vsel %vm3036, %v3077, 0.0
  %v3118 = vsel %vm3037, %v3079, 0.0
  %v3119 = vsel %vm3037, %v3081, 0.0
  %v3120 = vsel %vm3038, %v3083, 0.0
  %v3121 = vsel %vm3038, %v3085, 0.0
  %v3122 = vsel %vm3039, %v3087, 0.0
  %v3123 = vsel %vm3039, %v3089, 0.0
  %v3124 = vsel %vm3040, %v3091, 0.0
  %v3125 = vsel %vm3040, %v3093, 0.0
  %v3127 = vlaneseq
  %v3128 = vshrl.u32 %v3127, 7
  %v3129 = vsub.s32 0, %v3128
  %v3130 = vrot.slane %v2926, %v3129
  %v3131 = vlaneseq
  %v3132 = vshrl.u32 %v3131, 7
  %v3133 = vsub.s32 1, %v3132
  %v3134 = vrot.slane %v2926, %v3133
  %v3137 = vadd.f32 %v3130, %v3110
  %v3138 = vadd.f32 %v3134, %v3111
  %v3139 = vadd.f32 %v3130, %v3112
  %v3140 = vadd.f32 %v3134, %v3113
  %v3141 = vadd.f32 %v3130, %v3114
  %v3142 = vadd.f32 %v3134, %v3115
  %v3143 = vadd.f32 %v3130, %v3116
  %v3144 = vadd.f32 %v3134, %v3117
  %v3145 = vadd.f32 %v3130, %v3118
  %v3146 = vadd.f32 %v3134, %v3119
  %v3147 = vadd.f32 %v3130, %v3120
  %v3148 = vadd.f32 %v3134, %v3121
  %v3149 = vadd.f32 %v3130, %v3122
  %v3150 = vadd.f32 %v3134, %v3123
  %v3151 = vadd.f32 %v3130, %v3124
  %v3152 = vadd.f32 %v3134, %v3125
  %v3153 = vadd.f32 %v3137, %v2814
  %v3154 = vadd.f32 %v3138, %v2816
  %v3155 = vadd.f32 %v3139, %v2818
  %v3156 = vadd.f32 %v3140, %v2820
  %v3157 = vadd.f32 %v3141, %v2824
  %v3158 = vadd.f32 %v3142, %v2826
  %v3159 = vadd.f32 %v3143, %v2828
  %v3160 = vadd.f32 %v3144, %v2830
  %v3161 = vadd.f32 %v3145, %v2834
  %v3162 = vadd.f32 %v3146, %v2836
  %v3163 = vadd.f32 %v3147, %v2838
  %v3164 = vadd.f32 %v3148, %v2840
  %v3165 = vadd.f32 %v3149, %v2844
  %v3166 = vadd.f32 %v3150, %v2846
  %v3167 = vadd.f32 %v3151, %v2848
  %v3168 = vadd.f32 %v3152, %v2850
  %v3169 = vld [vmem:[#allocation9 + $0xa0] sm:$0xfe]
  %v3170 = vld [vmem:[#allocation9 + $0xa8] sm:$0xfe]
  %v3171 = vld [vmem:[#allocation9 + $0xe0] sm:$0xff]
  %v3172 = vld [vmem:[#allocation9 + $0xe8] sm:$0xff]
  %v3173 = vld [vmem:[#allocation9 + $0x120] sm:$0xff]
  %v3174 = vld [vmem:[#allocation9 + $0x128] sm:$0xff]
  %v3175 = vld [vmem:[#allocation9 + $0x160] sm:$0xff]
  %v3176 = vld [vmem:[#allocation9 + $0x168] sm:$0xff]
  %v3177 = vld [vmem:[#allocation9 + $0x1a0] sm:$0xff]
  %v3178 = vld [vmem:[#allocation9 + $0x1a8] sm:$0xff]
  %v3179 = vld [vmem:[#allocation9 + $0x1e0] sm:$0xff]
  %v3180 = vld [vmem:[#allocation9 + $0x1e8] sm:$0xff]
  %v3181 = vld [vmem:[#allocation9 + $0x220] sm:$0xff]
  %v3182 = vld [vmem:[#allocation9 + $0x228] sm:$0xff]
  %v3183 = vld [vmem:[#allocation9 + $0x260] sm:$0xff]
  %v3184 = vld [vmem:[#allocation9 + $0x268] sm:$0xff]
  %v3185 = vld [vmem:[#allocation9 + $0x2a0] sm:$0x1]
  %v3186 = vld [vmem:[#allocation9 + $0x2a8] sm:$0x1]
  %v3187 = vadd.s32 %v1849, 1
  %v3188 = vadd.s32 %v1850, 1
  %v3189 = vadd.s32 %v1851, 1
  %v3190 = vadd.s32 %v1852, 1
  %v3191 = vadd.s32 %v1853, 1
  %v3192 = vadd.s32 %v1854, 1
  %v3193 = vadd.s32 %v1855, 1
  %v3194 = vadd.s32 %v1856, 1
  %vm3195 = vcmp.ge.s32.totalorder %v3187, 0
  %vm3196 = vcmp.ge.s32.totalorder %v3188, 0
  %vm3197 = vcmp.ge.s32.totalorder %v3189, 0
  %vm3198 = vcmp.ge.s32.totalorder %v3190, 0
  %vm3199 = vcmp.ge.s32.totalorder %v3191, 0
  %vm3200 = vcmp.ge.s32.totalorder %v3192, 0
  %vm3201 = vcmp.ge.s32.totalorder %v3193, 0
  %vm3202 = vcmp.ge.s32.totalorder %v3194, 0
  %vm3203 = vcmp.lt.s32.totalorder %v3187, 32
  %vm3204 = vcmp.lt.s32.totalorder %v3188, 32
  %vm3205 = vcmp.lt.s32.totalorder %v3189, 32
  %vm3206 = vcmp.lt.s32.totalorder %v3190, 32
  %vm3207 = vcmp.lt.s32.totalorder %v3191, 32
  %vm3208 = vcmp.lt.s32.totalorder %v3192, 32
  %vm3209 = vcmp.lt.s32.totalorder %v3193, 32
  %vm3210 = vcmp.lt.s32.totalorder %v3194, 32
  %vm3211 = vmand %vm3195, %vm3203
  %vm3212 = vmand %vm3196, %vm3204
  %vm3213 = vmand %vm3197, %vm3205
  %vm3214 = vmand %vm3198, %vm3206
  %vm3215 = vmand %vm3199, %vm3207
  %vm3216 = vmand %vm3200, %vm3208
  %vm3217 = vmand %vm3201, %vm3209
  %vm3218 = vmand %vm3202, %vm3210
  %v3219 = vsel %vm3211, 1, 0
  %v3220 = vsel %vm3212, 1, 0
  %v3221 = vsel %vm3213, 1, 0
  %v3222 = vsel %vm3214, 1, 0
  %v3223 = vsel %vm3215, 1, 0
  %v3224 = vsel %vm3216, 1, 0
  %v3225 = vsel %vm3217, 1, 0
  %v3226 = vsel %vm3218, 1, 0
  %vm3227 = vcmp.eq.s32.totalorder %v3219, 1
  %vm3228 = vcmp.eq.s32.totalorder %v3220, 1
  %vm3229 = vcmp.eq.s32.totalorder %v3221, 1
  %vm3230 = vcmp.eq.s32.totalorder %v3222, 1
  %vm3231 = vcmp.eq.s32.totalorder %v3223, 1
  %vm3232 = vcmp.eq.s32.totalorder %v3224, 1
  %vm3233 = vcmp.eq.s32.totalorder %v3225, 1
  %vm3234 = vcmp.eq.s32.totalorder %v3226, 1
  %vm3253 = vcmask 1046528
  %v3254 = vrot.slane %v3169, 1
  %v3255 = vrot.slane %v3171, 1
  %v3256 = vsel %vm3253, %v3254, %v3255
  %v3257 = vrot.slane %v3170, 1
  %v3258 = vrot.slane %v3172, 1
  %v3259 = vsel %vm3253, %v3257, %v3258
  %v3260 = vrot.slane %v3173, 1
  %v3261 = vsel %vm3253, %v3255, %v3260
  %v3262 = vrot.slane %v3174, 1
  %v3263 = vsel %vm3253, %v3258, %v3262
  %v3264 = vrot.slane %v3175, 1
  %v3265 = vsel %vm3253, %v3260, %v3264
  %v3266 = vrot.slane %v3176, 1
  %v3267 = vsel %vm3253, %v3262, %v3266
  %v3268 = vrot.slane %v3177, 1
  %v3269 = vsel %vm3253, %v3264, %v3268
  %v3270 = vrot.slane %v3178, 1
  %v3271 = vsel %vm3253, %v3266, %v3270
  %v3272 = vrot.slane %v3179, 1
  %v3273 = vsel %vm3253, %v3268, %v3272
  %v3274 = vrot.slane %v3180, 1
  %v3275 = vsel %vm3253, %v3270, %v3274
  %v3276 = vrot.slane %v3181, 1
  %v3277 = vsel %vm3253, %v3272, %v3276
  %v3278 = vrot.slane %v3182, 1
  %v3279 = vsel %vm3253, %v3274, %v3278
  %v3280 = vrot.slane %v3183, 1
  %v3281 = vsel %vm3253, %v3276, %v3280
  %v3282 = vrot.slane %v3184, 1
  %v3283 = vsel %vm3253, %v3278, %v3282
  %v3284 = vrot.slane %v3185, 1
  %v3285 = vsel %vm3253, %v3280, %v3284
  %v3286 = vrot.slane %v3186, 1
  %v3287 = vsel %vm3253, %v3282, %v3286
  %v3304 = vsel %vm3227, %v3256, 0.0
  %v3305 = vsel %vm3227, %v3259, 0.0
  %v3306 = vsel %vm3228, %v3261, 0.0
  %v3307 = vsel %vm3228, %v3263, 0.0
  %v3308 = vsel %vm3229, %v3265, 0.0
  %v3309 = vsel %vm3229, %v3267, 0.0
  %v3310 = vsel %vm3230, %v3269, 0.0
  %v3311 = vsel %vm3230, %v3271, 0.0
  %v3312 = vsel %vm3231, %v3273, 0.0
  %v3313 = vsel %vm3231, %v3275, 0.0
  %v3314 = vsel %vm3232, %v3277, 0.0
  %v3315 = vsel %vm3232, %v3279, 0.0
  %v3316 = vsel %vm3233, %v3281, 0.0
  %v3317 = vsel %vm3233, %v3283, 0.0
  %v3318 = vsel %vm3234, %v3285, 0.0
  %v3319 = vsel %vm3234, %v3287, 0.0
  %v3320 = vadd.f32 %v3153, %v3304
  %v3321 = vadd.f32 %v3154, %v3305
  %v3322 = vadd.f32 %v3155, %v3306
  %v3323 = vadd.f32 %v3156, %v3307
  %v3324 = vadd.f32 %v3157, %v3308
  %v3325 = vadd.f32 %v3158, %v3309
  %v3326 = vadd.f32 %v3159, %v3310
  %v3327 = vadd.f32 %v3160, %v3311
  %v3328 = vadd.f32 %v3161, %v3312
  %v3329 = vadd.f32 %v3162, %v3313
  %v3330 = vadd.f32 %v3163, %v3314
  %v3331 = vadd.f32 %v3164, %v3315
  %v3332 = vadd.f32 %v3165, %v3316
  %v3333 = vadd.f32 %v3166, %v3317
  %v3334 = vadd.f32 %v3167, %v3318
  %v3335 = vadd.f32 %v3168, %v3319
  %vm3336 = vcmp.ge.f32.partialorder %v3320, 0.0
  %vm3337 = vcmp.ge.f32.partialorder %v3321, 0.0
  %vm3338 = vcmp.ge.f32.partialorder %v3322, 0.0
  %vm3339 = vcmp.ge.f32.partialorder %v3323, 0.0
  %vm3340 = vcmp.ge.f32.partialorder %v3324, 0.0
  %vm3341 = vcmp.ge.f32.partialorder %v3325, 0.0
  %vm3342 = vcmp.ge.f32.partialorder %v3326, 0.0
  %vm3343 = vcmp.ge.f32.partialorder %v3327, 0.0
  %vm3344 = vcmp.ge.f32.partialorder %v3328, 0.0
  %vm3345 = vcmp.ge.f32.partialorder %v3329, 0.0
  %vm3346 = vcmp.ge.f32.partialorder %v3330, 0.0
  %vm3347 = vcmp.ge.f32.partialorder %v3331, 0.0
  %vm3348 = vcmp.ge.f32.partialorder %v3332, 0.0
  %vm3349 = vcmp.ge.f32.partialorder %v3333, 0.0
  %vm3350 = vcmp.ge.f32.partialorder %v3334, 0.0
  %vm3351 = vcmp.ge.f32.partialorder %v3335, 0.0
  %v3352 = vmul.f32 %v3320, 0.2
  %v3353 = vmul.f32 %v3321, 0.2
  %v3354 = vmul.f32 %v3322, 0.2
  %v3355 = vmul.f32 %v3323, 0.2
  %v3356 = vmul.f32 %v3324, 0.2
  %v3357 = vmul.f32 %v3325, 0.2
  %v3358 = vmul.f32 %v3326, 0.2
  %v3359 = vmul.f32 %v3327, 0.2
  %v3360 = vmul.f32 %v3328, 0.2
  %v3361 = vmul.f32 %v3329, 0.2
  %v3362 = vmul.f32 %v3330, 0.2
  %v3363 = vmul.f32 %v3331, 0.2
  %v3364 = vmul.f32 %v3332, 0.2
  %v3365 = vmul.f32 %v3333, 0.2
  %v3366 = vmul.f32 %v3334, 0.2
  %v3367 = vmul.f32 %v3335, 0.2
  %v3368 = vsel %vm3336, %v3320, %v3352
  %v3369 = vsel %vm3337, %v3321, %v3353
  %v3370 = vsel %vm3338, %v3322, %v3354
  %v3371 = vsel %vm3339, %v3323, %v3355
  %v3372 = vsel %vm3340, %v3324, %v3356
  %v3373 = vsel %vm3341, %v3325, %v3357
  %v3374 = vsel %vm3342, %v3326, %v3358
  %v3375 = vsel %vm3343, %v3327, %v3359
  %v3376 = vsel %vm3344, %v3328, %v3360
  %v3377 = vsel %vm3345, %v3329, %v3361
  %v3378 = vsel %vm3346, %v3330, %v3362
  %v3379 = vsel %vm3347, %v3331, %v3363
  %v3380 = vsel %vm3348, %v3332, %v3364
  %v3381 = vsel %vm3349, %v3333, %v3365
  %v3382 = vsel %vm3350, %v3334, %v3366
  %v3383 = vsel %vm3351, %v3335, %v3367
  %s3384 = smul.u32 %s2118, 8
  %s3385 = sshll.u32 %s3384, 4
  %3386 = dma.done %s326, %s3385
  %v3387 = vpack.c.bf16 %v3370, %v3368
  %v3388 = vpack.c.bf16 %v3371, %v3369
  %v3389 = vpack.c.bf16 %v3374, %v3372
  %v3390 = vpack.c.bf16 %v3375, %v3373
  %v3391 = vpack.c.bf16 %v3378, %v3376
  %v3392 = vpack.c.bf16 %v3379, %v3377
  %v3393 = vpack.c.bf16 %v3382, %v3380
  %v3394 = vpack.c.bf16 %v3383, %v3381
  %v3395 = vld [vmem:[#allocation4] sm:$0xff]
  %v3396 = vld [vmem:[#allocation4 + $0x8] sm:$0xff]
  %v3397 = vld [vmem:[#allocation4 + $0x10] sm:$0xff]
  %v3398 = vld [vmem:[#allocation4 + $0x18] sm:$0xff]
  %v3399 = vld [vmem:[#allocation4 + $0x20] sm:$0xff]
  %v3400 = vld [vmem:[#allocation4 + $0x28] sm:$0xff]
  %v3401 = vld [vmem:[#allocation4 + $0x30] sm:$0xff]
  %v3402 = vld [vmem:[#allocation4 + $0x38] sm:$0xff]
  %v3403 = vld [vmem:[#allocation4 + $0x40] sm:$0xff]
  %v3404 = vld [vmem:[#allocation4 + $0x48] sm:$0xff]
  %v3405 = vld [vmem:[#allocation4 + $0x50] sm:$0xff]
  %v3406 = vld [vmem:[#allocation4 + $0x58] sm:$0xff]
  %v3407 = vld [vmem:[#allocation4 + $0x60] sm:$0xff]
  %v3408 = vld [vmem:[#allocation4 + $0x68] sm:$0xff]
  %v3409 = vld [vmem:[#allocation4 + $0x70] sm:$0xff]
  %v3410 = vld [vmem:[#allocation4 + $0x78] sm:$0xff]
  %v3411 = vld [vmem:[#allocation4 + $0x80] sm:$0xff]
  %v3412 = vld [vmem:[#allocation4 + $0x88] sm:$0xff]
  %v3413 = vld [vmem:[#allocation4 + $0x90] sm:$0xff]
  %v3414 = vld [vmem:[#allocation4 + $0x98] sm:$0xff]
  %v3415 = vld [vmem:[#allocation4 + $0xa0] sm:$0xff]
  %v3416 = vld [vmem:[#allocation4 + $0xa8] sm:$0xff]
  %v3417 = vld [vmem:[#allocation4 + $0xb0] sm:$0xff]
  %v3418 = vld [vmem:[#allocation4 + $0xb8] sm:$0xff]
  %v3419 = vld [vmem:[#allocation4 + $0xc0] sm:$0xff]
  %v3420 = vld [vmem:[#allocation4 + $0xc8] sm:$0xff]
  %v3421 = vld [vmem:[#allocation4 + $0xd0] sm:$0xff]
  %v3422 = vld [vmem:[#allocation4 + $0xd8] sm:$0xff]
  %v3423 = vld [vmem:[#allocation4 + $0xe0] sm:$0xff]
  %v3424 = vld [vmem:[#allocation4 + $0xe8] sm:$0xff]
  %v3425 = vld [vmem:[#allocation4 + $0xf0] sm:$0xff]
  %v3426 = vld [vmem:[#allocation4 + $0xf8] sm:$0xff]
  %v3427 = vld [vmem:[#allocation4 + $0x100] sm:$0xff]
  %v3428 = vld [vmem:[#allocation4 + $0x108] sm:$0xff]
  %v3429 = vld [vmem:[#allocation4 + $0x110] sm:$0xff]
  %v3430 = vld [vmem:[#allocation4 + $0x118] sm:$0xff]
  %v3431 = vld [vmem:[#allocation4 + $0x120] sm:$0xff]
  %v3432 = vld [vmem:[#allocation4 + $0x128] sm:$0xff]
  %v3433 = vld [vmem:[#allocation4 + $0x130] sm:$0xff]
  %v3434 = vld [vmem:[#allocation4 + $0x138] sm:$0xff]
  %v3435 = vld [vmem:[#allocation4 + $0x140] sm:$0xff]
  %v3436 = vld [vmem:[#allocation4 + $0x148] sm:$0xff]
  %v3437 = vld [vmem:[#allocation4 + $0x150] sm:$0xff]
  %v3438 = vld [vmem:[#allocation4 + $0x158] sm:$0xff]
  %v3439 = vld [vmem:[#allocation4 + $0x160] sm:$0xff]
  %v3440 = vld [vmem:[#allocation4 + $0x168] sm:$0xff]
  %v3441 = vld [vmem:[#allocation4 + $0x170] sm:$0xff]
  %v3442 = vld [vmem:[#allocation4 + $0x178] sm:$0xff]
  %v3443 = vld [vmem:[#allocation4 + $0x180] sm:$0xff]
  %v3444 = vld [vmem:[#allocation4 + $0x188] sm:$0xff]
  %v3445 = vld [vmem:[#allocation4 + $0x190] sm:$0xff]
  %v3446 = vld [vmem:[#allocation4 + $0x198] sm:$0xff]
  %v3447 = vld [vmem:[#allocation4 + $0x1a0] sm:$0xff]
  %v3448 = vld [vmem:[#allocation4 + $0x1a8] sm:$0xff]
  %v3449 = vld [vmem:[#allocation4 + $0x1b0] sm:$0xff]
  %v3450 = vld [vmem:[#allocation4 + $0x1b8] sm:$0xff]
  %v3451 = vld [vmem:[#allocation4 + $0x1c0] sm:$0xff]
  %v3452 = vld [vmem:[#allocation4 + $0x1c8] sm:$0xff]
  %v3453 = vld [vmem:[#allocation4 + $0x1d0] sm:$0xff]
  %v3454 = vld [vmem:[#allocation4 + $0x1d8] sm:$0xff]
  %v3455 = vld [vmem:[#allocation4 + $0x1e0] sm:$0xff]
  %v3456 = vld [vmem:[#allocation4 + $0x1e8] sm:$0xff]
  %v3457 = vld [vmem:[#allocation4 + $0x1f0] sm:$0xff]
  %v3458 = vld [vmem:[#allocation4 + $0x1f8] sm:$0xff]
  %v3459 = vld [vmem:[#allocation4 + $0x200] sm:$0xff]
  %v3460 = vld [vmem:[#allocation4 + $0x208] sm:$0xff]
  %v3461 = vld [vmem:[#allocation4 + $0x210] sm:$0xff]
  %v3462 = vld [vmem:[#allocation4 + $0x218] sm:$0xff]
  %v3463 = vld [vmem:[#allocation4 + $0x220] sm:$0xff]
  %v3464 = vld [vmem:[#allocation4 + $0x228] sm:$0xff]
  %v3465 = vld [vmem:[#allocation4 + $0x230] sm:$0xff]
  %v3466 = vld [vmem:[#allocation4 + $0x238] sm:$0xff]
  %v3467 = vld [vmem:[#allocation4 + $0x240] sm:$0xff]
  %v3468 = vld [vmem:[#allocation4 + $0x248] sm:$0xff]
  %v3469 = vld [vmem:[#allocation4 + $0x250] sm:$0xff]
  %v3470 = vld [vmem:[#allocation4 + $0x258] sm:$0xff]
  %v3471 = vld [vmem:[#allocation4 + $0x260] sm:$0xff]
  %v3472 = vld [vmem:[#allocation4 + $0x268] sm:$0xff]
  %v3473 = vld [vmem:[#allocation4 + $0x270] sm:$0xff]
  %v3474 = vld [vmem:[#allocation4 + $0x278] sm:$0xff]
  %v3475 = vld [vmem:[#allocation4 + $0x280] sm:$0xff]
  %v3476 = vld [vmem:[#allocation4 + $0x288] sm:$0xff]
  %v3477 = vld [vmem:[#allocation4 + $0x290] sm:$0xff]
  %v3478 = vld [vmem:[#allocation4 + $0x298] sm:$0xff]
  %v3479 = vld [vmem:[#allocation4 + $0x2a0] sm:$0xff]
  %v3480 = vld [vmem:[#allocation4 + $0x2a8] sm:$0xff]
  %v3481 = vld [vmem:[#allocation4 + $0x2b0] sm:$0xff]
  %v3482 = vld [vmem:[#allocation4 + $0x2b8] sm:$0xff]
  %v3483 = vld [vmem:[#allocation4 + $0x2c0] sm:$0xff]
  %v3484 = vld [vmem:[#allocation4 + $0x2c8] sm:$0xff]
  %v3485 = vld [vmem:[#allocation4 + $0x2d0] sm:$0xff]
  %v3486 = vld [vmem:[#allocation4 + $0x2d8] sm:$0xff]
  %v3487 = vld [vmem:[#allocation4 + $0x2e0] sm:$0xff]
  %v3488 = vld [vmem:[#allocation4 + $0x2e8] sm:$0xff]
  %v3489 = vld [vmem:[#allocation4 + $0x2f0] sm:$0xff]
  %v3490 = vld [vmem:[#allocation4 + $0x2f8] sm:$0xff]
  %v3491 = vld [vmem:[#allocation4 + $0x300] sm:$0xff]
  %v3492 = vld [vmem:[#allocation4 + $0x308] sm:$0xff]
  %v3493 = vld [vmem:[#allocation4 + $0x310] sm:$0xff]
  %v3494 = vld [vmem:[#allocation4 + $0x318] sm:$0xff]
  %v3495 = vld [vmem:[#allocation4 + $0x320] sm:$0xff]
  %v3496 = vld [vmem:[#allocation4 + $0x328] sm:$0xff]
  %v3497 = vld [vmem:[#allocation4 + $0x330] sm:$0xff]
  %v3498 = vld [vmem:[#allocation4 + $0x338] sm:$0xff]
  %v3499 = vld [vmem:[#allocation4 + $0x340] sm:$0xff]
  %v3500 = vld [vmem:[#allocation4 + $0x348] sm:$0xff]
  %v3501 = vld [vmem:[#allocation4 + $0x350] sm:$0xff]
  %v3502 = vld [vmem:[#allocation4 + $0x358] sm:$0xff]
  %v3503 = vld [vmem:[#allocation4 + $0x360] sm:$0xff]
  %v3504 = vld [vmem:[#allocation4 + $0x368] sm:$0xff]
  %v3505 = vld [vmem:[#allocation4 + $0x370] sm:$0xff]
  %v3506 = vld [vmem:[#allocation4 + $0x378] sm:$0xff]
  %v3507 = vld [vmem:[#allocation4 + $0x380] sm:$0xff]
  %v3508 = vld [vmem:[#allocation4 + $0x388] sm:$0xff]
  %v3509 = vld [vmem:[#allocation4 + $0x390] sm:$0xff]
  %v3510 = vld [vmem:[#allocation4 + $0x398] sm:$0xff]
  %v3511 = vld [vmem:[#allocation4 + $0x3a0] sm:$0xff]
  %v3512 = vld [vmem:[#allocation4 + $0x3a8] sm:$0xff]
  %v3513 = vld [vmem:[#allocation4 + $0x3b0] sm:$0xff]
  %v3514 = vld [vmem:[#allocation4 + $0x3b8] sm:$0xff]
  %v3515 = vld [vmem:[#allocation4 + $0x3c0] sm:$0xff]
  %v3516 = vld [vmem:[#allocation4 + $0x3c8] sm:$0xff]
  %v3517 = vld [vmem:[#allocation4 + $0x3d0] sm:$0xff]
  %v3518 = vld [vmem:[#allocation4 + $0x3d8] sm:$0xff]
  %v3519 = vld [vmem:[#allocation4 + $0x3e0] sm:$0xff]
  %v3520 = vld [vmem:[#allocation4 + $0x3e8] sm:$0xff]
  %v3521 = vld [vmem:[#allocation4 + $0x3f0] sm:$0xff]
  %v3522 = vld [vmem:[#allocation4 + $0x3f8] sm:$0xff]
  %v3651 = vunpack.c.l.b16 %v3395
  %v3652 = vunpack.c.h.b16 %v3395
  %v3653 = vunpack.c.l.b16 %v3396
  %v3654 = vunpack.c.h.b16 %v3396
  %v3655 = vunpack.c.l.b16 %v3397
  %v3656 = vunpack.c.h.b16 %v3397
  %v3657 = vunpack.c.l.b16 %v3398
  %v3658 = vunpack.c.h.b16 %v3398
  %v3659 = vunpack.c.l.b16 %v3399
  %v3660 = vunpack.c.h.b16 %v3399
  %v3661 = vunpack.c.l.b16 %v3400
  %v3662 = vunpack.c.h.b16 %v3400
  %v3663 = vunpack.c.l.b16 %v3401
  %v3664 = vunpack.c.h.b16 %v3401
  %v3665 = vunpack.c.l.b16 %v3402
  %v3666 = vunpack.c.h.b16 %v3402
  %v3667 = vunpack.c.l.b16 %v3403
  %v3668 = vunpack.c.h.b16 %v3403
  %v3669 = vunpack.c.l.b16 %v3404
  %v3670 = vunpack.c.h.b16 %v3404
  %v3671 = vunpack.c.l.b16 %v3405
  %v3672 = vunpack.c.h.b16 %v3405
  %v3673 = vunpack.c.l.b16 %v3406
  %v3674 = vunpack.c.h.b16 %v3406
  %v3675 = vunpack.c.l.b16 %v3407
  %v3676 = vunpack.c.h.b16 %v3407
  %v3677 = vunpack.c.l.b16 %v3408
  %v3678 = vunpack.c.h.b16 %v3408
  %v3679 = vunpack.c.l.b16 %v3409
  %v3680 = vunpack.c.h.b16 %v3409
  %v3681 = vunpack.c.l.b16 %v3410
  %v3682 = vunpack.c.h.b16 %v3410
  %v3683 = vunpack.c.l.b16 %v3411
  %v3684 = vunpack.c.h.b16 %v3411
  %v3685 = vunpack.c.l.b16 %v3412
  %v3686 = vunpack.c.h.b16 %v3412
  %v3687 = vunpack.c.l.b16 %v3413
  %v3688 = vunpack.c.h.b16 %v3413
  %v3689 = vunpack.c.l.b16 %v3414
  %v3690 = vunpack.c.h.b16 %v3414
  %v3691 = vunpack.c.l.b16 %v3415
  %v3692 = vunpack.c.h.b16 %v3415
  %v3693 = vunpack.c.l.b16 %v3416
  %v3694 = vunpack.c.h.b16 %v3416
  %v3695 = vunpack.c.l.b16 %v3417
  %v3696 = vunpack.c.h.b16 %v3417
  %v3697 = vunpack.c.l.b16 %v3418
  %v3698 = vunpack.c.h.b16 %v3418
  %v3699 = vunpack.c.l.b16 %v3419
  %v3700 = vunpack.c.h.b16 %v3419
  %v3701 = vunpack.c.l.b16 %v3420
  %v3702 = vunpack.c.h.b16 %v3420
  %v3703 = vunpack.c.l.b16 %v3421
  %v3704 = vunpack.c.h.b16 %v3421
  %v3705 = vunpack.c.l.b16 %v3422
  %v3706 = vunpack.c.h.b16 %v3422
  %v3707 = vunpack.c.l.b16 %v3423
  %v3708 = vunpack.c.h.b16 %v3423
  %v3709 = vunpack.c.l.b16 %v3424
  %v3710 = vunpack.c.h.b16 %v3424
  %v3711 = vunpack.c.l.b16 %v3425
  %v3712 = vunpack.c.h.b16 %v3425
  %v3713 = vunpack.c.l.b16 %v3426
  %v3714 = vunpack.c.h.b16 %v3426
  %v3715 = vunpack.c.l.b16 %v3427
  %v3716 = vunpack.c.h.b16 %v3427
  %v3717 = vunpack.c.l.b16 %v3428
  %v3718 = vunpack.c.h.b16 %v3428
  %v3719 = vunpack.c.l.b16 %v3429
  %v3720 = vunpack.c.h.b16 %v3429
  %v3721 = vunpack.c.l.b16 %v3430
  %v3722 = vunpack.c.h.b16 %v3430
  %v3723 = vunpack.c.l.b16 %v3431
  %v3724 = vunpack.c.h.b16 %v3431
  %v3725 = vunpack.c.l.b16 %v3432
  %v3726 = vunpack.c.h.b16 %v3432
  %v3727 = vunpack.c.l.b16 %v3433
  %v3728 = vunpack.c.h.b16 %v3433
  %v3729 = vunpack.c.l.b16 %v3434
  %v3730 = vunpack.c.h.b16 %v3434
  %v3731 = vunpack.c.l.b16 %v3435
  %v3732 = vunpack.c.h.b16 %v3435
  %v3733 = vunpack.c.l.b16 %v3436
  %v3734 = vunpack.c.h.b16 %v3436
  %v3735 = vunpack.c.l.b16 %v3437
  %v3736 = vunpack.c.h.b16 %v3437
  %v3737 = vunpack.c.l.b16 %v3438
  %v3738 = vunpack.c.h.b16 %v3438
  %v3739 = vunpack.c.l.b16 %v3439
  %v3740 = vunpack.c.h.b16 %v3439
  %v3741 = vunpack.c.l.b16 %v3440
  %v3742 = vunpack.c.h.b16 %v3440
  %v3743 = vunpack.c.l.b16 %v3441
  %v3744 = vunpack.c.h.b16 %v3441
  %v3745 = vunpack.c.l.b16 %v3442
  %v3746 = vunpack.c.h.b16 %v3442
  %v3747 = vunpack.c.l.b16 %v3443
  %v3748 = vunpack.c.h.b16 %v3443
  %v3749 = vunpack.c.l.b16 %v3444
  %v3750 = vunpack.c.h.b16 %v3444
  %v3751 = vunpack.c.l.b16 %v3445
  %v3752 = vunpack.c.h.b16 %v3445
  %v3753 = vunpack.c.l.b16 %v3446
  %v3754 = vunpack.c.h.b16 %v3446
  %v3755 = vunpack.c.l.b16 %v3447
  %v3756 = vunpack.c.h.b16 %v3447
  %v3757 = vunpack.c.l.b16 %v3448
  %v3758 = vunpack.c.h.b16 %v3448
  %v3759 = vunpack.c.l.b16 %v3449
  %v3760 = vunpack.c.h.b16 %v3449
  %v3761 = vunpack.c.l.b16 %v3450
  %v3762 = vunpack.c.h.b16 %v3450
  %v3763 = vunpack.c.l.b16 %v3451
  %v3764 = vunpack.c.h.b16 %v3451
  %v3765 = vunpack.c.l.b16 %v3452
  %v3766 = vunpack.c.h.b16 %v3452
  %v3767 = vunpack.c.l.b16 %v3453
  %v3768 = vunpack.c.h.b16 %v3453
  %v3769 = vunpack.c.l.b16 %v3454
  %v3770 = vunpack.c.h.b16 %v3454
  %v3771 = vunpack.c.l.b16 %v3455
  %v3772 = vunpack.c.h.b16 %v3455
  %v3773 = vunpack.c.l.b16 %v3456
  %v3774 = vunpack.c.h.b16 %v3456
  %v3775 = vunpack.c.l.b16 %v3457
  %v3776 = vunpack.c.h.b16 %v3457
  %v3777 = vunpack.c.l.b16 %v3458
  %v3778 = vunpack.c.h.b16 %v3458
  %v3779 = vunpack.c.l.b16 %v3459
  %v3780 = vunpack.c.h.b16 %v3459
  %v3781 = vunpack.c.l.b16 %v3460
  %v3782 = vunpack.c.h.b16 %v3460
  %v3783 = vunpack.c.l.b16 %v3461
  %v3784 = vunpack.c.h.b16 %v3461
  %v3785 = vunpack.c.l.b16 %v3462
  %v3786 = vunpack.c.h.b16 %v3462
  %v3787 = vunpack.c.l.b16 %v3463
  %v3788 = vunpack.c.h.b16 %v3463
  %v3789 = vunpack.c.l.b16 %v3464
  %v3790 = vunpack.c.h.b16 %v3464
  %v3791 = vunpack.c.l.b16 %v3465
  %v3792 = vunpack.c.h.b16 %v3465
  %v3793 = vunpack.c.l.b16 %v3466
  %v3794 = vunpack.c.h.b16 %v3466
  %v3795 = vunpack.c.l.b16 %v3467
  %v3796 = vunpack.c.h.b16 %v3467
  %v3797 = vunpack.c.l.b16 %v3468
  %v3798 = vunpack.c.h.b16 %v3468
  %v3799 = vunpack.c.l.b16 %v3469
  %v3800 = vunpack.c.h.b16 %v3469
  %v3801 = vunpack.c.l.b16 %v3470
  %v3802 = vunpack.c.h.b16 %v3470
  %v3803 = vunpack.c.l.b16 %v3471
  %v3804 = vunpack.c.h.b16 %v3471
  %v3805 = vunpack.c.l.b16 %v3472
  %v3806 = vunpack.c.h.b16 %v3472
  %v3807 = vunpack.c.l.b16 %v3473
  %v3808 = vunpack.c.h.b16 %v3473
  %v3809 = vunpack.c.l.b16 %v3474
  %v3810 = vunpack.c.h.b16 %v3474
  %v3811 = vunpack.c.l.b16 %v3475
  %v3812 = vunpack.c.h.b16 %v3475
  %v3813 = vunpack.c.l.b16 %v3476
  %v3814 = vunpack.c.h.b16 %v3476
  %v3815 = vunpack.c.l.b16 %v3477
  %v3816 = vunpack.c.h.b16 %v3477
  %v3817 = vunpack.c.l.b16 %v3478
  %v3818 = vunpack.c.h.b16 %v3478
  %v3819 = vunpack.c.l.b16 %v3479
  %v3820 = vunpack.c.h.b16 %v3479
  %v3821 = vunpack.c.l.b16 %v3480
  %v3822 = vunpack.c.h.b16 %v3480
  %v3823 = vunpack.c.l.b16 %v3481
  %v3824 = vunpack.c.h.b16 %v3481
  %v3825 = vunpack.c.l.b16 %v3482
  %v3826 = vunpack.c.h.b16 %v3482
  %v3827 = vunpack.c.l.b16 %v3483
  %v3828 = vunpack.c.h.b16 %v3483
  %v3829 = vunpack.c.l.b16 %v3484
  %v3830 = vunpack.c.h.b16 %v3484
  %v3831 = vunpack.c.l.b16 %v3485
  %v3832 = vunpack.c.h.b16 %v3485
  %v3833 = vunpack.c.l.b16 %v3486
  %v3834 = vunpack.c.h.b16 %v3486
  %v3835 = vunpack.c.l.b16 %v3487
  %v3836 = vunpack.c.h.b16 %v3487
  %v3837 = vunpack.c.l.b16 %v3488
  %v3838 = vunpack.c.h.b16 %v3488
  %v3839 = vunpack.c.l.b16 %v3489
  %v3840 = vunpack.c.h.b16 %v3489
  %v3841 = vunpack.c.l.b16 %v3490
  %v3842 = vunpack.c.h.b16 %v3490
  %v3843 = vunpack.c.l.b16 %v3491
  %v3844 = vunpack.c.h.b16 %v3491
  %v3845 = vunpack.c.l.b16 %v3492
  %v3846 = vunpack.c.h.b16 %v3492
  %v3847 = vunpack.c.l.b16 %v3493
  %v3848 = vunpack.c.h.b16 %v3493
  %v3849 = vunpack.c.l.b16 %v3494
  %v3850 = vunpack.c.h.b16 %v3494
  %v3851 = vunpack.c.l.b16 %v3495
  %v3852 = vunpack.c.h.b16 %v3495
  %v3853 = vunpack.c.l.b16 %v3496
  %v3854 = vunpack.c.h.b16 %v3496
  %v3855 = vunpack.c.l.b16 %v3497
  %v3856 = vunpack.c.h.b16 %v3497
  %v3857 = vunpack.c.l.b16 %v3498
  %v3858 = vunpack.c.h.b16 %v3498
  %v3859 = vunpack.c.l.b16 %v3499
  %v3860 = vunpack.c.h.b16 %v3499
  %v3861 = vunpack.c.l.b16 %v3500
  %v3862 = vunpack.c.h.b16 %v3500
  %v3863 = vunpack.c.l.b16 %v3501
  %v3864 = vunpack.c.h.b16 %v3501
  %v3865 = vunpack.c.l.b16 %v3502
  %v3866 = vunpack.c.h.b16 %v3502
  %v3867 = vunpack.c.l.b16 %v3503
  %v3868 = vunpack.c.h.b16 %v3503
  %v3869 = vunpack.c.l.b16 %v3504
  %v3870 = vunpack.c.h.b16 %v3504
  %v3871 = vunpack.c.l.b16 %v3505
  %v3872 = vunpack.c.h.b16 %v3505
  %v3873 = vunpack.c.l.b16 %v3506
  %v3874 = vunpack.c.h.b16 %v3506
  %v3875 = vunpack.c.l.b16 %v3507
  %v3876 = vunpack.c.h.b16 %v3507
  %v3877 = vunpack.c.l.b16 %v3508
  %v3878 = vunpack.c.h.b16 %v3508
  %v3879 = vunpack.c.l.b16 %v3509
  %v3880 = vunpack.c.h.b16 %v3509
  %v3881 = vunpack.c.l.b16 %v3510
  %v3882 = vunpack.c.h.b16 %v3510
  %v3883 = vunpack.c.l.b16 %v3511
  %v3884 = vunpack.c.h.b16 %v3511
  %v3885 = vunpack.c.l.b16 %v3512
  %v3886 = vunpack.c.h.b16 %v3512
  %v3887 = vunpack.c.l.b16 %v3513
  %v3888 = vunpack.c.h.b16 %v3513
  %v3889 = vunpack.c.l.b16 %v3514
  %v3890 = vunpack.c.h.b16 %v3514
  %v3891 = vunpack.c.l.b16 %v3515
  %v3892 = vunpack.c.h.b16 %v3515
  %v3893 = vunpack.c.l.b16 %v3516
  %v3894 = vunpack.c.h.b16 %v3516
  %v3895 = vunpack.c.l.b16 %v3517
  %v3896 = vunpack.c.h.b16 %v3517
  %v3897 = vunpack.c.l.b16 %v3518
  %v3898 = vunpack.c.h.b16 %v3518
  %v3899 = vunpack.c.l.b16 %v3519
  %v3900 = vunpack.c.h.b16 %v3519
  %v3901 = vunpack.c.l.b16 %v3520
  %v3902 = vunpack.c.h.b16 %v3520
  %v3903 = vunpack.c.l.b16 %v3521
  %v3904 = vunpack.c.h.b16 %v3521
  %v3905 = vunpack.c.l.b16 %v3522
  %v3906 = vunpack.c.h.b16 %v3522
  %v3907 = vpack.c.b16 %v3659, %v3651
  %v3908 = vpack.c.b16 %v3660, %v3652
  %v3909 = vpack.c.b16 %v3661, %v3653
  %v3910 = vpack.c.b16 %v3662, %v3654
  %v3911 = vpack.c.b16 %v3663, %v3655
  %v3912 = vpack.c.b16 %v3664, %v3656
  %v3913 = vpack.c.b16 %v3665, %v3657
  %v3914 = vpack.c.b16 %v3666, %v3658
  %v3915 = vpack.c.b16 %v3675, %v3667
  %v3916 = vpack.c.b16 %v3676, %v3668
  %v3917 = vpack.c.b16 %v3677, %v3669
  %v3918 = vpack.c.b16 %v3678, %v3670
  %v3919 = vpack.c.b16 %v3679, %v3671
  %v3920 = vpack.c.b16 %v3680, %v3672
  %v3921 = vpack.c.b16 %v3681, %v3673
  %v3922 = vpack.c.b16 %v3682, %v3674
  %v3923 = vpack.c.b16 %v3691, %v3683
  %v3924 = vpack.c.b16 %v3692, %v3684
  %v3925 = vpack.c.b16 %v3693, %v3685
  %v3926 = vpack.c.b16 %v3694, %v3686
  %v3927 = vpack.c.b16 %v3695, %v3687
  %v3928 = vpack.c.b16 %v3696, %v3688
  %v3929 = vpack.c.b16 %v3697, %v3689
  %v3930 = vpack.c.b16 %v3698, %v3690
  %v3931 = vpack.c.b16 %v3707, %v3699
  %v3932 = vpack.c.b16 %v3708, %v3700
  %v3933 = vpack.c.b16 %v3709, %v3701
  %v3934 = vpack.c.b16 %v3710, %v3702
  %v3935 = vpack.c.b16 %v3711, %v3703
  %v3936 = vpack.c.b16 %v3712, %v3704
  %v3937 = vpack.c.b16 %v3713, %v3705
  %v3938 = vpack.c.b16 %v3714, %v3706
  %v3939 = vpack.c.b16 %v3723, %v3715
  %v3940 = vpack.c.b16 %v3724, %v3716
  %v3941 = vpack.c.b16 %v3725, %v3717
  %v3942 = vpack.c.b16 %v3726, %v3718
  %v3943 = vpack.c.b16 %v3727, %v3719
  %v3944 = vpack.c.b16 %v3728, %v3720
  %v3945 = vpack.c.b16 %v3729, %v3721
  %v3946 = vpack.c.b16 %v3730, %v3722
  %v3947 = vpack.c.b16 %v3739, %v3731
  %v3948 = vpack.c.b16 %v3740, %v3732
  %v3949 = vpack.c.b16 %v3741, %v3733
  %v3950 = vpack.c.b16 %v3742, %v3734
  %v3951 = vpack.c.b16 %v3743, %v3735
  %v3952 = vpack.c.b16 %v3744, %v3736
  %v3953 = vpack.c.b16 %v3745, %v3737
  %v3954 = vpack.c.b16 %v3746, %v3738
  %v3955 = vpack.c.b16 %v3755, %v3747
  %v3956 = vpack.c.b16 %v3756, %v3748
  %v3957 = vpack.c.b16 %v3757, %v3749
  %v3958 = vpack.c.b16 %v3758, %v3750
  %v3959 = vpack.c.b16 %v3759, %v3751
  %v3960 = vpack.c.b16 %v3760, %v3752
  %v3961 = vpack.c.b16 %v3761, %v3753
  %v3962 = vpack.c.b16 %v3762, %v3754
  %v3963 = vpack.c.b16 %v3771, %v3763
  %v3964 = vpack.c.b16 %v3772, %v3764
  %v3965 = vpack.c.b16 %v3773, %v3765
  %v3966 = vpack.c.b16 %v3774, %v3766
  %v3967 = vpack.c.b16 %v3775, %v3767
  %v3968 = vpack.c.b16 %v3776, %v3768
  %v3969 = vpack.c.b16 %v3777, %v3769
  %v3970 = vpack.c.b16 %v3778, %v3770
  %v3971 = vpack.c.b16 %v3787, %v3779
  %v3972 = vpack.c.b16 %v3788, %v3780
  %v3973 = vpack.c.b16 %v3789, %v3781
  %v3974 = vpack.c.b16 %v3790, %v3782
  %v3975 = vpack.c.b16 %v3791, %v3783
  %v3976 = vpack.c.b16 %v3792, %v3784
  %v3977 = vpack.c.b16 %v3793, %v3785
  %v3978 = vpack.c.b16 %v3794, %v3786
  %v3979 = vpack.c.b16 %v3803, %v3795
  %v3980 = vpack.c.b16 %v3804, %v3796
  %v3981 = vpack.c.b16 %v3805, %v3797
  %v3982 = vpack.c.b16 %v3806, %v3798
  %v3983 = vpack.c.b16 %v3807, %v3799
  %v3984 = vpack.c.b16 %v3808, %v3800
  %v3985 = vpack.c.b16 %v3809, %v3801
  %v3986 = vpack.c.b16 %v3810, %v3802
  %v3987 = vpack.c.b16 %v3819, %v3811
  %v3988 = vpack.c.b16 %v3820, %v3812
  %v3989 = vpack.c.b16 %v3821, %v3813
  %v3990 = vpack.c.b16 %v3822, %v3814
  %v3991 = vpack.c.b16 %v3823, %v3815
  %v3992 = vpack.c.b16 %v3824, %v3816
  %v3993 = vpack.c.b16 %v3825, %v3817
  %v3994 = vpack.c.b16 %v3826, %v3818
  %v3995 = vpack.c.b16 %v3835, %v3827
  %v3996 = vpack.c.b16 %v3836, %v3828
  %v3997 = vpack.c.b16 %v3837, %v3829
  %v3998 = vpack.c.b16 %v3838, %v3830
  %v3999 = vpack.c.b16 %v3839, %v3831
  %v4000 = vpack.c.b16 %v3840, %v3832
  %v4001 = vpack.c.b16 %v3841, %v3833
  %v4002 = vpack.c.b16 %v3842, %v3834
  %v4003 = vpack.c.b16 %v3851, %v3843
  %v4004 = vpack.c.b16 %v3852, %v3844
  %v4005 = vpack.c.b16 %v3853, %v3845
  %v4006 = vpack.c.b16 %v3854, %v3846
  %v4007 = vpack.c.b16 %v3855, %v3847
  %v4008 = vpack.c.b16 %v3856, %v3848
  %v4009 = vpack.c.b16 %v3857, %v3849
  %v4010 = vpack.c.b16 %v3858, %v3850
  %v4011 = vpack.c.b16 %v3867, %v3859
  %v4012 = vpack.c.b16 %v3868, %v3860
  %v4013 = vpack.c.b16 %v3869, %v3861
  %v4014 = vpack.c.b16 %v3870, %v3862
  %v4015 = vpack.c.b16 %v3871, %v3863
  %v4016 = vpack.c.b16 %v3872, %v3864
  %v4017 = vpack.c.b16 %v3873, %v3865
  %v4018 = vpack.c.b16 %v3874, %v3866
  %v4019 = vpack.c.b16 %v3883, %v3875
  %v4020 = vpack.c.b16 %v3884, %v3876
  %v4021 = vpack.c.b16 %v3885, %v3877
  %v4022 = vpack.c.b16 %v3886, %v3878
  %v4023 = vpack.c.b16 %v3887, %v3879
  %v4024 = vpack.c.b16 %v3888, %v3880
  %v4025 = vpack.c.b16 %v3889, %v3881
  %v4026 = vpack.c.b16 %v3890, %v3882
  %v4027 = vpack.c.b16 %v3899, %v3891
  %v4028 = vpack.c.b16 %v3900, %v3892
  %v4029 = vpack.c.b16 %v3901, %v3893
  %v4030 = vpack.c.b16 %v3902, %v3894
  %v4031 = vpack.c.b16 %v3903, %v3895
  %v4032 = vpack.c.b16 %v3904, %v3896
  %v4033 = vpack.c.b16 %v3905, %v3897
  %v4034 = vpack.c.b16 %v3906, %v3898
  %4163 = vmatprep.subr.bf16.mxu0 %v3964
  %4164 = vmatpush1.bf16.msra.mxu0 %v3963
  %4165 = vmatprep.subr.bf16.mxu0 %v3956
  %4166 = vmatpush1.bf16.msra.mxu0 %v3955
  %4167 = vmatprep.subr.bf16.mxu0 %v3948
  %4168 = vmatpush1.bf16.msra.mxu0 %v3947
  %4169 = vmatprep.subr.bf16.mxu0 %v3940
  %4170 = vmatpush1.bf16.msra.mxu0 %v3939
  %4171 = vmatprep.subr.bf16.mxu0 %v3932
  %4172 = vmatpush1.bf16.msra.mxu0 %v3931
  %4173 = vmatprep.subr.bf16.mxu0 %v3924
  %4174 = vmatpush1.bf16.msra.mxu0 %v3923
  %4175 = vmatprep.subr.bf16.mxu0 %v3916
  %4176 = vmatpush1.bf16.msra.mxu0 %v3915
  %4177 = vmatprep.subr.bf16.mxu0 %v3908
  %4178 = vmatpush1.bf16.msra.mxu0 %v3907
  %4179 = vmatprep.subr.bf16.mxu0 %v4028
  %4180 = vmatpush2.bf16.msra.mxu0 %v4027
  %4181 = vmatprep.subr.bf16.mxu0 %v4020
  %4182 = vmatpush2.bf16.msra.mxu0 %v4019
  %4183 = vmatprep.subr.bf16.mxu0 %v4012
  %4184 = vmatpush2.bf16.msra.mxu0 %v4011
  %4185 = vmatprep.subr.bf16.mxu0 %v4004
  %4186 = vmatpush2.bf16.msra.mxu0 %v4003
  %4187 = vmatprep.subr.bf16.mxu0 %v3996
  %4188 = vmatpush2.bf16.msra.mxu0 %v3995
  %4189 = vmatprep.subr.bf16.mxu0 %v3988
  %4190 = vmatpush2.bf16.msra.mxu0 %v3987
  %4191 = vmatprep.subr.bf16.mxu0 %v3980
  %4192 = vmatpush2.bf16.msra.mxu0 %v3979
  %4193 = vmatprep.subr.bf16.mxu0 %v3972
  %4194 = vmatpush2.bf16.msra.mxu0 %v3971
  %4195 = vmatprep.mubr.bf16.mxu0 %v3388
  %4196 = vmatmul.mubr.bf16.gmra.mxu0 %v3387
  %v4197 = vpop.f32.mrf.mxu0
  %v4198 = vadd.f32 0.0, %v4197
  %v4199 = vpop.f32.mrf.mxu0
  %v4200 = vadd.f32 0.0, %v4199
  %v4201 = vpop.f32.mrf.mxu0
  %v4202 = vadd.f32 0.0, %v4201
  %v4203 = vpop.f32.mrf.mxu0
  %v4204 = vadd.f32 0.0, %v4203
  %4205 = vmatprep.mubr.bf16.mxu0 %v3390
  %4206 = vmatmul.mubr.bf16.gmra.mxu0 %v3389
  %v4207 = vpop.f32.mrf.mxu0
  %v4208 = vadd.f32 0.0, %v4207
  %v4209 = vpop.f32.mrf.mxu0
  %v4210 = vadd.f32 0.0, %v4209
  %v4211 = vpop.f32.mrf.mxu0
  %v4212 = vadd.f32 0.0, %v4211
  %v4213 = vpop.f32.mrf.mxu0
  %v4214 = vadd.f32 0.0, %v4213
  %4215 = vmatprep.mubr.bf16.mxu0 %v3392
  %4216 = vmatmul.mubr.bf16.gmra.mxu0 %v3391
  %v4217 = vpop.f32.mrf.mxu0
  %v4218 = vadd.f32 0.0, %v4217
  %v4219 = vpop.f32.mrf.mxu0
  %v4220 = vadd.f32 0.0, %v4219
  %v4221 = vpop.f32.mrf.mxu0
  %v4222 = vadd.f32 0.0, %v4221
  %v4223 = vpop.f32.mrf.mxu0
  %v4224 = vadd.f32 0.0, %v4223
  %4225 = vmatprep.mubr.bf16.mxu0 %v3394
  %4226 = vmatmul.mubr.bf16.gmra.mxu0 %v3393
  %v4227 = vpop.f32.mrf.mxu0
  %v4228 = vadd.f32 0.0, %v4227
  %v4229 = vpop.f32.mrf.mxu0
  %v4230 = vadd.f32 0.0, %v4229
  %v4231 = vpop.f32.mrf.mxu0
  %v4232 = vadd.f32 0.0, %v4231
  %v4233 = vpop.f32.mrf.mxu0
  %v4234 = vadd.f32 0.0, %v4233
  %4235 = vdwg.mxu0
  %4236 = vmatprep.subr.bf16.mxu0 %v3966
  %4237 = vmatpush1.bf16.msra.mxu0 %v3965
  %4238 = vmatprep.subr.bf16.mxu0 %v3958
  %4239 = vmatpush1.bf16.msra.mxu0 %v3957
  %4240 = vmatprep.subr.bf16.mxu0 %v3950
  %4241 = vmatpush1.bf16.msra.mxu0 %v3949
  %4242 = vmatprep.subr.bf16.mxu0 %v3942
  %4243 = vmatpush1.bf16.msra.mxu0 %v3941
  %4244 = vmatprep.subr.bf16.mxu0 %v3934
  %4245 = vmatpush1.bf16.msra.mxu0 %v3933
  %4246 = vmatprep.subr.bf16.mxu0 %v3926
  %4247 = vmatpush1.bf16.msra.mxu0 %v3925
  %4248 = vmatprep.subr.bf16.mxu0 %v3918
  %4249 = vmatpush1.bf16.msra.mxu0 %v3917
  %4250 = vmatprep.subr.bf16.mxu0 %v3910
  %4251 = vmatpush1.bf16.msra.mxu0 %v3909
  %4252 = vmatprep.subr.bf16.mxu0 %v4030
  %4253 = vmatpush2.bf16.msra.mxu0 %v4029
  %4254 = vmatprep.subr.bf16.mxu0 %v4022
  %4255 = vmatpush2.bf16.msra.mxu0 %v4021
  %4256 = vmatprep.subr.bf16.mxu0 %v4014
  %4257 = vmatpush2.bf16.msra.mxu0 %v4013
  %4258 = vmatprep.subr.bf16.mxu0 %v4006
  %4259 = vmatpush2.bf16.msra.mxu0 %v4005
  %4260 = vmatprep.subr.bf16.mxu0 %v3998
  %4261 = vmatpush2.bf16.msra.mxu0 %v3997
  %4262 = vmatprep.subr.bf16.mxu0 %v3990
  %4263 = vmatpush2.bf16.msra.mxu0 %v3989
  %4264 = vmatprep.subr.bf16.mxu0 %v3982
  %4265 = vmatpush2.bf16.msra.mxu0 %v3981
  %4266 = vmatprep.subr.bf16.mxu0 %v3974
  %4267 = vmatpush2.bf16.msra.mxu0 %v3973
  %4268 = vmatprep.mubr.bf16.mxu0 %v3388
  %4269 = vmatmul.mubr.bf16.gmra.mxu0 %v3387
  %v4270 = vpop.f32.mrf.mxu0
  %v4271 = vadd.f32 0.0, %v4270
  %v4272 = vpop.f32.mrf.mxu0
  %v4273 = vadd.f32 0.0, %v4272
  %v4274 = vpop.f32.mrf.mxu0
  %v4275 = vadd.f32 0.0, %v4274
  %v4276 = vpop.f32.mrf.mxu0
  %v4277 = vadd.f32 0.0, %v4276
  %4278 = vmatprep.mubr.bf16.mxu0 %v3390
  %4279 = vmatmul.mubr.bf16.gmra.mxu0 %v3389
  %v4280 = vpop.f32.mrf.mxu0
  %v4281 = vadd.f32 0.0, %v4280
  %v4282 = vpop.f32.mrf.mxu0
  %v4283 = vadd.f32 0.0, %v4282
  %v4284 = vpop.f32.mrf.mxu0
  %v4285 = vadd.f32 0.0, %v4284
  %v4286 = vpop.f32.mrf.mxu0
  %v4287 = vadd.f32 0.0, %v4286
  %4288 = vmatprep.mubr.bf16.mxu0 %v3392
  %4289 = vmatmul.mubr.bf16.gmra.mxu0 %v3391
  %v4290 = vpop.f32.mrf.mxu0
  %v4291 = vadd.f32 0.0, %v4290
  %v4292 = vpop.f32.mrf.mxu0
  %v4293 = vadd.f32 0.0, %v4292
  %v4294 = vpop.f32.mrf.mxu0
  %v4295 = vadd.f32 0.0, %v4294
  %v4296 = vpop.f32.mrf.mxu0
  %v4297 = vadd.f32 0.0, %v4296
  %4298 = vmatprep.mubr.bf16.mxu0 %v3394
  %4299 = vmatmul.mubr.bf16.gmra.mxu0 %v3393
  %v4300 = vpop.f32.mrf.mxu0
  %v4301 = vadd.f32 0.0, %v4300
  %v4302 = vpop.f32.mrf.mxu0
  %v4303 = vadd.f32 0.0, %v4302
  %v4304 = vpop.f32.mrf.mxu0
  %v4305 = vadd.f32 0.0, %v4304
  %v4306 = vpop.f32.mrf.mxu0
  %v4307 = vadd.f32 0.0, %v4306
  %4308 = vdwg.mxu0
  %4309 = vmatprep.subr.bf16.mxu0 %v3968
  %4310 = vmatpush1.bf16.msra.mxu0 %v3967
  %4311 = vmatprep.subr.bf16.mxu0 %v3960
  %4312 = vmatpush1.bf16.msra.mxu0 %v3959
  %4313 = vmatprep.subr.bf16.mxu0 %v3952
  %4314 = vmatpush1.bf16.msra.mxu0 %v3951
  %4315 = vmatprep.subr.bf16.mxu0 %v3944
  %4316 = vmatpush1.bf16.msra.mxu0 %v3943
  %4317 = vmatprep.subr.bf16.mxu0 %v3936
  %4318 = vmatpush1.bf16.msra.mxu0 %v3935
  %4319 = vmatprep.subr.bf16.mxu0 %v3928
  %4320 = vmatpush1.bf16.msra.mxu0 %v3927
  %4321 = vmatprep.subr.bf16.mxu0 %v3920
  %4322 = vmatpush1.bf16.msra.mxu0 %v3919
  %4323 = vmatprep.subr.bf16.mxu0 %v3912
  %4324 = vmatpush1.bf16.msra.mxu0 %v3911
  %4325 = vmatprep.subr.bf16.mxu0 %v4032
  %4326 = vmatpush2.bf16.msra.mxu0 %v4031
  %4327 = vmatprep.subr.bf16.mxu0 %v4024
  %4328 = vmatpush2.bf16.msra.mxu0 %v4023
  %4329 = vmatprep.subr.bf16.mxu0 %v4016
  %4330 = vmatpush2.bf16.msra.mxu0 %v4015
  %4331 = vmatprep.subr.bf16.mxu0 %v4008
  %4332 = vmatpush2.bf16.msra.mxu0 %v4007
  %4333 = vmatprep.subr.bf16.mxu0 %v4000
  %4334 = vmatpush2.bf16.msra.mxu0 %v3999
  %4335 = vmatprep.subr.bf16.mxu0 %v3992
  %4336 = vmatpush2.bf16.msra.mxu0 %v3991
  %4337 = vmatprep.subr.bf16.mxu0 %v3984
  %4338 = vmatpush2.bf16.msra.mxu0 %v3983
  %4339 = vmatprep.subr.bf16.mxu0 %v3976
  %4340 = vmatpush2.bf16.msra.mxu0 %v3975
  %4341 = vmatprep.mubr.bf16.mxu0 %v3388
  %4342 = vmatmul.mubr.bf16.gmra.mxu0 %v3387
  %v4343 = vpop.f32.mrf.mxu0
  %v4344 = vadd.f32 0.0, %v4343
  %v4345 = vpop.f32.mrf.mxu0
  %v4346 = vadd.f32 0.0, %v4345
  %v4347 = vpop.f32.mrf.mxu0
  %v4348 = vadd.f32 0.0, %v4347
  %v4349 = vpop.f32.mrf.mxu0
  %v4350 = vadd.f32 0.0, %v4349
  %4351 = vmatprep.mubr.bf16.mxu0 %v3390
  %4352 = vmatmul.mubr.bf16.gmra.mxu0 %v3389
  %v4353 = vpop.f32.mrf.mxu0
  %v4354 = vadd.f32 0.0, %v4353
  %v4355 = vpop.f32.mrf.mxu0
  %v4356 = vadd.f32 0.0, %v4355
  %v4357 = vpop.f32.mrf.mxu0
  %v4358 = vadd.f32 0.0, %v4357
  %v4359 = vpop.f32.mrf.mxu0
  %v4360 = vadd.f32 0.0, %v4359
  %4361 = vmatprep.mubr.bf16.mxu0 %v3392
  %4362 = vmatmul.mubr.bf16.gmra.mxu0 %v3391
  %v4363 = vpop.f32.mrf.mxu0
  %v4364 = vadd.f32 0.0, %v4363
  %v4365 = vpop.f32.mrf.mxu0
  %v4366 = vadd.f32 0.0, %v4365
  %v4367 = vpop.f32.mrf.mxu0
  %v4368 = vadd.f32 0.0, %v4367
  %v4369 = vpop.f32.mrf.mxu0
  %v4370 = vadd.f32 0.0, %v4369
  %4371 = vmatprep.mubr.bf16.mxu0 %v3394
  %4372 = vmatmul.mubr.bf16.gmra.mxu0 %v3393
  %v4373 = vpop.f32.mrf.mxu0
  %v4374 = vadd.f32 0.0, %v4373
  %v4375 = vpop.f32.mrf.mxu0
  %v4376 = vadd.f32 0.0, %v4375
  %v4377 = vpop.f32.mrf.mxu0
  %v4378 = vadd.f32 0.0, %v4377
  %v4379 = vpop.f32.mrf.mxu0
  %v4380 = vadd.f32 0.0, %v4379
  %4381 = vdwg.mxu0
  %4382 = vmatprep.subr.bf16.mxu0 %v3970
  %4383 = vmatpush1.bf16.msra.mxu0 %v3969
  %4384 = vmatprep.subr.bf16.mxu0 %v3962
  %4385 = vmatpush1.bf16.msra.mxu0 %v3961
  %4386 = vmatprep.subr.bf16.mxu0 %v3954
  %4387 = vmatpush1.bf16.msra.mxu0 %v3953
  %4388 = vmatprep.subr.bf16.mxu0 %v3946
  %4389 = vmatpush1.bf16.msra.mxu0 %v3945
  %4390 = vmatprep.subr.bf16.mxu0 %v3938
  %4391 = vmatpush1.bf16.msra.mxu0 %v3937
  %4392 = vmatprep.subr.bf16.mxu0 %v3930
  %4393 = vmatpush1.bf16.msra.mxu0 %v3929
  %4394 = vmatprep.subr.bf16.mxu0 %v3922
  %4395 = vmatpush1.bf16.msra.mxu0 %v3921
  %4396 = vmatprep.subr.bf16.mxu0 %v3914
  %4397 = vmatpush1.bf16.msra.mxu0 %v3913
  %4398 = vmatprep.subr.bf16.mxu0 %v4034
  %4399 = vmatpush2.bf16.msra.mxu0 %v4033
  %4400 = vmatprep.subr.bf16.mxu0 %v4026
  %4401 = vmatpush2.bf16.msra.mxu0 %v4025
  %4402 = vmatprep.subr.bf16.mxu0 %v4018
  %4403 = vmatpush2.bf16.msra.mxu0 %v4017
  %4404 = vmatprep.subr.bf16.mxu0 %v4010
  %4405 = vmatpush2.bf16.msra.mxu0 %v4009
  %4406 = vmatprep.subr.bf16.mxu0 %v4002
  %4407 = vmatpush2.bf16.msra.mxu0 %v4001
  %4408 = vmatprep.subr.bf16.mxu0 %v3994
  %4409 = vmatpush2.bf16.msra.mxu0 %v3993
  %4410 = vmatprep.subr.bf16.mxu0 %v3986
  %4411 = vmatpush2.bf16.msra.mxu0 %v3985
  %4412 = vmatprep.subr.bf16.mxu0 %v3978
  %4413 = vmatpush2.bf16.msra.mxu0 %v3977
  %4414 = vmatprep.mubr.bf16.mxu0 %v3388
  %4415 = vmatmul.mubr.bf16.gmra.mxu0 %v3387
  %v4416 = vpop.f32.mrf.mxu0
  %v4417 = vadd.f32 0.0, %v4416
  %v4418 = vpop.f32.mrf.mxu0
  %v4419 = vadd.f32 0.0, %v4418
  %v4420 = vpop.f32.mrf.mxu0
  %v4421 = vadd.f32 0.0, %v4420
  %v4422 = vpop.f32.mrf.mxu0
  %v4423 = vadd.f32 0.0, %v4422
  %4424 = vmatprep.mubr.bf16.mxu0 %v3390
  %4425 = vmatmul.mubr.bf16.gmra.mxu0 %v3389
  %v4426 = vpop.f32.mrf.mxu0
  %v4427 = vadd.f32 0.0, %v4426
  %v4428 = vpop.f32.mrf.mxu0
  %v4429 = vadd.f32 0.0, %v4428
  %v4430 = vpop.f32.mrf.mxu0
  %v4431 = vadd.f32 0.0, %v4430
  %v4432 = vpop.f32.mrf.mxu0
  %v4433 = vadd.f32 0.0, %v4432
  %4434 = vmatprep.mubr.bf16.mxu0 %v3392
  %4435 = vmatmul.mubr.bf16.gmra.mxu0 %v3391
  %v4436 = vpop.f32.mrf.mxu0
  %v4437 = vadd.f32 0.0, %v4436
  %v4438 = vpop.f32.mrf.mxu0
  %v4439 = vadd.f32 0.0, %v4438
  %v4440 = vpop.f32.mrf.mxu0
  %v4441 = vadd.f32 0.0, %v4440
  %v4442 = vpop.f32.mrf.mxu0
  %v4443 = vadd.f32 0.0, %v4442
  %4444 = vmatprep.mubr.bf16.mxu0 %v3394
  %4445 = vmatmul.mubr.bf16.gmra.mxu0 %v3393
  %v4446 = vpop.f32.mrf.mxu0
  %v4447 = vadd.f32 0.0, %v4446
  %v4448 = vpop.f32.mrf.mxu0
  %v4449 = vadd.f32 0.0, %v4448
  %v4450 = vpop.f32.mrf.mxu0
  %v4451 = vadd.f32 0.0, %v4450
  %v4452 = vpop.f32.mrf.mxu0
  %v4453 = vadd.f32 0.0, %v4452
  %4454 = vdwg.mxu0
  %s4455 = scalar_lea.vmem %s1, 2
  %v4456 = vld [vmem:[%s4455] ss:$8 sm:$0x3]
  %4457 = vst [vmem:[#allocation9 + $0x80] sm:$0xff] %v4198
  %4458 = vst [vmem:[#allocation9 + $0x88] sm:$0xff] %v4200
  %4459 = vst [vmem:[#allocation9 + $0x90] sm:$0xff] %v4271
  %4460 = vst [vmem:[#allocation9 + $0x98] sm:$0xff] %v4273
  %4461 = vst [vmem:[#allocation9 + $0xa0] sm:$0xff] %v4344
  %4462 = vst [vmem:[#allocation9 + $0xa8] sm:$0xff] %v4346
  %4463 = vst [vmem:[#allocation9 + $0xb0] sm:$0xff] %v4417
  %4464 = vst [vmem:[#allocation9 + $0xb8] sm:$0xff] %v4419
  %4465 = vst [vmem:[#allocation9 + $0xc0] sm:$0xff] %v4202
  %4466 = vst [vmem:[#allocation9 + $0xc8] sm:$0xff] %v4204
  %4467 = vst [vmem:[#allocation9 + $0xd0] sm:$0xff] %v4275
  %4468 = vst [vmem:[#allocation9 + $0xd8] sm:$0xff] %v4277
  %4469 = vst [vmem:[#allocation9 + $0xe0] sm:$0xff] %v4348
  %4470 = vst [vmem:[#allocation9 + $0xe8] sm:$0xff] %v4350
  %4471 = vst [vmem:[#allocation9 + $0xf0] sm:$0xff] %v4421
  %4472 = vst [vmem:[#allocation9 + $0xf8] sm:$0xff] %v4423
  %4473 = vst [vmem:[#allocation9 + $0x100] sm:$0xff] %v4208
  %4474 = vst [vmem:[#allocation9 + $0x108] sm:$0xff] %v4210
  %4475 = vst [vmem:[#allocation9 + $0x110] sm:$0xff] %v4281
  %4476 = vst [vmem:[#allocation9 + $0x118] sm:$0xff] %v4283
  %4477 = vst [vmem:[#allocation9 + $0x120] sm:$0xff] %v4354
  %4478 = vst [vmem:[#allocation9 + $0x128] sm:$0xff] %v4356
  %4479 = vst [vmem:[#allocation9 + $0x130] sm:$0xff] %v4427
  %4480 = vst [vmem:[#allocation9 + $0x138] sm:$0xff] %v4429
  %4481 = vst [vmem:[#allocation9 + $0x140] sm:$0xff] %v4212
  %4482 = vst [vmem:[#allocation9 + $0x148] sm:$0xff] %v4214
  %4483 = vst [vmem:[#allocation9 + $0x150] sm:$0xff] %v4285
  %4484 = vst [vmem:[#allocation9 + $0x158] sm:$0xff] %v4287
  %4485 = vst [vmem:[#allocation9 + $0x160] sm:$0xff] %v4358
  %4486 = vst [vmem:[#allocation9 + $0x168] sm:$0xff] %v4360
  %4487 = vst [vmem:[#allocation9 + $0x170] sm:$0xff] %v4431
  %4488 = vst [vmem:[#allocation9 + $0x178] sm:$0xff] %v4433
  %4489 = vst [vmem:[#allocation9 + $0x180] sm:$0xff] %v4218
  %4490 = vst [vmem:[#allocation9 + $0x188] sm:$0xff] %v4220
  %4491 = vst [vmem:[#allocation9 + $0x190] sm:$0xff] %v4291
  %4492 = vst [vmem:[#allocation9 + $0x198] sm:$0xff] %v4293
  %4493 = vst [vmem:[#allocation9 + $0x1a0] sm:$0xff] %v4364
  %4494 = vst [vmem:[#allocation9 + $0x1a8] sm:$0xff] %v4366
  %4495 = vst [vmem:[#allocation9 + $0x1b0] sm:$0xff] %v4437
  %4496 = vst [vmem:[#allocation9 + $0x1b8] sm:$0xff] %v4439
  %4497 = vst [vmem:[#allocation9 + $0x1c0] sm:$0xff] %v4222
  %4498 = vst [vmem:[#allocation9 + $0x1c8] sm:$0xff] %v4224
  %4499 = vst [vmem:[#allocation9 + $0x1d0] sm:$0xff] %v4295
  %4500 = vst [vmem:[#allocation9 + $0x1d8] sm:$0xff] %v4297
  %4501 = vst [vmem:[#allocation9 + $0x1e0] sm:$0xff] %v4368
  %4502 = vst [vmem:[#allocation9 + $0x1e8] sm:$0xff] %v4370
  %4503 = vst [vmem:[#allocation9 + $0x1f0] sm:$0xff] %v4441
  %4504 = vst [vmem:[#allocation9 + $0x1f8] sm:$0xff] %v4443
  %4505 = vst [vmem:[#allocation9 + $0x200] sm:$0xff] %v4228
  %4506 = vst [vmem:[#allocation9 + $0x208] sm:$0xff] %v4230
  %4507 = vst [vmem:[#allocation9 + $0x210] sm:$0xff] %v4301
  %4508 = vst [vmem:[#allocation9 + $0x218] sm:$0xff] %v4303
  %4509 = vst [vmem:[#allocation9 + $0x220] sm:$0xff] %v4374
  %4510 = vst [vmem:[#allocation9 + $0x228] sm:$0xff] %v4376
  %4511 = vst [vmem:[#allocation9 + $0x230] sm:$0xff] %v4447
  %4512 = vst [vmem:[#allocation9 + $0x238] sm:$0xff] %v4449
  %4513 = vst [vmem:[#allocation9 + $0x240] sm:$0xff] %v4232
  %4514 = vst [vmem:[#allocation9 + $0x248] sm:$0xff] %v4234
  %4515 = vst [vmem:[#allocation9 + $0x250] sm:$0xff] %v4305
  %4516 = vst [vmem:[#allocation9 + $0x258] sm:$0xff] %v4307
  %4517 = vst [vmem:[#allocation9 + $0x260] sm:$0xff] %v4378
  %4518 = vst [vmem:[#allocation9 + $0x268] sm:$0xff] %v4380
  %4519 = vst [vmem:[#allocation9 + $0x270] sm:$0xff] %v4451
  %4520 = vst [vmem:[#allocation9 + $0x278] sm:$0xff] %v4453
  %v4521 = vld [vmem:[#allocation9 + $0x40] sm:$0x80]
  %v4522 = vld [vmem:[#allocation9 + $0x48] sm:$0x80]
  %v4523 = vld [vmem:[#allocation9 + $0x80] sm:$0xff]
  %v4524 = vld [vmem:[#allocation9 + $0x88] sm:$0xff]
  %v4525 = vld [vmem:[#allocation9 + $0xc0] sm:$0xff]
  %v4526 = vld [vmem:[#allocation9 + $0xc8] sm:$0xff]
  %v4527 = vld [vmem:[#allocation9 + $0x100] sm:$0xff]
  %v4528 = vld [vmem:[#allocation9 + $0x108] sm:$0xff]
  %v4529 = vld [vmem:[#allocation9 + $0x140] sm:$0xff]
  %v4530 = vld [vmem:[#allocation9 + $0x148] sm:$0xff]
  %v4531 = vld [vmem:[#allocation9 + $0x180] sm:$0xff]
  %v4532 = vld [vmem:[#allocation9 + $0x188] sm:$0xff]
  %v4533 = vld [vmem:[#allocation9 + $0x1c0] sm:$0xff]
  %v4534 = vld [vmem:[#allocation9 + $0x1c8] sm:$0xff]
  %v4535 = vld [vmem:[#allocation9 + $0x200] sm:$0xff]
  %v4536 = vld [vmem:[#allocation9 + $0x208] sm:$0xff]
  %v4537 = vld [vmem:[#allocation9 + $0x240] sm:$0x7f]
  %v4538 = vld [vmem:[#allocation9 + $0x248] sm:$0x7f]
  %v4557 = vrot.slane %v4521, 7
  %v4558 = vrot.slane %v4523, 7
  %v4559 = vsel %vm3059, %v4557, %v4558
  %v4560 = vrot.slane %v4522, 7
  %v4561 = vrot.slane %v4524, 7
  %v4562 = vsel %vm3059, %v4560, %v4561
  %v4563 = vrot.slane %v4525, 7
  %v4564 = vsel %vm3059, %v4558, %v4563
  %v4565 = vrot.slane %v4526, 7
  %v4566 = vsel %vm3059, %v4561, %v4565
  %v4567 = vrot.slane %v4527, 7
  %v4568 = vsel %vm3059, %v4563, %v4567
  %v4569 = vrot.slane %v4528, 7
  %v4570 = vsel %vm3059, %v4565, %v4569
  %v4571 = vrot.slane %v4529, 7
  %v4572 = vsel %vm3059, %v4567, %v4571
  %v4573 = vrot.slane %v4530, 7
  %v4574 = vsel %vm3059, %v4569, %v4573
  %v4575 = vrot.slane %v4531, 7
  %v4576 = vsel %vm3059, %v4571, %v4575
  %v4577 = vrot.slane %v4532, 7
  %v4578 = vsel %vm3059, %v4573, %v4577
  %v4579 = vrot.slane %v4533, 7
  %v4580 = vsel %vm3059, %v4575, %v4579
  %v4581 = vrot.slane %v4534, 7
  %v4582 = vsel %vm3059, %v4577, %v4581
  %v4583 = vrot.slane %v4535, 7
  %v4584 = vsel %vm3059, %v4579, %v4583
  %v4585 = vrot.slane %v4536, 7
  %v4586 = vsel %vm3059, %v4581, %v4585
  %v4587 = vrot.slane %v4537, 7
  %v4588 = vsel %vm3059, %v4583, %v4587
  %v4589 = vrot.slane %v4538, 7
  %v4590 = vsel %vm3059, %v4585, %v4589
  %v4607 = vsel %vm3033, %v4559, 0.0
  %v4608 = vsel %vm3033, %v4562, 0.0
  %v4609 = vsel %vm3034, %v4564, 0.0
  %v4610 = vsel %vm3034, %v4566, 0.0
  %v4611 = vsel %vm3035, %v4568, 0.0
  %v4612 = vsel %vm3035, %v4570, 0.0
  %v4613 = vsel %vm3036, %v4572, 0.0
  %v4614 = vsel %vm3036, %v4574, 0.0
  %v4615 = vsel %vm3037, %v4576, 0.0
  %v4616 = vsel %vm3037, %v4578, 0.0
  %v4617 = vsel %vm3038, %v4580, 0.0
  %v4618 = vsel %vm3038, %v4582, 0.0
  %v4619 = vsel %vm3039, %v4584, 0.0
  %v4620 = vsel %vm3039, %v4586, 0.0
  %v4621 = vsel %vm3040, %v4588, 0.0
  %v4622 = vsel %vm3040, %v4590, 0.0
  %v4624 = vlaneseq
  %v4625 = vshrl.u32 %v4624, 7
  %v4626 = vsub.s32 0, %v4625
  %v4627 = vrot.slane %v4456, %v4626
  %v4628 = vlaneseq
  %v4629 = vshrl.u32 %v4628, 7
  %v4630 = vsub.s32 1, %v4629
  %v4631 = vrot.slane %v4456, %v4630
  %v4634 = vadd.f32 %v4627, %v4607
  %v4635 = vadd.f32 %v4631, %v4608
  %v4636 = vadd.f32 %v4627, %v4609
  %v4637 = vadd.f32 %v4631, %v4610
  %v4638 = vadd.f32 %v4627, %v4611
  %v4639 = vadd.f32 %v4631, %v4612
  %v4640 = vadd.f32 %v4627, %v4613
  %v4641 = vadd.f32 %v4631, %v4614
  %v4642 = vadd.f32 %v4627, %v4615
  %v4643 = vadd.f32 %v4631, %v4616
  %v4644 = vadd.f32 %v4627, %v4617
  %v4645 = vadd.f32 %v4631, %v4618
  %v4646 = vadd.f32 %v4627, %v4619
  %v4647 = vadd.f32 %v4631, %v4620
  %v4648 = vadd.f32 %v4627, %v4621
  %v4649 = vadd.f32 %v4631, %v4622
  %v4650 = vadd.f32 %v4634, %v4271
  %v4651 = vadd.f32 %v4635, %v4273
  %v4652 = vadd.f32 %v4636, %v4275
  %v4653 = vadd.f32 %v4637, %v4277
  %v4654 = vadd.f32 %v4638, %v4281
  %v4655 = vadd.f32 %v4639, %v4283
  %v4656 = vadd.f32 %v4640, %v4285
  %v4657 = vadd.f32 %v4641, %v4287
  %v4658 = vadd.f32 %v4642, %v4291
  %v4659 = vadd.f32 %v4643, %v4293
  %v4660 = vadd.f32 %v4644, %v4295
  %v4661 = vadd.f32 %v4645, %v4297
  %v4662 = vadd.f32 %v4646, %v4301
  %v4663 = vadd.f32 %v4647, %v4303
  %v4664 = vadd.f32 %v4648, %v4305
  %v4665 = vadd.f32 %v4649, %v4307
  %v4666 = vld [vmem:[#allocation9 + $0xa0] sm:$0xfe]
  %v4667 = vld [vmem:[#allocation9 + $0xa8] sm:$0xfe]
  %v4668 = vld [vmem:[#allocation9 + $0xe0] sm:$0xff]
  %v4669 = vld [vmem:[#allocation9 + $0xe8] sm:$0xff]
  %v4670 = vld [vmem:[#allocation9 + $0x120] sm:$0xff]
  %v4671 = vld [vmem:[#allocation9 + $0x128] sm:$0xff]
  %v4672 = vld [vmem:[#allocation9 + $0x160] sm:$0xff]
  %v4673 = vld [vmem:[#allocation9 + $0x168] sm:$0xff]
  %v4674 = vld [vmem:[#allocation9 + $0x1a0] sm:$0xff]
  %v4675 = vld [vmem:[#allocation9 + $0x1a8] sm:$0xff]
  %v4676 = vld [vmem:[#allocation9 + $0x1e0] sm:$0xff]
  %v4677 = vld [vmem:[#allocation9 + $0x1e8] sm:$0xff]
  %v4678 = vld [vmem:[#allocation9 + $0x220] sm:$0xff]
  %v4679 = vld [vmem:[#allocation9 + $0x228] sm:$0xff]
  %v4680 = vld [vmem:[#allocation9 + $0x260] sm:$0xff]
  %v4681 = vld [vmem:[#allocation9 + $0x268] sm:$0xff]
  %v4682 = vld [vmem:[#allocation9 + $0x2a0] sm:$0x1]
  %v4683 = vld [vmem:[#allocation9 + $0x2a8] sm:$0x1]
  %v4702 = vrot.slane %v4666, 1
  %v4703 = vrot.slane %v4668, 1
  %v4704 = vsel %vm3253, %v4702, %v4703
  %v4705 = vrot.slane %v4667, 1
  %v4706 = vrot.slane %v4669, 1
  %v4707 = vsel %vm3253, %v4705, %v4706
  %v4708 = vrot.slane %v4670, 1
  %v4709 = vsel %vm3253, %v4703, %v4708
  %v4710 = vrot.slane %v4671, 1
  %v4711 = vsel %vm3253, %v4706, %v4710
  %v4712 = vrot.slane %v4672, 1
  %v4713 = vsel %vm3253, %v4708, %v4712
  %v4714 = vrot.slane %v4673, 1
  %v4715 = vsel %vm3253, %v4710, %v4714
  %v4716 = vrot.slane %v4674, 1
  %v4717 = vsel %vm3253, %v4712, %v4716
  %v4718 = vrot.slane %v4675, 1
  %v4719 = vsel %vm3253, %v4714, %v4718
  %v4720 = vrot.slane %v4676, 1
  %v4721 = vsel %vm3253, %v4716, %v4720
  %v4722 = vrot.slane %v4677, 1
  %v4723 = vsel %vm3253, %v4718, %v4722
  %v4724 = vrot.slane %v4678, 1
  %v4725 = vsel %vm3253, %v4720, %v4724
  %v4726 = vrot.slane %v4679, 1
  %v4727 = vsel %vm3253, %v4722, %v4726
  %v4728 = vrot.slane %v4680, 1
  %v4729 = vsel %vm3253, %v4724, %v4728
  %v4730 = vrot.slane %v4681, 1
  %v4731 = vsel %vm3253, %v4726, %v4730
  %v4732 = vrot.slane %v4682, 1
  %v4733 = vsel %vm3253, %v4728, %v4732
  %v4734 = vrot.slane %v4683, 1
  %v4735 = vsel %vm3253, %v4730, %v4734
  %v4752 = vsel %vm3227, %v4704, 0.0
  %v4753 = vsel %vm3227, %v4707, 0.0
  %v4754 = vsel %vm3228, %v4709, 0.0
  %v4755 = vsel %vm3228, %v4711, 0.0
  %v4756 = vsel %vm3229, %v4713, 0.0
  %v4757 = vsel %vm3229, %v4715, 0.0
  %v4758 = vsel %vm3230, %v4717, 0.0
  %v4759 = vsel %vm3230, %v4719, 0.0
  %v4760 = vsel %vm3231, %v4721, 0.0
  %v4761 = vsel %vm3231, %v4723, 0.0
  %v4762 = vsel %vm3232, %v4725, 0.0
  %v4763 = vsel %vm3232, %v4727, 0.0
  %v4764 = vsel %vm3233, %v4729, 0.0
  %v4765 = vsel %vm3233, %v4731, 0.0
  %v4766 = vsel %vm3234, %v4733, 0.0
  %v4767 = vsel %vm3234, %v4735, 0.0
  %v4768 = vadd.f32 %v4650, %v4752
  %v4769 = vadd.f32 %v4651, %v4753
  %v4770 = vadd.f32 %v4652, %v4754
  %v4771 = vadd.f32 %v4653, %v4755
  %v4772 = vadd.f32 %v4654, %v4756
  %v4773 = vadd.f32 %v4655, %v4757
  %v4774 = vadd.f32 %v4656, %v4758
  %v4775 = vadd.f32 %v4657, %v4759
  %v4776 = vadd.f32 %v4658, %v4760
  %v4777 = vadd.f32 %v4659, %v4761
  %v4778 = vadd.f32 %v4660, %v4762
  %v4779 = vadd.f32 %v4661, %v4763
  %v4780 = vadd.f32 %v4662, %v4764
  %v4781 = vadd.f32 %v4663, %v4765
  %v4782 = vadd.f32 %v4664, %v4766
  %v4783 = vadd.f32 %v4665, %v4767
  %v4784 = vld [vmem:[#allocation9 + $0xb0] sm:$0xfc]
  %v4785 = vld [vmem:[#allocation9 + $0xb8] sm:$0xfc]
  %v4786 = vld [vmem:[#allocation9 + $0xf0] sm:$0xff]
  %v4787 = vld [vmem:[#allocation9 + $0xf8] sm:$0xff]
  %v4788 = vld [vmem:[#allocation9 + $0x130] sm:$0xff]
  %v4789 = vld [vmem:[#allocation9 + $0x138] sm:$0xff]
  %v4790 = vld [vmem:[#allocation9 + $0x170] sm:$0xff]
  %v4791 = vld [vmem:[#allocation9 + $0x178] sm:$0xff]
  %v4792 = vld [vmem:[#allocation9 + $0x1b0] sm:$0xff]
  %v4793 = vld [vmem:[#allocation9 + $0x1b8] sm:$0xff]
  %v4794 = vld [vmem:[#allocation9 + $0x1f0] sm:$0xff]
  %v4795 = vld [vmem:[#allocation9 + $0x1f8] sm:$0xff]
  %v4796 = vld [vmem:[#allocation9 + $0x230] sm:$0xff]
  %v4797 = vld [vmem:[#allocation9 + $0x238] sm:$0xff]
  %v4798 = vld [vmem:[#allocation9 + $0x270] sm:$0xff]
  %v4799 = vld [vmem:[#allocation9 + $0x278] sm:$0xff]
  %v4800 = vld [vmem:[#allocation9 + $0x2b0] sm:$0x3]
  %v4801 = vld [vmem:[#allocation9 + $0x2b8] sm:$0x3]
  %v4802 = vadd.s32 %v1849, 2
  %v4803 = vadd.s32 %v1850, 2
  %v4804 = vadd.s32 %v1851, 2
  %v4805 = vadd.s32 %v1852, 2
  %v4806 = vadd.s32 %v1853, 2
  %v4807 = vadd.s32 %v1854, 2
  %v4808 = vadd.s32 %v1855, 2
  %v4809 = vadd.s32 %v1856, 2
  %vm4810 = vcmp.ge.s32.totalorder %v4802, 0
  %vm4811 = vcmp.ge.s32.totalorder %v4803, 0
  %vm4812 = vcmp.ge.s32.totalorder %v4804, 0
  %vm4813 = vcmp.ge.s32.totalorder %v4805, 0
  %vm4814 = vcmp.ge.s32.totalorder %v4806, 0
  %vm4815 = vcmp.ge.s32.totalorder %v4807, 0
  %vm4816 = vcmp.ge.s32.totalorder %v4808, 0
  %vm4817 = vcmp.ge.s32.totalorder %v4809, 0
  %vm4818 = vcmp.lt.s32.totalorder %v4802, 32
  %vm4819 = vcmp.lt.s32.totalorder %v4803, 32
  %vm4820 = vcmp.lt.s32.totalorder %v4804, 32
  %vm4821 = vcmp.lt.s32.totalorder %v4805, 32
  %vm4822 = vcmp.lt.s32.totalorder %v4806, 32
  %vm4823 = vcmp.lt.s32.totalorder %v4807, 32
  %vm4824 = vcmp.lt.s32.totalorder %v4808, 32
  %vm4825 = vcmp.lt.s32.totalorder %v4809, 32
  %vm4826 = vmand %vm4810, %vm4818
  %vm4827 = vmand %vm4811, %vm4819
  %vm4828 = vmand %vm4812, %vm4820
  %vm4829 = vmand %vm4813, %vm4821
  %vm4830 = vmand %vm4814, %vm4822
  %vm4831 = vmand %vm4815, %vm4823
  %vm4832 = vmand %vm4816, %vm4824
  %vm4833 = vmand %vm4817, %vm4825
  %v4834 = vsel %vm4826, 1, 0
  %v4835 = vsel %vm4827, 1, 0
  %v4836 = vsel %vm4828, 1, 0
  %v4837 = vsel %vm4829, 1, 0
  %v4838 = vsel %vm4830, 1, 0
  %v4839 = vsel %vm4831, 1, 0
  %v4840 = vsel %vm4832, 1, 0
  %v4841 = vsel %vm4833, 1, 0
  %vm4842 = vcmp.eq.s32.totalorder %v4834, 1
  %vm4843 = vcmp.eq.s32.totalorder %v4835, 1
  %vm4844 = vcmp.eq.s32.totalorder %v4836, 1
  %vm4845 = vcmp.eq.s32.totalorder %v4837, 1
  %vm4846 = vcmp.eq.s32.totalorder %v4838, 1
  %vm4847 = vcmp.eq.s32.totalorder %v4839, 1
  %vm4848 = vcmp.eq.s32.totalorder %v4840, 1
  %vm4849 = vcmp.eq.s32.totalorder %v4841, 1
  %vm4868 = vcmask 1045504
  %v4869 = vrot.slane %v4784, 2
  %v4870 = vrot.slane %v4786, 2
  %v4871 = vsel %vm4868, %v4869, %v4870
  %v4872 = vrot.slane %v4785, 2
  %v4873 = vrot.slane %v4787, 2
  %v4874 = vsel %vm4868, %v4872, %v4873
  %v4875 = vrot.slane %v4788, 2
  %v4876 = vsel %vm4868, %v4870, %v4875
  %v4877 = vrot.slane %v4789, 2
  %v4878 = vsel %vm4868, %v4873, %v4877
  %v4879 = vrot.slane %v4790, 2
  %v4880 = vsel %vm4868, %v4875, %v4879
  %v4881 = vrot.slane %v4791, 2
  %v4882 = vsel %vm4868, %v4877, %v4881
  %v4883 = vrot.slane %v4792, 2
  %v4884 = vsel %vm4868, %v4879, %v4883
  %v4885 = vrot.slane %v4793, 2
  %v4886 = vsel %vm4868, %v4881, %v4885
  %v4887 = vrot.slane %v4794, 2
  %v4888 = vsel %vm4868, %v4883, %v4887
  %v4889 = vrot.slane %v4795, 2
  %v4890 = vsel %vm4868, %v4885, %v4889
  %v4891 = vrot.slane %v4796, 2
  %v4892 = vsel %vm4868, %v4887, %v4891
  %v4893 = vrot.slane %v4797, 2
  %v4894 = vsel %vm4868, %v4889, %v4893
  %v4895 = vrot.slane %v4798, 2
  %v4896 = vsel %vm4868, %v4891, %v4895
  %v4897 = vrot.slane %v4799, 2
  %v4898 = vsel %vm4868, %v4893, %v4897
  %v4899 = vrot.slane %v4800, 2
  %v4900 = vsel %vm4868, %v4895, %v4899
  %v4901 = vrot.slane %v4801, 2
  %v4902 = vsel %vm4868, %v4897, %v4901
  %v4919 = vsel %vm4842, %v4871, 0.0
  %v4920 = vsel %vm4842, %v4874, 0.0
  %v4921 = vsel %vm4843, %v4876, 0.0
  %v4922 = vsel %vm4843, %v4878, 0.0
  %v4923 = vsel %vm4844, %v4880, 0.0
  %v4924 = vsel %vm4844, %v4882, 0.0
  %v4925 = vsel %vm4845, %v4884, 0.0
  %v4926 = vsel %vm4845, %v4886, 0.0
  %v4927 = vsel %vm4846, %v4888, 0.0
  %v4928 = vsel %vm4846, %v4890, 0.0
  %v4929 = vsel %vm4847, %v4892, 0.0
  %v4930 = vsel %vm4847, %v4894, 0.0
  %v4931 = vsel %vm4848, %v4896, 0.0
  %v4932 = vsel %vm4848, %v4898, 0.0
  %v4933 = vsel %vm4849, %v4900, 0.0
  %v4934 = vsel %vm4849, %v4902, 0.0
  %v4935 = vadd.f32 %v4768, %v4919
  %v4936 = vadd.f32 %v4769, %v4920
  %v4937 = vadd.f32 %v4770, %v4921
  %v4938 = vadd.f32 %v4771, %v4922
  %v4939 = vadd.f32 %v4772, %v4923
  %v4940 = vadd.f32 %v4773, %v4924
  %v4941 = vadd.f32 %v4774, %v4925
  %v4942 = vadd.f32 %v4775, %v4926
  %v4943 = vadd.f32 %v4776, %v4927
  %v4944 = vadd.f32 %v4777, %v4928
  %v4945 = vadd.f32 %v4778, %v4929
  %v4946 = vadd.f32 %v4779, %v4930
  %v4947 = vadd.f32 %v4780, %v4931
  %v4948 = vadd.f32 %v4781, %v4932
  %v4949 = vadd.f32 %v4782, %v4933
  %v4950 = vadd.f32 %v4783, %v4934
  %vm4951 = vcmp.ge.f32.partialorder %v4935, 0.0
  %vm4952 = vcmp.ge.f32.partialorder %v4936, 0.0
  %vm4953 = vcmp.ge.f32.partialorder %v4937, 0.0
  %vm4954 = vcmp.ge.f32.partialorder %v4938, 0.0
  %vm4955 = vcmp.ge.f32.partialorder %v4939, 0.0
  %vm4956 = vcmp.ge.f32.partialorder %v4940, 0.0
  %vm4957 = vcmp.ge.f32.partialorder %v4941, 0.0
  %vm4958 = vcmp.ge.f32.partialorder %v4942, 0.0
  %vm4959 = vcmp.ge.f32.partialorder %v4943, 0.0
  %vm4960 = vcmp.ge.f32.partialorder %v4944, 0.0
  %vm4961 = vcmp.ge.f32.partialorder %v4945, 0.0
  %vm4962 = vcmp.ge.f32.partialorder %v4946, 0.0
  %vm4963 = vcmp.ge.f32.partialorder %v4947, 0.0
  %vm4964 = vcmp.ge.f32.partialorder %v4948, 0.0
  %vm4965 = vcmp.ge.f32.partialorder %v4949, 0.0
  %vm4966 = vcmp.ge.f32.partialorder %v4950, 0.0
  %v4967 = vmul.f32 %v4935, 0.2
  %v4968 = vmul.f32 %v4936, 0.2
  %v4969 = vmul.f32 %v4937, 0.2
  %v4970 = vmul.f32 %v4938, 0.2
  %v4971 = vmul.f32 %v4939, 0.2
  %v4972 = vmul.f32 %v4940, 0.2
  %v4973 = vmul.f32 %v4941, 0.2
  %v4974 = vmul.f32 %v4942, 0.2
  %v4975 = vmul.f32 %v4943, 0.2
  %v4976 = vmul.f32 %v4944, 0.2
  %v4977 = vmul.f32 %v4945, 0.2
  %v4978 = vmul.f32 %v4946, 0.2
  %v4979 = vmul.f32 %v4947, 0.2
  %v4980 = vmul.f32 %v4948, 0.2
  %v4981 = vmul.f32 %v4949, 0.2
  %v4982 = vmul.f32 %v4950, 0.2
  %v4983 = vsel %vm4951, %v4935, %v4967
  %v4984 = vsel %vm4952, %v4936, %v4968
  %v4985 = vsel %vm4953, %v4937, %v4969
  %v4986 = vsel %vm4954, %v4938, %v4970
  %v4987 = vsel %vm4955, %v4939, %v4971
  %v4988 = vsel %vm4956, %v4940, %v4972
  %v4989 = vsel %vm4957, %v4941, %v4973
  %v4990 = vsel %vm4958, %v4942, %v4974
  %v4991 = vsel %vm4959, %v4943, %v4975
  %v4992 = vsel %vm4960, %v4944, %v4976
  %v4993 = vsel %vm4961, %v4945, %v4977
  %v4994 = vsel %vm4962, %v4946, %v4978
  %v4995 = vsel %vm4963, %v4947, %v4979
  %v4996 = vsel %vm4964, %v4948, %v4980
  %v4997 = vsel %vm4965, %v4949, %v4981
  %v4998 = vsel %vm4966, %v4950, %v4982
  %s4999 = sshll.u32 %s3384, 4
  %5000 = dma.done %s624, %s4999
  %v5001 = vpack.c.bf16 %v4985, %v4983
  %v5002 = vpack.c.bf16 %v4986, %v4984
  %v5003 = vpack.c.bf16 %v4989, %v4987
  %v5004 = vpack.c.bf16 %v4990, %v4988
  %v5005 = vpack.c.bf16 %v4993, %v4991
  %v5006 = vpack.c.bf16 %v4994, %v4992
  %v5007 = vpack.c.bf16 %v4997, %v4995
  %v5008 = vpack.c.bf16 %v4998, %v4996
  %v5009 = vld [vmem:[#allocation5] sm:$0xff]
  %v5010 = vld [vmem:[#allocation5 + $0x8] sm:$0xff]
  %v5011 = vld [vmem:[#allocation5 + $0x10] sm:$0xff]
  %v5012 = vld [vmem:[#allocation5 + $0x18] sm:$0xff]
  %v5013 = vld [vmem:[#allocation5 + $0x20] sm:$0xff]
  %v5014 = vld [vmem:[#allocation5 + $0x28] sm:$0xff]
  %v5015 = vld [vmem:[#allocation5 + $0x30] sm:$0xff]
  %v5016 = vld [vmem:[#allocation5 + $0x38] sm:$0xff]
  %v5017 = vld [vmem:[#allocation5 + $0x40] sm:$0xff]
  %v5018 = vld [vmem:[#allocation5 + $0x48] sm:$0xff]
  %v5019 = vld [vmem:[#allocation5 + $0x50] sm:$0xff]
  %v5020 = vld [vmem:[#allocation5 + $0x58] sm:$0xff]
  %v5021 = vld [vmem:[#allocation5 + $0x60] sm:$0xff]
  %v5022 = vld [vmem:[#allocation5 + $0x68] sm:$0xff]
  %v5023 = vld [vmem:[#allocation5 + $0x70] sm:$0xff]
  %v5024 = vld [vmem:[#allocation5 + $0x78] sm:$0xff]
  %v5025 = vld [vmem:[#allocation5 + $0x80] sm:$0xff]
  %v5026 = vld [vmem:[#allocation5 + $0x88] sm:$0xff]
  %v5027 = vld [vmem:[#allocation5 + $0x90] sm:$0xff]
  %v5028 = vld [vmem:[#allocation5 + $0x98] sm:$0xff]
  %v5029 = vld [vmem:[#allocation5 + $0xa0] sm:$0xff]
  %v5030 = vld [vmem:[#allocation5 + $0xa8] sm:$0xff]
  %v5031 = vld [vmem:[#allocation5 + $0xb0] sm:$0xff]
  %v5032 = vld [vmem:[#allocation5 + $0xb8] sm:$0xff]
  %v5033 = vld [vmem:[#allocation5 + $0xc0] sm:$0xff]
  %v5034 = vld [vmem:[#allocation5 + $0xc8] sm:$0xff]
  %v5035 = vld [vmem:[#allocation5 + $0xd0] sm:$0xff]
  %v5036 = vld [vmem:[#allocation5 + $0xd8] sm:$0xff]
  %v5037 = vld [vmem:[#allocation5 + $0xe0] sm:$0xff]
  %v5038 = vld [vmem:[#allocation5 + $0xe8] sm:$0xff]
  %v5039 = vld [vmem:[#allocation5 + $0xf0] sm:$0xff]
  %v5040 = vld [vmem:[#allocation5 + $0xf8] sm:$0xff]
  %v5041 = vld [vmem:[#allocation5 + $0x100] sm:$0xff]
  %v5042 = vld [vmem:[#allocation5 + $0x108] sm:$0xff]
  %v5043 = vld [vmem:[#allocation5 + $0x110] sm:$0xff]
  %v5044 = vld [vmem:[#allocation5 + $0x118] sm:$0xff]
  %v5045 = vld [vmem:[#allocation5 + $0x120] sm:$0xff]
  %v5046 = vld [vmem:[#allocation5 + $0x128] sm:$0xff]
  %v5047 = vld [vmem:[#allocation5 + $0x130] sm:$0xff]
  %v5048 = vld [vmem:[#allocation5 + $0x138] sm:$0xff]
  %v5049 = vld [vmem:[#allocation5 + $0x140] sm:$0xff]
  %v5050 = vld [vmem:[#allocation5 + $0x148] sm:$0xff]
  %v5051 = vld [vmem:[#allocation5 + $0x150] sm:$0xff]
  %v5052 = vld [vmem:[#allocation5 + $0x158] sm:$0xff]
  %v5053 = vld [vmem:[#allocation5 + $0x160] sm:$0xff]
  %v5054 = vld [vmem:[#allocation5 + $0x168] sm:$0xff]
  %v5055 = vld [vmem:[#allocation5 + $0x170] sm:$0xff]
  %v5056 = vld [vmem:[#allocation5 + $0x178] sm:$0xff]
  %v5057 = vld [vmem:[#allocation5 + $0x180] sm:$0xff]
  %v5058 = vld [vmem:[#allocation5 + $0x188] sm:$0xff]
  %v5059 = vld [vmem:[#allocation5 + $0x190] sm:$0xff]
  %v5060 = vld [vmem:[#allocation5 + $0x198] sm:$0xff]
  %v5061 = vld [vmem:[#allocation5 + $0x1a0] sm:$0xff]
  %v5062 = vld [vmem:[#allocation5 + $0x1a8] sm:$0xff]
  %v5063 = vld [vmem:[#allocation5 + $0x1b0] sm:$0xff]
  %v5064 = vld [vmem:[#allocation5 + $0x1b8] sm:$0xff]
  %v5065 = vld [vmem:[#allocation5 + $0x1c0] sm:$0xff]
  %v5066 = vld [vmem:[#allocation5 + $0x1c8] sm:$0xff]
  %v5067 = vld [vmem:[#allocation5 + $0x1d0] sm:$0xff]
  %v5068 = vld [vmem:[#allocation5 + $0x1d8] sm:$0xff]
  %v5069 = vld [vmem:[#allocation5 + $0x1e0] sm:$0xff]
  %v5070 = vld [vmem:[#allocation5 + $0x1e8] sm:$0xff]
  %v5071 = vld [vmem:[#allocation5 + $0x1f0] sm:$0xff]
  %v5072 = vld [vmem:[#allocation5 + $0x1f8] sm:$0xff]
  %v5073 = vld [vmem:[#allocation5 + $0x200] sm:$0xff]
  %v5074 = vld [vmem:[#allocation5 + $0x208] sm:$0xff]
  %v5075 = vld [vmem:[#allocation5 + $0x210] sm:$0xff]
  %v5076 = vld [vmem:[#allocation5 + $0x218] sm:$0xff]
  %v5077 = vld [vmem:[#allocation5 + $0x220] sm:$0xff]
  %v5078 = vld [vmem:[#allocation5 + $0x228] sm:$0xff]
  %v5079 = vld [vmem:[#allocation5 + $0x230] sm:$0xff]
  %v5080 = vld [vmem:[#allocation5 + $0x238] sm:$0xff]
  %v5081 = vld [vmem:[#allocation5 + $0x240] sm:$0xff]
  %v5082 = vld [vmem:[#allocation5 + $0x248] sm:$0xff]
  %v5083 = vld [vmem:[#allocation5 + $0x250] sm:$0xff]
  %v5084 = vld [vmem:[#allocation5 + $0x258] sm:$0xff]
  %v5085 = vld [vmem:[#allocation5 + $0x260] sm:$0xff]
  %v5086 = vld [vmem:[#allocation5 + $0x268] sm:$0xff]
  %v5087 = vld [vmem:[#allocation5 + $0x270] sm:$0xff]
  %v5088 = vld [vmem:[#allocation5 + $0x278] sm:$0xff]
  %v5089 = vld [vmem:[#allocation5 + $0x280] sm:$0xff]
  %v5090 = vld [vmem:[#allocation5 + $0x288] sm:$0xff]
  %v5091 = vld [vmem:[#allocation5 + $0x290] sm:$0xff]
  %v5092 = vld [vmem:[#allocation5 + $0x298] sm:$0xff]
  %v5093 = vld [vmem:[#allocation5 + $0x2a0] sm:$0xff]
  %v5094 = vld [vmem:[#allocation5 + $0x2a8] sm:$0xff]
  %v5095 = vld [vmem:[#allocation5 + $0x2b0] sm:$0xff]
  %v5096 = vld [vmem:[#allocation5 + $0x2b8] sm:$0xff]
  %v5097 = vld [vmem:[#allocation5 + $0x2c0] sm:$0xff]
  %v5098 = vld [vmem:[#allocation5 + $0x2c8] sm:$0xff]
  %v5099 = vld [vmem:[#allocation5 + $0x2d0] sm:$0xff]
  %v5100 = vld [vmem:[#allocation5 + $0x2d8] sm:$0xff]
  %v5101 = vld [vmem:[#allocation5 + $0x2e0] sm:$0xff]
  %v5102 = vld [vmem:[#allocation5 + $0x2e8] sm:$0xff]
  %v5103 = vld [vmem:[#allocation5 + $0x2f0] sm:$0xff]
  %v5104 = vld [vmem:[#allocation5 + $0x2f8] sm:$0xff]
  %v5105 = vld [vmem:[#allocation5 + $0x300] sm:$0xff]
  %v5106 = vld [vmem:[#allocation5 + $0x308] sm:$0xff]
  %v5107 = vld [vmem:[#allocation5 + $0x310] sm:$0xff]
  %v5108 = vld [vmem:[#allocation5 + $0x318] sm:$0xff]
  %v5109 = vld [vmem:[#allocation5 + $0x320] sm:$0xff]
  %v5110 = vld [vmem:[#allocation5 + $0x328] sm:$0xff]
  %v5111 = vld [vmem:[#allocation5 + $0x330] sm:$0xff]
  %v5112 = vld [vmem:[#allocation5 + $0x338] sm:$0xff]
  %v5113 = vld [vmem:[#allocation5 + $0x340] sm:$0xff]
  %v5114 = vld [vmem:[#allocation5 + $0x348] sm:$0xff]
  %v5115 = vld [vmem:[#allocation5 + $0x350] sm:$0xff]
  %v5116 = vld [vmem:[#allocation5 + $0x358] sm:$0xff]
  %v5117 = vld [vmem:[#allocation5 + $0x360] sm:$0xff]
  %v5118 = vld [vmem:[#allocation5 + $0x368] sm:$0xff]
  %v5119 = vld [vmem:[#allocation5 + $0x370] sm:$0xff]
  %v5120 = vld [vmem:[#allocation5 + $0x378] sm:$0xff]
  %v5121 = vld [vmem:[#allocation5 + $0x380] sm:$0xff]
  %v5122 = vld [vmem:[#allocation5 + $0x388] sm:$0xff]
  %v5123 = vld [vmem:[#allocation5 + $0x390] sm:$0xff]
  %v5124 = vld [vmem:[#allocation5 + $0x398] sm:$0xff]
  %v5125 = vld [vmem:[#allocation5 + $0x3a0] sm:$0xff]
  %v5126 = vld [vmem:[#allocation5 + $0x3a8] sm:$0xff]
  %v5127 = vld [vmem:[#allocation5 + $0x3b0] sm:$0xff]
  %v5128 = vld [vmem:[#allocation5 + $0x3b8] sm:$0xff]
  %v5129 = vld [vmem:[#allocation5 + $0x3c0] sm:$0xff]
  %v5130 = vld [vmem:[#allocation5 + $0x3c8] sm:$0xff]
  %v5131 = vld [vmem:[#allocation5 + $0x3d0] sm:$0xff]
  %v5132 = vld [vmem:[#allocation5 + $0x3d8] sm:$0xff]
  %v5133 = vld [vmem:[#allocation5 + $0x3e0] sm:$0xff]
  %v5134 = vld [vmem:[#allocation5 + $0x3e8] sm:$0xff]
  %v5135 = vld [vmem:[#allocation5 + $0x3f0] sm:$0xff]
  %v5136 = vld [vmem:[#allocation5 + $0x3f8] sm:$0xff]
  %v5265 = vunpack.c.l.b16 %v5009
  %v5266 = vunpack.c.h.b16 %v5009
  %v5267 = vunpack.c.l.b16 %v5010
  %v5268 = vunpack.c.h.b16 %v5010
  %v5269 = vunpack.c.l.b16 %v5011
  %v5270 = vunpack.c.h.b16 %v5011
  %v5271 = vunpack.c.l.b16 %v5012
  %v5272 = vunpack.c.h.b16 %v5012
  %v5273 = vunpack.c.l.b16 %v5013
  %v5274 = vunpack.c.h.b16 %v5013
  %v5275 = vunpack.c.l.b16 %v5014
  %v5276 = vunpack.c.h.b16 %v5014
  %v5277 = vunpack.c.l.b16 %v5015
  %v5278 = vunpack.c.h.b16 %v5015
  %v5279 = vunpack.c.l.b16 %v5016
  %v5280 = vunpack.c.h.b16 %v5016
  %v5281 = vunpack.c.l.b16 %v5017
  %v5282 = vunpack.c.h.b16 %v5017
  %v5283 = vunpack.c.l.b16 %v5018
  %v5284 = vunpack.c.h.b16 %v5018
  %v5285 = vunpack.c.l.b16 %v5019
  %v5286 = vunpack.c.h.b16 %v5019
  %v5287 = vunpack.c.l.b16 %v5020
  %v5288 = vunpack.c.h.b16 %v5020
  %v5289 = vunpack.c.l.b16 %v5021
  %v5290 = vunpack.c.h.b16 %v5021
  %v5291 = vunpack.c.l.b16 %v5022
  %v5292 = vunpack.c.h.b16 %v5022
  %v5293 = vunpack.c.l.b16 %v5023
  %v5294 = vunpack.c.h.b16 %v5023
  %v5295 = vunpack.c.l.b16 %v5024
  %v5296 = vunpack.c.h.b16 %v5024
  %v5297 = vunpack.c.l.b16 %v5025
  %v5298 = vunpack.c.h.b16 %v5025
  %v5299 = vunpack.c.l.b16 %v5026
  %v5300 = vunpack.c.h.b16 %v5026
  %v5301 = vunpack.c.l.b16 %v5027
  %v5302 = vunpack.c.h.b16 %v5027
  %v5303 = vunpack.c.l.b16 %v5028
  %v5304 = vunpack.c.h.b16 %v5028
  %v5305 = vunpack.c.l.b16 %v5029
  %v5306 = vunpack.c.h.b16 %v5029
  %v5307 = vunpack.c.l.b16 %v5030
  %v5308 = vunpack.c.h.b16 %v5030
  %v5309 = vunpack.c.l.b16 %v5031
  %v5310 = vunpack.c.h.b16 %v5031
  %v5311 = vunpack.c.l.b16 %v5032
  %v5312 = vunpack.c.h.b16 %v5032
  %v5313 = vunpack.c.l.b16 %v5033
  %v5314 = vunpack.c.h.b16 %v5033
  %v5315 = vunpack.c.l.b16 %v5034
  %v5316 = vunpack.c.h.b16 %v5034
  %v5317 = vunpack.c.l.b16 %v5035
  %v5318 = vunpack.c.h.b16 %v5035
  %v5319 = vunpack.c.l.b16 %v5036
  %v5320 = vunpack.c.h.b16 %v5036
  %v5321 = vunpack.c.l.b16 %v5037
  %v5322 = vunpack.c.h.b16 %v5037
  %v5323 = vunpack.c.l.b16 %v5038
  %v5324 = vunpack.c.h.b16 %v5038
  %v5325 = vunpack.c.l.b16 %v5039
  %v5326 = vunpack.c.h.b16 %v5039
  %v5327 = vunpack.c.l.b16 %v5040
  %v5328 = vunpack.c.h.b16 %v5040
  %v5329 = vunpack.c.l.b16 %v5041
  %v5330 = vunpack.c.h.b16 %v5041
  %v5331 = vunpack.c.l.b16 %v5042
  %v5332 = vunpack.c.h.b16 %v5042
  %v5333 = vunpack.c.l.b16 %v5043
  %v5334 = vunpack.c.h.b16 %v5043
  %v5335 = vunpack.c.l.b16 %v5044
  %v5336 = vunpack.c.h.b16 %v5044
  %v5337 = vunpack.c.l.b16 %v5045
  %v5338 = vunpack.c.h.b16 %v5045
  %v5339 = vunpack.c.l.b16 %v5046
  %v5340 = vunpack.c.h.b16 %v5046
  %v5341 = vunpack.c.l.b16 %v5047
  %v5342 = vunpack.c.h.b16 %v5047
  %v5343 = vunpack.c.l.b16 %v5048
  %v5344 = vunpack.c.h.b16 %v5048
  %v5345 = vunpack.c.l.b16 %v5049
  %v5346 = vunpack.c.h.b16 %v5049
  %v5347 = vunpack.c.l.b16 %v5050
  %v5348 = vunpack.c.h.b16 %v5050
  %v5349 = vunpack.c.l.b16 %v5051
  %v5350 = vunpack.c.h.b16 %v5051
  %v5351 = vunpack.c.l.b16 %v5052
  %v5352 = vunpack.c.h.b16 %v5052
  %v5353 = vunpack.c.l.b16 %v5053
  %v5354 = vunpack.c.h.b16 %v5053
  %v5355 = vunpack.c.l.b16 %v5054
  %v5356 = vunpack.c.h.b16 %v5054
  %v5357 = vunpack.c.l.b16 %v5055
  %v5358 = vunpack.c.h.b16 %v5055
  %v5359 = vunpack.c.l.b16 %v5056
  %v5360 = vunpack.c.h.b16 %v5056
  %v5361 = vunpack.c.l.b16 %v5057
  %v5362 = vunpack.c.h.b16 %v5057
  %v5363 = vunpack.c.l.b16 %v5058
  %v5364 = vunpack.c.h.b16 %v5058
  %v5365 = vunpack.c.l.b16 %v5059
  %v5366 = vunpack.c.h.b16 %v5059
  %v5367 = vunpack.c.l.b16 %v5060
  %v5368 = vunpack.c.h.b16 %v5060
  %v5369 = vunpack.c.l.b16 %v5061
  %v5370 = vunpack.c.h.b16 %v5061
  %v5371 = vunpack.c.l.b16 %v5062
  %v5372 = vunpack.c.h.b16 %v5062
  %v5373 = vunpack.c.l.b16 %v5063
  %v5374 = vunpack.c.h.b16 %v5063
  %v5375 = vunpack.c.l.b16 %v5064
  %v5376 = vunpack.c.h.b16 %v5064
  %v5377 = vunpack.c.l.b16 %v5065
  %v5378 = vunpack.c.h.b16 %v5065
  %v5379 = vunpack.c.l.b16 %v5066
  %v5380 = vunpack.c.h.b16 %v5066
  %v5381 = vunpack.c.l.b16 %v5067
  %v5382 = vunpack.c.h.b16 %v5067
  %v5383 = vunpack.c.l.b16 %v5068
  %v5384 = vunpack.c.h.b16 %v5068
  %v5385 = vunpack.c.l.b16 %v5069
  %v5386 = vunpack.c.h.b16 %v5069
  %v5387 = vunpack.c.l.b16 %v5070
  %v5388 = vunpack.c.h.b16 %v5070
  %v5389 = vunpack.c.l.b16 %v5071
  %v5390 = vunpack.c.h.b16 %v5071
  %v5391 = vunpack.c.l.b16 %v5072
  %v5392 = vunpack.c.h.b16 %v5072
  %v5393 = vunpack.c.l.b16 %v5073
  %v5394 = vunpack.c.h.b16 %v5073
  %v5395 = vunpack.c.l.b16 %v5074
  %v5396 = vunpack.c.h.b16 %v5074
  %v5397 = vunpack.c.l.b16 %v5075
  %v5398 = vunpack.c.h.b16 %v5075
  %v5399 = vunpack.c.l.b16 %v5076
  %v5400 = vunpack.c.h.b16 %v5076
  %v5401 = vunpack.c.l.b16 %v5077
  %v5402 = vunpack.c.h.b16 %v5077
  %v5403 = vunpack.c.l.b16 %v5078
  %v5404 = vunpack.c.h.b16 %v5078
  %v5405 = vunpack.c.l.b16 %v5079
  %v5406 = vunpack.c.h.b16 %v5079
  %v5407 = vunpack.c.l.b16 %v5080
  %v5408 = vunpack.c.h.b16 %v5080
  %v5409 = vunpack.c.l.b16 %v5081
  %v5410 = vunpack.c.h.b16 %v5081
  %v5411 = vunpack.c.l.b16 %v5082
  %v5412 = vunpack.c.h.b16 %v5082
  %v5413 = vunpack.c.l.b16 %v5083
  %v5414 = vunpack.c.h.b16 %v5083
  %v5415 = vunpack.c.l.b16 %v5084
  %v5416 = vunpack.c.h.b16 %v5084
  %v5417 = vunpack.c.l.b16 %v5085
  %v5418 = vunpack.c.h.b16 %v5085
  %v5419 = vunpack.c.l.b16 %v5086
  %v5420 = vunpack.c.h.b16 %v5086
  %v5421 = vunpack.c.l.b16 %v5087
  %v5422 = vunpack.c.h.b16 %v5087
  %v5423 = vunpack.c.l.b16 %v5088
  %v5424 = vunpack.c.h.b16 %v5088
  %v5425 = vunpack.c.l.b16 %v5089
  %v5426 = vunpack.c.h.b16 %v5089
  %v5427 = vunpack.c.l.b16 %v5090
  %v5428 = vunpack.c.h.b16 %v5090
  %v5429 = vunpack.c.l.b16 %v5091
  %v5430 = vunpack.c.h.b16 %v5091
  %v5431 = vunpack.c.l.b16 %v5092
  %v5432 = vunpack.c.h.b16 %v5092
  %v5433 = vunpack.c.l.b16 %v5093
  %v5434 = vunpack.c.h.b16 %v5093
  %v5435 = vunpack.c.l.b16 %v5094
  %v5436 = vunpack.c.h.b16 %v5094
  %v5437 = vunpack.c.l.b16 %v5095
  %v5438 = vunpack.c.h.b16 %v5095
  %v5439 = vunpack.c.l.b16 %v5096
  %v5440 = vunpack.c.h.b16 %v5096
  %v5441 = vunpack.c.l.b16 %v5097
  %v5442 = vunpack.c.h.b16 %v5097
  %v5443 = vunpack.c.l.b16 %v5098
  %v5444 = vunpack.c.h.b16 %v5098
  %v5445 = vunpack.c.l.b16 %v5099
  %v5446 = vunpack.c.h.b16 %v5099
  %v5447 = vunpack.c.l.b16 %v5100
  %v5448 = vunpack.c.h.b16 %v5100
  %v5449 = vunpack.c.l.b16 %v5101
  %v5450 = vunpack.c.h.b16 %v5101
  %v5451 = vunpack.c.l.b16 %v5102
  %v5452 = vunpack.c.h.b16 %v5102
  %v5453 = vunpack.c.l.b16 %v5103
  %v5454 = vunpack.c.h.b16 %v5103
  %v5455 = vunpack.c.l.b16 %v5104
  %v5456 = vunpack.c.h.b16 %v5104
  %v5457 = vunpack.c.l.b16 %v5105
  %v5458 = vunpack.c.h.b16 %v5105
  %v5459 = vunpack.c.l.b16 %v5106
  %v5460 = vunpack.c.h.b16 %v5106
  %v5461 = vunpack.c.l.b16 %v5107
  %v5462 = vunpack.c.h.b16 %v5107
  %v5463 = vunpack.c.l.b16 %v5108
  %v5464 = vunpack.c.h.b16 %v5108
  %v5465 = vunpack.c.l.b16 %v5109
  %v5466 = vunpack.c.h.b16 %v5109
  %v5467 = vunpack.c.l.b16 %v5110
  %v5468 = vunpack.c.h.b16 %v5110
  %v5469 = vunpack.c.l.b16 %v5111
  %v5470 = vunpack.c.h.b16 %v5111
  %v5471 = vunpack.c.l.b16 %v5112
  %v5472 = vunpack.c.h.b16 %v5112
  %v5473 = vunpack.c.l.b16 %v5113
  %v5474 = vunpack.c.h.b16 %v5113
  %v5475 = vunpack.c.l.b16 %v5114
  %v5476 = vunpack.c.h.b16 %v5114
  %v5477 = vunpack.c.l.b16 %v5115
  %v5478 = vunpack.c.h.b16 %v5115
  %v5479 = vunpack.c.l.b16 %v5116
  %v5480 = vunpack.c.h.b16 %v5116
  %v5481 = vunpack.c.l.b16 %v5117
  %v5482 = vunpack.c.h.b16 %v5117
  %v5483 = vunpack.c.l.b16 %v5118
  %v5484 = vunpack.c.h.b16 %v5118
  %v5485 = vunpack.c.l.b16 %v5119
  %v5486 = vunpack.c.h.b16 %v5119
  %v5487 = vunpack.c.l.b16 %v5120
  %v5488 = vunpack.c.h.b16 %v5120
  %v5489 = vunpack.c.l.b16 %v5121
  %v5490 = vunpack.c.h.b16 %v5121
  %v5491 = vunpack.c.l.b16 %v5122
  %v5492 = vunpack.c.h.b16 %v5122
  %v5493 = vunpack.c.l.b16 %v5123
  %v5494 = vunpack.c.h.b16 %v5123
  %v5495 = vunpack.c.l.b16 %v5124
  %v5496 = vunpack.c.h.b16 %v5124
  %v5497 = vunpack.c.l.b16 %v5125
  %v5498 = vunpack.c.h.b16 %v5125
  %v5499 = vunpack.c.l.b16 %v5126
  %v5500 = vunpack.c.h.b16 %v5126
  %v5501 = vunpack.c.l.b16 %v5127
  %v5502 = vunpack.c.h.b16 %v5127
  %v5503 = vunpack.c.l.b16 %v5128
  %v5504 = vunpack.c.h.b16 %v5128
  %v5505 = vunpack.c.l.b16 %v5129
  %v5506 = vunpack.c.h.b16 %v5129
  %v5507 = vunpack.c.l.b16 %v5130
  %v5508 = vunpack.c.h.b16 %v5130
  %v5509 = vunpack.c.l.b16 %v5131
  %v5510 = vunpack.c.h.b16 %v5131
  %v5511 = vunpack.c.l.b16 %v5132
  %v5512 = vunpack.c.h.b16 %v5132
  %v5513 = vunpack.c.l.b16 %v5133
  %v5514 = vunpack.c.h.b16 %v5133
  %v5515 = vunpack.c.l.b16 %v5134
  %v5516 = vunpack.c.h.b16 %v5134
  %v5517 = vunpack.c.l.b16 %v5135
  %v5518 = vunpack.c.h.b16 %v5135
  %v5519 = vunpack.c.l.b16 %v5136
  %v5520 = vunpack.c.h.b16 %v5136
  %v5521 = vpack.c.b16 %v5273, %v5265
  %v5522 = vpack.c.b16 %v5274, %v5266
  %v5523 = vpack.c.b16 %v5275, %v5267
  %v5524 = vpack.c.b16 %v5276, %v5268
  %v5525 = vpack.c.b16 %v5277, %v5269
  %v5526 = vpack.c.b16 %v5278, %v5270
  %v5527 = vpack.c.b16 %v5279, %v5271
  %v5528 = vpack.c.b16 %v5280, %v5272
  %v5529 = vpack.c.b16 %v5289, %v5281
  %v5530 = vpack.c.b16 %v5290, %v5282
  %v5531 = vpack.c.b16 %v5291, %v5283
  %v5532 = vpack.c.b16 %v5292, %v5284
  %v5533 = vpack.c.b16 %v5293, %v5285
  %v5534 = vpack.c.b16 %v5294, %v5286
  %v5535 = vpack.c.b16 %v5295, %v5287
  %v5536 = vpack.c.b16 %v5296, %v5288
  %v5537 = vpack.c.b16 %v5305, %v5297
  %v5538 = vpack.c.b16 %v5306, %v5298
  %v5539 = vpack.c.b16 %v5307, %v5299
  %v5540 = vpack.c.b16 %v5308, %v5300
  %v5541 = vpack.c.b16 %v5309, %v5301
  %v5542 = vpack.c.b16 %v5310, %v5302
  %v5543 = vpack.c.b16 %v5311, %v5303
  %v5544 = vpack.c.b16 %v5312, %v5304
  %v5545 = vpack.c.b16 %v5321, %v5313
  %v5546 = vpack.c.b16 %v5322, %v5314
  %v5547 = vpack.c.b16 %v5323, %v5315
  %v5548 = vpack.c.b16 %v5324, %v5316
  %v5549 = vpack.c.b16 %v5325, %v5317
  %v5550 = vpack.c.b16 %v5326, %v5318
  %v5551 = vpack.c.b16 %v5327, %v5319
  %v5552 = vpack.c.b16 %v5328, %v5320
  %v5553 = vpack.c.b16 %v5337, %v5329
  %v5554 = vpack.c.b16 %v5338, %v5330
  %v5555 = vpack.c.b16 %v5339, %v5331
  %v5556 = vpack.c.b16 %v5340, %v5332
  %v5557 = vpack.c.b16 %v5341, %v5333
  %v5558 = vpack.c.b16 %v5342, %v5334
  %v5559 = vpack.c.b16 %v5343, %v5335
  %v5560 = vpack.c.b16 %v5344, %v5336
  %v5561 = vpack.c.b16 %v5353, %v5345
  %v5562 = vpack.c.b16 %v5354, %v5346
  %v5563 = vpack.c.b16 %v5355, %v5347
  %v5564 = vpack.c.b16 %v5356, %v5348
  %v5565 = vpack.c.b16 %v5357, %v5349
  %v5566 = vpack.c.b16 %v5358, %v5350
  %v5567 = vpack.c.b16 %v5359, %v5351
  %v5568 = vpack.c.b16 %v5360, %v5352
  %v5569 = vpack.c.b16 %v5369, %v5361
  %v5570 = vpack.c.b16 %v5370, %v5362
  %v5571 = vpack.c.b16 %v5371, %v5363
  %v5572 = vpack.c.b16 %v5372, %v5364
  %v5573 = vpack.c.b16 %v5373, %v5365
  %v5574 = vpack.c.b16 %v5374, %v5366
  %v5575 = vpack.c.b16 %v5375, %v5367
  %v5576 = vpack.c.b16 %v5376, %v5368
  %v5577 = vpack.c.b16 %v5385, %v5377
  %v5578 = vpack.c.b16 %v5386, %v5378
  %v5579 = vpack.c.b16 %v5387, %v5379
  %v5580 = vpack.c.b16 %v5388, %v5380
  %v5581 = vpack.c.b16 %v5389, %v5381
  %v5582 = vpack.c.b16 %v5390, %v5382
  %v5583 = vpack.c.b16 %v5391, %v5383
  %v5584 = vpack.c.b16 %v5392, %v5384
  %v5585 = vpack.c.b16 %v5401, %v5393
  %v5586 = vpack.c.b16 %v5402, %v5394
  %v5587 = vpack.c.b16 %v5403, %v5395
  %v5588 = vpack.c.b16 %v5404, %v5396
  %v5589 = vpack.c.b16 %v5405, %v5397
  %v5590 = vpack.c.b16 %v5406, %v5398
  %v5591 = vpack.c.b16 %v5407, %v5399
  %v5592 = vpack.c.b16 %v5408, %v5400
  %v5593 = vpack.c.b16 %v5417, %v5409
  %v5594 = vpack.c.b16 %v5418, %v5410
  %v5595 = vpack.c.b16 %v5419, %v5411
  %v5596 = vpack.c.b16 %v5420, %v5412
  %v5597 = vpack.c.b16 %v5421, %v5413
  %v5598 = vpack.c.b16 %v5422, %v5414
  %v5599 = vpack.c.b16 %v5423, %v5415
  %v5600 = vpack.c.b16 %v5424, %v5416
  %v5601 = vpack.c.b16 %v5433, %v5425
  %v5602 = vpack.c.b16 %v5434, %v5426
  %v5603 = vpack.c.b16 %v5435, %v5427
  %v5604 = vpack.c.b16 %v5436, %v5428
  %v5605 = vpack.c.b16 %v5437, %v5429
  %v5606 = vpack.c.b16 %v5438, %v5430
  %v5607 = vpack.c.b16 %v5439, %v5431
  %v5608 = vpack.c.b16 %v5440, %v5432
  %v5609 = vpack.c.b16 %v5449, %v5441
  %v5610 = vpack.c.b16 %v5450, %v5442
  %v5611 = vpack.c.b16 %v5451, %v5443
  %v5612 = vpack.c.b16 %v5452, %v5444
  %v5613 = vpack.c.b16 %v5453, %v5445
  %v5614 = vpack.c.b16 %v5454, %v5446
  %v5615 = vpack.c.b16 %v5455, %v5447
  %v5616 = vpack.c.b16 %v5456, %v5448
  %v5617 = vpack.c.b16 %v5465, %v5457
  %v5618 = vpack.c.b16 %v5466, %v5458
  %v5619 = vpack.c.b16 %v5467, %v5459
  %v5620 = vpack.c.b16 %v5468, %v5460
  %v5621 = vpack.c.b16 %v5469, %v5461
  %v5622 = vpack.c.b16 %v5470, %v5462
  %v5623 = vpack.c.b16 %v5471, %v5463
  %v5624 = vpack.c.b16 %v5472, %v5464
  %v5625 = vpack.c.b16 %v5481, %v5473
  %v5626 = vpack.c.b16 %v5482, %v5474
  %v5627 = vpack.c.b16 %v5483, %v5475
  %v5628 = vpack.c.b16 %v5484, %v5476
  %v5629 = vpack.c.b16 %v5485, %v5477
  %v5630 = vpack.c.b16 %v5486, %v5478
  %v5631 = vpack.c.b16 %v5487, %v5479
  %v5632 = vpack.c.b16 %v5488, %v5480
  %v5633 = vpack.c.b16 %v5497, %v5489
  %v5634 = vpack.c.b16 %v5498, %v5490
  %v5635 = vpack.c.b16 %v5499, %v5491
  %v5636 = vpack.c.b16 %v5500, %v5492
  %v5637 = vpack.c.b16 %v5501, %v5493
  %v5638 = vpack.c.b16 %v5502, %v5494
  %v5639 = vpack.c.b16 %v5503, %v5495
  %v5640 = vpack.c.b16 %v5504, %v5496
  %v5641 = vpack.c.b16 %v5513, %v5505
  %v5642 = vpack.c.b16 %v5514, %v5506
  %v5643 = vpack.c.b16 %v5515, %v5507
  %v5644 = vpack.c.b16 %v5516, %v5508
  %v5645 = vpack.c.b16 %v5517, %v5509
  %v5646 = vpack.c.b16 %v5518, %v5510
  %v5647 = vpack.c.b16 %v5519, %v5511
  %v5648 = vpack.c.b16 %v5520, %v5512
  %5777 = vmatprep.subr.bf16.mxu0 %v5578
  %5778 = vmatpush1.bf16.msra.mxu0 %v5577
  %5779 = vmatprep.subr.bf16.mxu0 %v5570
  %5780 = vmatpush1.bf16.msra.mxu0 %v5569
  %5781 = vmatprep.subr.bf16.mxu0 %v5562
  %5782 = vmatpush1.bf16.msra.mxu0 %v5561
  %5783 = vmatprep.subr.bf16.mxu0 %v5554
  %5784 = vmatpush1.bf16.msra.mxu0 %v5553
  %5785 = vmatprep.subr.bf16.mxu0 %v5546
  %5786 = vmatpush1.bf16.msra.mxu0 %v5545
  %5787 = vmatprep.subr.bf16.mxu0 %v5538
  %5788 = vmatpush1.bf16.msra.mxu0 %v5537
  %5789 = vmatprep.subr.bf16.mxu0 %v5530
  %5790 = vmatpush1.bf16.msra.mxu0 %v5529
  %5791 = vmatprep.subr.bf16.mxu0 %v5522
  %5792 = vmatpush1.bf16.msra.mxu0 %v5521
  %5793 = vmatprep.subr.bf16.mxu0 %v5642
  %5794 = vmatpush2.bf16.msra.mxu0 %v5641
  %5795 = vmatprep.subr.bf16.mxu0 %v5634
  %5796 = vmatpush2.bf16.msra.mxu0 %v5633
  %5797 = vmatprep.subr.bf16.mxu0 %v5626
  %5798 = vmatpush2.bf16.msra.mxu0 %v5625
  %5799 = vmatprep.subr.bf16.mxu0 %v5618
  %5800 = vmatpush2.bf16.msra.mxu0 %v5617
  %5801 = vmatprep.subr.bf16.mxu0 %v5610
  %5802 = vmatpush2.bf16.msra.mxu0 %v5609
  %5803 = vmatprep.subr.bf16.mxu0 %v5602
  %5804 = vmatpush2.bf16.msra.mxu0 %v5601
  %5805 = vmatprep.subr.bf16.mxu0 %v5594
  %5806 = vmatpush2.bf16.msra.mxu0 %v5593
  %5807 = vmatprep.subr.bf16.mxu0 %v5586
  %5808 = vmatpush2.bf16.msra.mxu0 %v5585
  %5809 = vmatprep.mubr.bf16.mxu0 %v5002
  %5810 = vmatmul.mubr.bf16.gmra.mxu0 %v5001
  %v5811 = vpop.f32.mrf.mxu0
  %v5812 = vadd.f32 0.0, %v5811
  %v5813 = vpop.f32.mrf.mxu0
  %v5814 = vadd.f32 0.0, %v5813
  %v5815 = vpop.f32.mrf.mxu0
  %v5816 = vadd.f32 0.0, %v5815
  %v5817 = vpop.f32.mrf.mxu0
  %v5818 = vadd.f32 0.0, %v5817
  %5819 = vmatprep.mubr.bf16.mxu0 %v5004
  %5820 = vmatmul.mubr.bf16.gmra.mxu0 %v5003
  %v5821 = vpop.f32.mrf.mxu0
  %v5822 = vadd.f32 0.0, %v5821
  %v5823 = vpop.f32.mrf.mxu0
  %v5824 = vadd.f32 0.0, %v5823
  %v5825 = vpop.f32.mrf.mxu0
  %v5826 = vadd.f32 0.0, %v5825
  %v5827 = vpop.f32.mrf.mxu0
  %v5828 = vadd.f32 0.0, %v5827
  %5829 = vmatprep.mubr.bf16.mxu0 %v5006
  %5830 = vmatmul.mubr.bf16.gmra.mxu0 %v5005
  %v5831 = vpop.f32.mrf.mxu0
  %v5832 = vadd.f32 0.0, %v5831
  %v5833 = vpop.f32.mrf.mxu0
  %v5834 = vadd.f32 0.0, %v5833
  %v5835 = vpop.f32.mrf.mxu0
  %v5836 = vadd.f32 0.0, %v5835
  %v5837 = vpop.f32.mrf.mxu0
  %v5838 = vadd.f32 0.0, %v5837
  %5839 = vmatprep.mubr.bf16.mxu0 %v5008
  %5840 = vmatmul.mubr.bf16.gmra.mxu0 %v5007
  %v5841 = vpop.f32.mrf.mxu0
  %v5842 = vadd.f32 0.0, %v5841
  %v5843 = vpop.f32.mrf.mxu0
  %v5844 = vadd.f32 0.0, %v5843
  %v5845 = vpop.f32.mrf.mxu0
  %v5846 = vadd.f32 0.0, %v5845
  %v5847 = vpop.f32.mrf.mxu0
  %v5848 = vadd.f32 0.0, %v5847
  %5849 = vdwg.mxu0
  %5850 = vmatprep.subr.bf16.mxu0 %v5580
  %5851 = vmatpush1.bf16.msra.mxu0 %v5579
  %5852 = vmatprep.subr.bf16.mxu0 %v5572
  %5853 = vmatpush1.bf16.msra.mxu0 %v5571
  %5854 = vmatprep.subr.bf16.mxu0 %v5564
  %5855 = vmatpush1.bf16.msra.mxu0 %v5563
  %5856 = vmatprep.subr.bf16.mxu0 %v5556
  %5857 = vmatpush1.bf16.msra.mxu0 %v5555
  %5858 = vmatprep.subr.bf16.mxu0 %v5548
  %5859 = vmatpush1.bf16.msra.mxu0 %v5547
  %5860 = vmatprep.subr.bf16.mxu0 %v5540
  %5861 = vmatpush1.bf16.msra.mxu0 %v5539
  %5862 = vmatprep.subr.bf16.mxu0 %v5532
  %5863 = vmatpush1.bf16.msra.mxu0 %v5531
  %5864 = vmatprep.subr.bf16.mxu0 %v5524
  %5865 = vmatpush1.bf16.msra.mxu0 %v5523
  %5866 = vmatprep.subr.bf16.mxu0 %v5644
  %5867 = vmatpush2.bf16.msra.mxu0 %v5643
  %5868 = vmatprep.subr.bf16.mxu0 %v5636
  %5869 = vmatpush2.bf16.msra.mxu0 %v5635
  %5870 = vmatprep.subr.bf16.mxu0 %v5628
  %5871 = vmatpush2.bf16.msra.mxu0 %v5627
  %5872 = vmatprep.subr.bf16.mxu0 %v5620
  %5873 = vmatpush2.bf16.msra.mxu0 %v5619
  %5874 = vmatprep.subr.bf16.mxu0 %v5612
  %5875 = vmatpush2.bf16.msra.mxu0 %v5611
  %5876 = vmatprep.subr.bf16.mxu0 %v5604
  %5877 = vmatpush2.bf16.msra.mxu0 %v5603
  %5878 = vmatprep.subr.bf16.mxu0 %v5596
  %5879 = vmatpush2.bf16.msra.mxu0 %v5595
  %5880 = vmatprep.subr.bf16.mxu0 %v5588
  %5881 = vmatpush2.bf16.msra.mxu0 %v5587
  %5882 = vmatprep.mubr.bf16.mxu0 %v5002
  %5883 = vmatmul.mubr.bf16.gmra.mxu0 %v5001
  %v5884 = vpop.f32.mrf.mxu0
  %v5885 = vadd.f32 0.0, %v5884
  %v5886 = vpop.f32.mrf.mxu0
  %v5887 = vadd.f32 0.0, %v5886
  %v5888 = vpop.f32.mrf.mxu0
  %v5889 = vadd.f32 0.0, %v5888
  %v5890 = vpop.f32.mrf.mxu0
  %v5891 = vadd.f32 0.0, %v5890
  %5892 = vmatprep.mubr.bf16.mxu0 %v5004
  %5893 = vmatmul.mubr.bf16.gmra.mxu0 %v5003
  %v5894 = vpop.f32.mrf.mxu0
  %v5895 = vadd.f32 0.0, %v5894
  %v5896 = vpop.f32.mrf.mxu0
  %v5897 = vadd.f32 0.0, %v5896
  %v5898 = vpop.f32.mrf.mxu0
  %v5899 = vadd.f32 0.0, %v5898
  %v5900 = vpop.f32.mrf.mxu0
  %v5901 = vadd.f32 0.0, %v5900
  %5902 = vmatprep.mubr.bf16.mxu0 %v5006
  %5903 = vmatmul.mubr.bf16.gmra.mxu0 %v5005
  %v5904 = vpop.f32.mrf.mxu0
  %v5905 = vadd.f32 0.0, %v5904
  %v5906 = vpop.f32.mrf.mxu0
  %v5907 = vadd.f32 0.0, %v5906
  %v5908 = vpop.f32.mrf.mxu0
  %v5909 = vadd.f32 0.0, %v5908
  %v5910 = vpop.f32.mrf.mxu0
  %v5911 = vadd.f32 0.0, %v5910
  %5912 = vmatprep.mubr.bf16.mxu0 %v5008
  %5913 = vmatmul.mubr.bf16.gmra.mxu0 %v5007
  %v5914 = vpop.f32.mrf.mxu0
  %v5915 = vadd.f32 0.0, %v5914
  %v5916 = vpop.f32.mrf.mxu0
  %v5917 = vadd.f32 0.0, %v5916
  %v5918 = vpop.f32.mrf.mxu0
  %v5919 = vadd.f32 0.0, %v5918
  %v5920 = vpop.f32.mrf.mxu0
  %v5921 = vadd.f32 0.0, %v5920
  %5922 = vdwg.mxu0
  %5923 = vmatprep.subr.bf16.mxu0 %v5582
  %5924 = vmatpush1.bf16.msra.mxu0 %v5581
  %5925 = vmatprep.subr.bf16.mxu0 %v5574
  %5926 = vmatpush1.bf16.msra.mxu0 %v5573
  %5927 = vmatprep.subr.bf16.mxu0 %v5566
  %5928 = vmatpush1.bf16.msra.mxu0 %v5565
  %5929 = vmatprep.subr.bf16.mxu0 %v5558
  %5930 = vmatpush1.bf16.msra.mxu0 %v5557
  %5931 = vmatprep.subr.bf16.mxu0 %v5550
  %5932 = vmatpush1.bf16.msra.mxu0 %v5549
  %5933 = vmatprep.subr.bf16.mxu0 %v5542
  %5934 = vmatpush1.bf16.msra.mxu0 %v5541
  %5935 = vmatprep.subr.bf16.mxu0 %v5534
  %5936 = vmatpush1.bf16.msra.mxu0 %v5533
  %5937 = vmatprep.subr.bf16.mxu0 %v5526
  %5938 = vmatpush1.bf16.msra.mxu0 %v5525
  %5939 = vmatprep.subr.bf16.mxu0 %v5646
  %5940 = vmatpush2.bf16.msra.mxu0 %v5645
  %5941 = vmatprep.subr.bf16.mxu0 %v5638
  %5942 = vmatpush2.bf16.msra.mxu0 %v5637
  %5943 = vmatprep.subr.bf16.mxu0 %v5630
  %5944 = vmatpush2.bf16.msra.mxu0 %v5629
  %5945 = vmatprep.subr.bf16.mxu0 %v5622
  %5946 = vmatpush2.bf16.msra.mxu0 %v5621
  %5947 = vmatprep.subr.bf16.mxu0 %v5614
  %5948 = vmatpush2.bf16.msra.mxu0 %v5613
  %5949 = vmatprep.subr.bf16.mxu0 %v5606
  %5950 = vmatpush2.bf16.msra.mxu0 %v5605
  %5951 = vmatprep.subr.bf16.mxu0 %v5598
  %5952 = vmatpush2.bf16.msra.mxu0 %v5597
  %5953 = vmatprep.subr.bf16.mxu0 %v5590
  %5954 = vmatpush2.bf16.msra.mxu0 %v5589
  %5955 = vmatprep.mubr.bf16.mxu0 %v5002
  %5956 = vmatmul.mubr.bf16.gmra.mxu0 %v5001
  %v5957 = vpop.f32.mrf.mxu0
  %v5958 = vadd.f32 0.0, %v5957
  %v5959 = vpop.f32.mrf.mxu0
  %v5960 = vadd.f32 0.0, %v5959
  %v5961 = vpop.f32.mrf.mxu0
  %v5962 = vadd.f32 0.0, %v5961
  %v5963 = vpop.f32.mrf.mxu0
  %v5964 = vadd.f32 0.0, %v5963
  %5965 = vmatprep.mubr.bf16.mxu0 %v5004
  %5966 = vmatmul.mubr.bf16.gmra.mxu0 %v5003
  %v5967 = vpop.f32.mrf.mxu0
  %v5968 = vadd.f32 0.0, %v5967
  %v5969 = vpop.f32.mrf.mxu0
  %v5970 = vadd.f32 0.0, %v5969
  %v5971 = vpop.f32.mrf.mxu0
  %v5972 = vadd.f32 0.0, %v5971
  %v5973 = vpop.f32.mrf.mxu0
  %v5974 = vadd.f32 0.0, %v5973
  %5975 = vmatprep.mubr.bf16.mxu0 %v5006
  %5976 = vmatmul.mubr.bf16.gmra.mxu0 %v5005
  %v5977 = vpop.f32.mrf.mxu0
  %v5978 = vadd.f32 0.0, %v5977
  %v5979 = vpop.f32.mrf.mxu0
  %v5980 = vadd.f32 0.0, %v5979
  %v5981 = vpop.f32.mrf.mxu0
  %v5982 = vadd.f32 0.0, %v5981
  %v5983 = vpop.f32.mrf.mxu0
  %v5984 = vadd.f32 0.0, %v5983
  %5985 = vmatprep.mubr.bf16.mxu0 %v5008
  %5986 = vmatmul.mubr.bf16.gmra.mxu0 %v5007
  %v5987 = vpop.f32.mrf.mxu0
  %v5988 = vadd.f32 0.0, %v5987
  %v5989 = vpop.f32.mrf.mxu0
  %v5990 = vadd.f32 0.0, %v5989
  %v5991 = vpop.f32.mrf.mxu0
  %v5992 = vadd.f32 0.0, %v5991
  %v5993 = vpop.f32.mrf.mxu0
  %v5994 = vadd.f32 0.0, %v5993
  %5995 = vdwg.mxu0
  %5996 = vmatprep.subr.bf16.mxu0 %v5584
  %5997 = vmatpush1.bf16.msra.mxu0 %v5583
  %5998 = vmatprep.subr.bf16.mxu0 %v5576
  %5999 = vmatpush1.bf16.msra.mxu0 %v5575
  %6000 = vmatprep.subr.bf16.mxu0 %v5568
  %6001 = vmatpush1.bf16.msra.mxu0 %v5567
  %6002 = vmatprep.subr.bf16.mxu0 %v5560
  %6003 = vmatpush1.bf16.msra.mxu0 %v5559
  %6004 = vmatprep.subr.bf16.mxu0 %v5552
  %6005 = vmatpush1.bf16.msra.mxu0 %v5551
  %6006 = vmatprep.subr.bf16.mxu0 %v5544
  %6007 = vmatpush1.bf16.msra.mxu0 %v5543
  %6008 = vmatprep.subr.bf16.mxu0 %v5536
  %6009 = vmatpush1.bf16.msra.mxu0 %v5535
  %6010 = vmatprep.subr.bf16.mxu0 %v5528
  %6011 = vmatpush1.bf16.msra.mxu0 %v5527
  %6012 = vmatprep.subr.bf16.mxu0 %v5648
  %6013 = vmatpush2.bf16.msra.mxu0 %v5647
  %6014 = vmatprep.subr.bf16.mxu0 %v5640
  %6015 = vmatpush2.bf16.msra.mxu0 %v5639
  %6016 = vmatprep.subr.bf16.mxu0 %v5632
  %6017 = vmatpush2.bf16.msra.mxu0 %v5631
  %6018 = vmatprep.subr.bf16.mxu0 %v5624
  %6019 = vmatpush2.bf16.msra.mxu0 %v5623
  %6020 = vmatprep.subr.bf16.mxu0 %v5616
  %6021 = vmatpush2.bf16.msra.mxu0 %v5615
  %6022 = vmatprep.subr.bf16.mxu0 %v5608
  %6023 = vmatpush2.bf16.msra.mxu0 %v5607
  %6024 = vmatprep.subr.bf16.mxu0 %v5600
  %6025 = vmatpush2.bf16.msra.mxu0 %v5599
  %6026 = vmatprep.subr.bf16.mxu0 %v5592
  %6027 = vmatpush2.bf16.msra.mxu0 %v5591
  %6028 = vmatprep.mubr.bf16.mxu0 %v5002
  %6029 = vmatmul.mubr.bf16.gmra.mxu0 %v5001
  %v6030 = vpop.f32.mrf.mxu0
  %v6031 = vadd.f32 0.0, %v6030
  %v6032 = vpop.f32.mrf.mxu0
  %v6033 = vadd.f32 0.0, %v6032
  %v6034 = vpop.f32.mrf.mxu0
  %v6035 = vadd.f32 0.0, %v6034
  %v6036 = vpop.f32.mrf.mxu0
  %v6037 = vadd.f32 0.0, %v6036
  %6038 = vmatprep.mubr.bf16.mxu0 %v5004
  %6039 = vmatmul.mubr.bf16.gmra.mxu0 %v5003
  %v6040 = vpop.f32.mrf.mxu0
  %v6041 = vadd.f32 0.0, %v6040
  %v6042 = vpop.f32.mrf.mxu0
  %v6043 = vadd.f32 0.0, %v6042
  %v6044 = vpop.f32.mrf.mxu0
  %v6045 = vadd.f32 0.0, %v6044
  %v6046 = vpop.f32.mrf.mxu0
  %v6047 = vadd.f32 0.0, %v6046
  %6048 = vmatprep.mubr.bf16.mxu0 %v5006
  %6049 = vmatmul.mubr.bf16.gmra.mxu0 %v5005
  %v6050 = vpop.f32.mrf.mxu0
  %v6051 = vadd.f32 0.0, %v6050
  %v6052 = vpop.f32.mrf.mxu0
  %v6053 = vadd.f32 0.0, %v6052
  %v6054 = vpop.f32.mrf.mxu0
  %v6055 = vadd.f32 0.0, %v6054
  %v6056 = vpop.f32.mrf.mxu0
  %v6057 = vadd.f32 0.0, %v6056
  %6058 = vmatprep.mubr.bf16.mxu0 %v5008
  %6059 = vmatmul.mubr.bf16.gmra.mxu0 %v5007
  %v6060 = vpop.f32.mrf.mxu0
  %v6061 = vadd.f32 0.0, %v6060
  %v6062 = vpop.f32.mrf.mxu0
  %v6063 = vadd.f32 0.0, %v6062
  %v6064 = vpop.f32.mrf.mxu0
  %v6065 = vadd.f32 0.0, %v6064
  %v6066 = vpop.f32.mrf.mxu0
  %v6067 = vadd.f32 0.0, %v6066
  %6068 = vdwg.mxu0
  %s6069 = scalar_lea.vmem %s1, 3
  %v6070 = vld [vmem:[%s6069] ss:$8 sm:$0x3]
  %6071 = vst [vmem:[#allocation9 + $0x80] sm:$0xff] %v5812
  %6072 = vst [vmem:[#allocation9 + $0x88] sm:$0xff] %v5814
  %6073 = vst [vmem:[#allocation9 + $0x90] sm:$0xff] %v5885
  %6074 = vst [vmem:[#allocation9 + $0x98] sm:$0xff] %v5887
  %6075 = vst [vmem:[#allocation9 + $0xa0] sm:$0xff] %v5958
  %6076 = vst [vmem:[#allocation9 + $0xa8] sm:$0xff] %v5960
  %6077 = vst [vmem:[#allocation9 + $0xb0] sm:$0xff] %v6031
  %6078 = vst [vmem:[#allocation9 + $0xb8] sm:$0xff] %v6033
  %6079 = vst [vmem:[#allocation9 + $0xc0] sm:$0xff] %v5816
  %6080 = vst [vmem:[#allocation9 + $0xc8] sm:$0xff] %v5818
  %6081 = vst [vmem:[#allocation9 + $0xd0] sm:$0xff] %v5889
  %6082 = vst [vmem:[#allocation9 + $0xd8] sm:$0xff] %v5891
  %6083 = vst [vmem:[#allocation9 + $0xe0] sm:$0xff] %v5962
  %6084 = vst [vmem:[#allocation9 + $0xe8] sm:$0xff] %v5964
  %6085 = vst [vmem:[#allocation9 + $0xf0] sm:$0xff] %v6035
  %6086 = vst [vmem:[#allocation9 + $0xf8] sm:$0xff] %v6037
  %6087 = vst [vmem:[#allocation9 + $0x100] sm:$0xff] %v5822
  %6088 = vst [vmem:[#allocation9 + $0x108] sm:$0xff] %v5824
  %6089 = vst [vmem:[#allocation9 + $0x110] sm:$0xff] %v5895
  %6090 = vst [vmem:[#allocation9 + $0x118] sm:$0xff] %v5897
  %6091 = vst [vmem:[#allocation9 + $0x120] sm:$0xff] %v5968
  %6092 = vst [vmem:[#allocation9 + $0x128] sm:$0xff] %v5970
  %6093 = vst [vmem:[#allocation9 + $0x130] sm:$0xff] %v6041
  %6094 = vst [vmem:[#allocation9 + $0x138] sm:$0xff] %v6043
  %6095 = vst [vmem:[#allocation9 + $0x140] sm:$0xff] %v5826
  %6096 = vst [vmem:[#allocation9 + $0x148] sm:$0xff] %v5828
  %6097 = vst [vmem:[#allocation9 + $0x150] sm:$0xff] %v5899
  %6098 = vst [vmem:[#allocation9 + $0x158] sm:$0xff] %v5901
  %6099 = vst [vmem:[#allocation9 + $0x160] sm:$0xff] %v5972
  %6100 = vst [vmem:[#allocation9 + $0x168] sm:$0xff] %v5974
  %6101 = vst [vmem:[#allocation9 + $0x170] sm:$0xff] %v6045
  %6102 = vst [vmem:[#allocation9 + $0x178] sm:$0xff] %v6047
  %6103 = vst [vmem:[#allocation9 + $0x180] sm:$0xff] %v5832
  %6104 = vst [vmem:[#allocation9 + $0x188] sm:$0xff] %v5834
  %6105 = vst [vmem:[#allocation9 + $0x190] sm:$0xff] %v5905
  %6106 = vst [vmem:[#allocation9 + $0x198] sm:$0xff] %v5907
  %6107 = vst [vmem:[#allocation9 + $0x1a0] sm:$0xff] %v5978
  %6108 = vst [vmem:[#allocation9 + $0x1a8] sm:$0xff] %v5980
  %6109 = vst [vmem:[#allocation9 + $0x1b0] sm:$0xff] %v6051
  %6110 = vst [vmem:[#allocation9 + $0x1b8] sm:$0xff] %v6053
  %6111 = vst [vmem:[#allocation9 + $0x1c0] sm:$0xff] %v5836
  %6112 = vst [vmem:[#allocation9 + $0x1c8] sm:$0xff] %v5838
  %6113 = vst [vmem:[#allocation9 + $0x1d0] sm:$0xff] %v5909
  %6114 = vst [vmem:[#allocation9 + $0x1d8] sm:$0xff] %v5911
  %6115 = vst [vmem:[#allocation9 + $0x1e0] sm:$0xff] %v5982
  %6116 = vst [vmem:[#allocation9 + $0x1e8] sm:$0xff] %v5984
  %6117 = vst [vmem:[#allocation9 + $0x1f0] sm:$0xff] %v6055
  %6118 = vst [vmem:[#allocation9 + $0x1f8] sm:$0xff] %v6057
  %6119 = vst [vmem:[#allocation9 + $0x200] sm:$0xff] %v5842
  %6120 = vst [vmem:[#allocation9 + $0x208] sm:$0xff] %v5844
  %6121 = vst [vmem:[#allocation9 + $0x210] sm:$0xff] %v5915
  %6122 = vst [vmem:[#allocation9 + $0x218] sm:$0xff] %v5917
  %6123 = vst [vmem:[#allocation9 + $0x220] sm:$0xff] %v5988
  %6124 = vst [vmem:[#allocation9 + $0x228] sm:$0xff] %v5990
  %6125 = vst [vmem:[#allocation9 + $0x230] sm:$0xff] %v6061
  %6126 = vst [vmem:[#allocation9 + $0x238] sm:$0xff] %v6063
  %6127 = vst [vmem:[#allocation9 + $0x240] sm:$0xff] %v5846
  %6128 = vst [vmem:[#allocation9 + $0x248] sm:$0xff] %v5848
  %6129 = vst [vmem:[#allocation9 + $0x250] sm:$0xff] %v5919
  %6130 = vst [vmem:[#allocation9 + $0x258] sm:$0xff] %v5921
  %6131 = vst [vmem:[#allocation9 + $0x260] sm:$0xff] %v5992
  %6132 = vst [vmem:[#allocation9 + $0x268] sm:$0xff] %v5994
  %6133 = vst [vmem:[#allocation9 + $0x270] sm:$0xff] %v6065
  %6134 = vst [vmem:[#allocation9 + $0x278] sm:$0xff] %v6067
  %v6135 = vld [vmem:[#allocation9 + $0x40] sm:$0xc0]
  %v6136 = vld [vmem:[#allocation9 + $0x48] sm:$0xc0]
  %v6137 = vld [vmem:[#allocation9 + $0x80] sm:$0xff]
  %v6138 = vld [vmem:[#allocation9 + $0x88] sm:$0xff]
  %v6139 = vld [vmem:[#allocation9 + $0xc0] sm:$0xff]
  %v6140 = vld [vmem:[#allocation9 + $0xc8] sm:$0xff]
  %v6141 = vld [vmem:[#allocation9 + $0x100] sm:$0xff]
  %v6142 = vld [vmem:[#allocation9 + $0x108] sm:$0xff]
  %v6143 = vld [vmem:[#allocation9 + $0x140] sm:$0xff]
  %v6144 = vld [vmem:[#allocation9 + $0x148] sm:$0xff]
  %v6145 = vld [vmem:[#allocation9 + $0x180] sm:$0xff]
  %v6146 = vld [vmem:[#allocation9 + $0x188] sm:$0xff]
  %v6147 = vld [vmem:[#allocation9 + $0x1c0] sm:$0xff]
  %v6148 = vld [vmem:[#allocation9 + $0x1c8] sm:$0xff]
  %v6149 = vld [vmem:[#allocation9 + $0x200] sm:$0xff]
  %v6150 = vld [vmem:[#allocation9 + $0x208] sm:$0xff]
  %v6151 = vld [vmem:[#allocation9 + $0x240] sm:$0x3f]
  %v6152 = vld [vmem:[#allocation9 + $0x248] sm:$0x3f]
  %v6153 = vadd.s32 %v1849, 4294967294
  %v6154 = vadd.s32 %v1850, 4294967294
  %v6155 = vadd.s32 %v1851, 4294967294
  %v6156 = vadd.s32 %v1852, 4294967294
  %v6157 = vadd.s32 %v1853, 4294967294
  %v6158 = vadd.s32 %v1854, 4294967294
  %v6159 = vadd.s32 %v1855, 4294967294
  %v6160 = vadd.s32 %v1856, 4294967294
  %vm6161 = vcmp.ge.s32.totalorder %v6153, 0
  %vm6162 = vcmp.ge.s32.totalorder %v6154, 0
  %vm6163 = vcmp.ge.s32.totalorder %v6155, 0
  %vm6164 = vcmp.ge.s32.totalorder %v6156, 0
  %vm6165 = vcmp.ge.s32.totalorder %v6157, 0
  %vm6166 = vcmp.ge.s32.totalorder %v6158, 0
  %vm6167 = vcmp.ge.s32.totalorder %v6159, 0
  %vm6168 = vcmp.ge.s32.totalorder %v6160, 0
  %vm6169 = vcmp.lt.s32.totalorder %v6153, 32
  %vm6170 = vcmp.lt.s32.totalorder %v6154, 32
  %vm6171 = vcmp.lt.s32.totalorder %v6155, 32
  %vm6172 = vcmp.lt.s32.totalorder %v6156, 32
  %vm6173 = vcmp.lt.s32.totalorder %v6157, 32
  %vm6174 = vcmp.lt.s32.totalorder %v6158, 32
  %vm6175 = vcmp.lt.s32.totalorder %v6159, 32
  %vm6176 = vcmp.lt.s32.totalorder %v6160, 32
  %vm6177 = vmand %vm6161, %vm6169
  %vm6178 = vmand %vm6162, %vm6170
  %vm6179 = vmand %vm6163, %vm6171
  %vm6180 = vmand %vm6164, %vm6172
  %vm6181 = vmand %vm6165, %vm6173
  %vm6182 = vmand %vm6166, %vm6174
  %vm6183 = vmand %vm6167, %vm6175
  %vm6184 = vmand %vm6168, %vm6176
  %v6185 = vsel %vm6177, 1, 0
  %v6186 = vsel %vm6178, 1, 0
  %v6187 = vsel %vm6179, 1, 0
  %v6188 = vsel %vm6180, 1, 0
  %v6189 = vsel %vm6181, 1, 0
  %v6190 = vsel %vm6182, 1, 0
  %v6191 = vsel %vm6183, 1, 0
  %v6192 = vsel %vm6184, 1, 0
  %vm6193 = vcmp.eq.s32.totalorder %v6185, 1
  %vm6194 = vcmp.eq.s32.totalorder %v6186, 1
  %vm6195 = vcmp.eq.s32.totalorder %v6187, 1
  %vm6196 = vcmp.eq.s32.totalorder %v6188, 1
  %vm6197 = vcmp.eq.s32.totalorder %v6189, 1
  %vm6198 = vcmp.eq.s32.totalorder %v6190, 1
  %vm6199 = vcmp.eq.s32.totalorder %v6191, 1
  %vm6200 = vcmp.eq.s32.totalorder %v6192, 1
  %vm6219 = vcmask 1041408
  %v6220 = vrot.slane %v6135, 6
  %v6221 = vrot.slane %v6137, 6
  %v6222 = vsel %vm6219, %v6220, %v6221
  %v6223 = vrot.slane %v6136, 6
  %v6224 = vrot.slane %v6138, 6
  %v6225 = vsel %vm6219, %v6223, %v6224
  %v6226 = vrot.slane %v6139, 6
  %v6227 = vsel %vm6219, %v6221, %v6226
  %v6228 = vrot.slane %v6140, 6
  %v6229 = vsel %vm6219, %v6224, %v6228
  %v6230 = vrot.slane %v6141, 6
  %v6231 = vsel %vm6219, %v6226, %v6230
  %v6232 = vrot.slane %v6142, 6
  %v6233 = vsel %vm6219, %v6228, %v6232
  %v6234 = vrot.slane %v6143, 6
  %v6235 = vsel %vm6219, %v6230, %v6234
  %v6236 = vrot.slane %v6144, 6
  %v6237 = vsel %vm6219, %v6232, %v6236
  %v6238 = vrot.slane %v6145, 6
  %v6239 = vsel %vm6219, %v6234, %v6238
  %v6240 = vrot.slane %v6146, 6
  %v6241 = vsel %vm6219, %v6236, %v6240
  %v6242 = vrot.slane %v6147, 6
  %v6243 = vsel %vm6219, %v6238, %v6242
  %v6244 = vrot.slane %v6148, 6
  %v6245 = vsel %vm6219, %v6240, %v6244
  %v6246 = vrot.slane %v6149, 6
  %v6247 = vsel %vm6219, %v6242, %v6246
  %v6248 = vrot.slane %v6150, 6
  %v6249 = vsel %vm6219, %v6244, %v6248
  %v6250 = vrot.slane %v6151, 6
  %v6251 = vsel %vm6219, %v6246, %v6250
  %v6252 = vrot.slane %v6152, 6
  %v6253 = vsel %vm6219, %v6248, %v6252
  %v6270 = vsel %vm6193, %v6222, 0.0
  %v6271 = vsel %vm6193, %v6225, 0.0
  %v6272 = vsel %vm6194, %v6227, 0.0
  %v6273 = vsel %vm6194, %v6229, 0.0
  %v6274 = vsel %vm6195, %v6231, 0.0
  %v6275 = vsel %vm6195, %v6233, 0.0
  %v6276 = vsel %vm6196, %v6235, 0.0
  %v6277 = vsel %vm6196, %v6237, 0.0
  %v6278 = vsel %vm6197, %v6239, 0.0
  %v6279 = vsel %vm6197, %v6241, 0.0
  %v6280 = vsel %vm6198, %v6243, 0.0
  %v6281 = vsel %vm6198, %v6245, 0.0
  %v6282 = vsel %vm6199, %v6247, 0.0
  %v6283 = vsel %vm6199, %v6249, 0.0
  %v6284 = vsel %vm6200, %v6251, 0.0
  %v6285 = vsel %vm6200, %v6253, 0.0
  %v6287 = vlaneseq
  %v6288 = vshrl.u32 %v6287, 7
  %v6289 = vsub.s32 0, %v6288
  %v6290 = vrot.slane %v6070, %v6289
  %v6291 = vlaneseq
  %v6292 = vshrl.u32 %v6291, 7
  %v6293 = vsub.s32 1, %v6292
  %v6294 = vrot.slane %v6070, %v6293
  %v6297 = vadd.f32 %v6290, %v6270
  %v6298 = vadd.f32 %v6294, %v6271
  %v6299 = vadd.f32 %v6290, %v6272
  %v6300 = vadd.f32 %v6294, %v6273
  %v6301 = vadd.f32 %v6290, %v6274
  %v6302 = vadd.f32 %v6294, %v6275
  %v6303 = vadd.f32 %v6290, %v6276
  %v6304 = vadd.f32 %v6294, %v6277
  %v6305 = vadd.f32 %v6290, %v6278
  %v6306 = vadd.f32 %v6294, %v6279
  %v6307 = vadd.f32 %v6290, %v6280
  %v6308 = vadd.f32 %v6294, %v6281
  %v6309 = vadd.f32 %v6290, %v6282
  %v6310 = vadd.f32 %v6294, %v6283
  %v6311 = vadd.f32 %v6290, %v6284
  %v6312 = vadd.f32 %v6294, %v6285
  %v6313 = vadd.f32 %v6297, %v5885
  %v6314 = vadd.f32 %v6298, %v5887
  %v6315 = vadd.f32 %v6299, %v5889
  %v6316 = vadd.f32 %v6300, %v5891
  %v6317 = vadd.f32 %v6301, %v5895
  %v6318 = vadd.f32 %v6302, %v5897
  %v6319 = vadd.f32 %v6303, %v5899
  %v6320 = vadd.f32 %v6304, %v5901
  %v6321 = vadd.f32 %v6305, %v5905
  %v6322 = vadd.f32 %v6306, %v5907
  %v6323 = vadd.f32 %v6307, %v5909
  %v6324 = vadd.f32 %v6308, %v5911
  %v6325 = vadd.f32 %v6309, %v5915
  %v6326 = vadd.f32 %v6310, %v5917
  %v6327 = vadd.f32 %v6311, %v5919
  %v6328 = vadd.f32 %v6312, %v5921
  %v6329 = vld [vmem:[#allocation9 + $0xa0] sm:$0xfc]
  %v6330 = vld [vmem:[#allocation9 + $0xa8] sm:$0xfc]
  %v6331 = vld [vmem:[#allocation9 + $0xe0] sm:$0xff]
  %v6332 = vld [vmem:[#allocation9 + $0xe8] sm:$0xff]
  %v6333 = vld [vmem:[#allocation9 + $0x120] sm:$0xff]
  %v6334 = vld [vmem:[#allocation9 + $0x128] sm:$0xff]
  %v6335 = vld [vmem:[#allocation9 + $0x160] sm:$0xff]
  %v6336 = vld [vmem:[#allocation9 + $0x168] sm:$0xff]
  %v6337 = vld [vmem:[#allocation9 + $0x1a0] sm:$0xff]
  %v6338 = vld [vmem:[#allocation9 + $0x1a8] sm:$0xff]
  %v6339 = vld [vmem:[#allocation9 + $0x1e0] sm:$0xff]
  %v6340 = vld [vmem:[#allocation9 + $0x1e8] sm:$0xff]
  %v6341 = vld [vmem:[#allocation9 + $0x220] sm:$0xff]
  %v6342 = vld [vmem:[#allocation9 + $0x228] sm:$0xff]
  %v6343 = vld [vmem:[#allocation9 + $0x260] sm:$0xff]
  %v6344 = vld [vmem:[#allocation9 + $0x268] sm:$0xff]
  %v6345 = vld [vmem:[#allocation9 + $0x2a0] sm:$0x3]
  %v6346 = vld [vmem:[#allocation9 + $0x2a8] sm:$0x3]
  %v6365 = vrot.slane %v6329, 2
  %v6366 = vrot.slane %v6331, 2
  %v6367 = vsel %vm4868, %v6365, %v6366
  %v6368 = vrot.slane %v6330, 2
  %v6369 = vrot.slane %v6332, 2
  %v6370 = vsel %vm4868, %v6368, %v6369
  %v6371 = vrot.slane %v6333, 2
  %v6372 = vsel %vm4868, %v6366, %v6371
  %v6373 = vrot.slane %v6334, 2
  %v6374 = vsel %vm4868, %v6369, %v6373
  %v6375 = vrot.slane %v6335, 2
  %v6376 = vsel %vm4868, %v6371, %v6375
  %v6377 = vrot.slane %v6336, 2
  %v6378 = vsel %vm4868, %v6373, %v6377
  %v6379 = vrot.slane %v6337, 2
  %v6380 = vsel %vm4868, %v6375, %v6379
  %v6381 = vrot.slane %v6338, 2
  %v6382 = vsel %vm4868, %v6377, %v6381
  %v6383 = vrot.slane %v6339, 2
  %v6384 = vsel %vm4868, %v6379, %v6383
  %v6385 = vrot.slane %v6340, 2
  %v6386 = vsel %vm4868, %v6381, %v6385
  %v6387 = vrot.slane %v6341, 2
  %v6388 = vsel %vm4868, %v6383, %v6387
  %v6389 = vrot.slane %v6342, 2
  %v6390 = vsel %vm4868, %v6385, %v6389
  %v6391 = vrot.slane %v6343, 2
  %v6392 = vsel %vm4868, %v6387, %v6391
  %v6393 = vrot.slane %v6344, 2
  %v6394 = vsel %vm4868, %v6389, %v6393
  %v6395 = vrot.slane %v6345, 2
  %v6396 = vsel %vm4868, %v6391, %v6395
  %v6397 = vrot.slane %v6346, 2
  %v6398 = vsel %vm4868, %v6393, %v6397
  %v6415 = vsel %vm4842, %v6367, 0.0
  %v6416 = vsel %vm4842, %v6370, 0.0
  %v6417 = vsel %vm4843, %v6372, 0.0
  %v6418 = vsel %vm4843, %v6374, 0.0
  %v6419 = vsel %vm4844, %v6376, 0.0
  %v6420 = vsel %vm4844, %v6378, 0.0
  %v6421 = vsel %vm4845, %v6380, 0.0
  %v6422 = vsel %vm4845, %v6382, 0.0
  %v6423 = vsel %vm4846, %v6384, 0.0
  %v6424 = vsel %vm4846, %v6386, 0.0
  %v6425 = vsel %vm4847, %v6388, 0.0
  %v6426 = vsel %vm4847, %v6390, 0.0
  %v6427 = vsel %vm4848, %v6392, 0.0
  %v6428 = vsel %vm4848, %v6394, 0.0
  %v6429 = vsel %vm4849, %v6396, 0.0
  %v6430 = vsel %vm4849, %v6398, 0.0
  %v6431 = vadd.f32 %v6313, %v6415
  %v6432 = vadd.f32 %v6314, %v6416
  %v6433 = vadd.f32 %v6315, %v6417
  %v6434 = vadd.f32 %v6316, %v6418
  %v6435 = vadd.f32 %v6317, %v6419
  %v6436 = vadd.f32 %v6318, %v6420
  %v6437 = vadd.f32 %v6319, %v6421
  %v6438 = vadd.f32 %v6320, %v6422
  %v6439 = vadd.f32 %v6321, %v6423
  %v6440 = vadd.f32 %v6322, %v6424
  %v6441 = vadd.f32 %v6323, %v6425
  %v6442 = vadd.f32 %v6324, %v6426
  %v6443 = vadd.f32 %v6325, %v6427
  %v6444 = vadd.f32 %v6326, %v6428
  %v6445 = vadd.f32 %v6327, %v6429
  %v6446 = vadd.f32 %v6328, %v6430
  %v6447 = vld [vmem:[#allocation9 + $0xb0] sm:$0xf0]
  %v6448 = vld [vmem:[#allocation9 + $0xb8] sm:$0xf0]
  %v6449 = vld [vmem:[#allocation9 + $0xf0] sm:$0xff]
  %v6450 = vld [vmem:[#allocation9 + $0xf8] sm:$0xff]
  %v6451 = vld [vmem:[#allocation9 + $0x130] sm:$0xff]
  %v6452 = vld [vmem:[#allocation9 + $0x138] sm:$0xff]
  %v6453 = vld [vmem:[#allocation9 + $0x170] sm:$0xff]
  %v6454 = vld [vmem:[#allocation9 + $0x178] sm:$0xff]
  %v6455 = vld [vmem:[#allocation9 + $0x1b0] sm:$0xff]
  %v6456 = vld [vmem:[#allocation9 + $0x1b8] sm:$0xff]
  %v6457 = vld [vmem:[#allocation9 + $0x1f0] sm:$0xff]
  %v6458 = vld [vmem:[#allocation9 + $0x1f8] sm:$0xff]
  %v6459 = vld [vmem:[#allocation9 + $0x230] sm:$0xff]
  %v6460 = vld [vmem:[#allocation9 + $0x238] sm:$0xff]
  %v6461 = vld [vmem:[#allocation9 + $0x270] sm:$0xff]
  %v6462 = vld [vmem:[#allocation9 + $0x278] sm:$0xff]
  %v6463 = vld [vmem:[#allocation9 + $0x2b0] sm:$0xf]
  %v6464 = vld [vmem:[#allocation9 + $0x2b8] sm:$0xf]
  %v6465 = vadd.s32 %v1849, 4
  %v6466 = vadd.s32 %v1850, 4
  %v6467 = vadd.s32 %v1851, 4
  %v6468 = vadd.s32 %v1852, 4
  %v6469 = vadd.s32 %v1853, 4
  %v6470 = vadd.s32 %v1854, 4
  %v6471 = vadd.s32 %v1855, 4
  %v6472 = vadd.s32 %v1856, 4
  %vm6473 = vcmp.ge.s32.totalorder %v6465, 0
  %vm6474 = vcmp.ge.s32.totalorder %v6466, 0
  %vm6475 = vcmp.ge.s32.totalorder %v6467, 0
  %vm6476 = vcmp.ge.s32.totalorder %v6468, 0
  %vm6477 = vcmp.ge.s32.totalorder %v6469, 0
  %vm6478 = vcmp.ge.s32.totalorder %v6470, 0
  %vm6479 = vcmp.ge.s32.totalorder %v6471, 0
  %vm6480 = vcmp.ge.s32.totalorder %v6472, 0
  %vm6481 = vcmp.lt.s32.totalorder %v6465, 32
  %vm6482 = vcmp.lt.s32.totalorder %v6466, 32
  %vm6483 = vcmp.lt.s32.totalorder %v6467, 32
  %vm6484 = vcmp.lt.s32.totalorder %v6468, 32
  %vm6485 = vcmp.lt.s32.totalorder %v6469, 32
  %vm6486 = vcmp.lt.s32.totalorder %v6470, 32
  %vm6487 = vcmp.lt.s32.totalorder %v6471, 32
  %vm6488 = vcmp.lt.s32.totalorder %v6472, 32
  %vm6489 = vmand %vm6473, %vm6481
  %vm6490 = vmand %vm6474, %vm6482
  %vm6491 = vmand %vm6475, %vm6483
  %vm6492 = vmand %vm6476, %vm6484
  %vm6493 = vmand %vm6477, %vm6485
  %vm6494 = vmand %vm6478, %vm6486
  %vm6495 = vmand %vm6479, %vm6487
  %vm6496 = vmand %vm6480, %vm6488
  %v6497 = vsel %vm6489, 1, 0
  %v6498 = vsel %vm6490, 1, 0
  %v6499 = vsel %vm6491, 1, 0
  %v6500 = vsel %vm6492, 1, 0
  %v6501 = vsel %vm6493, 1, 0
  %v6502 = vsel %vm6494, 1, 0
  %v6503 = vsel %vm6495, 1, 0
  %v6504 = vsel %vm6496, 1, 0
  %vm6505 = vcmp.eq.s32.totalorder %v6497, 1
  %vm6506 = vcmp.eq.s32.totalorder %v6498, 1
  %vm6507 = vcmp.eq.s32.totalorder %v6499, 1
  %vm6508 = vcmp.eq.s32.totalorder %v6500, 1
  %vm6509 = vcmp.eq.s32.totalorder %v6501, 1
  %vm6510 = vcmp.eq.s32.totalorder %v6502, 1
  %vm6511 = vcmp.eq.s32.totalorder %v6503, 1
  %vm6512 = vcmp.eq.s32.totalorder %v6504, 1
  %vm6531 = vcmask 1043456
  %v6532 = vrot.slane %v6447, 4
  %v6533 = vrot.slane %v6449, 4
  %v6534 = vsel %vm6531, %v6532, %v6533
  %v6535 = vrot.slane %v6448, 4
  %v6536 = vrot.slane %v6450, 4
  %v6537 = vsel %vm6531, %v6535, %v6536
  %v6538 = vrot.slane %v6451, 4
  %v6539 = vsel %vm6531, %v6533, %v6538
  %v6540 = vrot.slane %v6452, 4
  %v6541 = vsel %vm6531, %v6536, %v6540
  %v6542 = vrot.slane %v6453, 4
  %v6543 = vsel %vm6531, %v6538, %v6542
  %v6544 = vrot.slane %v6454, 4
  %v6545 = vsel %vm6531, %v6540, %v6544
  %v6546 = vrot.slane %v6455, 4
  %v6547 = vsel %vm6531, %v6542, %v6546
  %v6548 = vrot.slane %v6456, 4
  %v6549 = vsel %vm6531, %v6544, %v6548
  %v6550 = vrot.slane %v6457, 4
  %v6551 = vsel %vm6531, %v6546, %v6550
  %v6552 = vrot.slane %v6458, 4
  %v6553 = vsel %vm6531, %v6548, %v6552
  %v6554 = vrot.slane %v6459, 4
  %v6555 = vsel %vm6531, %v6550, %v6554
  %v6556 = vrot.slane %v6460, 4
  %v6557 = vsel %vm6531, %v6552, %v6556
  %v6558 = vrot.slane %v6461, 4
  %v6559 = vsel %vm6531, %v6554, %v6558
  %v6560 = vrot.slane %v6462, 4
  %v6561 = vsel %vm6531, %v6556, %v6560
  %v6562 = vrot.slane %v6463, 4
  %v6563 = vsel %vm6531, %v6558, %v6562
  %v6564 = vrot.slane %v6464, 4
  %v6565 = vsel %vm6531, %v6560, %v6564
  %v6582 = vsel %vm6505, %v6534, 0.0
  %v6583 = vsel %vm6505, %v6537, 0.0
  %v6584 = vsel %vm6506, %v6539, 0.0
  %v6585 = vsel %vm6506, %v6541, 0.0
  %v6586 = vsel %vm6507, %v6543, 0.0
  %v6587 = vsel %vm6507, %v6545, 0.0
  %v6588 = vsel %vm6508, %v6547, 0.0
  %v6589 = vsel %vm6508, %v6549, 0.0
  %v6590 = vsel %vm6509, %v6551, 0.0
  %v6591 = vsel %vm6509, %v6553, 0.0
  %v6592 = vsel %vm6510, %v6555, 0.0
  %v6593 = vsel %vm6510, %v6557, 0.0
  %v6594 = vsel %vm6511, %v6559, 0.0
  %v6595 = vsel %vm6511, %v6561, 0.0
  %v6596 = vsel %vm6512, %v6563, 0.0
  %v6597 = vsel %vm6512, %v6565, 0.0
  %v6598 = vadd.f32 %v6431, %v6582
  %v6599 = vadd.f32 %v6432, %v6583
  %v6600 = vadd.f32 %v6433, %v6584
  %v6601 = vadd.f32 %v6434, %v6585
  %v6602 = vadd.f32 %v6435, %v6586
  %v6603 = vadd.f32 %v6436, %v6587
  %v6604 = vadd.f32 %v6437, %v6588
  %v6605 = vadd.f32 %v6438, %v6589
  %v6606 = vadd.f32 %v6439, %v6590
  %v6607 = vadd.f32 %v6440, %v6591
  %v6608 = vadd.f32 %v6441, %v6592
  %v6609 = vadd.f32 %v6442, %v6593
  %v6610 = vadd.f32 %v6443, %v6594
  %v6611 = vadd.f32 %v6444, %v6595
  %v6612 = vadd.f32 %v6445, %v6596
  %v6613 = vadd.f32 %v6446, %v6597
  %vm6614 = vcmp.ge.f32.partialorder %v6598, 0.0
  %vm6615 = vcmp.ge.f32.partialorder %v6599, 0.0
  %vm6616 = vcmp.ge.f32.partialorder %v6600, 0.0
  %vm6617 = vcmp.ge.f32.partialorder %v6601, 0.0
  %vm6618 = vcmp.ge.f32.partialorder %v6602, 0.0
  %vm6619 = vcmp.ge.f32.partialorder %v6603, 0.0
  %vm6620 = vcmp.ge.f32.partialorder %v6604, 0.0
  %vm6621 = vcmp.ge.f32.partialorder %v6605, 0.0
  %vm6622 = vcmp.ge.f32.partialorder %v6606, 0.0
  %vm6623 = vcmp.ge.f32.partialorder %v6607, 0.0
  %vm6624 = vcmp.ge.f32.partialorder %v6608, 0.0
  %vm6625 = vcmp.ge.f32.partialorder %v6609, 0.0
  %vm6626 = vcmp.ge.f32.partialorder %v6610, 0.0
  %vm6627 = vcmp.ge.f32.partialorder %v6611, 0.0
  %vm6628 = vcmp.ge.f32.partialorder %v6612, 0.0
  %vm6629 = vcmp.ge.f32.partialorder %v6613, 0.0
  %v6630 = vmul.f32 %v6598, 0.2
  %v6631 = vmul.f32 %v6599, 0.2
  %v6632 = vmul.f32 %v6600, 0.2
  %v6633 = vmul.f32 %v6601, 0.2
  %v6634 = vmul.f32 %v6602, 0.2
  %v6635 = vmul.f32 %v6603, 0.2
  %v6636 = vmul.f32 %v6604, 0.2
  %v6637 = vmul.f32 %v6605, 0.2
  %v6638 = vmul.f32 %v6606, 0.2
  %v6639 = vmul.f32 %v6607, 0.2
  %v6640 = vmul.f32 %v6608, 0.2
  %v6641 = vmul.f32 %v6609, 0.2
  %v6642 = vmul.f32 %v6610, 0.2
  %v6643 = vmul.f32 %v6611, 0.2
  %v6644 = vmul.f32 %v6612, 0.2
  %v6645 = vmul.f32 %v6613, 0.2
  %v6646 = vsel %vm6614, %v6598, %v6630
  %v6647 = vsel %vm6615, %v6599, %v6631
  %v6648 = vsel %vm6616, %v6600, %v6632
  %v6649 = vsel %vm6617, %v6601, %v6633
  %v6650 = vsel %vm6618, %v6602, %v6634
  %v6651 = vsel %vm6619, %v6603, %v6635
  %v6652 = vsel %vm6620, %v6604, %v6636
  %v6653 = vsel %vm6621, %v6605, %v6637
  %v6654 = vsel %vm6622, %v6606, %v6638
  %v6655 = vsel %vm6623, %v6607, %v6639
  %v6656 = vsel %vm6624, %v6608, %v6640
  %v6657 = vsel %vm6625, %v6609, %v6641
  %v6658 = vsel %vm6626, %v6610, %v6642
  %v6659 = vsel %vm6627, %v6611, %v6643
  %v6660 = vsel %vm6628, %v6612, %v6644
  %v6661 = vsel %vm6629, %v6613, %v6645
  %s6662 = sshll.u32 %s3384, 4
  %6663 = dma.done %s922, %s6662
  %v6664 = vpack.c.bf16 %v6648, %v6646
  %v6665 = vpack.c.bf16 %v6649, %v6647
  %v6666 = vpack.c.bf16 %v6652, %v6650
  %v6667 = vpack.c.bf16 %v6653, %v6651
  %v6668 = vpack.c.bf16 %v6656, %v6654
  %v6669 = vpack.c.bf16 %v6657, %v6655
  %v6670 = vpack.c.bf16 %v6660, %v6658
  %v6671 = vpack.c.bf16 %v6661, %v6659
  %v6672 = vld [vmem:[#allocation6] sm:$0xff]
  %v6673 = vld [vmem:[#allocation6 + $0x8] sm:$0xff]
  %v6674 = vld [vmem:[#allocation6 + $0x10] sm:$0xff]
  %v6675 = vld [vmem:[#allocation6 + $0x18] sm:$0xff]
  %v6676 = vld [vmem:[#allocation6 + $0x20] sm:$0xff]
  %v6677 = vld [vmem:[#allocation6 + $0x28] sm:$0xff]
  %v6678 = vld [vmem:[#allocation6 + $0x30] sm:$0xff]
  %v6679 = vld [vmem:[#allocation6 + $0x38] sm:$0xff]
  %v6680 = vld [vmem:[#allocation6 + $0x40] sm:$0xff]
  %v6681 = vld [vmem:[#allocation6 + $0x48] sm:$0xff]
  %v6682 = vld [vmem:[#allocation6 + $0x50] sm:$0xff]
  %v6683 = vld [vmem:[#allocation6 + $0x58] sm:$0xff]
  %v6684 = vld [vmem:[#allocation6 + $0x60] sm:$0xff]
  %v6685 = vld [vmem:[#allocation6 + $0x68] sm:$0xff]
  %v6686 = vld [vmem:[#allocation6 + $0x70] sm:$0xff]
  %v6687 = vld [vmem:[#allocation6 + $0x78] sm:$0xff]
  %v6688 = vld [vmem:[#allocation6 + $0x80] sm:$0xff]
  %v6689 = vld [vmem:[#allocation6 + $0x88] sm:$0xff]
  %v6690 = vld [vmem:[#allocation6 + $0x90] sm:$0xff]
  %v6691 = vld [vmem:[#allocation6 + $0x98] sm:$0xff]
  %v6692 = vld [vmem:[#allocation6 + $0xa0] sm:$0xff]
  %v6693 = vld [vmem:[#allocation6 + $0xa8] sm:$0xff]
  %v6694 = vld [vmem:[#allocation6 + $0xb0] sm:$0xff]
  %v6695 = vld [vmem:[#allocation6 + $0xb8] sm:$0xff]
  %v6696 = vld [vmem:[#allocation6 + $0xc0] sm:$0xff]
  %v6697 = vld [vmem:[#allocation6 + $0xc8] sm:$0xff]
  %v6698 = vld [vmem:[#allocation6 + $0xd0] sm:$0xff]
  %v6699 = vld [vmem:[#allocation6 + $0xd8] sm:$0xff]
  %v6700 = vld [vmem:[#allocation6 + $0xe0] sm:$0xff]
  %v6701 = vld [vmem:[#allocation6 + $0xe8] sm:$0xff]
  %v6702 = vld [vmem:[#allocation6 + $0xf0] sm:$0xff]
  %v6703 = vld [vmem:[#allocation6 + $0xf8] sm:$0xff]
  %v6704 = vld [vmem:[#allocation6 + $0x100] sm:$0xff]
  %v6705 = vld [vmem:[#allocation6 + $0x108] sm:$0xff]
  %v6706 = vld [vmem:[#allocation6 + $0x110] sm:$0xff]
  %v6707 = vld [vmem:[#allocation6 + $0x118] sm:$0xff]
  %v6708 = vld [vmem:[#allocation6 + $0x120] sm:$0xff]
  %v6709 = vld [vmem:[#allocation6 + $0x128] sm:$0xff]
  %v6710 = vld [vmem:[#allocation6 + $0x130] sm:$0xff]
  %v6711 = vld [vmem:[#allocation6 + $0x138] sm:$0xff]
  %v6712 = vld [vmem:[#allocation6 + $0x140] sm:$0xff]
  %v6713 = vld [vmem:[#allocation6 + $0x148] sm:$0xff]
  %v6714 = vld [vmem:[#allocation6 + $0x150] sm:$0xff]
  %v6715 = vld [vmem:[#allocation6 + $0x158] sm:$0xff]
  %v6716 = vld [vmem:[#allocation6 + $0x160] sm:$0xff]
  %v6717 = vld [vmem:[#allocation6 + $0x168] sm:$0xff]
  %v6718 = vld [vmem:[#allocation6 + $0x170] sm:$0xff]
  %v6719 = vld [vmem:[#allocation6 + $0x178] sm:$0xff]
  %v6720 = vld [vmem:[#allocation6 + $0x180] sm:$0xff]
  %v6721 = vld [vmem:[#allocation6 + $0x188] sm:$0xff]
  %v6722 = vld [vmem:[#allocation6 + $0x190] sm:$0xff]
  %v6723 = vld [vmem:[#allocation6 + $0x198] sm:$0xff]
  %v6724 = vld [vmem:[#allocation6 + $0x1a0] sm:$0xff]
  %v6725 = vld [vmem:[#allocation6 + $0x1a8] sm:$0xff]
  %v6726 = vld [vmem:[#allocation6 + $0x1b0] sm:$0xff]
  %v6727 = vld [vmem:[#allocation6 + $0x1b8] sm:$0xff]
  %v6728 = vld [vmem:[#allocation6 + $0x1c0] sm:$0xff]
  %v6729 = vld [vmem:[#allocation6 + $0x1c8] sm:$0xff]
  %v6730 = vld [vmem:[#allocation6 + $0x1d0] sm:$0xff]
  %v6731 = vld [vmem:[#allocation6 + $0x1d8] sm:$0xff]
  %v6732 = vld [vmem:[#allocation6 + $0x1e0] sm:$0xff]
  %v6733 = vld [vmem:[#allocation6 + $0x1e8] sm:$0xff]
  %v6734 = vld [vmem:[#allocation6 + $0x1f0] sm:$0xff]
  %v6735 = vld [vmem:[#allocation6 + $0x1f8] sm:$0xff]
  %v6736 = vld [vmem:[#allocation6 + $0x200] sm:$0xff]
  %v6737 = vld [vmem:[#allocation6 + $0x208] sm:$0xff]
  %v6738 = vld [vmem:[#allocation6 + $0x210] sm:$0xff]
  %v6739 = vld [vmem:[#allocation6 + $0x218] sm:$0xff]
  %v6740 = vld [vmem:[#allocation6 + $0x220] sm:$0xff]
  %v6741 = vld [vmem:[#allocation6 + $0x228] sm:$0xff]
  %v6742 = vld [vmem:[#allocation6 + $0x230] sm:$0xff]
  %v6743 = vld [vmem:[#allocation6 + $0x238] sm:$0xff]
  %v6744 = vld [vmem:[#allocation6 + $0x240] sm:$0xff]
  %v6745 = vld [vmem:[#allocation6 + $0x248] sm:$0xff]
  %v6746 = vld [vmem:[#allocation6 + $0x250] sm:$0xff]
  %v6747 = vld [vmem:[#allocation6 + $0x258] sm:$0xff]
  %v6748 = vld [vmem:[#allocation6 + $0x260] sm:$0xff]
  %v6749 = vld [vmem:[#allocation6 + $0x268] sm:$0xff]
  %v6750 = vld [vmem:[#allocation6 + $0x270] sm:$0xff]
  %v6751 = vld [vmem:[#allocation6 + $0x278] sm:$0xff]
  %v6752 = vld [vmem:[#allocation6 + $0x280] sm:$0xff]
  %v6753 = vld [vmem:[#allocation6 + $0x288] sm:$0xff]
  %v6754 = vld [vmem:[#allocation6 + $0x290] sm:$0xff]
  %v6755 = vld [vmem:[#allocation6 + $0x298] sm:$0xff]
  %v6756 = vld [vmem:[#allocation6 + $0x2a0] sm:$0xff]
  %v6757 = vld [vmem:[#allocation6 + $0x2a8] sm:$0xff]
  %v6758 = vld [vmem:[#allocation6 + $0x2b0] sm:$0xff]
  %v6759 = vld [vmem:[#allocation6 + $0x2b8] sm:$0xff]
  %v6760 = vld [vmem:[#allocation6 + $0x2c0] sm:$0xff]
  %v6761 = vld [vmem:[#allocation6 + $0x2c8] sm:$0xff]
  %v6762 = vld [vmem:[#allocation6 + $0x2d0] sm:$0xff]
  %v6763 = vld [vmem:[#allocation6 + $0x2d8] sm:$0xff]
  %v6764 = vld [vmem:[#allocation6 + $0x2e0] sm:$0xff]
  %v6765 = vld [vmem:[#allocation6 + $0x2e8] sm:$0xff]
  %v6766 = vld [vmem:[#allocation6 + $0x2f0] sm:$0xff]
  %v6767 = vld [vmem:[#allocation6 + $0x2f8] sm:$0xff]
  %v6768 = vld [vmem:[#allocation6 + $0x300] sm:$0xff]
  %v6769 = vld [vmem:[#allocation6 + $0x308] sm:$0xff]
  %v6770 = vld [vmem:[#allocation6 + $0x310] sm:$0xff]
  %v6771 = vld [vmem:[#allocation6 + $0x318] sm:$0xff]
  %v6772 = vld [vmem:[#allocation6 + $0x320] sm:$0xff]
  %v6773 = vld [vmem:[#allocation6 + $0x328] sm:$0xff]
  %v6774 = vld [vmem:[#allocation6 + $0x330] sm:$0xff]
  %v6775 = vld [vmem:[#allocation6 + $0x338] sm:$0xff]
  %v6776 = vld [vmem:[#allocation6 + $0x340] sm:$0xff]
  %v6777 = vld [vmem:[#allocation6 + $0x348] sm:$0xff]
  %v6778 = vld [vmem:[#allocation6 + $0x350] sm:$0xff]
  %v6779 = vld [vmem:[#allocation6 + $0x358] sm:$0xff]
  %v6780 = vld [vmem:[#allocation6 + $0x360] sm:$0xff]
  %v6781 = vld [vmem:[#allocation6 + $0x368] sm:$0xff]
  %v6782 = vld [vmem:[#allocation6 + $0x370] sm:$0xff]
  %v6783 = vld [vmem:[#allocation6 + $0x378] sm:$0xff]
  %v6784 = vld [vmem:[#allocation6 + $0x380] sm:$0xff]
  %v6785 = vld [vmem:[#allocation6 + $0x388] sm:$0xff]
  %v6786 = vld [vmem:[#allocation6 + $0x390] sm:$0xff]
  %v6787 = vld [vmem:[#allocation6 + $0x398] sm:$0xff]
  %v6788 = vld [vmem:[#allocation6 + $0x3a0] sm:$0xff]
  %v6789 = vld [vmem:[#allocation6 + $0x3a8] sm:$0xff]
  %v6790 = vld [vmem:[#allocation6 + $0x3b0] sm:$0xff]
  %v6791 = vld [vmem:[#allocation6 + $0x3b8] sm:$0xff]
  %v6792 = vld [vmem:[#allocation6 + $0x3c0] sm:$0xff]
  %v6793 = vld [vmem:[#allocation6 + $0x3c8] sm:$0xff]
  %v6794 = vld [vmem:[#allocation6 + $0x3d0] sm:$0xff]
  %v6795 = vld [vmem:[#allocation6 + $0x3d8] sm:$0xff]
  %v6796 = vld [vmem:[#allocation6 + $0x3e0] sm:$0xff]
  %v6797 = vld [vmem:[#allocation6 + $0x3e8] sm:$0xff]
  %v6798 = vld [vmem:[#allocation6 + $0x3f0] sm:$0xff]
  %v6799 = vld [vmem:[#allocation6 + $0x3f8] sm:$0xff]
  %v6928 = vunpack.c.l.b16 %v6672
  %v6929 = vunpack.c.h.b16 %v6672
  %v6930 = vunpack.c.l.b16 %v6673
  %v6931 = vunpack.c.h.b16 %v6673
  %v6932 = vunpack.c.l.b16 %v6674
  %v6933 = vunpack.c.h.b16 %v6674
  %v6934 = vunpack.c.l.b16 %v6675
  %v6935 = vunpack.c.h.b16 %v6675
  %v6936 = vunpack.c.l.b16 %v6676
  %v6937 = vunpack.c.h.b16 %v6676
  %v6938 = vunpack.c.l.b16 %v6677
  %v6939 = vunpack.c.h.b16 %v6677
  %v6940 = vunpack.c.l.b16 %v6678
  %v6941 = vunpack.c.h.b16 %v6678
  %v6942 = vunpack.c.l.b16 %v6679
  %v6943 = vunpack.c.h.b16 %v6679
  %v6944 = vunpack.c.l.b16 %v6680
  %v6945 = vunpack.c.h.b16 %v6680
  %v6946 = vunpack.c.l.b16 %v6681
  %v6947 = vunpack.c.h.b16 %v6681
  %v6948 = vunpack.c.l.b16 %v6682
  %v6949 = vunpack.c.h.b16 %v6682
  %v6950 = vunpack.c.l.b16 %v6683
  %v6951 = vunpack.c.h.b16 %v6683
  %v6952 = vunpack.c.l.b16 %v6684
  %v6953 = vunpack.c.h.b16 %v6684
  %v6954 = vunpack.c.l.b16 %v6685
  %v6955 = vunpack.c.h.b16 %v6685
  %v6956 = vunpack.c.l.b16 %v6686
  %v6957 = vunpack.c.h.b16 %v6686
  %v6958 = vunpack.c.l.b16 %v6687
  %v6959 = vunpack.c.h.b16 %v6687
  %v6960 = vunpack.c.l.b16 %v6688
  %v6961 = vunpack.c.h.b16 %v6688
  %v6962 = vunpack.c.l.b16 %v6689
  %v6963 = vunpack.c.h.b16 %v6689
  %v6964 = vunpack.c.l.b16 %v6690
  %v6965 = vunpack.c.h.b16 %v6690
  %v6966 = vunpack.c.l.b16 %v6691
  %v6967 = vunpack.c.h.b16 %v6691
  %v6968 = vunpack.c.l.b16 %v6692
  %v6969 = vunpack.c.h.b16 %v6692
  %v6970 = vunpack.c.l.b16 %v6693
  %v6971 = vunpack.c.h.b16 %v6693
  %v6972 = vunpack.c.l.b16 %v6694
  %v6973 = vunpack.c.h.b16 %v6694
  %v6974 = vunpack.c.l.b16 %v6695
  %v6975 = vunpack.c.h.b16 %v6695
  %v6976 = vunpack.c.l.b16 %v6696
  %v6977 = vunpack.c.h.b16 %v6696
  %v6978 = vunpack.c.l.b16 %v6697
  %v6979 = vunpack.c.h.b16 %v6697
  %v6980 = vunpack.c.l.b16 %v6698
  %v6981 = vunpack.c.h.b16 %v6698
  %v6982 = vunpack.c.l.b16 %v6699
  %v6983 = vunpack.c.h.b16 %v6699
  %v6984 = vunpack.c.l.b16 %v6700
  %v6985 = vunpack.c.h.b16 %v6700
  %v6986 = vunpack.c.l.b16 %v6701
  %v6987 = vunpack.c.h.b16 %v6701
  %v6988 = vunpack.c.l.b16 %v6702
  %v6989 = vunpack.c.h.b16 %v6702
  %v6990 = vunpack.c.l.b16 %v6703
  %v6991 = vunpack.c.h.b16 %v6703
  %v6992 = vunpack.c.l.b16 %v6704
  %v6993 = vunpack.c.h.b16 %v6704
  %v6994 = vunpack.c.l.b16 %v6705
  %v6995 = vunpack.c.h.b16 %v6705
  %v6996 = vunpack.c.l.b16 %v6706
  %v6997 = vunpack.c.h.b16 %v6706
  %v6998 = vunpack.c.l.b16 %v6707
  %v6999 = vunpack.c.h.b16 %v6707
  %v7000 = vunpack.c.l.b16 %v6708
  %v7001 = vunpack.c.h.b16 %v6708
  %v7002 = vunpack.c.l.b16 %v6709
  %v7003 = vunpack.c.h.b16 %v6709
  %v7004 = vunpack.c.l.b16 %v6710
  %v7005 = vunpack.c.h.b16 %v6710
  %v7006 = vunpack.c.l.b16 %v6711
  %v7007 = vunpack.c.h.b16 %v6711
  %v7008 = vunpack.c.l.b16 %v6712
  %v7009 = vunpack.c.h.b16 %v6712
  %v7010 = vunpack.c.l.b16 %v6713
  %v7011 = vunpack.c.h.b16 %v6713
  %v7012 = vunpack.c.l.b16 %v6714
  %v7013 = vunpack.c.h.b16 %v6714
  %v7014 = vunpack.c.l.b16 %v6715
  %v7015 = vunpack.c.h.b16 %v6715
  %v7016 = vunpack.c.l.b16 %v6716
  %v7017 = vunpack.c.h.b16 %v6716
  %v7018 = vunpack.c.l.b16 %v6717
  %v7019 = vunpack.c.h.b16 %v6717
  %v7020 = vunpack.c.l.b16 %v6718
  %v7021 = vunpack.c.h.b16 %v6718
  %v7022 = vunpack.c.l.b16 %v6719
  %v7023 = vunpack.c.h.b16 %v6719
  %v7024 = vunpack.c.l.b16 %v6720
  %v7025 = vunpack.c.h.b16 %v6720
  %v7026 = vunpack.c.l.b16 %v6721
  %v7027 = vunpack.c.h.b16 %v6721
  %v7028 = vunpack.c.l.b16 %v6722
  %v7029 = vunpack.c.h.b16 %v6722
  %v7030 = vunpack.c.l.b16 %v6723
  %v7031 = vunpack.c.h.b16 %v6723
  %v7032 = vunpack.c.l.b16 %v6724
  %v7033 = vunpack.c.h.b16 %v6724
  %v7034 = vunpack.c.l.b16 %v6725
  %v7035 = vunpack.c.h.b16 %v6725
  %v7036 = vunpack.c.l.b16 %v6726
  %v7037 = vunpack.c.h.b16 %v6726
  %v7038 = vunpack.c.l.b16 %v6727
  %v7039 = vunpack.c.h.b16 %v6727
  %v7040 = vunpack.c.l.b16 %v6728
  %v7041 = vunpack.c.h.b16 %v6728
  %v7042 = vunpack.c.l.b16 %v6729
  %v7043 = vunpack.c.h.b16 %v6729
  %v7044 = vunpack.c.l.b16 %v6730
  %v7045 = vunpack.c.h.b16 %v6730
  %v7046 = vunpack.c.l.b16 %v6731
  %v7047 = vunpack.c.h.b16 %v6731
  %v7048 = vunpack.c.l.b16 %v6732
  %v7049 = vunpack.c.h.b16 %v6732
  %v7050 = vunpack.c.l.b16 %v6733
  %v7051 = vunpack.c.h.b16 %v6733
  %v7052 = vunpack.c.l.b16 %v6734
  %v7053 = vunpack.c.h.b16 %v6734
  %v7054 = vunpack.c.l.b16 %v6735
  %v7055 = vunpack.c.h.b16 %v6735
  %v7056 = vunpack.c.l.b16 %v6736
  %v7057 = vunpack.c.h.b16 %v6736
  %v7058 = vunpack.c.l.b16 %v6737
  %v7059 = vunpack.c.h.b16 %v6737
  %v7060 = vunpack.c.l.b16 %v6738
  %v7061 = vunpack.c.h.b16 %v6738
  %v7062 = vunpack.c.l.b16 %v6739
  %v7063 = vunpack.c.h.b16 %v6739
  %v7064 = vunpack.c.l.b16 %v6740
  %v7065 = vunpack.c.h.b16 %v6740
  %v7066 = vunpack.c.l.b16 %v6741
  %v7067 = vunpack.c.h.b16 %v6741
  %v7068 = vunpack.c.l.b16 %v6742
  %v7069 = vunpack.c.h.b16 %v6742
  %v7070 = vunpack.c.l.b16 %v6743
  %v7071 = vunpack.c.h.b16 %v6743
  %v7072 = vunpack.c.l.b16 %v6744
  %v7073 = vunpack.c.h.b16 %v6744
  %v7074 = vunpack.c.l.b16 %v6745
  %v7075 = vunpack.c.h.b16 %v6745
  %v7076 = vunpack.c.l.b16 %v6746
  %v7077 = vunpack.c.h.b16 %v6746
  %v7078 = vunpack.c.l.b16 %v6747
  %v7079 = vunpack.c.h.b16 %v6747
  %v7080 = vunpack.c.l.b16 %v6748
  %v7081 = vunpack.c.h.b16 %v6748
  %v7082 = vunpack.c.l.b16 %v6749
  %v7083 = vunpack.c.h.b16 %v6749
  %v7084 = vunpack.c.l.b16 %v6750
  %v7085 = vunpack.c.h.b16 %v6750
  %v7086 = vunpack.c.l.b16 %v6751
  %v7087 = vunpack.c.h.b16 %v6751
  %v7088 = vunpack.c.l.b16 %v6752
  %v7089 = vunpack.c.h.b16 %v6752
  %v7090 = vunpack.c.l.b16 %v6753
  %v7091 = vunpack.c.h.b16 %v6753
  %v7092 = vunpack.c.l.b16 %v6754
  %v7093 = vunpack.c.h.b16 %v6754
  %v7094 = vunpack.c.l.b16 %v6755
  %v7095 = vunpack.c.h.b16 %v6755
  %v7096 = vunpack.c.l.b16 %v6756
  %v7097 = vunpack.c.h.b16 %v6756
  %v7098 = vunpack.c.l.b16 %v6757
  %v7099 = vunpack.c.h.b16 %v6757
  %v7100 = vunpack.c.l.b16 %v6758
  %v7101 = vunpack.c.h.b16 %v6758
  %v7102 = vunpack.c.l.b16 %v6759
  %v7103 = vunpack.c.h.b16 %v6759
  %v7104 = vunpack.c.l.b16 %v6760
  %v7105 = vunpack.c.h.b16 %v6760
  %v7106 = vunpack.c.l.b16 %v6761
  %v7107 = vunpack.c.h.b16 %v6761
  %v7108 = vunpack.c.l.b16 %v6762
  %v7109 = vunpack.c.h.b16 %v6762
  %v7110 = vunpack.c.l.b16 %v6763
  %v7111 = vunpack.c.h.b16 %v6763
  %v7112 = vunpack.c.l.b16 %v6764
  %v7113 = vunpack.c.h.b16 %v6764
  %v7114 = vunpack.c.l.b16 %v6765
  %v7115 = vunpack.c.h.b16 %v6765
  %v7116 = vunpack.c.l.b16 %v6766
  %v7117 = vunpack.c.h.b16 %v6766
  %v7118 = vunpack.c.l.b16 %v6767
  %v7119 = vunpack.c.h.b16 %v6767
  %v7120 = vunpack.c.l.b16 %v6768
  %v7121 = vunpack.c.h.b16 %v6768
  %v7122 = vunpack.c.l.b16 %v6769
  %v7123 = vunpack.c.h.b16 %v6769
  %v7124 = vunpack.c.l.b16 %v6770
  %v7125 = vunpack.c.h.b16 %v6770
  %v7126 = vunpack.c.l.b16 %v6771
  %v7127 = vunpack.c.h.b16 %v6771
  %v7128 = vunpack.c.l.b16 %v6772
  %v7129 = vunpack.c.h.b16 %v6772
  %v7130 = vunpack.c.l.b16 %v6773
  %v7131 = vunpack.c.h.b16 %v6773
  %v7132 = vunpack.c.l.b16 %v6774
  %v7133 = vunpack.c.h.b16 %v6774
  %v7134 = vunpack.c.l.b16 %v6775
  %v7135 = vunpack.c.h.b16 %v6775
  %v7136 = vunpack.c.l.b16 %v6776
  %v7137 = vunpack.c.h.b16 %v6776
  %v7138 = vunpack.c.l.b16 %v6777
  %v7139 = vunpack.c.h.b16 %v6777
  %v7140 = vunpack.c.l.b16 %v6778
  %v7141 = vunpack.c.h.b16 %v6778
  %v7142 = vunpack.c.l.b16 %v6779
  %v7143 = vunpack.c.h.b16 %v6779
  %v7144 = vunpack.c.l.b16 %v6780
  %v7145 = vunpack.c.h.b16 %v6780
  %v7146 = vunpack.c.l.b16 %v6781
  %v7147 = vunpack.c.h.b16 %v6781
  %v7148 = vunpack.c.l.b16 %v6782
  %v7149 = vunpack.c.h.b16 %v6782
  %v7150 = vunpack.c.l.b16 %v6783
  %v7151 = vunpack.c.h.b16 %v6783
  %v7152 = vunpack.c.l.b16 %v6784
  %v7153 = vunpack.c.h.b16 %v6784
  %v7154 = vunpack.c.l.b16 %v6785
  %v7155 = vunpack.c.h.b16 %v6785
  %v7156 = vunpack.c.l.b16 %v6786
  %v7157 = vunpack.c.h.b16 %v6786
  %v7158 = vunpack.c.l.b16 %v6787
  %v7159 = vunpack.c.h.b16 %v6787
  %v7160 = vunpack.c.l.b16 %v6788
  %v7161 = vunpack.c.h.b16 %v6788
  %v7162 = vunpack.c.l.b16 %v6789
  %v7163 = vunpack.c.h.b16 %v6789
  %v7164 = vunpack.c.l.b16 %v6790
  %v7165 = vunpack.c.h.b16 %v6790
  %v7166 = vunpack.c.l.b16 %v6791
  %v7167 = vunpack.c.h.b16 %v6791
  %v7168 = vunpack.c.l.b16 %v6792
  %v7169 = vunpack.c.h.b16 %v6792
  %v7170 = vunpack.c.l.b16 %v6793
  %v7171 = vunpack.c.h.b16 %v6793
  %v7172 = vunpack.c.l.b16 %v6794
  %v7173 = vunpack.c.h.b16 %v6794
  %v7174 = vunpack.c.l.b16 %v6795
  %v7175 = vunpack.c.h.b16 %v6795
  %v7176 = vunpack.c.l.b16 %v6796
  %v7177 = vunpack.c.h.b16 %v6796
  %v7178 = vunpack.c.l.b16 %v6797
  %v7179 = vunpack.c.h.b16 %v6797
  %v7180 = vunpack.c.l.b16 %v6798
  %v7181 = vunpack.c.h.b16 %v6798
  %v7182 = vunpack.c.l.b16 %v6799
  %v7183 = vunpack.c.h.b16 %v6799
  %v7184 = vpack.c.b16 %v6936, %v6928
  %v7185 = vpack.c.b16 %v6937, %v6929
  %v7186 = vpack.c.b16 %v6938, %v6930
  %v7187 = vpack.c.b16 %v6939, %v6931
  %v7188 = vpack.c.b16 %v6940, %v6932
  %v7189 = vpack.c.b16 %v6941, %v6933
  %v7190 = vpack.c.b16 %v6942, %v6934
  %v7191 = vpack.c.b16 %v6943, %v6935
  %v7192 = vpack.c.b16 %v6952, %v6944
  %v7193 = vpack.c.b16 %v6953, %v6945
  %v7194 = vpack.c.b16 %v6954, %v6946
  %v7195 = vpack.c.b16 %v6955, %v6947
  %v7196 = vpack.c.b16 %v6956, %v6948
  %v7197 = vpack.c.b16 %v6957, %v6949
  %v7198 = vpack.c.b16 %v6958, %v6950
  %v7199 = vpack.c.b16 %v6959, %v6951
  %v7200 = vpack.c.b16 %v6968, %v6960
  %v7201 = vpack.c.b16 %v6969, %v6961
  %v7202 = vpack.c.b16 %v6970, %v6962
  %v7203 = vpack.c.b16 %v6971, %v6963
  %v7204 = vpack.c.b16 %v6972, %v6964
  %v7205 = vpack.c.b16 %v6973, %v6965
  %v7206 = vpack.c.b16 %v6974, %v6966
  %v7207 = vpack.c.b16 %v6975, %v6967
  %v7208 = vpack.c.b16 %v6984, %v6976
  %v7209 = vpack.c.b16 %v6985, %v6977
  %v7210 = vpack.c.b16 %v6986, %v6978
  %v7211 = vpack.c.b16 %v6987, %v6979
  %v7212 = vpack.c.b16 %v6988, %v6980
  %v7213 = vpack.c.b16 %v6989, %v6981
  %v7214 = vpack.c.b16 %v6990, %v6982
  %v7215 = vpack.c.b16 %v6991, %v6983
  %v7216 = vpack.c.b16 %v7000, %v6992
  %v7217 = vpack.c.b16 %v7001, %v6993
  %v7218 = vpack.c.b16 %v7002, %v6994
  %v7219 = vpack.c.b16 %v7003, %v6995
  %v7220 = vpack.c.b16 %v7004, %v6996
  %v7221 = vpack.c.b16 %v7005, %v6997
  %v7222 = vpack.c.b16 %v7006, %v6998
  %v7223 = vpack.c.b16 %v7007, %v6999
  %v7224 = vpack.c.b16 %v7016, %v7008
  %v7225 = vpack.c.b16 %v7017, %v7009
  %v7226 = vpack.c.b16 %v7018, %v7010
  %v7227 = vpack.c.b16 %v7019, %v7011
  %v7228 = vpack.c.b16 %v7020, %v7012
  %v7229 = vpack.c.b16 %v7021, %v7013
  %v7230 = vpack.c.b16 %v7022, %v7014
  %v7231 = vpack.c.b16 %v7023, %v7015
  %v7232 = vpack.c.b16 %v7032, %v7024
  %v7233 = vpack.c.b16 %v7033, %v7025
  %v7234 = vpack.c.b16 %v7034, %v7026
  %v7235 = vpack.c.b16 %v7035, %v7027
  %v7236 = vpack.c.b16 %v7036, %v7028
  %v7237 = vpack.c.b16 %v7037, %v7029
  %v7238 = vpack.c.b16 %v7038, %v7030
  %v7239 = vpack.c.b16 %v7039, %v7031
  %v7240 = vpack.c.b16 %v7048, %v7040
  %v7241 = vpack.c.b16 %v7049, %v7041
  %v7242 = vpack.c.b16 %v7050, %v7042
  %v7243 = vpack.c.b16 %v7051, %v7043
  %v7244 = vpack.c.b16 %v7052, %v7044
  %v7245 = vpack.c.b16 %v7053, %v7045
  %v7246 = vpack.c.b16 %v7054, %v7046
  %v7247 = vpack.c.b16 %v7055, %v7047
  %v7248 = vpack.c.b16 %v7064, %v7056
  %v7249 = vpack.c.b16 %v7065, %v7057
  %v7250 = vpack.c.b16 %v7066, %v7058
  %v7251 = vpack.c.b16 %v7067, %v7059
  %v7252 = vpack.c.b16 %v7068, %v7060
  %v7253 = vpack.c.b16 %v7069, %v7061
  %v7254 = vpack.c.b16 %v7070, %v7062
  %v7255 = vpack.c.b16 %v7071, %v7063
  %v7256 = vpack.c.b16 %v7080, %v7072
  %v7257 = vpack.c.b16 %v7081, %v7073
  %v7258 = vpack.c.b16 %v7082, %v7074
  %v7259 = vpack.c.b16 %v7083, %v7075
  %v7260 = vpack.c.b16 %v7084, %v7076
  %v7261 = vpack.c.b16 %v7085, %v7077
  %v7262 = vpack.c.b16 %v7086, %v7078
  %v7263 = vpack.c.b16 %v7087, %v7079
  %v7264 = vpack.c.b16 %v7096, %v7088
  %v7265 = vpack.c.b16 %v7097, %v7089
  %v7266 = vpack.c.b16 %v7098, %v7090
  %v7267 = vpack.c.b16 %v7099, %v7091
  %v7268 = vpack.c.b16 %v7100, %v7092
  %v7269 = vpack.c.b16 %v7101, %v7093
  %v7270 = vpack.c.b16 %v7102, %v7094
  %v7271 = vpack.c.b16 %v7103, %v7095
  %v7272 = vpack.c.b16 %v7112, %v7104
  %v7273 = vpack.c.b16 %v7113, %v7105
  %v7274 = vpack.c.b16 %v7114, %v7106
  %v7275 = vpack.c.b16 %v7115, %v7107
  %v7276 = vpack.c.b16 %v7116, %v7108
  %v7277 = vpack.c.b16 %v7117, %v7109
  %v7278 = vpack.c.b16 %v7118, %v7110
  %v7279 = vpack.c.b16 %v7119, %v7111
  %v7280 = vpack.c.b16 %v7128, %v7120
  %v7281 = vpack.c.b16 %v7129, %v7121
  %v7282 = vpack.c.b16 %v7130, %v7122
  %v7283 = vpack.c.b16 %v7131, %v7123
  %v7284 = vpack.c.b16 %v7132, %v7124
  %v7285 = vpack.c.b16 %v7133, %v7125
  %v7286 = vpack.c.b16 %v7134, %v7126
  %v7287 = vpack.c.b16 %v7135, %v7127
  %v7288 = vpack.c.b16 %v7144, %v7136
  %v7289 = vpack.c.b16 %v7145, %v7137
  %v7290 = vpack.c.b16 %v7146, %v7138
  %v7291 = vpack.c.b16 %v7147, %v7139
  %v7292 = vpack.c.b16 %v7148, %v7140
  %v7293 = vpack.c.b16 %v7149, %v7141
  %v7294 = vpack.c.b16 %v7150, %v7142
  %v7295 = vpack.c.b16 %v7151, %v7143
  %v7296 = vpack.c.b16 %v7160, %v7152
  %v7297 = vpack.c.b16 %v7161, %v7153
  %v7298 = vpack.c.b16 %v7162, %v7154
  %v7299 = vpack.c.b16 %v7163, %v7155
  %v7300 = vpack.c.b16 %v7164, %v7156
  %v7301 = vpack.c.b16 %v7165, %v7157
  %v7302 = vpack.c.b16 %v7166, %v7158
  %v7303 = vpack.c.b16 %v7167, %v7159
  %v7304 = vpack.c.b16 %v7176, %v7168
  %v7305 = vpack.c.b16 %v7177, %v7169
  %v7306 = vpack.c.b16 %v7178, %v7170
  %v7307 = vpack.c.b16 %v7179, %v7171
  %v7308 = vpack.c.b16 %v7180, %v7172
  %v7309 = vpack.c.b16 %v7181, %v7173
  %v7310 = vpack.c.b16 %v7182, %v7174
  %v7311 = vpack.c.b16 %v7183, %v7175
  %7440 = vmatprep.subr.bf16.mxu0 %v7241
  %7441 = vmatpush1.bf16.msra.mxu0 %v7240
  %7442 = vmatprep.subr.bf16.mxu0 %v7233
  %7443 = vmatpush1.bf16.msra.mxu0 %v7232
  %7444 = vmatprep.subr.bf16.mxu0 %v7225
  %7445 = vmatpush1.bf16.msra.mxu0 %v7224
  %7446 = vmatprep.subr.bf16.mxu0 %v7217
  %7447 = vmatpush1.bf16.msra.mxu0 %v7216
  %7448 = vmatprep.subr.bf16.mxu0 %v7209
  %7449 = vmatpush1.bf16.msra.mxu0 %v7208
  %7450 = vmatprep.subr.bf16.mxu0 %v7201
  %7451 = vmatpush1.bf16.msra.mxu0 %v7200
  %7452 = vmatprep.subr.bf16.mxu0 %v7193
  %7453 = vmatpush1.bf16.msra.mxu0 %v7192
  %7454 = vmatprep.subr.bf16.mxu0 %v7185
  %7455 = vmatpush1.bf16.msra.mxu0 %v7184
  %7456 = vmatprep.subr.bf16.mxu0 %v7305
  %7457 = vmatpush2.bf16.msra.mxu0 %v7304
  %7458 = vmatprep.subr.bf16.mxu0 %v7297
  %7459 = vmatpush2.bf16.msra.mxu0 %v7296
  %7460 = vmatprep.subr.bf16.mxu0 %v7289
  %7461 = vmatpush2.bf16.msra.mxu0 %v7288
  %7462 = vmatprep.subr.bf16.mxu0 %v7281
  %7463 = vmatpush2.bf16.msra.mxu0 %v7280
  %7464 = vmatprep.subr.bf16.mxu0 %v7273
  %7465 = vmatpush2.bf16.msra.mxu0 %v7272
  %7466 = vmatprep.subr.bf16.mxu0 %v7265
  %7467 = vmatpush2.bf16.msra.mxu0 %v7264
  %7468 = vmatprep.subr.bf16.mxu0 %v7257
  %7469 = vmatpush2.bf16.msra.mxu0 %v7256
  %7470 = vmatprep.subr.bf16.mxu0 %v7249
  %7471 = vmatpush2.bf16.msra.mxu0 %v7248
  %7472 = vmatprep.mubr.bf16.mxu0 %v6665
  %7473 = vmatmul.mubr.bf16.gmra.mxu0 %v6664
  %v7474 = vpop.f32.mrf.mxu0
  %v7475 = vadd.f32 0.0, %v7474
  %v7476 = vpop.f32.mrf.mxu0
  %v7477 = vadd.f32 0.0, %v7476
  %v7478 = vpop.f32.mrf.mxu0
  %v7479 = vadd.f32 0.0, %v7478
  %v7480 = vpop.f32.mrf.mxu0
  %v7481 = vadd.f32 0.0, %v7480
  %7482 = vmatprep.mubr.bf16.mxu0 %v6667
  %7483 = vmatmul.mubr.bf16.gmra.mxu0 %v6666
  %v7484 = vpop.f32.mrf.mxu0
  %v7485 = vadd.f32 0.0, %v7484
  %v7486 = vpop.f32.mrf.mxu0
  %v7487 = vadd.f32 0.0, %v7486
  %v7488 = vpop.f32.mrf.mxu0
  %v7489 = vadd.f32 0.0, %v7488
  %v7490 = vpop.f32.mrf.mxu0
  %v7491 = vadd.f32 0.0, %v7490
  %7492 = vmatprep.mubr.bf16.mxu0 %v6669
  %7493 = vmatmul.mubr.bf16.gmra.mxu0 %v6668
  %v7494 = vpop.f32.mrf.mxu0
  %v7495 = vadd.f32 0.0, %v7494
  %v7496 = vpop.f32.mrf.mxu0
  %v7497 = vadd.f32 0.0, %v7496
  %v7498 = vpop.f32.mrf.mxu0
  %v7499 = vadd.f32 0.0, %v7498
  %v7500 = vpop.f32.mrf.mxu0
  %v7501 = vadd.f32 0.0, %v7500
  %7502 = vmatprep.mubr.bf16.mxu0 %v6671
  %7503 = vmatmul.mubr.bf16.gmra.mxu0 %v6670
  %v7504 = vpop.f32.mrf.mxu0
  %v7505 = vadd.f32 0.0, %v7504
  %v7506 = vpop.f32.mrf.mxu0
  %v7507 = vadd.f32 0.0, %v7506
  %v7508 = vpop.f32.mrf.mxu0
  %v7509 = vadd.f32 0.0, %v7508
  %v7510 = vpop.f32.mrf.mxu0
  %v7511 = vadd.f32 0.0, %v7510
  %7512 = vdwg.mxu0
  %7513 = vmatprep.subr.bf16.mxu0 %v7243
  %7514 = vmatpush1.bf16.msra.mxu0 %v7242
  %7515 = vmatprep.subr.bf16.mxu0 %v7235
  %7516 = vmatpush1.bf16.msra.mxu0 %v7234
  %7517 = vmatprep.subr.bf16.mxu0 %v7227
  %7518 = vmatpush1.bf16.msra.mxu0 %v7226
  %7519 = vmatprep.subr.bf16.mxu0 %v7219
  %7520 = vmatpush1.bf16.msra.mxu0 %v7218
  %7521 = vmatprep.subr.bf16.mxu0 %v7211
  %7522 = vmatpush1.bf16.msra.mxu0 %v7210
  %7523 = vmatprep.subr.bf16.mxu0 %v7203
  %7524 = vmatpush1.bf16.msra.mxu0 %v7202
  %7525 = vmatprep.subr.bf16.mxu0 %v7195
  %7526 = vmatpush1.bf16.msra.mxu0 %v7194
  %7527 = vmatprep.subr.bf16.mxu0 %v7187
  %7528 = vmatpush1.bf16.msra.mxu0 %v7186
  %7529 = vmatprep.subr.bf16.mxu0 %v7307
  %7530 = vmatpush2.bf16.msra.mxu0 %v7306
  %7531 = vmatprep.subr.bf16.mxu0 %v7299
  %7532 = vmatpush2.bf16.msra.mxu0 %v7298
  %7533 = vmatprep.subr.bf16.mxu0 %v7291
  %7534 = vmatpush2.bf16.msra.mxu0 %v7290
  %7535 = vmatprep.subr.bf16.mxu0 %v7283
  %7536 = vmatpush2.bf16.msra.mxu0 %v7282
  %7537 = vmatprep.subr.bf16.mxu0 %v7275
  %7538 = vmatpush2.bf16.msra.mxu0 %v7274
  %7539 = vmatprep.subr.bf16.mxu0 %v7267
  %7540 = vmatpush2.bf16.msra.mxu0 %v7266
  %7541 = vmatprep.subr.bf16.mxu0 %v7259
  %7542 = vmatpush2.bf16.msra.mxu0 %v7258
  %7543 = vmatprep.subr.bf16.mxu0 %v7251
  %7544 = vmatpush2.bf16.msra.mxu0 %v7250
  %7545 = vmatprep.mubr.bf16.mxu0 %v6665
  %7546 = vmatmul.mubr.bf16.gmra.mxu0 %v6664
  %v7547 = vpop.f32.mrf.mxu0
  %v7548 = vadd.f32 0.0, %v7547
  %v7549 = vpop.f32.mrf.mxu0
  %v7550 = vadd.f32 0.0, %v7549
  %v7551 = vpop.f32.mrf.mxu0
  %v7552 = vadd.f32 0.0, %v7551
  %v7553 = vpop.f32.mrf.mxu0
  %v7554 = vadd.f32 0.0, %v7553
  %7555 = vmatprep.mubr.bf16.mxu0 %v6667
  %7556 = vmatmul.mubr.bf16.gmra.mxu0 %v6666
  %v7557 = vpop.f32.mrf.mxu0
  %v7558 = vadd.f32 0.0, %v7557
  %v7559 = vpop.f32.mrf.mxu0
  %v7560 = vadd.f32 0.0, %v7559
  %v7561 = vpop.f32.mrf.mxu0
  %v7562 = vadd.f32 0.0, %v7561
  %v7563 = vpop.f32.mrf.mxu0
  %v7564 = vadd.f32 0.0, %v7563
  %7565 = vmatprep.mubr.bf16.mxu0 %v6669
  %7566 = vmatmul.mubr.bf16.gmra.mxu0 %v6668
  %v7567 = vpop.f32.mrf.mxu0
  %v7568 = vadd.f32 0.0, %v7567
  %v7569 = vpop.f32.mrf.mxu0
  %v7570 = vadd.f32 0.0, %v7569
  %v7571 = vpop.f32.mrf.mxu0
  %v7572 = vadd.f32 0.0, %v7571
  %v7573 = vpop.f32.mrf.mxu0
  %v7574 = vadd.f32 0.0, %v7573
  %7575 = vmatprep.mubr.bf16.mxu0 %v6671
  %7576 = vmatmul.mubr.bf16.gmra.mxu0 %v6670
  %v7577 = vpop.f32.mrf.mxu0
  %v7578 = vadd.f32 0.0, %v7577
  %v7579 = vpop.f32.mrf.mxu0
  %v7580 = vadd.f32 0.0, %v7579
  %v7581 = vpop.f32.mrf.mxu0
  %v7582 = vadd.f32 0.0, %v7581
  %v7583 = vpop.f32.mrf.mxu0
  %v7584 = vadd.f32 0.0, %v7583
  %7585 = vdwg.mxu0
  %7586 = vmatprep.subr.bf16.mxu0 %v7245
  %7587 = vmatpush1.bf16.msra.mxu0 %v7244
  %7588 = vmatprep.subr.bf16.mxu0 %v7237
  %7589 = vmatpush1.bf16.msra.mxu0 %v7236
  %7590 = vmatprep.subr.bf16.mxu0 %v7229
  %7591 = vmatpush1.bf16.msra.mxu0 %v7228
  %7592 = vmatprep.subr.bf16.mxu0 %v7221
  %7593 = vmatpush1.bf16.msra.mxu0 %v7220
  %7594 = vmatprep.subr.bf16.mxu0 %v7213
  %7595 = vmatpush1.bf16.msra.mxu0 %v7212
  %7596 = vmatprep.subr.bf16.mxu0 %v7205
  %7597 = vmatpush1.bf16.msra.mxu0 %v7204
  %7598 = vmatprep.subr.bf16.mxu0 %v7197
  %7599 = vmatpush1.bf16.msra.mxu0 %v7196
  %7600 = vmatprep.subr.bf16.mxu0 %v7189
  %7601 = vmatpush1.bf16.msra.mxu0 %v7188
  %7602 = vmatprep.subr.bf16.mxu0 %v7309
  %7603 = vmatpush2.bf16.msra.mxu0 %v7308
  %7604 = vmatprep.subr.bf16.mxu0 %v7301
  %7605 = vmatpush2.bf16.msra.mxu0 %v7300
  %7606 = vmatprep.subr.bf16.mxu0 %v7293
  %7607 = vmatpush2.bf16.msra.mxu0 %v7292
  %7608 = vmatprep.subr.bf16.mxu0 %v7285
  %7609 = vmatpush2.bf16.msra.mxu0 %v7284
  %7610 = vmatprep.subr.bf16.mxu0 %v7277
  %7611 = vmatpush2.bf16.msra.mxu0 %v7276
  %7612 = vmatprep.subr.bf16.mxu0 %v7269
  %7613 = vmatpush2.bf16.msra.mxu0 %v7268
  %7614 = vmatprep.subr.bf16.mxu0 %v7261
  %7615 = vmatpush2.bf16.msra.mxu0 %v7260
  %7616 = vmatprep.subr.bf16.mxu0 %v7253
  %7617 = vmatpush2.bf16.msra.mxu0 %v7252
  %7618 = vmatprep.mubr.bf16.mxu0 %v6665
  %7619 = vmatmul.mubr.bf16.gmra.mxu0 %v6664
  %v7620 = vpop.f32.mrf.mxu0
  %v7621 = vadd.f32 0.0, %v7620
  %v7622 = vpop.f32.mrf.mxu0
  %v7623 = vadd.f32 0.0, %v7622
  %v7624 = vpop.f32.mrf.mxu0
  %v7625 = vadd.f32 0.0, %v7624
  %v7626 = vpop.f32.mrf.mxu0
  %v7627 = vadd.f32 0.0, %v7626
  %7628 = vmatprep.mubr.bf16.mxu0 %v6667
  %7629 = vmatmul.mubr.bf16.gmra.mxu0 %v6666
  %v7630 = vpop.f32.mrf.mxu0
  %v7631 = vadd.f32 0.0, %v7630
  %v7632 = vpop.f32.mrf.mxu0
  %v7633 = vadd.f32 0.0, %v7632
  %v7634 = vpop.f32.mrf.mxu0
  %v7635 = vadd.f32 0.0, %v7634
  %v7636 = vpop.f32.mrf.mxu0
  %v7637 = vadd.f32 0.0, %v7636
  %7638 = vmatprep.mubr.bf16.mxu0 %v6669
  %7639 = vmatmul.mubr.bf16.gmra.mxu0 %v6668
  %v7640 = vpop.f32.mrf.mxu0
  %v7641 = vadd.f32 0.0, %v7640
  %v7642 = vpop.f32.mrf.mxu0
  %v7643 = vadd.f32 0.0, %v7642
  %v7644 = vpop.f32.mrf.mxu0
  %v7645 = vadd.f32 0.0, %v7644
  %v7646 = vpop.f32.mrf.mxu0
  %v7647 = vadd.f32 0.0, %v7646
  %7648 = vmatprep.mubr.bf16.mxu0 %v6671
  %7649 = vmatmul.mubr.bf16.gmra.mxu0 %v6670
  %v7650 = vpop.f32.mrf.mxu0
  %v7651 = vadd.f32 0.0, %v7650
  %v7652 = vpop.f32.mrf.mxu0
  %v7653 = vadd.f32 0.0, %v7652
  %v7654 = vpop.f32.mrf.mxu0
  %v7655 = vadd.f32 0.0, %v7654
  %v7656 = vpop.f32.mrf.mxu0
  %v7657 = vadd.f32 0.0, %v7656
  %7658 = vdwg.mxu0
  %7659 = vmatprep.subr.bf16.mxu0 %v7247
  %7660 = vmatpush1.bf16.msra.mxu0 %v7246
  %7661 = vmatprep.subr.bf16.mxu0 %v7239
  %7662 = vmatpush1.bf16.msra.mxu0 %v7238
  %7663 = vmatprep.subr.bf16.mxu0 %v7231
  %7664 = vmatpush1.bf16.msra.mxu0 %v7230
  %7665 = vmatprep.subr.bf16.mxu0 %v7223
  %7666 = vmatpush1.bf16.msra.mxu0 %v7222
  %7667 = vmatprep.subr.bf16.mxu0 %v7215
  %7668 = vmatpush1.bf16.msra.mxu0 %v7214
  %7669 = vmatprep.subr.bf16.mxu0 %v7207
  %7670 = vmatpush1.bf16.msra.mxu0 %v7206
  %7671 = vmatprep.subr.bf16.mxu0 %v7199
  %7672 = vmatpush1.bf16.msra.mxu0 %v7198
  %7673 = vmatprep.subr.bf16.mxu0 %v7191
  %7674 = vmatpush1.bf16.msra.mxu0 %v7190
  %7675 = vmatprep.subr.bf16.mxu0 %v7311
  %7676 = vmatpush2.bf16.msra.mxu0 %v7310
  %7677 = vmatprep.subr.bf16.mxu0 %v7303
  %7678 = vmatpush2.bf16.msra.mxu0 %v7302
  %7679 = vmatprep.subr.bf16.mxu0 %v7295
  %7680 = vmatpush2.bf16.msra.mxu0 %v7294
  %7681 = vmatprep.subr.bf16.mxu0 %v7287
  %7682 = vmatpush2.bf16.msra.mxu0 %v7286
  %7683 = vmatprep.subr.bf16.mxu0 %v7279
  %7684 = vmatpush2.bf16.msra.mxu0 %v7278
  %7685 = vmatprep.subr.bf16.mxu0 %v7271
  %7686 = vmatpush2.bf16.msra.mxu0 %v7270
  %7687 = vmatprep.subr.bf16.mxu0 %v7263
  %7688 = vmatpush2.bf16.msra.mxu0 %v7262
  %7689 = vmatprep.subr.bf16.mxu0 %v7255
  %7690 = vmatpush2.bf16.msra.mxu0 %v7254
  %7691 = vmatprep.mubr.bf16.mxu0 %v6665
  %7692 = vmatmul.mubr.bf16.gmra.mxu0 %v6664
  %v7693 = vpop.f32.mrf.mxu0
  %v7694 = vadd.f32 0.0, %v7693
  %v7695 = vpop.f32.mrf.mxu0
  %v7696 = vadd.f32 0.0, %v7695
  %v7697 = vpop.f32.mrf.mxu0
  %v7698 = vadd.f32 0.0, %v7697
  %v7699 = vpop.f32.mrf.mxu0
  %v7700 = vadd.f32 0.0, %v7699
  %7701 = vmatprep.mubr.bf16.mxu0 %v6667
  %7702 = vmatmul.mubr.bf16.gmra.mxu0 %v6666
  %v7703 = vpop.f32.mrf.mxu0
  %v7704 = vadd.f32 0.0, %v7703
  %v7705 = vpop.f32.mrf.mxu0
  %v7706 = vadd.f32 0.0, %v7705
  %v7707 = vpop.f32.mrf.mxu0
  %v7708 = vadd.f32 0.0, %v7707
  %v7709 = vpop.f32.mrf.mxu0
  %v7710 = vadd.f32 0.0, %v7709
  %7711 = vmatprep.mubr.bf16.mxu0 %v6669
  %7712 = vmatmul.mubr.bf16.gmra.mxu0 %v6668
  %v7713 = vpop.f32.mrf.mxu0
  %v7714 = vadd.f32 0.0, %v7713
  %v7715 = vpop.f32.mrf.mxu0
  %v7716 = vadd.f32 0.0, %v7715
  %v7717 = vpop.f32.mrf.mxu0
  %v7718 = vadd.f32 0.0, %v7717
  %v7719 = vpop.f32.mrf.mxu0
  %v7720 = vadd.f32 0.0, %v7719
  %7721 = vmatprep.mubr.bf16.mxu0 %v6671
  %7722 = vmatmul.mubr.bf16.gmra.mxu0 %v6670
  %v7723 = vpop.f32.mrf.mxu0
  %v7724 = vadd.f32 0.0, %v7723
  %v7725 = vpop.f32.mrf.mxu0
  %v7726 = vadd.f32 0.0, %v7725
  %v7727 = vpop.f32.mrf.mxu0
  %v7728 = vadd.f32 0.0, %v7727
  %v7729 = vpop.f32.mrf.mxu0
  %v7730 = vadd.f32 0.0, %v7729
  %7731 = vdwg.mxu0
  %s7732 = scalar_lea.vmem %s1, 4
  %v7733 = vld [vmem:[%s7732] ss:$8 sm:$0x3]
  %7734 = vst [vmem:[#allocation9 + $0x80] sm:$0xff] %v7475
  %7735 = vst [vmem:[#allocation9 + $0x88] sm:$0xff] %v7477
  %7736 = vst [vmem:[#allocation9 + $0x90] sm:$0xff] %v7548
  %7737 = vst [vmem:[#allocation9 + $0x98] sm:$0xff] %v7550
  %7738 = vst [vmem:[#allocation9 + $0xa0] sm:$0xff] %v7621
  %7739 = vst [vmem:[#allocation9 + $0xa8] sm:$0xff] %v7623
  %7740 = vst [vmem:[#allocation9 + $0xb0] sm:$0xff] %v7694
  %7741 = vst [vmem:[#allocation9 + $0xb8] sm:$0xff] %v7696
  %7742 = vst [vmem:[#allocation9 + $0xc0] sm:$0xff] %v7479
  %7743 = vst [vmem:[#allocation9 + $0xc8] sm:$0xff] %v7481
  %7744 = vst [vmem:[#allocation9 + $0xd0] sm:$0xff] %v7552
  %7745 = vst [vmem:[#allocation9 + $0xd8] sm:$0xff] %v7554
  %7746 = vst [vmem:[#allocation9 + $0xe0] sm:$0xff] %v7625
  %7747 = vst [vmem:[#allocation9 + $0xe8] sm:$0xff] %v7627
  %7748 = vst [vmem:[#allocation9 + $0xf0] sm:$0xff] %v7698
  %7749 = vst [vmem:[#allocation9 + $0xf8] sm:$0xff] %v7700
  %7750 = vst [vmem:[#allocation9 + $0x100] sm:$0xff] %v7485
  %7751 = vst [vmem:[#allocation9 + $0x108] sm:$0xff] %v7487
  %7752 = vst [vmem:[#allocation9 + $0x110] sm:$0xff] %v7558
  %7753 = vst [vmem:[#allocation9 + $0x118] sm:$0xff] %v7560
  %7754 = vst [vmem:[#allocation9 + $0x120] sm:$0xff] %v7631
  %7755 = vst [vmem:[#allocation9 + $0x128] sm:$0xff] %v7633
  %7756 = vst [vmem:[#allocation9 + $0x130] sm:$0xff] %v7704
  %7757 = vst [vmem:[#allocation9 + $0x138] sm:$0xff] %v7706
  %7758 = vst [vmem:[#allocation9 + $0x140] sm:$0xff] %v7489
  %7759 = vst [vmem:[#allocation9 + $0x148] sm:$0xff] %v7491
  %7760 = vst [vmem:[#allocation9 + $0x150] sm:$0xff] %v7562
  %7761 = vst [vmem:[#allocation9 + $0x158] sm:$0xff] %v7564
  %7762 = vst [vmem:[#allocation9 + $0x160] sm:$0xff] %v7635
  %7763 = vst [vmem:[#allocation9 + $0x168] sm:$0xff] %v7637
  %7764 = vst [vmem:[#allocation9 + $0x170] sm:$0xff] %v7708
  %7765 = vst [vmem:[#allocation9 + $0x178] sm:$0xff] %v7710
  %7766 = vst [vmem:[#allocation9 + $0x180] sm:$0xff] %v7495
  %7767 = vst [vmem:[#allocation9 + $0x188] sm:$0xff] %v7497
  %7768 = vst [vmem:[#allocation9 + $0x190] sm:$0xff] %v7568
  %7769 = vst [vmem:[#allocation9 + $0x198] sm:$0xff] %v7570
  %7770 = vst [vmem:[#allocation9 + $0x1a0] sm:$0xff] %v7641
  %7771 = vst [vmem:[#allocation9 + $0x1a8] sm:$0xff] %v7643
  %7772 = vst [vmem:[#allocation9 + $0x1b0] sm:$0xff] %v7714
  %7773 = vst [vmem:[#allocation9 + $0x1b8] sm:$0xff] %v7716
  %7774 = vst [vmem:[#allocation9 + $0x1c0] sm:$0xff] %v7499
  %7775 = vst [vmem:[#allocation9 + $0x1c8] sm:$0xff] %v7501
  %7776 = vst [vmem:[#allocation9 + $0x1d0] sm:$0xff] %v7572
  %7777 = vst [vmem:[#allocation9 + $0x1d8] sm:$0xff] %v7574
  %7778 = vst [vmem:[#allocation9 + $0x1e0] sm:$0xff] %v7645
  %7779 = vst [vmem:[#allocation9 + $0x1e8] sm:$0xff] %v7647
  %7780 = vst [vmem:[#allocation9 + $0x1f0] sm:$0xff] %v7718
  %7781 = vst [vmem:[#allocation9 + $0x1f8] sm:$0xff] %v7720
  %7782 = vst [vmem:[#allocation9 + $0x200] sm:$0xff] %v7505
  %7783 = vst [vmem:[#allocation9 + $0x208] sm:$0xff] %v7507
  %7784 = vst [vmem:[#allocation9 + $0x210] sm:$0xff] %v7578
  %7785 = vst [vmem:[#allocation9 + $0x218] sm:$0xff] %v7580
  %7786 = vst [vmem:[#allocation9 + $0x220] sm:$0xff] %v7651
  %7787 = vst [vmem:[#allocation9 + $0x228] sm:$0xff] %v7653
  %7788 = vst [vmem:[#allocation9 + $0x230] sm:$0xff] %v7724
  %7789 = vst [vmem:[#allocation9 + $0x238] sm:$0xff] %v7726
  %7790 = vst [vmem:[#allocation9 + $0x240] sm:$0xff] %v7509
  %7791 = vst [vmem:[#allocation9 + $0x248] sm:$0xff] %v7511
  %7792 = vst [vmem:[#allocation9 + $0x250] sm:$0xff] %v7582
  %7793 = vst [vmem:[#allocation9 + $0x258] sm:$0xff] %v7584
  %7794 = vst [vmem:[#allocation9 + $0x260] sm:$0xff] %v7655
  %7795 = vst [vmem:[#allocation9 + $0x268] sm:$0xff] %v7657
  %7796 = vst [vmem:[#allocation9 + $0x270] sm:$0xff] %v7728
  %7797 = vst [vmem:[#allocation9 + $0x278] sm:$0xff] %v7730
  %v7798 = vld [vmem:[#allocation9 + $0x40] sm:$0xf0]
  %v7799 = vld [vmem:[#allocation9 + $0x48] sm:$0xf0]
  %v7800 = vld [vmem:[#allocation9 + $0x80] sm:$0xff]
  %v7801 = vld [vmem:[#allocation9 + $0x88] sm:$0xff]
  %v7802 = vld [vmem:[#allocation9 + $0xc0] sm:$0xff]
  %v7803 = vld [vmem:[#allocation9 + $0xc8] sm:$0xff]
  %v7804 = vld [vmem:[#allocation9 + $0x100] sm:$0xff]
  %v7805 = vld [vmem:[#allocation9 + $0x108] sm:$0xff]
  %v7806 = vld [vmem:[#allocation9 + $0x140] sm:$0xff]
  %v7807 = vld [vmem:[#allocation9 + $0x148] sm:$0xff]
  %v7808 = vld [vmem:[#allocation9 + $0x180] sm:$0xff]
  %v7809 = vld [vmem:[#allocation9 + $0x188] sm:$0xff]
  %v7810 = vld [vmem:[#allocation9 + $0x1c0] sm:$0xff]
  %v7811 = vld [vmem:[#allocation9 + $0x1c8] sm:$0xff]
  %v7812 = vld [vmem:[#allocation9 + $0x200] sm:$0xff]
  %v7813 = vld [vmem:[#allocation9 + $0x208] sm:$0xff]
  %v7814 = vld [vmem:[#allocation9 + $0x240] sm:$0xf]
  %v7815 = vld [vmem:[#allocation9 + $0x248] sm:$0xf]
  %v7816 = vadd.s32 %v1849, 4294967292
  %v7817 = vadd.s32 %v1850, 4294967292
  %v7818 = vadd.s32 %v1851, 4294967292
  %v7819 = vadd.s32 %v1852, 4294967292
  %v7820 = vadd.s32 %v1853, 4294967292
  %v7821 = vadd.s32 %v1854, 4294967292
  %v7822 = vadd.s32 %v1855, 4294967292
  %v7823 = vadd.s32 %v1856, 4294967292
  %vm7824 = vcmp.ge.s32.totalorder %v7816, 0
  %vm7825 = vcmp.ge.s32.totalorder %v7817, 0
  %vm7826 = vcmp.ge.s32.totalorder %v7818, 0
  %vm7827 = vcmp.ge.s32.totalorder %v7819, 0
  %vm7828 = vcmp.ge.s32.totalorder %v7820, 0
  %vm7829 = vcmp.ge.s32.totalorder %v7821, 0
  %vm7830 = vcmp.ge.s32.totalorder %v7822, 0
  %vm7831 = vcmp.ge.s32.totalorder %v7823, 0
  %vm7832 = vcmp.lt.s32.totalorder %v7816, 32
  %vm7833 = vcmp.lt.s32.totalorder %v7817, 32
  %vm7834 = vcmp.lt.s32.totalorder %v7818, 32
  %vm7835 = vcmp.lt.s32.totalorder %v7819, 32
  %vm7836 = vcmp.lt.s32.totalorder %v7820, 32
  %vm7837 = vcmp.lt.s32.totalorder %v7821, 32
  %vm7838 = vcmp.lt.s32.totalorder %v7822, 32
  %vm7839 = vcmp.lt.s32.totalorder %v7823, 32
  %vm7840 = vmand %vm7824, %vm7832
  %vm7841 = vmand %vm7825, %vm7833
  %vm7842 = vmand %vm7826, %vm7834
  %vm7843 = vmand %vm7827, %vm7835
  %vm7844 = vmand %vm7828, %vm7836
  %vm7845 = vmand %vm7829, %vm7837
  %vm7846 = vmand %vm7830, %vm7838
  %vm7847 = vmand %vm7831, %vm7839
  %v7848 = vsel %vm7840, 1, 0
  %v7849 = vsel %vm7841, 1, 0
  %v7850 = vsel %vm7842, 1, 0
  %v7851 = vsel %vm7843, 1, 0
  %v7852 = vsel %vm7844, 1, 0
  %v7853 = vsel %vm7845, 1, 0
  %v7854 = vsel %vm7846, 1, 0
  %v7855 = vsel %vm7847, 1, 0
  %vm7856 = vcmp.eq.s32.totalorder %v7848, 1
  %vm7857 = vcmp.eq.s32.totalorder %v7849, 1
  %vm7858 = vcmp.eq.s32.totalorder %v7850, 1
  %vm7859 = vcmp.eq.s32.totalorder %v7851, 1
  %vm7860 = vcmp.eq.s32.totalorder %v7852, 1
  %vm7861 = vcmp.eq.s32.totalorder %v7853, 1
  %vm7862 = vcmp.eq.s32.totalorder %v7854, 1
  %vm7863 = vcmp.eq.s32.totalorder %v7855, 1
  %v7882 = vrot.slane %v7798, 4
  %v7883 = vrot.slane %v7800, 4
  %v7884 = vsel %vm6531, %v7882, %v7883
  %v7885 = vrot.slane %v7799, 4
  %v7886 = vrot.slane %v7801, 4
  %v7887 = vsel %vm6531, %v7885, %v7886
  %v7888 = vrot.slane %v7802, 4
  %v7889 = vsel %vm6531, %v7883, %v7888
  %v7890 = vrot.slane %v7803, 4
  %v7891 = vsel %vm6531, %v7886, %v7890
  %v7892 = vrot.slane %v7804, 4
  %v7893 = vsel %vm6531, %v7888, %v7892
  %v7894 = vrot.slane %v7805, 4
  %v7895 = vsel %vm6531, %v7890, %v7894
  %v7896 = vrot.slane %v7806, 4
  %v7897 = vsel %vm6531, %v7892, %v7896
  %v7898 = vrot.slane %v7807, 4
  %v7899 = vsel %vm6531, %v7894, %v7898
  %v7900 = vrot.slane %v7808, 4
  %v7901 = vsel %vm6531, %v7896, %v7900
  %v7902 = vrot.slane %v7809, 4
  %v7903 = vsel %vm6531, %v7898, %v7902
  %v7904 = vrot.slane %v7810, 4
  %v7905 = vsel %vm6531, %v7900, %v7904
  %v7906 = vrot.slane %v7811, 4
  %v7907 = vsel %vm6531, %v7902, %v7906
  %v7908 = vrot.slane %v7812, 4
  %v7909 = vsel %vm6531, %v7904, %v7908
  %v7910 = vrot.slane %v7813, 4
  %v7911 = vsel %vm6531, %v7906, %v7910
  %v7912 = vrot.slane %v7814, 4
  %v7913 = vsel %vm6531, %v7908, %v7912
  %v7914 = vrot.slane %v7815, 4
  %v7915 = vsel %vm6531, %v7910, %v7914
  %v7932 = vsel %vm7856, %v7884, 0.0
  %v7933 = vsel %vm7856, %v7887, 0.0
  %v7934 = vsel %vm7857, %v7889, 0.0
  %v7935 = vsel %vm7857, %v7891, 0.0
  %v7936 = vsel %vm7858, %v7893, 0.0
  %v7937 = vsel %vm7858, %v7895, 0.0
  %v7938 = vsel %vm7859, %v7897, 0.0
  %v7939 = vsel %vm7859, %v7899, 0.0
  %v7940 = vsel %vm7860, %v7901, 0.0
  %v7941 = vsel %vm7860, %v7903, 0.0
  %v7942 = vsel %vm7861, %v7905, 0.0
  %v7943 = vsel %vm7861, %v7907, 0.0
  %v7944 = vsel %vm7862, %v7909, 0.0
  %v7945 = vsel %vm7862, %v7911, 0.0
  %v7946 = vsel %vm7863, %v7913, 0.0
  %v7947 = vsel %vm7863, %v7915, 0.0
  %v7949 = vlaneseq
  %v7950 = vshrl.u32 %v7949, 7
  %v7951 = vsub.s32 0, %v7950
  %v7952 = vrot.slane %v7733, %v7951
  %v7953 = vlaneseq
  %v7954 = vshrl.u32 %v7953, 7
  %v7955 = vsub.s32 1, %v7954
  %v7956 = vrot.slane %v7733, %v7955
  %v7959 = vadd.f32 %v7952, %v7932
  %v7960 = vadd.f32 %v7956, %v7933
  %v7961 = vadd.f32 %v7952, %v7934
  %v7962 = vadd.f32 %v7956, %v7935
  %v7963 = vadd.f32 %v7952, %v7936
  %v7964 = vadd.f32 %v7956, %v7937
  %v7965 = vadd.f32 %v7952, %v7938
  %v7966 = vadd.f32 %v7956, %v7939
  %v7967 = vadd.f32 %v7952, %v7940
  %v7968 = vadd.f32 %v7956, %v7941
  %v7969 = vadd.f32 %v7952, %v7942
  %v7970 = vadd.f32 %v7956, %v7943
  %v7971 = vadd.f32 %v7952, %v7944
  %v7972 = vadd.f32 %v7956, %v7945
  %v7973 = vadd.f32 %v7952, %v7946
  %v7974 = vadd.f32 %v7956, %v7947
  %v7975 = vadd.f32 %v7959, %v7548
  %v7976 = vadd.f32 %v7960, %v7550
  %v7977 = vadd.f32 %v7961, %v7552
  %v7978 = vadd.f32 %v7962, %v7554
  %v7979 = vadd.f32 %v7963, %v7558
  %v7980 = vadd.f32 %v7964, %v7560
  %v7981 = vadd.f32 %v7965, %v7562
  %v7982 = vadd.f32 %v7966, %v7564
  %v7983 = vadd.f32 %v7967, %v7568
  %v7984 = vadd.f32 %v7968, %v7570
  %v7985 = vadd.f32 %v7969, %v7572
  %v7986 = vadd.f32 %v7970, %v7574
  %v7987 = vadd.f32 %v7971, %v7578
  %v7988 = vadd.f32 %v7972, %v7580
  %v7989 = vadd.f32 %v7973, %v7582
  %v7990 = vadd.f32 %v7974, %v7584
  %v7991 = vld [vmem:[#allocation9 + $0xa0] sm:$0xf0]
  %v7992 = vld [vmem:[#allocation9 + $0xa8] sm:$0xf0]
  %v7993 = vld [vmem:[#allocation9 + $0xe0] sm:$0xff]
  %v7994 = vld [vmem:[#allocation9 + $0xe8] sm:$0xff]
  %v7995 = vld [vmem:[#allocation9 + $0x120] sm:$0xff]
  %v7996 = vld [vmem:[#allocation9 + $0x128] sm:$0xff]
  %v7997 = vld [vmem:[#allocation9 + $0x160] sm:$0xff]
  %v7998 = vld [vmem:[#allocation9 + $0x168] sm:$0xff]
  %v7999 = vld [vmem:[#allocation9 + $0x1a0] sm:$0xff]
  %v8000 = vld [vmem:[#allocation9 + $0x1a8] sm:$0xff]
  %v8001 = vld [vmem:[#allocation9 + $0x1e0] sm:$0xff]
  %v8002 = vld [vmem:[#allocation9 + $0x1e8] sm:$0xff]
  %v8003 = vld [vmem:[#allocation9 + $0x220] sm:$0xff]
  %v8004 = vld [vmem:[#allocation9 + $0x228] sm:$0xff]
  %v8005 = vld [vmem:[#allocation9 + $0x260] sm:$0xff]
  %v8006 = vld [vmem:[#allocation9 + $0x268] sm:$0xff]
  %v8007 = vld [vmem:[#allocation9 + $0x2a0] sm:$0xf]
  %v8008 = vld [vmem:[#allocation9 + $0x2a8] sm:$0xf]
  %v8027 = vrot.slane %v7991, 4
  %v8028 = vrot.slane %v7993, 4
  %v8029 = vsel %vm6531, %v8027, %v8028
  %v8030 = vrot.slane %v7992, 4
  %v8031 = vrot.slane %v7994, 4
  %v8032 = vsel %vm6531, %v8030, %v8031
  %v8033 = vrot.slane %v7995, 4
  %v8034 = vsel %vm6531, %v8028, %v8033
  %v8035 = vrot.slane %v7996, 4
  %v8036 = vsel %vm6531, %v8031, %v8035
  %v8037 = vrot.slane %v7997, 4
  %v8038 = vsel %vm6531, %v8033, %v8037
  %v8039 = vrot.slane %v7998, 4
  %v8040 = vsel %vm6531, %v8035, %v8039
  %v8041 = vrot.slane %v7999, 4
  %v8042 = vsel %vm6531, %v8037, %v8041
  %v8043 = vrot.slane %v8000, 4
  %v8044 = vsel %vm6531, %v8039, %v8043
  %v8045 = vrot.slane %v8001, 4
  %v8046 = vsel %vm6531, %v8041, %v8045
  %v8047 = vrot.slane %v8002, 4
  %v8048 = vsel %vm6531, %v8043, %v8047
  %v8049 = vrot.slane %v8003, 4
  %v8050 = vsel %vm6531, %v8045, %v8049
  %v8051 = vrot.slane %v8004, 4
  %v8052 = vsel %vm6531, %v8047, %v8051
  %v8053 = vrot.slane %v8005, 4
  %v8054 = vsel %vm6531, %v8049, %v8053
  %v8055 = vrot.slane %v8006, 4
  %v8056 = vsel %vm6531, %v8051, %v8055
  %v8057 = vrot.slane %v8007, 4
  %v8058 = vsel %vm6531, %v8053, %v8057
  %v8059 = vrot.slane %v8008, 4
  %v8060 = vsel %vm6531, %v8055, %v8059
  %v8077 = vsel %vm6505, %v8029, 0.0
  %v8078 = vsel %vm6505, %v8032, 0.0
  %v8079 = vsel %vm6506, %v8034, 0.0
  %v8080 = vsel %vm6506, %v8036, 0.0
  %v8081 = vsel %vm6507, %v8038, 0.0
  %v8082 = vsel %vm6507, %v8040, 0.0
  %v8083 = vsel %vm6508, %v8042, 0.0
  %v8084 = vsel %vm6508, %v8044, 0.0
  %v8085 = vsel %vm6509, %v8046, 0.0
  %v8086 = vsel %vm6509, %v8048, 0.0
  %v8087 = vsel %vm6510, %v8050, 0.0
  %v8088 = vsel %vm6510, %v8052, 0.0
  %v8089 = vsel %vm6511, %v8054, 0.0
  %v8090 = vsel %vm6511, %v8056, 0.0
  %v8091 = vsel %vm6512, %v8058, 0.0
  %v8092 = vsel %vm6512, %v8060, 0.0
  %v8093 = vadd.f32 %v7975, %v8077
  %v8094 = vadd.f32 %v7976, %v8078
  %v8095 = vadd.f32 %v7977, %v8079
  %v8096 = vadd.f32 %v7978, %v8080
  %v8097 = vadd.f32 %v7979, %v8081
  %v8098 = vadd.f32 %v7980, %v8082
  %v8099 = vadd.f32 %v7981, %v8083
  %v8100 = vadd.f32 %v7982, %v8084
  %v8101 = vadd.f32 %v7983, %v8085
  %v8102 = vadd.f32 %v7984, %v8086
  %v8103 = vadd.f32 %v7985, %v8087
  %v8104 = vadd.f32 %v7986, %v8088
  %v8105 = vadd.f32 %v7987, %v8089
  %v8106 = vadd.f32 %v7988, %v8090
  %v8107 = vadd.f32 %v7989, %v8091
  %v8108 = vadd.f32 %v7990, %v8092
  %v8109 = vld [vmem:[#allocation9 + $0xf0] sm:$0xff]
  %v8110 = vld [vmem:[#allocation9 + $0xf8] sm:$0xff]
  %v8111 = vld [vmem:[#allocation9 + $0x130] sm:$0xff]
  %v8112 = vld [vmem:[#allocation9 + $0x138] sm:$0xff]
  %v8113 = vld [vmem:[#allocation9 + $0x170] sm:$0xff]
  %v8114 = vld [vmem:[#allocation9 + $0x178] sm:$0xff]
  %v8115 = vld [vmem:[#allocation9 + $0x1b0] sm:$0xff]
  %v8116 = vld [vmem:[#allocation9 + $0x1b8] sm:$0xff]
  %v8117 = vld [vmem:[#allocation9 + $0x1f0] sm:$0xff]
  %v8118 = vld [vmem:[#allocation9 + $0x1f8] sm:$0xff]
  %v8119 = vld [vmem:[#allocation9 + $0x230] sm:$0xff]
  %v8120 = vld [vmem:[#allocation9 + $0x238] sm:$0xff]
  %v8121 = vld [vmem:[#allocation9 + $0x270] sm:$0xff]
  %v8122 = vld [vmem:[#allocation9 + $0x278] sm:$0xff]
  %v8123 = vld [vmem:[#allocation9 + $0x2b0] sm:$0xff]
  %v8124 = vld [vmem:[#allocation9 + $0x2b8] sm:$0xff]
  %v8125 = vadd.s32 %v1849, 8
  %v8126 = vadd.s32 %v1850, 8
  %v8127 = vadd.s32 %v1851, 8
  %v8128 = vadd.s32 %v1852, 8
  %v8129 = vadd.s32 %v1853, 8
  %v8130 = vadd.s32 %v1854, 8
  %v8131 = vadd.s32 %v1855, 8
  %v8132 = vadd.s32 %v1856, 8
  %vm8133 = vcmp.ge.s32.totalorder %v8125, 0
  %vm8134 = vcmp.ge.s32.totalorder %v8126, 0
  %vm8135 = vcmp.ge.s32.totalorder %v8127, 0
  %vm8136 = vcmp.ge.s32.totalorder %v8128, 0
  %vm8137 = vcmp.ge.s32.totalorder %v8129, 0
  %vm8138 = vcmp.ge.s32.totalorder %v8130, 0
  %vm8139 = vcmp.ge.s32.totalorder %v8131, 0
  %vm8140 = vcmp.ge.s32.totalorder %v8132, 0
  %vm8141 = vcmp.lt.s32.totalorder %v8125, 32
  %vm8142 = vcmp.lt.s32.totalorder %v8126, 32
  %vm8143 = vcmp.lt.s32.totalorder %v8127, 32
  %vm8144 = vcmp.lt.s32.totalorder %v8128, 32
  %vm8145 = vcmp.lt.s32.totalorder %v8129, 32
  %vm8146 = vcmp.lt.s32.totalorder %v8130, 32
  %vm8147 = vcmp.lt.s32.totalorder %v8131, 32
  %vm8148 = vcmp.lt.s32.totalorder %v8132, 32
  %vm8149 = vmand %vm8133, %vm8141
  %vm8150 = vmand %vm8134, %vm8142
  %vm8151 = vmand %vm8135, %vm8143
  %vm8152 = vmand %vm8136, %vm8144
  %vm8153 = vmand %vm8137, %vm8145
  %vm8154 = vmand %vm8138, %vm8146
  %vm8155 = vmand %vm8139, %vm8147
  %vm8156 = vmand %vm8140, %vm8148
  %v8157 = vsel %vm8149, 1, 0
  %v8158 = vsel %vm8150, 1, 0
  %v8159 = vsel %vm8151, 1, 0
  %v8160 = vsel %vm8152, 1, 0
  %v8161 = vsel %vm8153, 1, 0
  %v8162 = vsel %vm8154, 1, 0
  %v8163 = vsel %vm8155, 1, 0
  %v8164 = vsel %vm8156, 1, 0
  %vm8165 = vcmp.eq.s32.totalorder %v8157, 1
  %vm8166 = vcmp.eq.s32.totalorder %v8158, 1
  %vm8167 = vcmp.eq.s32.totalorder %v8159, 1
  %vm8168 = vcmp.eq.s32.totalorder %v8160, 1
  %vm8169 = vcmp.eq.s32.totalorder %v8161, 1
  %vm8170 = vcmp.eq.s32.totalorder %v8162, 1
  %vm8171 = vcmp.eq.s32.totalorder %v8163, 1
  %vm8172 = vcmp.eq.s32.totalorder %v8164, 1
  %v8173 = vsel %vm8165, %v8109, 0.0
  %v8174 = vsel %vm8165, %v8110, 0.0
  %v8175 = vsel %vm8166, %v8111, 0.0
  %v8176 = vsel %vm8166, %v8112, 0.0
  %v8177 = vsel %vm8167, %v8113, 0.0
  %v8178 = vsel %vm8167, %v8114, 0.0
  %v8179 = vsel %vm8168, %v8115, 0.0
  %v8180 = vsel %vm8168, %v8116, 0.0
  %v8181 = vsel %vm8169, %v8117, 0.0
  %v8182 = vsel %vm8169, %v8118, 0.0
  %v8183 = vsel %vm8170, %v8119, 0.0
  %v8184 = vsel %vm8170, %v8120, 0.0
  %v8185 = vsel %vm8171, %v8121, 0.0
  %v8186 = vsel %vm8171, %v8122, 0.0
  %v8187 = vsel %vm8172, %v8123, 0.0
  %v8188 = vsel %vm8172, %v8124, 0.0
  %v8189 = vadd.f32 %v8093, %v8173
  %v8190 = vadd.f32 %v8094, %v8174
  %v8191 = vadd.f32 %v8095, %v8175
  %v8192 = vadd.f32 %v8096, %v8176
  %v8193 = vadd.f32 %v8097, %v8177
  %v8194 = vadd.f32 %v8098, %v8178
  %v8195 = vadd.f32 %v8099, %v8179
  %v8196 = vadd.f32 %v8100, %v8180
  %v8197 = vadd.f32 %v8101, %v8181
  %v8198 = vadd.f32 %v8102, %v8182
  %v8199 = vadd.f32 %v8103, %v8183
  %v8200 = vadd.f32 %v8104, %v8184
  %v8201 = vadd.f32 %v8105, %v8185
  %v8202 = vadd.f32 %v8106, %v8186
  %v8203 = vadd.f32 %v8107, %v8187
  %v8204 = vadd.f32 %v8108, %v8188
  %vm8205 = vcmp.ge.f32.partialorder %v8189, 0.0
  %vm8206 = vcmp.ge.f32.partialorder %v8190, 0.0
  %vm8207 = vcmp.ge.f32.partialorder %v8191, 0.0
  %vm8208 = vcmp.ge.f32.partialorder %v8192, 0.0
  %vm8209 = vcmp.ge.f32.partialorder %v8193, 0.0
  %vm8210 = vcmp.ge.f32.partialorder %v8194, 0.0
  %vm8211 = vcmp.ge.f32.partialorder %v8195, 0.0
  %vm8212 = vcmp.ge.f32.partialorder %v8196, 0.0
  %vm8213 = vcmp.ge.f32.partialorder %v8197, 0.0
  %vm8214 = vcmp.ge.f32.partialorder %v8198, 0.0
  %vm8215 = vcmp.ge.f32.partialorder %v8199, 0.0
  %vm8216 = vcmp.ge.f32.partialorder %v8200, 0.0
  %vm8217 = vcmp.ge.f32.partialorder %v8201, 0.0
  %vm8218 = vcmp.ge.f32.partialorder %v8202, 0.0
  %vm8219 = vcmp.ge.f32.partialorder %v8203, 0.0
  %vm8220 = vcmp.ge.f32.partialorder %v8204, 0.0
  %v8221 = vmul.f32 %v8189, 0.2
  %v8222 = vmul.f32 %v8190, 0.2
  %v8223 = vmul.f32 %v8191, 0.2
  %v8224 = vmul.f32 %v8192, 0.2
  %v8225 = vmul.f32 %v8193, 0.2
  %v8226 = vmul.f32 %v8194, 0.2
  %v8227 = vmul.f32 %v8195, 0.2
  %v8228 = vmul.f32 %v8196, 0.2
  %v8229 = vmul.f32 %v8197, 0.2
  %v8230 = vmul.f32 %v8198, 0.2
  %v8231 = vmul.f32 %v8199, 0.2
  %v8232 = vmul.f32 %v8200, 0.2
  %v8233 = vmul.f32 %v8201, 0.2
  %v8234 = vmul.f32 %v8202, 0.2
  %v8235 = vmul.f32 %v8203, 0.2
  %v8236 = vmul.f32 %v8204, 0.2
  %v8237 = vsel %vm8205, %v8189, %v8221
  %v8238 = vsel %vm8206, %v8190, %v8222
  %v8239 = vsel %vm8207, %v8191, %v8223
  %v8240 = vsel %vm8208, %v8192, %v8224
  %v8241 = vsel %vm8209, %v8193, %v8225
  %v8242 = vsel %vm8210, %v8194, %v8226
  %v8243 = vsel %vm8211, %v8195, %v8227
  %v8244 = vsel %vm8212, %v8196, %v8228
  %v8245 = vsel %vm8213, %v8197, %v8229
  %v8246 = vsel %vm8214, %v8198, %v8230
  %v8247 = vsel %vm8215, %v8199, %v8231
  %v8248 = vsel %vm8216, %v8200, %v8232
  %v8249 = vsel %vm8217, %v8201, %v8233
  %v8250 = vsel %vm8218, %v8202, %v8234
  %v8251 = vsel %vm8219, %v8203, %v8235
  %v8252 = vsel %vm8220, %v8204, %v8236
  %s8253 = sshll.u32 %s3384, 4
  %8254 = dma.done %s1220, %s8253
  %v8255 = vpack.c.bf16 %v8239, %v8237
  %v8256 = vpack.c.bf16 %v8240, %v8238
  %v8257 = vpack.c.bf16 %v8243, %v8241
  %v8258 = vpack.c.bf16 %v8244, %v8242
  %v8259 = vpack.c.bf16 %v8247, %v8245
  %v8260 = vpack.c.bf16 %v8248, %v8246
  %v8261 = vpack.c.bf16 %v8251, %v8249
  %v8262 = vpack.c.bf16 %v8252, %v8250
  %v8263 = vld [vmem:[#allocation7] sm:$0xff]
  %v8264 = vld [vmem:[#allocation7 + $0x8] sm:$0xff]
  %v8265 = vld [vmem:[#allocation7 + $0x10] sm:$0xff]
  %v8266 = vld [vmem:[#allocation7 + $0x18] sm:$0xff]
  %v8267 = vld [vmem:[#allocation7 + $0x20] sm:$0xff]
  %v8268 = vld [vmem:[#allocation7 + $0x28] sm:$0xff]
  %v8269 = vld [vmem:[#allocation7 + $0x30] sm:$0xff]
  %v8270 = vld [vmem:[#allocation7 + $0x38] sm:$0xff]
  %v8271 = vld [vmem:[#allocation7 + $0x40] sm:$0xff]
  %v8272 = vld [vmem:[#allocation7 + $0x48] sm:$0xff]
  %v8273 = vld [vmem:[#allocation7 + $0x50] sm:$0xff]
  %v8274 = vld [vmem:[#allocation7 + $0x58] sm:$0xff]
  %v8275 = vld [vmem:[#allocation7 + $0x60] sm:$0xff]
  %v8276 = vld [vmem:[#allocation7 + $0x68] sm:$0xff]
  %v8277 = vld [vmem:[#allocation7 + $0x70] sm:$0xff]
  %v8278 = vld [vmem:[#allocation7 + $0x78] sm:$0xff]
  %v8279 = vld [vmem:[#allocation7 + $0x80] sm:$0xff]
  %v8280 = vld [vmem:[#allocation7 + $0x88] sm:$0xff]
  %v8281 = vld [vmem:[#allocation7 + $0x90] sm:$0xff]
  %v8282 = vld [vmem:[#allocation7 + $0x98] sm:$0xff]
  %v8283 = vld [vmem:[#allocation7 + $0xa0] sm:$0xff]
  %v8284 = vld [vmem:[#allocation7 + $0xa8] sm:$0xff]
  %v8285 = vld [vmem:[#allocation7 + $0xb0] sm:$0xff]
  %v8286 = vld [vmem:[#allocation7 + $0xb8] sm:$0xff]
  %v8287 = vld [vmem:[#allocation7 + $0xc0] sm:$0xff]
  %v8288 = vld [vmem:[#allocation7 + $0xc8] sm:$0xff]
  %v8289 = vld [vmem:[#allocation7 + $0xd0] sm:$0xff]
  %v8290 = vld [vmem:[#allocation7 + $0xd8] sm:$0xff]
  %v8291 = vld [vmem:[#allocation7 + $0xe0] sm:$0xff]
  %v8292 = vld [vmem:[#allocation7 + $0xe8] sm:$0xff]
  %v8293 = vld [vmem:[#allocation7 + $0xf0] sm:$0xff]
  %v8294 = vld [vmem:[#allocation7 + $0xf8] sm:$0xff]
  %v8295 = vld [vmem:[#allocation7 + $0x100] sm:$0xff]
  %v8296 = vld [vmem:[#allocation7 + $0x108] sm:$0xff]
  %v8297 = vld [vmem:[#allocation7 + $0x110] sm:$0xff]
  %v8298 = vld [vmem:[#allocation7 + $0x118] sm:$0xff]
  %v8299 = vld [vmem:[#allocation7 + $0x120] sm:$0xff]
  %v8300 = vld [vmem:[#allocation7 + $0x128] sm:$0xff]
  %v8301 = vld [vmem:[#allocation7 + $0x130] sm:$0xff]
  %v8302 = vld [vmem:[#allocation7 + $0x138] sm:$0xff]
  %v8303 = vld [vmem:[#allocation7 + $0x140] sm:$0xff]
  %v8304 = vld [vmem:[#allocation7 + $0x148] sm:$0xff]
  %v8305 = vld [vmem:[#allocation7 + $0x150] sm:$0xff]
  %v8306 = vld [vmem:[#allocation7 + $0x158] sm:$0xff]
  %v8307 = vld [vmem:[#allocation7 + $0x160] sm:$0xff]
  %v8308 = vld [vmem:[#allocation7 + $0x168] sm:$0xff]
  %v8309 = vld [vmem:[#allocation7 + $0x170] sm:$0xff]
  %v8310 = vld [vmem:[#allocation7 + $0x178] sm:$0xff]
  %v8311 = vld [vmem:[#allocation7 + $0x180] sm:$0xff]
  %v8312 = vld [vmem:[#allocation7 + $0x188] sm:$0xff]
  %v8313 = vld [vmem:[#allocation7 + $0x190] sm:$0xff]
  %v8314 = vld [vmem:[#allocation7 + $0x198] sm:$0xff]
  %v8315 = vld [vmem:[#allocation7 + $0x1a0] sm:$0xff]
  %v8316 = vld [vmem:[#allocation7 + $0x1a8] sm:$0xff]
  %v8317 = vld [vmem:[#allocation7 + $0x1b0] sm:$0xff]
  %v8318 = vld [vmem:[#allocation7 + $0x1b8] sm:$0xff]
  %v8319 = vld [vmem:[#allocation7 + $0x1c0] sm:$0xff]
  %v8320 = vld [vmem:[#allocation7 + $0x1c8] sm:$0xff]
  %v8321 = vld [vmem:[#allocation7 + $0x1d0] sm:$0xff]
  %v8322 = vld [vmem:[#allocation7 + $0x1d8] sm:$0xff]
  %v8323 = vld [vmem:[#allocation7 + $0x1e0] sm:$0xff]
  %v8324 = vld [vmem:[#allocation7 + $0x1e8] sm:$0xff]
  %v8325 = vld [vmem:[#allocation7 + $0x1f0] sm:$0xff]
  %v8326 = vld [vmem:[#allocation7 + $0x1f8] sm:$0xff]
  %v8327 = vld [vmem:[#allocation7 + $0x200] sm:$0xff]
  %v8328 = vld [vmem:[#allocation7 + $0x208] sm:$0xff]
  %v8329 = vld [vmem:[#allocation7 + $0x210] sm:$0xff]
  %v8330 = vld [vmem:[#allocation7 + $0x218] sm:$0xff]
  %v8331 = vld [vmem:[#allocation7 + $0x220] sm:$0xff]
  %v8332 = vld [vmem:[#allocation7 + $0x228] sm:$0xff]
  %v8333 = vld [vmem:[#allocation7 + $0x230] sm:$0xff]
  %v8334 = vld [vmem:[#allocation7 + $0x238] sm:$0xff]
  %v8335 = vld [vmem:[#allocation7 + $0x240] sm:$0xff]
  %v8336 = vld [vmem:[#allocation7 + $0x248] sm:$0xff]
  %v8337 = vld [vmem:[#allocation7 + $0x250] sm:$0xff]
  %v8338 = vld [vmem:[#allocation7 + $0x258] sm:$0xff]
  %v8339 = vld [vmem:[#allocation7 + $0x260] sm:$0xff]
  %v8340 = vld [vmem:[#allocation7 + $0x268] sm:$0xff]
  %v8341 = vld [vmem:[#allocation7 + $0x270] sm:$0xff]
  %v8342 = vld [vmem:[#allocation7 + $0x278] sm:$0xff]
  %v8343 = vld [vmem:[#allocation7 + $0x280] sm:$0xff]
  %v8344 = vld [vmem:[#allocation7 + $0x288] sm:$0xff]
  %v8345 = vld [vmem:[#allocation7 + $0x290] sm:$0xff]
  %v8346 = vld [vmem:[#allocation7 + $0x298] sm:$0xff]
  %v8347 = vld [vmem:[#allocation7 + $0x2a0] sm:$0xff]
  %v8348 = vld [vmem:[#allocation7 + $0x2a8] sm:$0xff]
  %v8349 = vld [vmem:[#allocation7 + $0x2b0] sm:$0xff]
  %v8350 = vld [vmem:[#allocation7 + $0x2b8] sm:$0xff]
  %v8351 = vld [vmem:[#allocation7 + $0x2c0] sm:$0xff]
  %v8352 = vld [vmem:[#allocation7 + $0x2c8] sm:$0xff]
  %v8353 = vld [vmem:[#allocation7 + $0x2d0] sm:$0xff]
  %v8354 = vld [vmem:[#allocation7 + $0x2d8] sm:$0xff]
  %v8355 = vld [vmem:[#allocation7 + $0x2e0] sm:$0xff]
  %v8356 = vld [vmem:[#allocation7 + $0x2e8] sm:$0xff]
  %v8357 = vld [vmem:[#allocation7 + $0x2f0] sm:$0xff]
  %v8358 = vld [vmem:[#allocation7 + $0x2f8] sm:$0xff]
  %v8359 = vld [vmem:[#allocation7 + $0x300] sm:$0xff]
  %v8360 = vld [vmem:[#allocation7 + $0x308] sm:$0xff]
  %v8361 = vld [vmem:[#allocation7 + $0x310] sm:$0xff]
  %v8362 = vld [vmem:[#allocation7 + $0x318] sm:$0xff]
  %v8363 = vld [vmem:[#allocation7 + $0x320] sm:$0xff]
  %v8364 = vld [vmem:[#allocation7 + $0x328] sm:$0xff]
  %v8365 = vld [vmem:[#allocation7 + $0x330] sm:$0xff]
  %v8366 = vld [vmem:[#allocation7 + $0x338] sm:$0xff]
  %v8367 = vld [vmem:[#allocation7 + $0x340] sm:$0xff]
  %v8368 = vld [vmem:[#allocation7 + $0x348] sm:$0xff]
  %v8369 = vld [vmem:[#allocation7 + $0x350] sm:$0xff]
  %v8370 = vld [vmem:[#allocation7 + $0x358] sm:$0xff]
  %v8371 = vld [vmem:[#allocation7 + $0x360] sm:$0xff]
  %v8372 = vld [vmem:[#allocation7 + $0x368] sm:$0xff]
  %v8373 = vld [vmem:[#allocation7 + $0x370] sm:$0xff]
  %v8374 = vld [vmem:[#allocation7 + $0x378] sm:$0xff]
  %v8375 = vld [vmem:[#allocation7 + $0x380] sm:$0xff]
  %v8376 = vld [vmem:[#allocation7 + $0x388] sm:$0xff]
  %v8377 = vld [vmem:[#allocation7 + $0x390] sm:$0xff]
  %v8378 = vld [vmem:[#allocation7 + $0x398] sm:$0xff]
  %v8379 = vld [vmem:[#allocation7 + $0x3a0] sm:$0xff]
  %v8380 = vld [vmem:[#allocation7 + $0x3a8] sm:$0xff]
  %v8381 = vld [vmem:[#allocation7 + $0x3b0] sm:$0xff]
  %v8382 = vld [vmem:[#allocation7 + $0x3b8] sm:$0xff]
  %v8383 = vld [vmem:[#allocation7 + $0x3c0] sm:$0xff]
  %v8384 = vld [vmem:[#allocation7 + $0x3c8] sm:$0xff]
  %v8385 = vld [vmem:[#allocation7 + $0x3d0] sm:$0xff]
  %v8386 = vld [vmem:[#allocation7 + $0x3d8] sm:$0xff]
  %v8387 = vld [vmem:[#allocation7 + $0x3e0] sm:$0xff]
  %v8388 = vld [vmem:[#allocation7 + $0x3e8] sm:$0xff]
  %v8389 = vld [vmem:[#allocation7 + $0x3f0] sm:$0xff]
  %v8390 = vld [vmem:[#allocation7 + $0x3f8] sm:$0xff]
  %v8519 = vunpack.c.l.b16 %v8263
  %v8520 = vunpack.c.h.b16 %v8263
  %v8521 = vunpack.c.l.b16 %v8264
  %v8522 = vunpack.c.h.b16 %v8264
  %v8523 = vunpack.c.l.b16 %v8265
  %v8524 = vunpack.c.h.b16 %v8265
  %v8525 = vunpack.c.l.b16 %v8266
  %v8526 = vunpack.c.h.b16 %v8266
  %v8527 = vunpack.c.l.b16 %v8267
  %v8528 = vunpack.c.h.b16 %v8267
  %v8529 = vunpack.c.l.b16 %v8268
  %v8530 = vunpack.c.h.b16 %v8268
  %v8531 = vunpack.c.l.b16 %v8269
  %v8532 = vunpack.c.h.b16 %v8269
  %v8533 = vunpack.c.l.b16 %v8270
  %v8534 = vunpack.c.h.b16 %v8270
  %v8535 = vunpack.c.l.b16 %v8271
  %v8536 = vunpack.c.h.b16 %v8271
  %v8537 = vunpack.c.l.b16 %v8272
  %v8538 = vunpack.c.h.b16 %v8272
  %v8539 = vunpack.c.l.b16 %v8273
  %v8540 = vunpack.c.h.b16 %v8273
  %v8541 = vunpack.c.l.b16 %v8274
  %v8542 = vunpack.c.h.b16 %v8274
  %v8543 = vunpack.c.l.b16 %v8275
  %v8544 = vunpack.c.h.b16 %v8275
  %v8545 = vunpack.c.l.b16 %v8276
  %v8546 = vunpack.c.h.b16 %v8276
  %v8547 = vunpack.c.l.b16 %v8277
  %v8548 = vunpack.c.h.b16 %v8277
  %v8549 = vunpack.c.l.b16 %v8278
  %v8550 = vunpack.c.h.b16 %v8278
  %v8551 = vunpack.c.l.b16 %v8279
  %v8552 = vunpack.c.h.b16 %v8279
  %v8553 = vunpack.c.l.b16 %v8280
  %v8554 = vunpack.c.h.b16 %v8280
  %v8555 = vunpack.c.l.b16 %v8281
  %v8556 = vunpack.c.h.b16 %v8281
  %v8557 = vunpack.c.l.b16 %v8282
  %v8558 = vunpack.c.h.b16 %v8282
  %v8559 = vunpack.c.l.b16 %v8283
  %v8560 = vunpack.c.h.b16 %v8283
  %v8561 = vunpack.c.l.b16 %v8284
  %v8562 = vunpack.c.h.b16 %v8284
  %v8563 = vunpack.c.l.b16 %v8285
  %v8564 = vunpack.c.h.b16 %v8285
  %v8565 = vunpack.c.l.b16 %v8286
  %v8566 = vunpack.c.h.b16 %v8286
  %v8567 = vunpack.c.l.b16 %v8287
  %v8568 = vunpack.c.h.b16 %v8287
  %v8569 = vunpack.c.l.b16 %v8288
  %v8570 = vunpack.c.h.b16 %v8288
  %v8571 = vunpack.c.l.b16 %v8289
  %v8572 = vunpack.c.h.b16 %v8289
  %v8573 = vunpack.c.l.b16 %v8290
  %v8574 = vunpack.c.h.b16 %v8290
  %v8575 = vunpack.c.l.b16 %v8291
  %v8576 = vunpack.c.h.b16 %v8291
  %v8577 = vunpack.c.l.b16 %v8292
  %v8578 = vunpack.c.h.b16 %v8292
  %v8579 = vunpack.c.l.b16 %v8293
  %v8580 = vunpack.c.h.b16 %v8293
  %v8581 = vunpack.c.l.b16 %v8294
  %v8582 = vunpack.c.h.b16 %v8294
  %v8583 = vunpack.c.l.b16 %v8295
  %v8584 = vunpack.c.h.b16 %v8295
  %v8585 = vunpack.c.l.b16 %v8296
  %v8586 = vunpack.c.h.b16 %v8296
  %v8587 = vunpack.c.l.b16 %v8297
  %v8588 = vunpack.c.h.b16 %v8297
  %v8589 = vunpack.c.l.b16 %v8298
  %v8590 = vunpack.c.h.b16 %v8298
  %v8591 = vunpack.c.l.b16 %v8299
  %v8592 = vunpack.c.h.b16 %v8299
  %v8593 = vunpack.c.l.b16 %v8300
  %v8594 = vunpack.c.h.b16 %v8300
  %v8595 = vunpack.c.l.b16 %v8301
  %v8596 = vunpack.c.h.b16 %v8301
  %v8597 = vunpack.c.l.b16 %v8302
  %v8598 = vunpack.c.h.b16 %v8302
  %v8599 = vunpack.c.l.b16 %v8303
  %v8600 = vunpack.c.h.b16 %v8303
  %v8601 = vunpack.c.l.b16 %v8304
  %v8602 = vunpack.c.h.b16 %v8304
  %v8603 = vunpack.c.l.b16 %v8305
  %v8604 = vunpack.c.h.b16 %v8305
  %v8605 = vunpack.c.l.b16 %v8306
  %v8606 = vunpack.c.h.b16 %v8306
  %v8607 = vunpack.c.l.b16 %v8307
  %v8608 = vunpack.c.h.b16 %v8307
  %v8609 = vunpack.c.l.b16 %v8308
  %v8610 = vunpack.c.h.b16 %v8308
  %v8611 = vunpack.c.l.b16 %v8309
  %v8612 = vunpack.c.h.b16 %v8309
  %v8613 = vunpack.c.l.b16 %v8310
  %v8614 = vunpack.c.h.b16 %v8310
  %v8615 = vunpack.c.l.b16 %v8311
  %v8616 = vunpack.c.h.b16 %v8311
  %v8617 = vunpack.c.l.b16 %v8312
  %v8618 = vunpack.c.h.b16 %v8312
  %v8619 = vunpack.c.l.b16 %v8313
  %v8620 = vunpack.c.h.b16 %v8313
  %v8621 = vunpack.c.l.b16 %v8314
  %v8622 = vunpack.c.h.b16 %v8314
  %v8623 = vunpack.c.l.b16 %v8315
  %v8624 = vunpack.c.h.b16 %v8315
  %v8625 = vunpack.c.l.b16 %v8316
  %v8626 = vunpack.c.h.b16 %v8316
  %v8627 = vunpack.c.l.b16 %v8317
  %v8628 = vunpack.c.h.b16 %v8317
  %v8629 = vunpack.c.l.b16 %v8318
  %v8630 = vunpack.c.h.b16 %v8318
  %v8631 = vunpack.c.l.b16 %v8319
  %v8632 = vunpack.c.h.b16 %v8319
  %v8633 = vunpack.c.l.b16 %v8320
  %v8634 = vunpack.c.h.b16 %v8320
  %v8635 = vunpack.c.l.b16 %v8321
  %v8636 = vunpack.c.h.b16 %v8321
  %v8637 = vunpack.c.l.b16 %v8322
  %v8638 = vunpack.c.h.b16 %v8322
  %v8639 = vunpack.c.l.b16 %v8323
  %v8640 = vunpack.c.h.b16 %v8323
  %v8641 = vunpack.c.l.b16 %v8324
  %v8642 = vunpack.c.h.b16 %v8324
  %v8643 = vunpack.c.l.b16 %v8325
  %v8644 = vunpack.c.h.b16 %v8325
  %v8645 = vunpack.c.l.b16 %v8326
  %v8646 = vunpack.c.h.b16 %v8326
  %v8647 = vunpack.c.l.b16 %v8327
  %v8648 = vunpack.c.h.b16 %v8327
  %v8649 = vunpack.c.l.b16 %v8328
  %v8650 = vunpack.c.h.b16 %v8328
  %v8651 = vunpack.c.l.b16 %v8329
  %v8652 = vunpack.c.h.b16 %v8329
  %v8653 = vunpack.c.l.b16 %v8330
  %v8654 = vunpack.c.h.b16 %v8330
  %v8655 = vunpack.c.l.b16 %v8331
  %v8656 = vunpack.c.h.b16 %v8331
  %v8657 = vunpack.c.l.b16 %v8332
  %v8658 = vunpack.c.h.b16 %v8332
  %v8659 = vunpack.c.l.b16 %v8333
  %v8660 = vunpack.c.h.b16 %v8333
  %v8661 = vunpack.c.l.b16 %v8334
  %v8662 = vunpack.c.h.b16 %v8334
  %v8663 = vunpack.c.l.b16 %v8335
  %v8664 = vunpack.c.h.b16 %v8335
  %v8665 = vunpack.c.l.b16 %v8336
  %v8666 = vunpack.c.h.b16 %v8336
  %v8667 = vunpack.c.l.b16 %v8337
  %v8668 = vunpack.c.h.b16 %v8337
  %v8669 = vunpack.c.l.b16 %v8338
  %v8670 = vunpack.c.h.b16 %v8338
  %v8671 = vunpack.c.l.b16 %v8339
  %v8672 = vunpack.c.h.b16 %v8339
  %v8673 = vunpack.c.l.b16 %v8340
  %v8674 = vunpack.c.h.b16 %v8340
  %v8675 = vunpack.c.l.b16 %v8341
  %v8676 = vunpack.c.h.b16 %v8341
  %v8677 = vunpack.c.l.b16 %v8342
  %v8678 = vunpack.c.h.b16 %v8342
  %v8679 = vunpack.c.l.b16 %v8343
  %v8680 = vunpack.c.h.b16 %v8343
  %v8681 = vunpack.c.l.b16 %v8344
  %v8682 = vunpack.c.h.b16 %v8344
  %v8683 = vunpack.c.l.b16 %v8345
  %v8684 = vunpack.c.h.b16 %v8345
  %v8685 = vunpack.c.l.b16 %v8346
  %v8686 = vunpack.c.h.b16 %v8346
  %v8687 = vunpack.c.l.b16 %v8347
  %v8688 = vunpack.c.h.b16 %v8347
  %v8689 = vunpack.c.l.b16 %v8348
  %v8690 = vunpack.c.h.b16 %v8348
  %v8691 = vunpack.c.l.b16 %v8349
  %v8692 = vunpack.c.h.b16 %v8349
  %v8693 = vunpack.c.l.b16 %v8350
  %v8694 = vunpack.c.h.b16 %v8350
  %v8695 = vunpack.c.l.b16 %v8351
  %v8696 = vunpack.c.h.b16 %v8351
  %v8697 = vunpack.c.l.b16 %v8352
  %v8698 = vunpack.c.h.b16 %v8352
  %v8699 = vunpack.c.l.b16 %v8353
  %v8700 = vunpack.c.h.b16 %v8353
  %v8701 = vunpack.c.l.b16 %v8354
  %v8702 = vunpack.c.h.b16 %v8354
  %v8703 = vunpack.c.l.b16 %v8355
  %v8704 = vunpack.c.h.b16 %v8355
  %v8705 = vunpack.c.l.b16 %v8356
  %v8706 = vunpack.c.h.b16 %v8356
  %v8707 = vunpack.c.l.b16 %v8357
  %v8708 = vunpack.c.h.b16 %v8357
  %v8709 = vunpack.c.l.b16 %v8358
  %v8710 = vunpack.c.h.b16 %v8358
  %v8711 = vunpack.c.l.b16 %v8359
  %v8712 = vunpack.c.h.b16 %v8359
  %v8713 = vunpack.c.l.b16 %v8360
  %v8714 = vunpack.c.h.b16 %v8360
  %v8715 = vunpack.c.l.b16 %v8361
  %v8716 = vunpack.c.h.b16 %v8361
  %v8717 = vunpack.c.l.b16 %v8362
  %v8718 = vunpack.c.h.b16 %v8362
  %v8719 = vunpack.c.l.b16 %v8363
  %v8720 = vunpack.c.h.b16 %v8363
  %v8721 = vunpack.c.l.b16 %v8364
  %v8722 = vunpack.c.h.b16 %v8364
  %v8723 = vunpack.c.l.b16 %v8365
  %v8724 = vunpack.c.h.b16 %v8365
  %v8725 = vunpack.c.l.b16 %v8366
  %v8726 = vunpack.c.h.b16 %v8366
  %v8727 = vunpack.c.l.b16 %v8367
  %v8728 = vunpack.c.h.b16 %v8367
  %v8729 = vunpack.c.l.b16 %v8368
  %v8730 = vunpack.c.h.b16 %v8368
  %v8731 = vunpack.c.l.b16 %v8369
  %v8732 = vunpack.c.h.b16 %v8369
  %v8733 = vunpack.c.l.b16 %v8370
  %v8734 = vunpack.c.h.b16 %v8370
  %v8735 = vunpack.c.l.b16 %v8371
  %v8736 = vunpack.c.h.b16 %v8371
  %v8737 = vunpack.c.l.b16 %v8372
  %v8738 = vunpack.c.h.b16 %v8372
  %v8739 = vunpack.c.l.b16 %v8373
  %v8740 = vunpack.c.h.b16 %v8373
  %v8741 = vunpack.c.l.b16 %v8374
  %v8742 = vunpack.c.h.b16 %v8374
  %v8743 = vunpack.c.l.b16 %v8375
  %v8744 = vunpack.c.h.b16 %v8375
  %v8745 = vunpack.c.l.b16 %v8376
  %v8746 = vunpack.c.h.b16 %v8376
  %v8747 = vunpack.c.l.b16 %v8377
  %v8748 = vunpack.c.h.b16 %v8377
  %v8749 = vunpack.c.l.b16 %v8378
  %v8750 = vunpack.c.h.b16 %v8378
  %v8751 = vunpack.c.l.b16 %v8379
  %v8752 = vunpack.c.h.b16 %v8379
  %v8753 = vunpack.c.l.b16 %v8380
  %v8754 = vunpack.c.h.b16 %v8380
  %v8755 = vunpack.c.l.b16 %v8381
  %v8756 = vunpack.c.h.b16 %v8381
  %v8757 = vunpack.c.l.b16 %v8382
  %v8758 = vunpack.c.h.b16 %v8382
  %v8759 = vunpack.c.l.b16 %v8383
  %v8760 = vunpack.c.h.b16 %v8383
  %v8761 = vunpack.c.l.b16 %v8384
  %v8762 = vunpack.c.h.b16 %v8384
  %v8763 = vunpack.c.l.b16 %v8385
  %v8764 = vunpack.c.h.b16 %v8385
  %v8765 = vunpack.c.l.b16 %v8386
  %v8766 = vunpack.c.h.b16 %v8386
  %v8767 = vunpack.c.l.b16 %v8387
  %v8768 = vunpack.c.h.b16 %v8387
  %v8769 = vunpack.c.l.b16 %v8388
  %v8770 = vunpack.c.h.b16 %v8388
  %v8771 = vunpack.c.l.b16 %v8389
  %v8772 = vunpack.c.h.b16 %v8389
  %v8773 = vunpack.c.l.b16 %v8390
  %v8774 = vunpack.c.h.b16 %v8390
  %v8775 = vpack.c.b16 %v8527, %v8519
  %v8776 = vpack.c.b16 %v8528, %v8520
  %v8777 = vpack.c.b16 %v8529, %v8521
  %v8778 = vpack.c.b16 %v8530, %v8522
  %v8779 = vpack.c.b16 %v8531, %v8523
  %v8780 = vpack.c.b16 %v8532, %v8524
  %v8781 = vpack.c.b16 %v8533, %v8525
  %v8782 = vpack.c.b16 %v8534, %v8526
  %v8783 = vpack.c.b16 %v8543, %v8535
  %v8784 = vpack.c.b16 %v8544, %v8536
  %v8785 = vpack.c.b16 %v8545, %v8537
  %v8786 = vpack.c.b16 %v8546, %v8538
  %v8787 = vpack.c.b16 %v8547, %v8539
  %v8788 = vpack.c.b16 %v8548, %v8540
  %v8789 = vpack.c.b16 %v8549, %v8541
  %v8790 = vpack.c.b16 %v8550, %v8542
  %v8791 = vpack.c.b16 %v8559, %v8551
  %v8792 = vpack.c.b16 %v8560, %v8552
  %v8793 = vpack.c.b16 %v8561, %v8553
  %v8794 = vpack.c.b16 %v8562, %v8554
  %v8795 = vpack.c.b16 %v8563, %v8555
  %v8796 = vpack.c.b16 %v8564, %v8556
  %v8797 = vpack.c.b16 %v8565, %v8557
  %v8798 = vpack.c.b16 %v8566, %v8558
  %v8799 = vpack.c.b16 %v8575, %v8567
  %v8800 = vpack.c.b16 %v8576, %v8568
  %v8801 = vpack.c.b16 %v8577, %v8569
  %v8802 = vpack.c.b16 %v8578, %v8570
  %v8803 = vpack.c.b16 %v8579, %v8571
  %v8804 = vpack.c.b16 %v8580, %v8572
  %v8805 = vpack.c.b16 %v8581, %v8573
  %v8806 = vpack.c.b16 %v8582, %v8574
  %v8807 = vpack.c.b16 %v8591, %v8583
  %v8808 = vpack.c.b16 %v8592, %v8584
  %v8809 = vpack.c.b16 %v8593, %v8585
  %v8810 = vpack.c.b16 %v8594, %v8586
  %v8811 = vpack.c.b16 %v8595, %v8587
  %v8812 = vpack.c.b16 %v8596, %v8588
  %v8813 = vpack.c.b16 %v8597, %v8589
  %v8814 = vpack.c.b16 %v8598, %v8590
  %v8815 = vpack.c.b16 %v8607, %v8599
  %v8816 = vpack.c.b16 %v8608, %v8600
  %v8817 = vpack.c.b16 %v8609, %v8601
  %v8818 = vpack.c.b16 %v8610, %v8602
  %v8819 = vpack.c.b16 %v8611, %v8603
  %v8820 = vpack.c.b16 %v8612, %v8604
  %v8821 = vpack.c.b16 %v8613, %v8605
  %v8822 = vpack.c.b16 %v8614, %v8606
  %v8823 = vpack.c.b16 %v8623, %v8615
  %v8824 = vpack.c.b16 %v8624, %v8616
  %v8825 = vpack.c.b16 %v8625, %v8617
  %v8826 = vpack.c.b16 %v8626, %v8618
  %v8827 = vpack.c.b16 %v8627, %v8619
  %v8828 = vpack.c.b16 %v8628, %v8620
  %v8829 = vpack.c.b16 %v8629, %v8621
  %v8830 = vpack.c.b16 %v8630, %v8622
  %v8831 = vpack.c.b16 %v8639, %v8631
  %v8832 = vpack.c.b16 %v8640, %v8632
  %v8833 = vpack.c.b16 %v8641, %v8633
  %v8834 = vpack.c.b16 %v8642, %v8634
  %v8835 = vpack.c.b16 %v8643, %v8635
  %v8836 = vpack.c.b16 %v8644, %v8636
  %v8837 = vpack.c.b16 %v8645, %v8637
  %v8838 = vpack.c.b16 %v8646, %v8638
  %v8839 = vpack.c.b16 %v8655, %v8647
  %v8840 = vpack.c.b16 %v8656, %v8648
  %v8841 = vpack.c.b16 %v8657, %v8649
  %v8842 = vpack.c.b16 %v8658, %v8650
  %v8843 = vpack.c.b16 %v8659, %v8651
  %v8844 = vpack.c.b16 %v8660, %v8652
  %v8845 = vpack.c.b16 %v8661, %v8653
  %v8846 = vpack.c.b16 %v8662, %v8654
  %v8847 = vpack.c.b16 %v8671, %v8663
  %v8848 = vpack.c.b16 %v8672, %v8664
  %v8849 = vpack.c.b16 %v8673, %v8665
  %v8850 = vpack.c.b16 %v8674, %v8666
  %v8851 = vpack.c.b16 %v8675, %v8667
  %v8852 = vpack.c.b16 %v8676, %v8668
  %v8853 = vpack.c.b16 %v8677, %v8669
  %v8854 = vpack.c.b16 %v8678, %v8670
  %v8855 = vpack.c.b16 %v8687, %v8679
  %v8856 = vpack.c.b16 %v8688, %v8680
  %v8857 = vpack.c.b16 %v8689, %v8681
  %v8858 = vpack.c.b16 %v8690, %v8682
  %v8859 = vpack.c.b16 %v8691, %v8683
  %v8860 = vpack.c.b16 %v8692, %v8684
  %v8861 = vpack.c.b16 %v8693, %v8685
  %v8862 = vpack.c.b16 %v8694, %v8686
  %v8863 = vpack.c.b16 %v8703, %v8695
  %v8864 = vpack.c.b16 %v8704, %v8696
  %v8865 = vpack.c.b16 %v8705, %v8697
  %v8866 = vpack.c.b16 %v8706, %v8698
  %v8867 = vpack.c.b16 %v8707, %v8699
  %v8868 = vpack.c.b16 %v8708, %v8700
  %v8869 = vpack.c.b16 %v8709, %v8701
  %v8870 = vpack.c.b16 %v8710, %v8702
  %v8871 = vpack.c.b16 %v8719, %v8711
  %v8872 = vpack.c.b16 %v8720, %v8712
  %v8873 = vpack.c.b16 %v8721, %v8713
  %v8874 = vpack.c.b16 %v8722, %v8714
  %v8875 = vpack.c.b16 %v8723, %v8715
  %v8876 = vpack.c.b16 %v8724, %v8716
  %v8877 = vpack.c.b16 %v8725, %v8717
  %v8878 = vpack.c.b16 %v8726, %v8718
  %v8879 = vpack.c.b16 %v8735, %v8727
  %v8880 = vpack.c.b16 %v8736, %v8728
  %v8881 = vpack.c.b16 %v8737, %v8729
  %v8882 = vpack.c.b16 %v8738, %v8730
  %v8883 = vpack.c.b16 %v8739, %v8731
  %v8884 = vpack.c.b16 %v8740, %v8732
  %v8885 = vpack.c.b16 %v8741, %v8733
  %v8886 = vpack.c.b16 %v8742, %v8734
  %v8887 = vpack.c.b16 %v8751, %v8743
  %v8888 = vpack.c.b16 %v8752, %v8744
  %v8889 = vpack.c.b16 %v8753, %v8745
  %v8890 = vpack.c.b16 %v8754, %v8746
  %v8891 = vpack.c.b16 %v8755, %v8747
  %v8892 = vpack.c.b16 %v8756, %v8748
  %v8893 = vpack.c.b16 %v8757, %v8749
  %v8894 = vpack.c.b16 %v8758, %v8750
  %v8895 = vpack.c.b16 %v8767, %v8759
  %v8896 = vpack.c.b16 %v8768, %v8760
  %v8897 = vpack.c.b16 %v8769, %v8761
  %v8898 = vpack.c.b16 %v8770, %v8762
  %v8899 = vpack.c.b16 %v8771, %v8763
  %v8900 = vpack.c.b16 %v8772, %v8764
  %v8901 = vpack.c.b16 %v8773, %v8765
  %v8902 = vpack.c.b16 %v8774, %v8766
  %9031 = vmatprep.subr.bf16.mxu0 %v8832
  %9032 = vmatpush1.bf16.msra.mxu0 %v8831
  %9033 = vmatprep.subr.bf16.mxu0 %v8824
  %9034 = vmatpush1.bf16.msra.mxu0 %v8823
  %9035 = vmatprep.subr.bf16.mxu0 %v8816
  %9036 = vmatpush1.bf16.msra.mxu0 %v8815
  %9037 = vmatprep.subr.bf16.mxu0 %v8808
  %9038 = vmatpush1.bf16.msra.mxu0 %v8807
  %9039 = vmatprep.subr.bf16.mxu0 %v8800
  %9040 = vmatpush1.bf16.msra.mxu0 %v8799
  %9041 = vmatprep.subr.bf16.mxu0 %v8792
  %9042 = vmatpush1.bf16.msra.mxu0 %v8791
  %9043 = vmatprep.subr.bf16.mxu0 %v8784
  %9044 = vmatpush1.bf16.msra.mxu0 %v8783
  %9045 = vmatprep.subr.bf16.mxu0 %v8776
  %9046 = vmatpush1.bf16.msra.mxu0 %v8775
  %9047 = vmatprep.subr.bf16.mxu0 %v8896
  %9048 = vmatpush2.bf16.msra.mxu0 %v8895
  %9049 = vmatprep.subr.bf16.mxu0 %v8888
  %9050 = vmatpush2.bf16.msra.mxu0 %v8887
  %9051 = vmatprep.subr.bf16.mxu0 %v8880
  %9052 = vmatpush2.bf16.msra.mxu0 %v8879
  %9053 = vmatprep.subr.bf16.mxu0 %v8872
  %9054 = vmatpush2.bf16.msra.mxu0 %v8871
  %9055 = vmatprep.subr.bf16.mxu0 %v8864
  %9056 = vmatpush2.bf16.msra.mxu0 %v8863
  %9057 = vmatprep.subr.bf16.mxu0 %v8856
  %9058 = vmatpush2.bf16.msra.mxu0 %v8855
  %9059 = vmatprep.subr.bf16.mxu0 %v8848
  %9060 = vmatpush2.bf16.msra.mxu0 %v8847
  %9061 = vmatprep.subr.bf16.mxu0 %v8840
  %9062 = vmatpush2.bf16.msra.mxu0 %v8839
  %9063 = vmatprep.mubr.bf16.mxu0 %v8256
  %9064 = vmatmul.mubr.bf16.gmra.mxu0 %v8255
  %v9065 = vpop.f32.mrf.mxu0
  %v9066 = vadd.f32 0.0, %v9065
  %v9067 = vpop.f32.mrf.mxu0
  %v9068 = vadd.f32 0.0, %v9067
  %v9069 = vpop.f32.mrf.mxu0
  %v9070 = vadd.f32 0.0, %v9069
  %v9071 = vpop.f32.mrf.mxu0
  %v9072 = vadd.f32 0.0, %v9071
  %9073 = vmatprep.mubr.bf16.mxu0 %v8258
  %9074 = vmatmul.mubr.bf16.gmra.mxu0 %v8257
  %v9075 = vpop.f32.mrf.mxu0
  %v9076 = vadd.f32 0.0, %v9075
  %v9077 = vpop.f32.mrf.mxu0
  %v9078 = vadd.f32 0.0, %v9077
  %v9079 = vpop.f32.mrf.mxu0
  %v9080 = vadd.f32 0.0, %v9079
  %v9081 = vpop.f32.mrf.mxu0
  %v9082 = vadd.f32 0.0, %v9081
  %9083 = vmatprep.mubr.bf16.mxu0 %v8260
  %9084 = vmatmul.mubr.bf16.gmra.mxu0 %v8259
  %v9085 = vpop.f32.mrf.mxu0
  %v9086 = vadd.f32 0.0, %v9085
  %v9087 = vpop.f32.mrf.mxu0
  %v9088 = vadd.f32 0.0, %v9087
  %v9089 = vpop.f32.mrf.mxu0
  %v9090 = vadd.f32 0.0, %v9089
  %v9091 = vpop.f32.mrf.mxu0
  %v9092 = vadd.f32 0.0, %v9091
  %9093 = vmatprep.mubr.bf16.mxu0 %v8262
  %9094 = vmatmul.mubr.bf16.gmra.mxu0 %v8261
  %v9095 = vpop.f32.mrf.mxu0
  %v9096 = vadd.f32 0.0, %v9095
  %v9097 = vpop.f32.mrf.mxu0
  %v9098 = vadd.f32 0.0, %v9097
  %v9099 = vpop.f32.mrf.mxu0
  %v9100 = vadd.f32 0.0, %v9099
  %v9101 = vpop.f32.mrf.mxu0
  %v9102 = vadd.f32 0.0, %v9101
  %9103 = vdwg.mxu0
  %9104 = vmatprep.subr.bf16.mxu0 %v8834
  %9105 = vmatpush1.bf16.msra.mxu0 %v8833
  %9106 = vmatprep.subr.bf16.mxu0 %v8826
  %9107 = vmatpush1.bf16.msra.mxu0 %v8825
  %9108 = vmatprep.subr.bf16.mxu0 %v8818
  %9109 = vmatpush1.bf16.msra.mxu0 %v8817
  %9110 = vmatprep.subr.bf16.mxu0 %v8810
  %9111 = vmatpush1.bf16.msra.mxu0 %v8809
  %9112 = vmatprep.subr.bf16.mxu0 %v8802
  %9113 = vmatpush1.bf16.msra.mxu0 %v8801
  %9114 = vmatprep.subr.bf16.mxu0 %v8794
  %9115 = vmatpush1.bf16.msra.mxu0 %v8793
  %9116 = vmatprep.subr.bf16.mxu0 %v8786
  %9117 = vmatpush1.bf16.msra.mxu0 %v8785
  %9118 = vmatprep.subr.bf16.mxu0 %v8778
  %9119 = vmatpush1.bf16.msra.mxu0 %v8777
  %9120 = vmatprep.subr.bf16.mxu0 %v8898
  %9121 = vmatpush2.bf16.msra.mxu0 %v8897
  %9122 = vmatprep.subr.bf16.mxu0 %v8890
  %9123 = vmatpush2.bf16.msra.mxu0 %v8889
  %9124 = vmatprep.subr.bf16.mxu0 %v8882
  %9125 = vmatpush2.bf16.msra.mxu0 %v8881
  %9126 = vmatprep.subr.bf16.mxu0 %v8874
  %9127 = vmatpush2.bf16.msra.mxu0 %v8873
  %9128 = vmatprep.subr.bf16.mxu0 %v8866
  %9129 = vmatpush2.bf16.msra.mxu0 %v8865
  %9130 = vmatprep.subr.bf16.mxu0 %v8858
  %9131 = vmatpush2.bf16.msra.mxu0 %v8857
  %9132 = vmatprep.subr.bf16.mxu0 %v8850
  %9133 = vmatpush2.bf16.msra.mxu0 %v8849
  %9134 = vmatprep.subr.bf16.mxu0 %v8842
  %9135 = vmatpush2.bf16.msra.mxu0 %v8841
  %9136 = vmatprep.mubr.bf16.mxu0 %v8256
  %9137 = vmatmul.mubr.bf16.gmra.mxu0 %v8255
  %v9138 = vpop.f32.mrf.mxu0
  %v9139 = vadd.f32 0.0, %v9138
  %v9140 = vpop.f32.mrf.mxu0
  %v9141 = vadd.f32 0.0, %v9140
  %v9142 = vpop.f32.mrf.mxu0
  %v9143 = vadd.f32 0.0, %v9142
  %v9144 = vpop.f32.mrf.mxu0
  %v9145 = vadd.f32 0.0, %v9144
  %9146 = vmatprep.mubr.bf16.mxu0 %v8258
  %9147 = vmatmul.mubr.bf16.gmra.mxu0 %v8257
  %v9148 = vpop.f32.mrf.mxu0
  %v9149 = vadd.f32 0.0, %v9148
  %v9150 = vpop.f32.mrf.mxu0
  %v9151 = vadd.f32 0.0, %v9150
  %v9152 = vpop.f32.mrf.mxu0
  %v9153 = vadd.f32 0.0, %v9152
  %v9154 = vpop.f32.mrf.mxu0
  %v9155 = vadd.f32 0.0, %v9154
  %9156 = vmatprep.mubr.bf16.mxu0 %v8260
  %9157 = vmatmul.mubr.bf16.gmra.mxu0 %v8259
  %v9158 = vpop.f32.mrf.mxu0
  %v9159 = vadd.f32 0.0, %v9158
  %v9160 = vpop.f32.mrf.mxu0
  %v9161 = vadd.f32 0.0, %v9160
  %v9162 = vpop.f32.mrf.mxu0
  %v9163 = vadd.f32 0.0, %v9162
  %v9164 = vpop.f32.mrf.mxu0
  %v9165 = vadd.f32 0.0, %v9164
  %9166 = vmatprep.mubr.bf16.mxu0 %v8262
  %9167 = vmatmul.mubr.bf16.gmra.mxu0 %v8261
  %v9168 = vpop.f32.mrf.mxu0
  %v9169 = vadd.f32 0.0, %v9168
  %v9170 = vpop.f32.mrf.mxu0
  %v9171 = vadd.f32 0.0, %v9170
  %v9172 = vpop.f32.mrf.mxu0
  %v9173 = vadd.f32 0.0, %v9172
  %v9174 = vpop.f32.mrf.mxu0
  %v9175 = vadd.f32 0.0, %v9174
  %9176 = vdwg.mxu0
  %9177 = vmatprep.subr.bf16.mxu0 %v8836
  %9178 = vmatpush1.bf16.msra.mxu0 %v8835
  %9179 = vmatprep.subr.bf16.mxu0 %v8828
  %9180 = vmatpush1.bf16.msra.mxu0 %v8827
  %9181 = vmatprep.subr.bf16.mxu0 %v8820
  %9182 = vmatpush1.bf16.msra.mxu0 %v8819
  %9183 = vmatprep.subr.bf16.mxu0 %v8812
  %9184 = vmatpush1.bf16.msra.mxu0 %v8811
  %9185 = vmatprep.subr.bf16.mxu0 %v8804
  %9186 = vmatpush1.bf16.msra.mxu0 %v8803
  %9187 = vmatprep.subr.bf16.mxu0 %v8796
  %9188 = vmatpush1.bf16.msra.mxu0 %v8795
  %9189 = vmatprep.subr.bf16.mxu0 %v8788
  %9190 = vmatpush1.bf16.msra.mxu0 %v8787
  %9191 = vmatprep.subr.bf16.mxu0 %v8780
  %9192 = vmatpush1.bf16.msra.mxu0 %v8779
  %9193 = vmatprep.subr.bf16.mxu0 %v8900
  %9194 = vmatpush2.bf16.msra.mxu0 %v8899
  %9195 = vmatprep.subr.bf16.mxu0 %v8892
  %9196 = vmatpush2.bf16.msra.mxu0 %v8891
  %9197 = vmatprep.subr.bf16.mxu0 %v8884
  %9198 = vmatpush2.bf16.msra.mxu0 %v8883
  %9199 = vmatprep.subr.bf16.mxu0 %v8876
  %9200 = vmatpush2.bf16.msra.mxu0 %v8875
  %9201 = vmatprep.subr.bf16.mxu0 %v8868
  %9202 = vmatpush2.bf16.msra.mxu0 %v8867
  %9203 = vmatprep.subr.bf16.mxu0 %v8860
  %9204 = vmatpush2.bf16.msra.mxu0 %v8859
  %9205 = vmatprep.subr.bf16.mxu0 %v8852
  %9206 = vmatpush2.bf16.msra.mxu0 %v8851
  %9207 = vmatprep.subr.bf16.mxu0 %v8844
  %9208 = vmatpush2.bf16.msra.mxu0 %v8843
  %9209 = vmatprep.mubr.bf16.mxu0 %v8256
  %9210 = vmatmul.mubr.bf16.gmra.mxu0 %v8255
  %v9211 = vpop.f32.mrf.mxu0
  %v9212 = vadd.f32 0.0, %v9211
  %v9213 = vpop.f32.mrf.mxu0
  %v9214 = vadd.f32 0.0, %v9213
  %v9215 = vpop.f32.mrf.mxu0
  %v9216 = vadd.f32 0.0, %v9215
  %v9217 = vpop.f32.mrf.mxu0
  %v9218 = vadd.f32 0.0, %v9217
  %9219 = vmatprep.mubr.bf16.mxu0 %v8258
  %9220 = vmatmul.mubr.bf16.gmra.mxu0 %v8257
  %v9221 = vpop.f32.mrf.mxu0
  %v9222 = vadd.f32 0.0, %v9221
  %v9223 = vpop.f32.mrf.mxu0
  %v9224 = vadd.f32 0.0, %v9223
  %v9225 = vpop.f32.mrf.mxu0
  %v9226 = vadd.f32 0.0, %v9225
  %v9227 = vpop.f32.mrf.mxu0
  %v9228 = vadd.f32 0.0, %v9227
  %9229 = vmatprep.mubr.bf16.mxu0 %v8260
  %9230 = vmatmul.mubr.bf16.gmra.mxu0 %v8259
  %v9231 = vpop.f32.mrf.mxu0
  %v9232 = vadd.f32 0.0, %v9231
  %v9233 = vpop.f32.mrf.mxu0
  %v9234 = vadd.f32 0.0, %v9233
  %v9235 = vpop.f32.mrf.mxu0
  %v9236 = vadd.f32 0.0, %v9235
  %v9237 = vpop.f32.mrf.mxu0
  %v9238 = vadd.f32 0.0, %v9237
  %9239 = vmatprep.mubr.bf16.mxu0 %v8262
  %9240 = vmatmul.mubr.bf16.gmra.mxu0 %v8261
  %v9241 = vpop.f32.mrf.mxu0
  %v9242 = vadd.f32 0.0, %v9241
  %v9243 = vpop.f32.mrf.mxu0
  %v9244 = vadd.f32 0.0, %v9243
  %v9245 = vpop.f32.mrf.mxu0
  %v9246 = vadd.f32 0.0, %v9245
  %v9247 = vpop.f32.mrf.mxu0
  %v9248 = vadd.f32 0.0, %v9247
  %9249 = vdwg.mxu0
  %9250 = vmatprep.subr.bf16.mxu0 %v8838
  %9251 = vmatpush1.bf16.msra.mxu0 %v8837
  %9252 = vmatprep.subr.bf16.mxu0 %v8830
  %9253 = vmatpush1.bf16.msra.mxu0 %v8829
  %9254 = vmatprep.subr.bf16.mxu0 %v8822
  %9255 = vmatpush1.bf16.msra.mxu0 %v8821
  %9256 = vmatprep.subr.bf16.mxu0 %v8814
  %9257 = vmatpush1.bf16.msra.mxu0 %v8813
  %9258 = vmatprep.subr.bf16.mxu0 %v8806
  %9259 = vmatpush1.bf16.msra.mxu0 %v8805
  %9260 = vmatprep.subr.bf16.mxu0 %v8798
  %9261 = vmatpush1.bf16.msra.mxu0 %v8797
  %9262 = vmatprep.subr.bf16.mxu0 %v8790
  %9263 = vmatpush1.bf16.msra.mxu0 %v8789
  %9264 = vmatprep.subr.bf16.mxu0 %v8782
  %9265 = vmatpush1.bf16.msra.mxu0 %v8781
  %9266 = vmatprep.subr.bf16.mxu0 %v8902
  %9267 = vmatpush2.bf16.msra.mxu0 %v8901
  %9268 = vmatprep.subr.bf16.mxu0 %v8894
  %9269 = vmatpush2.bf16.msra.mxu0 %v8893
  %9270 = vmatprep.subr.bf16.mxu0 %v8886
  %9271 = vmatpush2.bf16.msra.mxu0 %v8885
  %9272 = vmatprep.subr.bf16.mxu0 %v8878
  %9273 = vmatpush2.bf16.msra.mxu0 %v8877
  %9274 = vmatprep.subr.bf16.mxu0 %v8870
  %9275 = vmatpush2.bf16.msra.mxu0 %v8869
  %9276 = vmatprep.subr.bf16.mxu0 %v8862
  %9277 = vmatpush2.bf16.msra.mxu0 %v8861
  %9278 = vmatprep.subr.bf16.mxu0 %v8854
  %9279 = vmatpush2.bf16.msra.mxu0 %v8853
  %9280 = vmatprep.subr.bf16.mxu0 %v8846
  %9281 = vmatpush2.bf16.msra.mxu0 %v8845
  %9282 = vmatprep.mubr.bf16.mxu0 %v8256
  %9283 = vmatmul.mubr.bf16.gmra.mxu0 %v8255
  %v9284 = vpop.f32.mrf.mxu0
  %v9285 = vadd.f32 0.0, %v9284
  %v9286 = vpop.f32.mrf.mxu0
  %v9287 = vadd.f32 0.0, %v9286
  %v9288 = vpop.f32.mrf.mxu0
  %v9289 = vadd.f32 0.0, %v9288
  %v9290 = vpop.f32.mrf.mxu0
  %v9291 = vadd.f32 0.0, %v9290
  %9292 = vmatprep.mubr.bf16.mxu0 %v8258
  %9293 = vmatmul.mubr.bf16.gmra.mxu0 %v8257
  %v9294 = vpop.f32.mrf.mxu0
  %v9295 = vadd.f32 0.0, %v9294
  %v9296 = vpop.f32.mrf.mxu0
  %v9297 = vadd.f32 0.0, %v9296
  %v9298 = vpop.f32.mrf.mxu0
  %v9299 = vadd.f32 0.0, %v9298
  %v9300 = vpop.f32.mrf.mxu0
  %v9301 = vadd.f32 0.0, %v9300
  %9302 = vmatprep.mubr.bf16.mxu0 %v8260
  %9303 = vmatmul.mubr.bf16.gmra.mxu0 %v8259
  %v9304 = vpop.f32.mrf.mxu0
  %v9305 = vadd.f32 0.0, %v9304
  %v9306 = vpop.f32.mrf.mxu0
  %v9307 = vadd.f32 0.0, %v9306
  %v9308 = vpop.f32.mrf.mxu0
  %v9309 = vadd.f32 0.0, %v9308
  %v9310 = vpop.f32.mrf.mxu0
  %v9311 = vadd.f32 0.0, %v9310
  %9312 = vmatprep.mubr.bf16.mxu0 %v8262
  %9313 = vmatmul.mubr.bf16.gmra.mxu0 %v8261
  %v9314 = vpop.f32.mrf.mxu0
  %v9315 = vadd.f32 0.0, %v9314
  %v9316 = vpop.f32.mrf.mxu0
  %v9317 = vadd.f32 0.0, %v9316
  %v9318 = vpop.f32.mrf.mxu0
  %v9319 = vadd.f32 0.0, %v9318
  %v9320 = vpop.f32.mrf.mxu0
  %v9321 = vadd.f32 0.0, %v9320
  %9322 = vdwg.mxu0
  %s9323 = scalar_lea.vmem %s1, 5
  %v9324 = vld [vmem:[%s9323] ss:$8 sm:$0x3]
  %9325 = vst [vmem:[#allocation9 + $0x80] sm:$0xff] %v9066
  %9326 = vst [vmem:[#allocation9 + $0x88] sm:$0xff] %v9068
  %9327 = vst [vmem:[#allocation9 + $0x90] sm:$0xff] %v9139
  %9328 = vst [vmem:[#allocation9 + $0x98] sm:$0xff] %v9141
  %9329 = vst [vmem:[#allocation9 + $0xa0] sm:$0xff] %v9212
  %9330 = vst [vmem:[#allocation9 + $0xa8] sm:$0xff] %v9214
  %9331 = vst [vmem:[#allocation9 + $0xb0] sm:$0xff] %v9285
  %9332 = vst [vmem:[#allocation9 + $0xb8] sm:$0xff] %v9287
  %9333 = vst [vmem:[#allocation9 + $0xc0] sm:$0xff] %v9070
  %9334 = vst [vmem:[#allocation9 + $0xc8] sm:$0xff] %v9072
  %9335 = vst [vmem:[#allocation9 + $0xd0] sm:$0xff] %v9143
  %9336 = vst [vmem:[#allocation9 + $0xd8] sm:$0xff] %v9145
  %9337 = vst [vmem:[#allocation9 + $0xe0] sm:$0xff] %v9216
  %9338 = vst [vmem:[#allocation9 + $0xe8] sm:$0xff] %v9218
  %9339 = vst [vmem:[#allocation9 + $0xf0] sm:$0xff] %v9289
  %9340 = vst [vmem:[#allocation9 + $0xf8] sm:$0xff] %v9291
  %9341 = vst [vmem:[#allocation9 + $0x100] sm:$0xff] %v9076
  %9342 = vst [vmem:[#allocation9 + $0x108] sm:$0xff] %v9078
  %9343 = vst [vmem:[#allocation9 + $0x110] sm:$0xff] %v9149
  %9344 = vst [vmem:[#allocation9 + $0x118] sm:$0xff] %v9151
  %9345 = vst [vmem:[#allocation9 + $0x120] sm:$0xff] %v9222
  %9346 = vst [vmem:[#allocation9 + $0x128] sm:$0xff] %v9224
  %9347 = vst [vmem:[#allocation9 + $0x130] sm:$0xff] %v9295
  %9348 = vst [vmem:[#allocation9 + $0x138] sm:$0xff] %v9297
  %9349 = vst [vmem:[#allocation9 + $0x140] sm:$0xff] %v9080
  %9350 = vst [vmem:[#allocation9 + $0x148] sm:$0xff] %v9082
  %9351 = vst [vmem:[#allocation9 + $0x150] sm:$0xff] %v9153
  %9352 = vst [vmem:[#allocation9 + $0x158] sm:$0xff] %v9155
  %9353 = vst [vmem:[#allocation9 + $0x160] sm:$0xff] %v9226
  %9354 = vst [vmem:[#allocation9 + $0x168] sm:$0xff] %v9228
  %9355 = vst [vmem:[#allocation9 + $0x170] sm:$0xff] %v9299
  %9356 = vst [vmem:[#allocation9 + $0x178] sm:$0xff] %v9301
  %9357 = vst [vmem:[#allocation9 + $0x180] sm:$0xff] %v9086
  %9358 = vst [vmem:[#allocation9 + $0x188] sm:$0xff] %v9088
  %9359 = vst [vmem:[#allocation9 + $0x190] sm:$0xff] %v9159
  %9360 = vst [vmem:[#allocation9 + $0x198] sm:$0xff] %v9161
  %9361 = vst [vmem:[#allocation9 + $0x1a0] sm:$0xff] %v9232
  %9362 = vst [vmem:[#allocation9 + $0x1a8] sm:$0xff] %v9234
  %9363 = vst [vmem:[#allocation9 + $0x1b0] sm:$0xff] %v9305
  %9364 = vst [vmem:[#allocation9 + $0x1b8] sm:$0xff] %v9307
  %9365 = vst [vmem:[#allocation9 + $0x1c0] sm:$0xff] %v9090
  %9366 = vst [vmem:[#allocation9 + $0x1c8] sm:$0xff] %v9092
  %9367 = vst [vmem:[#allocation9 + $0x1d0] sm:$0xff] %v9163
  %9368 = vst [vmem:[#allocation9 + $0x1d8] sm:$0xff] %v9165
  %9369 = vst [vmem:[#allocation9 + $0x1e0] sm:$0xff] %v9236
  %9370 = vst [vmem:[#allocation9 + $0x1e8] sm:$0xff] %v9238
  %9371 = vst [vmem:[#allocation9 + $0x1f0] sm:$0xff] %v9309
  %9372 = vst [vmem:[#allocation9 + $0x1f8] sm:$0xff] %v9311
  %9373 = vst [vmem:[#allocation9 + $0x200] sm:$0xff] %v9096
  %9374 = vst [vmem:[#allocation9 + $0x208] sm:$0xff] %v9098
  %9375 = vst [vmem:[#allocation9 + $0x210] sm:$0xff] %v9169
  %9376 = vst [vmem:[#allocation9 + $0x218] sm:$0xff] %v9171
  %9377 = vst [vmem:[#allocation9 + $0x220] sm:$0xff] %v9242
  %9378 = vst [vmem:[#allocation9 + $0x228] sm:$0xff] %v9244
  %9379 = vst [vmem:[#allocation9 + $0x230] sm:$0xff] %v9315
  %9380 = vst [vmem:[#allocation9 + $0x238] sm:$0xff] %v9317
  %9381 = vst [vmem:[#allocation9 + $0x240] sm:$0xff] %v9100
  %9382 = vst [vmem:[#allocation9 + $0x248] sm:$0xff] %v9102
  %9383 = vst [vmem:[#allocation9 + $0x250] sm:$0xff] %v9173
  %9384 = vst [vmem:[#allocation9 + $0x258] sm:$0xff] %v9175
  %9385 = vst [vmem:[#allocation9 + $0x260] sm:$0xff] %v9246
  %9386 = vst [vmem:[#allocation9 + $0x268] sm:$0xff] %v9248
  %9387 = vst [vmem:[#allocation9 + $0x270] sm:$0xff] %v9319
  %9388 = vst [vmem:[#allocation9 + $0x278] sm:$0xff] %v9321
  %v9389 = vld [vmem:[#allocation9 + $0x40] sm:$0xff]
  %v9390 = vld [vmem:[#allocation9 + $0x48] sm:$0xff]
  %v9391 = vld [vmem:[#allocation9 + $0x80] sm:$0xff]
  %v9392 = vld [vmem:[#allocation9 + $0x88] sm:$0xff]
  %v9393 = vld [vmem:[#allocation9 + $0xc0] sm:$0xff]
  %v9394 = vld [vmem:[#allocation9 + $0xc8] sm:$0xff]
  %v9395 = vld [vmem:[#allocation9 + $0x100] sm:$0xff]
  %v9396 = vld [vmem:[#allocation9 + $0x108] sm:$0xff]
  %v9397 = vld [vmem:[#allocation9 + $0x140] sm:$0xff]
  %v9398 = vld [vmem:[#allocation9 + $0x148] sm:$0xff]
  %v9399 = vld [vmem:[#allocation9 + $0x180] sm:$0xff]
  %v9400 = vld [vmem:[#allocation9 + $0x188] sm:$0xff]
  %v9401 = vld [vmem:[#allocation9 + $0x1c0] sm:$0xff]
  %v9402 = vld [vmem:[#allocation9 + $0x1c8] sm:$0xff]
  %v9403 = vld [vmem:[#allocation9 + $0x200] sm:$0xff]
  %v9404 = vld [vmem:[#allocation9 + $0x208] sm:$0xff]
  %v9405 = vadd.s32 %v1849, 4294967288
  %v9406 = vadd.s32 %v1850, 4294967288
  %v9407 = vadd.s32 %v1851, 4294967288
  %v9408 = vadd.s32 %v1852, 4294967288
  %v9409 = vadd.s32 %v1853, 4294967288
  %v9410 = vadd.s32 %v1854, 4294967288
  %v9411 = vadd.s32 %v1855, 4294967288
  %v9412 = vadd.s32 %v1856, 4294967288
  %vm9413 = vcmp.ge.s32.totalorder %v9405, 0
  %vm9414 = vcmp.ge.s32.totalorder %v9406, 0
  %vm9415 = vcmp.ge.s32.totalorder %v9407, 0
  %vm9416 = vcmp.ge.s32.totalorder %v9408, 0
  %vm9417 = vcmp.ge.s32.totalorder %v9409, 0
  %vm9418 = vcmp.ge.s32.totalorder %v9410, 0
  %vm9419 = vcmp.ge.s32.totalorder %v9411, 0
  %vm9420 = vcmp.ge.s32.totalorder %v9412, 0
  %vm9421 = vcmp.lt.s32.totalorder %v9405, 32
  %vm9422 = vcmp.lt.s32.totalorder %v9406, 32
  %vm9423 = vcmp.lt.s32.totalorder %v9407, 32
  %vm9424 = vcmp.lt.s32.totalorder %v9408, 32
  %vm9425 = vcmp.lt.s32.totalorder %v9409, 32
  %vm9426 = vcmp.lt.s32.totalorder %v9410, 32
  %vm9427 = vcmp.lt.s32.totalorder %v9411, 32
  %vm9428 = vcmp.lt.s32.totalorder %v9412, 32
  %vm9429 = vmand %vm9413, %vm9421
  %vm9430 = vmand %vm9414, %vm9422
  %vm9431 = vmand %vm9415, %vm9423
  %vm9432 = vmand %vm9416, %vm9424
  %vm9433 = vmand %vm9417, %vm9425
  %vm9434 = vmand %vm9418, %vm9426
  %vm9435 = vmand %vm9419, %vm9427
  %vm9436 = vmand %vm9420, %vm9428
  %v9437 = vsel %vm9429, 1, 0
  %v9438 = vsel %vm9430, 1, 0
  %v9439 = vsel %vm9431, 1, 0
  %v9440 = vsel %vm9432, 1, 0
  %v9441 = vsel %vm9433, 1, 0
  %v9442 = vsel %vm9434, 1, 0
  %v9443 = vsel %vm9435, 1, 0
  %v9444 = vsel %vm9436, 1, 0
  %vm9445 = vcmp.eq.s32.totalorder %v9437, 1
  %vm9446 = vcmp.eq.s32.totalorder %v9438, 1
  %vm9447 = vcmp.eq.s32.totalorder %v9439, 1
  %vm9448 = vcmp.eq.s32.totalorder %v9440, 1
  %vm9449 = vcmp.eq.s32.totalorder %v9441, 1
  %vm9450 = vcmp.eq.s32.totalorder %v9442, 1
  %vm9451 = vcmp.eq.s32.totalorder %v9443, 1
  %vm9452 = vcmp.eq.s32.totalorder %v9444, 1
  %v9453 = vsel %vm9445, %v9389, 0.0
  %v9454 = vsel %vm9445, %v9390, 0.0
  %v9455 = vsel %vm9446, %v9391, 0.0
  %v9456 = vsel %vm9446, %v9392, 0.0
  %v9457 = vsel %vm9447, %v9393, 0.0
  %v9458 = vsel %vm9447, %v9394, 0.0
  %v9459 = vsel %vm9448, %v9395, 0.0
  %v9460 = vsel %vm9448, %v9396, 0.0
  %v9461 = vsel %vm9449, %v9397, 0.0
  %v9462 = vsel %vm9449, %v9398, 0.0
  %v9463 = vsel %vm9450, %v9399, 0.0
  %v9464 = vsel %vm9450, %v9400, 0.0
  %v9465 = vsel %vm9451, %v9401, 0.0
  %v9466 = vsel %vm9451, %v9402, 0.0
  %v9467 = vsel %vm9452, %v9403, 0.0
  %v9468 = vsel %vm9452, %v9404, 0.0
  %v9470 = vlaneseq
  %v9471 = vshrl.u32 %v9470, 7
  %v9472 = vsub.s32 0, %v9471
  %v9473 = vrot.slane %v9324, %v9472
  %v9474 = vlaneseq
  %v9475 = vshrl.u32 %v9474, 7
  %v9476 = vsub.s32 1, %v9475
  %v9477 = vrot.slane %v9324, %v9476
  %v9480 = vadd.f32 %v9473, %v9453
  %v9481 = vadd.f32 %v9477, %v9454
  %v9482 = vadd.f32 %v9473, %v9455
  %v9483 = vadd.f32 %v9477, %v9456
  %v9484 = vadd.f32 %v9473, %v9457
  %v9485 = vadd.f32 %v9477, %v9458
  %v9486 = vadd.f32 %v9473, %v9459
  %v9487 = vadd.f32 %v9477, %v9460
  %v9488 = vadd.f32 %v9473, %v9461
  %v9489 = vadd.f32 %v9477, %v9462
  %v9490 = vadd.f32 %v9473, %v9463
  %v9491 = vadd.f32 %v9477, %v9464
  %v9492 = vadd.f32 %v9473, %v9465
  %v9493 = vadd.f32 %v9477, %v9466
  %v9494 = vadd.f32 %v9473, %v9467
  %v9495 = vadd.f32 %v9477, %v9468
  %v9496 = vadd.f32 %v9480, %v9139
  %v9497 = vadd.f32 %v9481, %v9141
  %v9498 = vadd.f32 %v9482, %v9143
  %v9499 = vadd.f32 %v9483, %v9145
  %v9500 = vadd.f32 %v9484, %v9149
  %v9501 = vadd.f32 %v9485, %v9151
  %v9502 = vadd.f32 %v9486, %v9153
  %v9503 = vadd.f32 %v9487, %v9155
  %v9504 = vadd.f32 %v9488, %v9159
  %v9505 = vadd.f32 %v9489, %v9161
  %v9506 = vadd.f32 %v9490, %v9163
  %v9507 = vadd.f32 %v9491, %v9165
  %v9508 = vadd.f32 %v9492, %v9169
  %v9509 = vadd.f32 %v9493, %v9171
  %v9510 = vadd.f32 %v9494, %v9173
  %v9511 = vadd.f32 %v9495, %v9175
  %v9512 = vld [vmem:[#allocation9 + $0xe0] sm:$0xff]
  %v9513 = vld [vmem:[#allocation9 + $0xe8] sm:$0xff]
  %v9514 = vld [vmem:[#allocation9 + $0x120] sm:$0xff]
  %v9515 = vld [vmem:[#allocation9 + $0x128] sm:$0xff]
  %v9516 = vld [vmem:[#allocation9 + $0x160] sm:$0xff]
  %v9517 = vld [vmem:[#allocation9 + $0x168] sm:$0xff]
  %v9518 = vld [vmem:[#allocation9 + $0x1a0] sm:$0xff]
  %v9519 = vld [vmem:[#allocation9 + $0x1a8] sm:$0xff]
  %v9520 = vld [vmem:[#allocation9 + $0x1e0] sm:$0xff]
  %v9521 = vld [vmem:[#allocation9 + $0x1e8] sm:$0xff]
  %v9522 = vld [vmem:[#allocation9 + $0x220] sm:$0xff]
  %v9523 = vld [vmem:[#allocation9 + $0x228] sm:$0xff]
  %v9524 = vld [vmem:[#allocation9 + $0x260] sm:$0xff]
  %v9525 = vld [vmem:[#allocation9 + $0x268] sm:$0xff]
  %v9526 = vld [vmem:[#allocation9 + $0x2a0] sm:$0xff]
  %v9527 = vld [vmem:[#allocation9 + $0x2a8] sm:$0xff]
  %v9528 = vsel %vm8165, %v9512, 0.0
  %v9529 = vsel %vm8165, %v9513, 0.0
  %v9530 = vsel %vm8166, %v9514, 0.0
  %v9531 = vsel %vm8166, %v9515, 0.0
  %v9532 = vsel %vm8167, %v9516, 0.0
  %v9533 = vsel %vm8167, %v9517, 0.0
  %v9534 = vsel %vm8168, %v9518, 0.0
  %v9535 = vsel %vm8168, %v9519, 0.0
  %v9536 = vsel %vm8169, %v9520, 0.0
  %v9537 = vsel %vm8169, %v9521, 0.0
  %v9538 = vsel %vm8170, %v9522, 0.0
  %v9539 = vsel %vm8170, %v9523, 0.0
  %v9540 = vsel %vm8171, %v9524, 0.0
  %v9541 = vsel %vm8171, %v9525, 0.0
  %v9542 = vsel %vm8172, %v9526, 0.0
  %v9543 = vsel %vm8172, %v9527, 0.0
  %v9544 = vadd.f32 %v9496, %v9528
  %v9545 = vadd.f32 %v9497, %v9529
  %v9546 = vadd.f32 %v9498, %v9530
  %v9547 = vadd.f32 %v9499, %v9531
  %v9548 = vadd.f32 %v9500, %v9532
  %v9549 = vadd.f32 %v9501, %v9533
  %v9550 = vadd.f32 %v9502, %v9534
  %v9551 = vadd.f32 %v9503, %v9535
  %v9552 = vadd.f32 %v9504, %v9536
  %v9553 = vadd.f32 %v9505, %v9537
  %v9554 = vadd.f32 %v9506, %v9538
  %v9555 = vadd.f32 %v9507, %v9539
  %v9556 = vadd.f32 %v9508, %v9540
  %v9557 = vadd.f32 %v9509, %v9541
  %v9558 = vadd.f32 %v9510, %v9542
  %v9559 = vadd.f32 %v9511, %v9543
  %v9560 = vld [vmem:[#allocation9 + $0x130] sm:$0xff]
  %v9561 = vld [vmem:[#allocation9 + $0x138] sm:$0xff]
  %v9562 = vld [vmem:[#allocation9 + $0x170] sm:$0xff]
  %v9563 = vld [vmem:[#allocation9 + $0x178] sm:$0xff]
  %v9564 = vld [vmem:[#allocation9 + $0x1b0] sm:$0xff]
  %v9565 = vld [vmem:[#allocation9 + $0x1b8] sm:$0xff]
  %v9566 = vld [vmem:[#allocation9 + $0x1f0] sm:$0xff]
  %v9567 = vld [vmem:[#allocation9 + $0x1f8] sm:$0xff]
  %v9568 = vld [vmem:[#allocation9 + $0x230] sm:$0xff]
  %v9569 = vld [vmem:[#allocation9 + $0x238] sm:$0xff]
  %v9570 = vld [vmem:[#allocation9 + $0x270] sm:$0xff]
  %v9571 = vld [vmem:[#allocation9 + $0x278] sm:$0xff]
  %v9572 = vld [vmem:[#allocation9 + $0x2b0] sm:$0xff]
  %v9573 = vld [vmem:[#allocation9 + $0x2b8] sm:$0xff]
  %v9574 = vld [vmem:[#allocation9 + $0x2f0] sm:$0xff]
  %v9575 = vld [vmem:[#allocation9 + $0x2f8] sm:$0xff]
  %v9576 = vadd.s32 %v1849, 16
  %v9577 = vadd.s32 %v1850, 16
  %v9578 = vadd.s32 %v1851, 16
  %v9579 = vadd.s32 %v1852, 16
  %v9580 = vadd.s32 %v1853, 16
  %v9581 = vadd.s32 %v1854, 16
  %v9582 = vadd.s32 %v1855, 16
  %v9583 = vadd.s32 %v1856, 16
  %vm9584 = vcmp.ge.s32.totalorder %v9576, 0
  %vm9585 = vcmp.ge.s32.totalorder %v9577, 0
  %vm9586 = vcmp.ge.s32.totalorder %v9578, 0
  %vm9587 = vcmp.ge.s32.totalorder %v9579, 0
  %vm9588 = vcmp.ge.s32.totalorder %v9580, 0
  %vm9589 = vcmp.ge.s32.totalorder %v9581, 0
  %vm9590 = vcmp.ge.s32.totalorder %v9582, 0
  %vm9591 = vcmp.ge.s32.totalorder %v9583, 0
  %vm9592 = vcmp.lt.s32.totalorder %v9576, 32
  %vm9593 = vcmp.lt.s32.totalorder %v9577, 32
  %vm9594 = vcmp.lt.s32.totalorder %v9578, 32
  %vm9595 = vcmp.lt.s32.totalorder %v9579, 32
  %vm9596 = vcmp.lt.s32.totalorder %v9580, 32
  %vm9597 = vcmp.lt.s32.totalorder %v9581, 32
  %vm9598 = vcmp.lt.s32.totalorder %v9582, 32
  %vm9599 = vcmp.lt.s32.totalorder %v9583, 32
  %vm9600 = vmand %vm9584, %vm9592
  %vm9601 = vmand %vm9585, %vm9593
  %vm9602 = vmand %vm9586, %vm9594
  %vm9603 = vmand %vm9587, %vm9595
  %vm9604 = vmand %vm9588, %vm9596
  %vm9605 = vmand %vm9589, %vm9597
  %vm9606 = vmand %vm9590, %vm9598
  %vm9607 = vmand %vm9591, %vm9599
  %v9608 = vsel %vm9600, 1, 0
  %v9609 = vsel %vm9601, 1, 0
  %v9610 = vsel %vm9602, 1, 0
  %v9611 = vsel %vm9603, 1, 0
  %v9612 = vsel %vm9604, 1, 0
  %v9613 = vsel %vm9605, 1, 0
  %v9614 = vsel %vm9606, 1, 0
  %v9615 = vsel %vm9607, 1, 0
  %vm9616 = vcmp.eq.s32.totalorder %v9608, 1
  %vm9617 = vcmp.eq.s32.totalorder %v9609, 1
  %vm9618 = vcmp.eq.s32.totalorder %v9610, 1
  %vm9619 = vcmp.eq.s32.totalorder %v9611, 1
  %vm9620 = vcmp.eq.s32.totalorder %v9612, 1
  %vm9621 = vcmp.eq.s32.totalorder %v9613, 1
  %vm9622 = vcmp.eq.s32.totalorder %v9614, 1
  %vm9623 = vcmp.eq.s32.totalorder %v9615, 1
  %v9624 = vsel %vm9616, %v9560, 0.0
  %v9625 = vsel %vm9616, %v9561, 0.0
  %v9626 = vsel %vm9617, %v9562, 0.0
  %v9627 = vsel %vm9617, %v9563, 0.0
  %v9628 = vsel %vm9618, %v9564, 0.0
  %v9629 = vsel %vm9618, %v9565, 0.0
  %v9630 = vsel %vm9619, %v9566, 0.0
  %v9631 = vsel %vm9619, %v9567, 0.0
  %v9632 = vsel %vm9620, %v9568, 0.0
  %v9633 = vsel %vm9620, %v9569, 0.0
  %v9634 = vsel %vm9621, %v9570, 0.0
  %v9635 = vsel %vm9621, %v9571, 0.0
  %v9636 = vsel %vm9622, %v9572, 0.0
  %v9637 = vsel %vm9622, %v9573, 0.0
  %v9638 = vsel %vm9623, %v9574, 0.0
  %v9639 = vsel %vm9623, %v9575, 0.0
  %v9640 = vadd.f32 %v9544, %v9624
  %v9641 = vadd.f32 %v9545, %v9625
  %v9642 = vadd.f32 %v9546, %v9626
  %v9643 = vadd.f32 %v9547, %v9627
  %v9644 = vadd.f32 %v9548, %v9628
  %v9645 = vadd.f32 %v9549, %v9629
  %v9646 = vadd.f32 %v9550, %v9630
  %v9647 = vadd.f32 %v9551, %v9631
  %v9648 = vadd.f32 %v9552, %v9632
  %v9649 = vadd.f32 %v9553, %v9633
  %v9650 = vadd.f32 %v9554, %v9634
  %v9651 = vadd.f32 %v9555, %v9635
  %v9652 = vadd.f32 %v9556, %v9636
  %v9653 = vadd.f32 %v9557, %v9637
  %v9654 = vadd.f32 %v9558, %v9638
  %v9655 = vadd.f32 %v9559, %v9639
  %vm9656 = vcmp.ge.f32.partialorder %v9640, 0.0
  %vm9657 = vcmp.ge.f32.partialorder %v9641, 0.0
  %vm9658 = vcmp.ge.f32.partialorder %v9642, 0.0
  %vm9659 = vcmp.ge.f32.partialorder %v9643, 0.0
  %vm9660 = vcmp.ge.f32.partialorder %v9644, 0.0
  %vm9661 = vcmp.ge.f32.partialorder %v9645, 0.0
  %vm9662 = vcmp.ge.f32.partialorder %v9646, 0.0
  %vm9663 = vcmp.ge.f32.partialorder %v9647, 0.0
  %vm9664 = vcmp.ge.f32.partialorder %v9648, 0.0
  %vm9665 = vcmp.ge.f32.partialorder %v9649, 0.0
  %vm9666 = vcmp.ge.f32.partialorder %v9650, 0.0
  %vm9667 = vcmp.ge.f32.partialorder %v9651, 0.0
  %vm9668 = vcmp.ge.f32.partialorder %v9652, 0.0
  %vm9669 = vcmp.ge.f32.partialorder %v9653, 0.0
  %vm9670 = vcmp.ge.f32.partialorder %v9654, 0.0
  %vm9671 = vcmp.ge.f32.partialorder %v9655, 0.0
  %v9672 = vmul.f32 %v9640, 0.2
  %v9673 = vmul.f32 %v9641, 0.2
  %v9674 = vmul.f32 %v9642, 0.2
  %v9675 = vmul.f32 %v9643, 0.2
  %v9676 = vmul.f32 %v9644, 0.2
  %v9677 = vmul.f32 %v9645, 0.2
  %v9678 = vmul.f32 %v9646, 0.2
  %v9679 = vmul.f32 %v9647, 0.2
  %v9680 = vmul.f32 %v9648, 0.2
  %v9681 = vmul.f32 %v9649, 0.2
  %v9682 = vmul.f32 %v9650, 0.2
  %v9683 = vmul.f32 %v9651, 0.2
  %v9684 = vmul.f32 %v9652, 0.2
  %v9685 = vmul.f32 %v9653, 0.2
  %v9686 = vmul.f32 %v9654, 0.2
  %v9687 = vmul.f32 %v9655, 0.2
  %v9688 = vsel %vm9656, %v9640, %v9672
  %v9689 = vsel %vm9657, %v9641, %v9673
  %v9690 = vsel %vm9658, %v9642, %v9674
  %v9691 = vsel %vm9659, %v9643, %v9675
  %v9692 = vsel %vm9660, %v9644, %v9676
  %v9693 = vsel %vm9661, %v9645, %v9677
  %v9694 = vsel %vm9662, %v9646, %v9678
  %v9695 = vsel %vm9663, %v9647, %v9679
  %v9696 = vsel %vm9664, %v9648, %v9680
  %v9697 = vsel %vm9665, %v9649, %v9681
  %v9698 = vsel %vm9666, %v9650, %v9682
  %v9699 = vsel %vm9667, %v9651, %v9683
  %v9700 = vsel %vm9668, %v9652, %v9684
  %v9701 = vsel %vm9669, %v9653, %v9685
  %v9702 = vsel %vm9670, %v9654, %v9686
  %v9703 = vsel %vm9671, %v9655, %v9687
  %s9704 = smul.u32 %s2118, 3
  %s9705 = sshll.u32 %s9704, 4
  %9706 = dma.done %s1518, %s9705
  %v9707 = vpack.c.bf16 %v9690, %v9688
  %v9708 = vpack.c.bf16 %v9691, %v9689
  %v9709 = vpack.c.bf16 %v9694, %v9692
  %v9710 = vpack.c.bf16 %v9695, %v9693
  %v9711 = vpack.c.bf16 %v9698, %v9696
  %v9712 = vpack.c.bf16 %v9699, %v9697
  %v9713 = vpack.c.bf16 %v9702, %v9700
  %v9714 = vpack.c.bf16 %v9703, %v9701
  %v9715 = vld [vmem:[#allocation8] sm:$0xff]
  %v9716 = vld [vmem:[#allocation8 + $0x8] sm:$0xf]
  %v9717 = vld [vmem:[#allocation8 + $0xc] sm:$0xff]
  %v9718 = vld [vmem:[#allocation8 + $0x14] sm:$0xf]
  %v9719 = vld [vmem:[#allocation8 + $0x18] sm:$0xff]
  %v9720 = vld [vmem:[#allocation8 + $0x20] sm:$0xf]
  %v9721 = vld [vmem:[#allocation8 + $0x24] sm:$0xff]
  %v9722 = vld [vmem:[#allocation8 + $0x2c] sm:$0xf]
  %v9723 = vld [vmem:[#allocation8 + $0x30] sm:$0xff]
  %v9724 = vld [vmem:[#allocation8 + $0x38] sm:$0xf]
  %v9725 = vld [vmem:[#allocation8 + $0x3c] sm:$0xff]
  %v9726 = vld [vmem:[#allocation8 + $0x44] sm:$0xf]
  %v9727 = vld [vmem:[#allocation8 + $0x48] sm:$0xff]
  %v9728 = vld [vmem:[#allocation8 + $0x50] sm:$0xf]
  %v9729 = vld [vmem:[#allocation8 + $0x54] sm:$0xff]
  %v9730 = vld [vmem:[#allocation8 + $0x5c] sm:$0xf]
  %v9731 = vld [vmem:[#allocation8 + $0x60] sm:$0xff]
  %v9732 = vld [vmem:[#allocation8 + $0x68] sm:$0xf]
  %v9733 = vld [vmem:[#allocation8 + $0x6c] sm:$0xff]
  %v9734 = vld [vmem:[#allocation8 + $0x74] sm:$0xf]
  %v9735 = vld [vmem:[#allocation8 + $0x78] sm:$0xff]
  %v9736 = vld [vmem:[#allocation8 + $0x80] sm:$0xf]
  %v9737 = vld [vmem:[#allocation8 + $0x84] sm:$0xff]
  %v9738 = vld [vmem:[#allocation8 + $0x8c] sm:$0xf]
  %v9739 = vld [vmem:[#allocation8 + $0x90] sm:$0xff]
  %v9740 = vld [vmem:[#allocation8 + $0x98] sm:$0xf]
  %v9741 = vld [vmem:[#allocation8 + $0x9c] sm:$0xff]
  %v9742 = vld [vmem:[#allocation8 + $0xa4] sm:$0xf]
  %v9743 = vld [vmem:[#allocation8 + $0xa8] sm:$0xff]
  %v9744 = vld [vmem:[#allocation8 + $0xb0] sm:$0xf]
  %v9745 = vld [vmem:[#allocation8 + $0xb4] sm:$0xff]
  %v9746 = vld [vmem:[#allocation8 + $0xbc] sm:$0xf]
  %v9747 = vld [vmem:[#allocation8 + $0xc0] sm:$0xff]
  %v9748 = vld [vmem:[#allocation8 + $0xc8] sm:$0xf]
  %v9749 = vld [vmem:[#allocation8 + $0xcc] sm:$0xff]
  %v9750 = vld [vmem:[#allocation8 + $0xd4] sm:$0xf]
  %v9751 = vld [vmem:[#allocation8 + $0xd8] sm:$0xff]
  %v9752 = vld [vmem:[#allocation8 + $0xe0] sm:$0xf]
  %v9753 = vld [vmem:[#allocation8 + $0xe4] sm:$0xff]
  %v9754 = vld [vmem:[#allocation8 + $0xec] sm:$0xf]
  %v9755 = vld [vmem:[#allocation8 + $0xf0] sm:$0xff]
  %v9756 = vld [vmem:[#allocation8 + $0xf8] sm:$0xf]
  %v9757 = vld [vmem:[#allocation8 + $0xfc] sm:$0xff]
  %v9758 = vld [vmem:[#allocation8 + $0x104] sm:$0xf]
  %v9759 = vld [vmem:[#allocation8 + $0x108] sm:$0xff]
  %v9760 = vld [vmem:[#allocation8 + $0x110] sm:$0xf]
  %v9761 = vld [vmem:[#allocation8 + $0x114] sm:$0xff]
  %v9762 = vld [vmem:[#allocation8 + $0x11c] sm:$0xf]
  %v9763 = vld [vmem:[#allocation8 + $0x120] sm:$0xff]
  %v9764 = vld [vmem:[#allocation8 + $0x128] sm:$0xf]
  %v9765 = vld [vmem:[#allocation8 + $0x12c] sm:$0xff]
  %v9766 = vld [vmem:[#allocation8 + $0x134] sm:$0xf]
  %v9767 = vld [vmem:[#allocation8 + $0x138] sm:$0xff]
  %v9768 = vld [vmem:[#allocation8 + $0x140] sm:$0xf]
  %v9769 = vld [vmem:[#allocation8 + $0x144] sm:$0xff]
  %v9770 = vld [vmem:[#allocation8 + $0x14c] sm:$0xf]
  %v9771 = vld [vmem:[#allocation8 + $0x150] sm:$0xff]
  %v9772 = vld [vmem:[#allocation8 + $0x158] sm:$0xf]
  %v9773 = vld [vmem:[#allocation8 + $0x15c] sm:$0xff]
  %v9774 = vld [vmem:[#allocation8 + $0x164] sm:$0xf]
  %v9775 = vld [vmem:[#allocation8 + $0x168] sm:$0xff]
  %v9776 = vld [vmem:[#allocation8 + $0x170] sm:$0xf]
  %v9777 = vld [vmem:[#allocation8 + $0x174] sm:$0xff]
  %v9778 = vld [vmem:[#allocation8 + $0x17c] sm:$0xf]
  %v9843 = vunpack.c.l.b16 %v9715
  %v9844 = vunpack.c.h.b16 %v9715
  %v9845 = vunpack.c.l.b16 %v9716
  %v9846 = vunpack.c.l.b16 %v9717
  %v9847 = vunpack.c.h.b16 %v9717
  %v9848 = vunpack.c.l.b16 %v9718
  %v9849 = vunpack.c.l.b16 %v9719
  %v9850 = vunpack.c.h.b16 %v9719
  %v9851 = vunpack.c.l.b16 %v9720
  %v9852 = vunpack.c.l.b16 %v9721
  %v9853 = vunpack.c.h.b16 %v9721
  %v9854 = vunpack.c.l.b16 %v9722
  %v9855 = vunpack.c.l.b16 %v9723
  %v9856 = vunpack.c.h.b16 %v9723
  %v9857 = vunpack.c.l.b16 %v9724
  %v9858 = vunpack.c.l.b16 %v9725
  %v9859 = vunpack.c.h.b16 %v9725
  %v9860 = vunpack.c.l.b16 %v9726
  %v9861 = vunpack.c.l.b16 %v9727
  %v9862 = vunpack.c.h.b16 %v9727
  %v9863 = vunpack.c.l.b16 %v9728
  %v9864 = vunpack.c.l.b16 %v9729
  %v9865 = vunpack.c.h.b16 %v9729
  %v9866 = vunpack.c.l.b16 %v9730
  %v9867 = vunpack.c.l.b16 %v9731
  %v9868 = vunpack.c.h.b16 %v9731
  %v9869 = vunpack.c.l.b16 %v9732
  %v9870 = vunpack.c.l.b16 %v9733
  %v9871 = vunpack.c.h.b16 %v9733
  %v9872 = vunpack.c.l.b16 %v9734
  %v9873 = vunpack.c.l.b16 %v9735
  %v9874 = vunpack.c.h.b16 %v9735
  %v9875 = vunpack.c.l.b16 %v9736
  %v9876 = vunpack.c.l.b16 %v9737
  %v9877 = vunpack.c.h.b16 %v9737
  %v9878 = vunpack.c.l.b16 %v9738
  %v9879 = vunpack.c.l.b16 %v9739
  %v9880 = vunpack.c.h.b16 %v9739
  %v9881 = vunpack.c.l.b16 %v9740
  %v9882 = vunpack.c.l.b16 %v9741
  %v9883 = vunpack.c.h.b16 %v9741
  %v9884 = vunpack.c.l.b16 %v9742
  %v9885 = vunpack.c.l.b16 %v9743
  %v9886 = vunpack.c.h.b16 %v9743
  %v9887 = vunpack.c.l.b16 %v9744
  %v9888 = vunpack.c.l.b16 %v9745
  %v9889 = vunpack.c.h.b16 %v9745
  %v9890 = vunpack.c.l.b16 %v9746
  %v9891 = vunpack.c.l.b16 %v9747
  %v9892 = vunpack.c.h.b16 %v9747
  %v9893 = vunpack.c.l.b16 %v9748
  %v9894 = vunpack.c.l.b16 %v9749
  %v9895 = vunpack.c.h.b16 %v9749
  %v9896 = vunpack.c.l.b16 %v9750
  %v9897 = vunpack.c.l.b16 %v9751
  %v9898 = vunpack.c.h.b16 %v9751
  %v9899 = vunpack.c.l.b16 %v9752
  %v9900 = vunpack.c.l.b16 %v9753
  %v9901 = vunpack.c.h.b16 %v9753
  %v9902 = vunpack.c.l.b16 %v9754
  %v9903 = vunpack.c.l.b16 %v9755
  %v9904 = vunpack.c.h.b16 %v9755
  %v9905 = vunpack.c.l.b16 %v9756
  %v9906 = vunpack.c.l.b16 %v9757
  %v9907 = vunpack.c.h.b16 %v9757
  %v9908 = vunpack.c.l.b16 %v9758
  %v9909 = vunpack.c.l.b16 %v9759
  %v9910 = vunpack.c.h.b16 %v9759
  %v9911 = vunpack.c.l.b16 %v9760
  %v9912 = vunpack.c.l.b16 %v9761
  %v9913 = vunpack.c.h.b16 %v9761
  %v9914 = vunpack.c.l.b16 %v9762
  %v9915 = vunpack.c.l.b16 %v9763
  %v9916 = vunpack.c.h.b16 %v9763
  %v9917 = vunpack.c.l.b16 %v9764
  %v9918 = vunpack.c.l.b16 %v9765
  %v9919 = vunpack.c.h.b16 %v9765
  %v9920 = vunpack.c.l.b16 %v9766
  %v9921 = vunpack.c.l.b16 %v9767
  %v9922 = vunpack.c.h.b16 %v9767
  %v9923 = vunpack.c.l.b16 %v9768
  %v9924 = vunpack.c.l.b16 %v9769
  %v9925 = vunpack.c.h.b16 %v9769
  %v9926 = vunpack.c.l.b16 %v9770
  %v9927 = vunpack.c.l.b16 %v9771
  %v9928 = vunpack.c.h.b16 %v9771
  %v9929 = vunpack.c.l.b16 %v9772
  %v9930 = vunpack.c.l.b16 %v9773
  %v9931 = vunpack.c.h.b16 %v9773
  %v9932 = vunpack.c.l.b16 %v9774
  %v9933 = vunpack.c.l.b16 %v9775
  %v9934 = vunpack.c.h.b16 %v9775
  %v9935 = vunpack.c.l.b16 %v9776
  %v9936 = vunpack.c.l.b16 %v9777
  %v9937 = vunpack.c.h.b16 %v9777
  %v9938 = vunpack.c.l.b16 %v9778
  %v9939 = vpack.c.b16 %v9846, %v9843
  %v9940 = vpack.c.b16 %v9847, %v9844
  %v9941 = vpack.c.b16 %v9848, %v9845
  %v9942 = vpack.c.b16 %v9852, %v9849
  %v9943 = vpack.c.b16 %v9853, %v9850
  %v9944 = vpack.c.b16 %v9854, %v9851
  %v9945 = vpack.c.b16 %v9858, %v9855
  %v9946 = vpack.c.b16 %v9859, %v9856
  %v9947 = vpack.c.b16 %v9860, %v9857
  %v9948 = vpack.c.b16 %v9864, %v9861
  %v9949 = vpack.c.b16 %v9865, %v9862
  %v9950 = vpack.c.b16 %v9866, %v9863
  %v9951 = vpack.c.b16 %v9870, %v9867
  %v9952 = vpack.c.b16 %v9871, %v9868
  %v9953 = vpack.c.b16 %v9872, %v9869
  %v9954 = vpack.c.b16 %v9876, %v9873
  %v9955 = vpack.c.b16 %v9877, %v9874
  %v9956 = vpack.c.b16 %v9878, %v9875
  %v9957 = vpack.c.b16 %v9882, %v9879
  %v9958 = vpack.c.b16 %v9883, %v9880
  %v9959 = vpack.c.b16 %v9884, %v9881
  %v9960 = vpack.c.b16 %v9888, %v9885
  %v9961 = vpack.c.b16 %v9889, %v9886
  %v9962 = vpack.c.b16 %v9890, %v9887
  %v9963 = vpack.c.b16 %v9894, %v9891
  %v9964 = vpack.c.b16 %v9895, %v9892
  %v9965 = vpack.c.b16 %v9896, %v9893
  %v9966 = vpack.c.b16 %v9900, %v9897
  %v9967 = vpack.c.b16 %v9901, %v9898
  %v9968 = vpack.c.b16 %v9902, %v9899
  %v9969 = vpack.c.b16 %v9906, %v9903
  %v9970 = vpack.c.b16 %v9907, %v9904
  %v9971 = vpack.c.b16 %v9908, %v9905
  %v9972 = vpack.c.b16 %v9912, %v9909
  %v9973 = vpack.c.b16 %v9913, %v9910
  %v9974 = vpack.c.b16 %v9914, %v9911
  %v9975 = vpack.c.b16 %v9918, %v9915
  %v9976 = vpack.c.b16 %v9919, %v9916
  %v9977 = vpack.c.b16 %v9920, %v9917
  %v9978 = vpack.c.b16 %v9924, %v9921
  %v9979 = vpack.c.b16 %v9925, %v9922
  %v9980 = vpack.c.b16 %v9926, %v9923
  %v9981 = vpack.c.b16 %v9930, %v9927
  %v9982 = vpack.c.b16 %v9931, %v9928
  %v9983 = vpack.c.b16 %v9932, %v9929
  %v9984 = vpack.c.b16 %v9936, %v9933
  %v9985 = vpack.c.b16 %v9937, %v9934
  %v9986 = vpack.c.b16 %v9938, %v9935
  %10035 = vmatprep.subr.bf16.mxu0 %v9961
  %10036 = vmatpush1.bf16.msra.mxu0 %v9960
  %10037 = vmatprep.subr.bf16.mxu0 %v9958
  %10038 = vmatpush1.bf16.msra.mxu0 %v9957
  %10039 = vmatprep.subr.bf16.mxu0 %v9955
  %10040 = vmatpush1.bf16.msra.mxu0 %v9954
  %10041 = vmatprep.subr.bf16.mxu0 %v9952
  %10042 = vmatpush1.bf16.msra.mxu0 %v9951
  %10043 = vmatprep.subr.bf16.mxu0 %v9949
  %10044 = vmatpush1.bf16.msra.mxu0 %v9948
  %10045 = vmatprep.subr.bf16.mxu0 %v9946
  %10046 = vmatpush1.bf16.msra.mxu0 %v9945
  %10047 = vmatprep.subr.bf16.mxu0 %v9943
  %10048 = vmatpush1.bf16.msra.mxu0 %v9942
  %10049 = vmatprep.subr.bf16.mxu0 %v9940
  %10050 = vmatpush1.bf16.msra.mxu0 %v9939
  %10051 = vmatprep.subr.bf16.mxu0 %v9985
  %10052 = vmatpush2.bf16.msra.mxu0 %v9984
  %10053 = vmatprep.subr.bf16.mxu0 %v9982
  %10054 = vmatpush2.bf16.msra.mxu0 %v9981
  %10055 = vmatprep.subr.bf16.mxu0 %v9979
  %10056 = vmatpush2.bf16.msra.mxu0 %v9978
  %10057 = vmatprep.subr.bf16.mxu0 %v9976
  %10058 = vmatpush2.bf16.msra.mxu0 %v9975
  %10059 = vmatprep.subr.bf16.mxu0 %v9973
  %10060 = vmatpush2.bf16.msra.mxu0 %v9972
  %10061 = vmatprep.subr.bf16.mxu0 %v9970
  %10062 = vmatpush2.bf16.msra.mxu0 %v9969
  %10063 = vmatprep.subr.bf16.mxu0 %v9967
  %10064 = vmatpush2.bf16.msra.mxu0 %v9966
  %10065 = vmatprep.subr.bf16.mxu0 %v9964
  %10066 = vmatpush2.bf16.msra.mxu0 %v9963
  %10067 = vmatprep.mubr.bf16.mxu0 %v9708
  %10068 = vmatmul.mubr.bf16.gmra.mxu0 %v9707
  %v10069 = vpop.f32.mrf.mxu0
  %v10070 = vadd.f32 0.0, %v10069
  %v10071 = vpop.f32.mrf.mxu0
  %v10072 = vadd.f32 0.0, %v10071
  %v10073 = vpop.f32.mrf.mxu0
  %v10074 = vadd.f32 0.0, %v10073
  %v10075 = vpop.f32.mrf.mxu0
  %v10076 = vadd.f32 0.0, %v10075
  %10077 = vmatprep.mubr.bf16.mxu0 %v9710
  %10078 = vmatmul.mubr.bf16.gmra.mxu0 %v9709
  %v10079 = vpop.f32.mrf.mxu0
  %v10080 = vadd.f32 0.0, %v10079
  %v10081 = vpop.f32.mrf.mxu0
  %v10082 = vadd.f32 0.0, %v10081
  %v10083 = vpop.f32.mrf.mxu0
  %v10084 = vadd.f32 0.0, %v10083
  %v10085 = vpop.f32.mrf.mxu0
  %v10086 = vadd.f32 0.0, %v10085
  %10087 = vmatprep.mubr.bf16.mxu0 %v9712
  %10088 = vmatmul.mubr.bf16.gmra.mxu0 %v9711
  %v10089 = vpop.f32.mrf.mxu0
  %v10090 = vadd.f32 0.0, %v10089
  %v10091 = vpop.f32.mrf.mxu0
  %v10092 = vadd.f32 0.0, %v10091
  %v10093 = vpop.f32.mrf.mxu0
  %v10094 = vadd.f32 0.0, %v10093
  %v10095 = vpop.f32.mrf.mxu0
  %v10096 = vadd.f32 0.0, %v10095
  %10097 = vmatprep.mubr.bf16.mxu0 %v9714
  %10098 = vmatmul.mubr.bf16.gmra.mxu0 %v9713
  %v10099 = vpop.f32.mrf.mxu0
  %v10100 = vadd.f32 0.0, %v10099
  %v10101 = vpop.f32.mrf.mxu0
  %v10102 = vadd.f32 0.0, %v10101
  %v10103 = vpop.f32.mrf.mxu0
  %v10104 = vadd.f32 0.0, %v10103
  %v10105 = vpop.f32.mrf.mxu0
  %v10106 = vadd.f32 0.0, %v10105
  %10107 = vdwg.mxu0
  %10108 = vmatprep.subr.bf16.mxu0 0
  %10109 = vmatpush1.bf16.msra.mxu0 %v9962
  %10110 = vmatprep.subr.bf16.mxu0 0
  %10111 = vmatpush1.bf16.msra.mxu0 %v9959
  %10112 = vmatprep.subr.bf16.mxu0 0
  %10113 = vmatpush1.bf16.msra.mxu0 %v9956
  %10114 = vmatprep.subr.bf16.mxu0 0
  %10115 = vmatpush1.bf16.msra.mxu0 %v9953
  %10116 = vmatprep.subr.bf16.mxu0 0
  %10117 = vmatpush1.bf16.msra.mxu0 %v9950
  %10118 = vmatprep.subr.bf16.mxu0 0
  %10119 = vmatpush1.bf16.msra.mxu0 %v9947
  %10120 = vmatprep.subr.bf16.mxu0 0
  %10121 = vmatpush1.bf16.msra.mxu0 %v9944
  %10122 = vmatprep.subr.bf16.mxu0 0
  %10123 = vmatpush1.bf16.msra.mxu0 %v9941
  %10124 = vmatprep.subr.bf16.mxu0 0
  %10125 = vmatpush2.bf16.msra.mxu0 %v9986
  %10126 = vmatprep.subr.bf16.mxu0 0
  %10127 = vmatpush2.bf16.msra.mxu0 %v9983
  %10128 = vmatprep.subr.bf16.mxu0 0
  %10129 = vmatpush2.bf16.msra.mxu0 %v9980
  %10130 = vmatprep.subr.bf16.mxu0 0
  %10131 = vmatpush2.bf16.msra.mxu0 %v9977
  %10132 = vmatprep.subr.bf16.mxu0 0
  %10133 = vmatpush2.bf16.msra.mxu0 %v9974
  %10134 = vmatprep.subr.bf16.mxu0 0
  %10135 = vmatpush2.bf16.msra.mxu0 %v9971
  %10136 = vmatprep.subr.bf16.mxu0 0
  %10137 = vmatpush2.bf16.msra.mxu0 %v9968
  %10138 = vmatprep.subr.bf16.mxu0 0
  %10139 = vmatpush2.bf16.msra.mxu0 %v9965
  %10140 = vmatprep.mubr.bf16.mxu0 %v9708
  %10141 = vmatmul.mubr.bf16.gmra.mxu0 %v9707
  %v10142 = vpop.f32.mrf.mxu0
  %v10143 = vadd.f32 0.0, %v10142
  %v10144 = vpop.f32.mrf.mxu0
  %v10145 = vpop.f32.mrf.mxu0
  %v10146 = vadd.f32 0.0, %v10145
  %v10147 = vpop.f32.mrf.mxu0
  %10148 = vmatprep.mubr.bf16.mxu0 %v9710
  %10149 = vmatmul.mubr.bf16.gmra.mxu0 %v9709
  %v10150 = vpop.f32.mrf.mxu0
  %v10151 = vadd.f32 0.0, %v10150
  %v10152 = vpop.f32.mrf.mxu0
  %v10153 = vpop.f32.mrf.mxu0
  %v10154 = vadd.f32 0.0, %v10153
  %v10155 = vpop.f32.mrf.mxu0
  %10156 = vmatprep.mubr.bf16.mxu0 %v9712
  %10157 = vmatmul.mubr.bf16.gmra.mxu0 %v9711
  %v10158 = vpop.f32.mrf.mxu0
  %v10159 = vadd.f32 0.0, %v10158
  %v10160 = vpop.f32.mrf.mxu0
  %v10161 = vpop.f32.mrf.mxu0
  %v10162 = vadd.f32 0.0, %v10161
  %v10163 = vpop.f32.mrf.mxu0
  %10164 = vmatprep.mubr.bf16.mxu0 %v9714
  %10165 = vmatmul.mubr.bf16.gmra.mxu0 %v9713
  %v10166 = vpop.f32.mrf.mxu0
  %v10167 = vadd.f32 0.0, %v10166
  %v10168 = vpop.f32.mrf.mxu0
  %v10169 = vpop.f32.mrf.mxu0
  %v10170 = vadd.f32 0.0, %v10169
  %v10171 = vpop.f32.mrf.mxu0
  %10172 = vdwg.mxu0
  %v10173 = vld [vmem:[%s1 + $0x6] ss:$0 sm:$0xff]
  %10174 = vst [vmem:[#allocation9 + $0x80] sm:$0xff] %v10070
  %10175 = vst [vmem:[#allocation9 + $0x88] sm:$0xff] %v10072
  %10176 = vst [vmem:[#allocation9 + $0x90] sm:$0xff] %v10143
  %10177 = vst [vmem:[#allocation9 + $0xc0] sm:$0xff] %v10074
  %10178 = vst [vmem:[#allocation9 + $0xc8] sm:$0xff] %v10076
  %10179 = vst [vmem:[#allocation9 + $0xd0] sm:$0xff] %v10146
  %10180 = vst [vmem:[#allocation9 + $0x100] sm:$0xff] %v10080
  %10181 = vst [vmem:[#allocation9 + $0x108] sm:$0xff] %v10082
  %10182 = vst [vmem:[#allocation9 + $0x110] sm:$0xff] %v10151
  %10183 = vst [vmem:[#allocation9 + $0x140] sm:$0xff] %v10084
  %10184 = vst [vmem:[#allocation9 + $0x148] sm:$0xff] %v10086
  %10185 = vst [vmem:[#allocation9 + $0x150] sm:$0xff] %v10154
  %10186 = vst [vmem:[#allocation9 + $0x180] sm:$0xff] %v10090
  %10187 = vst [vmem:[#allocation9 + $0x188] sm:$0xff] %v10092
  %10188 = vst [vmem:[#allocation9 + $0x190] sm:$0xff] %v10159
  %10189 = vst [vmem:[#allocation9 + $0x1c0] sm:$0xff] %v10094
  %10190 = vst [vmem:[#allocation9 + $0x1c8] sm:$0xff] %v10096
  %10191 = vst [vmem:[#allocation9 + $0x1d0] sm:$0xff] %v10162
  %10192 = vst [vmem:[#allocation9 + $0x200] sm:$0xff] %v10100
  %10193 = vst [vmem:[#allocation9 + $0x208] sm:$0xff] %v10102
  %10194 = vst [vmem:[#allocation9 + $0x210] sm:$0xff] %v10167
  %10195 = vst [vmem:[#allocation9 + $0x240] sm:$0xff] %v10104
  %10196 = vst [vmem:[#allocation9 + $0x248] sm:$0xff] %v10106
  %10197 = vst [vmem:[#allocation9 + $0x250] sm:$0xff] %v10170
  %v10198 = vld [vmem:[#allocation9] sm:$0xff]
  %v10199 = vld [vmem:[#allocation9 + $0x40] sm:$0xff]
  %v10200 = vld [vmem:[#allocation9 + $0x80] sm:$0xff]
  %v10201 = vld [vmem:[#allocation9 + $0xc0] sm:$0xff]
  %v10202 = vld [vmem:[#allocation9 + $0x100] sm:$0xff]
  %v10203 = vld [vmem:[#allocation9 + $0x140] sm:$0xff]
  %v10204 = vld [vmem:[#allocation9 + $0x180] sm:$0xff]
  %v10205 = vld [vmem:[#allocation9 + $0x1c0] sm:$0xff]
  %v10206 = vadd.s32 %v1849, 4294967280
  %v10207 = vadd.s32 %v1850, 4294967280
  %v10208 = vadd.s32 %v1851, 4294967280
  %v10209 = vadd.s32 %v1852, 4294967280
  %v10210 = vadd.s32 %v1853, 4294967280
  %v10211 = vadd.s32 %v1854, 4294967280
  %v10212 = vadd.s32 %v1855, 4294967280
  %v10213 = vadd.s32 %v1856, 4294967280
  %vm10214 = vcmp.ge.s32.totalorder %v10206, 0
  %vm10215 = vcmp.ge.s32.totalorder %v10207, 0
  %vm10216 = vcmp.ge.s32.totalorder %v10208, 0
  %vm10217 = vcmp.ge.s32.totalorder %v10209, 0
  %vm10218 = vcmp.ge.s32.totalorder %v10210, 0
  %vm10219 = vcmp.ge.s32.totalorder %v10211, 0
  %vm10220 = vcmp.ge.s32.totalorder %v10212, 0
  %vm10221 = vcmp.ge.s32.totalorder %v10213, 0
  %vm10222 = vcmp.lt.s32.totalorder %v10206, 32
  %vm10223 = vcmp.lt.s32.totalorder %v10207, 32
  %vm10224 = vcmp.lt.s32.totalorder %v10208, 32
  %vm10225 = vcmp.lt.s32.totalorder %v10209, 32
  %vm10226 = vcmp.lt.s32.totalorder %v10210, 32
  %vm10227 = vcmp.lt.s32.totalorder %v10211, 32
  %vm10228 = vcmp.lt.s32.totalorder %v10212, 32
  %vm10229 = vcmp.lt.s32.totalorder %v10213, 32
  %vm10230 = vmand %vm10214, %vm10222
  %vm10231 = vmand %vm10215, %vm10223
  %vm10232 = vmand %vm10216, %vm10224
  %vm10233 = vmand %vm10217, %vm10225
  %vm10234 = vmand %vm10218, %vm10226
  %vm10235 = vmand %vm10219, %vm10227
  %vm10236 = vmand %vm10220, %vm10228
  %vm10237 = vmand %vm10221, %vm10229
  %v10238 = vsel %vm10230, 1, 0
  %v10239 = vsel %vm10231, 1, 0
  %v10240 = vsel %vm10232, 1, 0
  %v10241 = vsel %vm10233, 1, 0
  %v10242 = vsel %vm10234, 1, 0
  %v10243 = vsel %vm10235, 1, 0
  %v10244 = vsel %vm10236, 1, 0
  %v10245 = vsel %vm10237, 1, 0
  %vm10246 = vcmp.eq.s32.totalorder %v10238, 1
  %vm10247 = vcmp.eq.s32.totalorder %v10239, 1
  %vm10248 = vcmp.eq.s32.totalorder %v10240, 1
  %vm10249 = vcmp.eq.s32.totalorder %v10241, 1
  %vm10250 = vcmp.eq.s32.totalorder %v10242, 1
  %vm10251 = vcmp.eq.s32.totalorder %v10243, 1
  %vm10252 = vcmp.eq.s32.totalorder %v10244, 1
  %vm10253 = vcmp.eq.s32.totalorder %v10245, 1
  %v10254 = vsel %vm10246, %v10198, 0.0
  %v10255 = vsel %vm10247, %v10199, 0.0
  %v10256 = vsel %vm10248, %v10200, 0.0
  %v10257 = vsel %vm10249, %v10201, 0.0
  %v10258 = vsel %vm10250, %v10202, 0.0
  %v10259 = vsel %vm10251, %v10203, 0.0
  %v10260 = vsel %vm10252, %v10204, 0.0
  %v10261 = vsel %vm10253, %v10205, 0.0
  %v10262 = vadd.f32 %v10173, %v10254
  %v10263 = vadd.f32 %v10173, %v10255
  %v10264 = vadd.f32 %v10173, %v10256
  %v10265 = vadd.f32 %v10173, %v10257
  %v10266 = vadd.f32 %v10173, %v10258
  %v10267 = vadd.f32 %v10173, %v10259
  %v10268 = vadd.f32 %v10173, %v10260
  %v10269 = vadd.f32 %v10173, %v10261
  %v10270 = vadd.f32 %v10262, %v10072
  %v10271 = vadd.f32 %v10263, %v10076
  %v10272 = vadd.f32 %v10264, %v10082
  %v10273 = vadd.f32 %v10265, %v10086
  %v10274 = vadd.f32 %v10266, %v10092
  %v10275 = vadd.f32 %v10267, %v10096
  %v10276 = vadd.f32 %v10268, %v10102
  %v10277 = vadd.f32 %v10269, %v10106
  %v10278 = vld [vmem:[#allocation9 + $0x110] sm:$0xff]
  %v10279 = vld [vmem:[#allocation9 + $0x150] sm:$0xff]
  %v10280 = vld [vmem:[#allocation9 + $0x190] sm:$0xff]
  %v10281 = vld [vmem:[#allocation9 + $0x1d0] sm:$0xff]
  %v10282 = vld [vmem:[#allocation9 + $0x210] sm:$0xff]
  %v10283 = vld [vmem:[#allocation9 + $0x250] sm:$0xff]
  %v10284 = vld [vmem:[#allocation9 + $0x290] sm:$0xff]
  %v10285 = vld [vmem:[#allocation9 + $0x2d0] sm:$0xff]
  %v10286 = vsel %vm9616, %v10278, 0.0
  %v10287 = vsel %vm9617, %v10279, 0.0
  %v10288 = vsel %vm9618, %v10280, 0.0
  %v10289 = vsel %vm9619, %v10281, 0.0
  %v10290 = vsel %vm9620, %v10282, 0.0
  %v10291 = vsel %vm9621, %v10283, 0.0
  %v10292 = vsel %vm9622, %v10284, 0.0
  %v10293 = vsel %vm9623, %v10285, 0.0
  %v10294 = vadd.f32 %v10270, %v10286
  %v10295 = vadd.f32 %v10271, %v10287
  %v10296 = vadd.f32 %v10272, %v10288
  %v10297 = vadd.f32 %v10273, %v10289
  %v10298 = vadd.f32 %v10274, %v10290
  %v10299 = vadd.f32 %v10275, %v10291
  %v10300 = vadd.f32 %v10276, %v10292
  %v10301 = vadd.f32 %v10277, %v10293
  %vm10302 = vcmp.ge.f32.partialorder %v10294, 0.0
  %vm10303 = vcmp.ge.f32.partialorder %v10295, 0.0
  %vm10304 = vcmp.ge.f32.partialorder %v10296, 0.0
  %vm10305 = vcmp.ge.f32.partialorder %v10297, 0.0
  %vm10306 = vcmp.ge.f32.partialorder %v10298, 0.0
  %vm10307 = vcmp.ge.f32.partialorder %v10299, 0.0
  %vm10308 = vcmp.ge.f32.partialorder %v10300, 0.0
  %vm10309 = vcmp.ge.f32.partialorder %v10301, 0.0
  %v10310 = vmul.f32 %v10294, 0.2
  %v10311 = vmul.f32 %v10295, 0.2
  %v10312 = vmul.f32 %v10296, 0.2
  %v10313 = vmul.f32 %v10297, 0.2
  %v10314 = vmul.f32 %v10298, 0.2
  %v10315 = vmul.f32 %v10299, 0.2
  %v10316 = vmul.f32 %v10300, 0.2
  %v10317 = vmul.f32 %v10301, 0.2
  %v10318 = vsel %vm10302, %v10294, %v10310
  %v10319 = vsel %vm10303, %v10295, %v10311
  %v10320 = vsel %vm10304, %v10296, %v10312
  %v10321 = vsel %vm10305, %v10297, %v10313
  %v10322 = vsel %vm10306, %v10298, %v10314
  %v10323 = vsel %vm10307, %v10299, %v10315
  %v10324 = vsel %vm10308, %v10300, %v10316
  %v10325 = vsel %vm10309, %v10301, %v10317
  %10326 = vst [vmem:[%s9] sm:$0xff] %v10318
  %10327 = vst [vmem:[%s9 + $0x8] sm:$0xff] %v10319
  %10328 = vst [vmem:[%s9 + $0x10] sm:$0xff] %v10320
  %10329 = vst [vmem:[%s9 + $0x18] sm:$0xff] %v10321
  %10330 = vst [vmem:[%s9 + $0x20] sm:$0xff] %v10322
  %10331 = vst [vmem:[%s9 + $0x28] sm:$0xff] %v10323
  %10332 = vst [vmem:[%s9 + $0x30] sm:$0xff] %v10324
  %10333 = vst [vmem:[%s9 + $0x38] sm:$0xff] %v10325
  // Predicated region
  $region248: #{_lambda_.1} parent=0 // pred_check
    _
  $region249: #{_lambda_.1} parent=0 // pred_check_branch
    %10335 = sbr.rel (0) target = $region251
  $region250: #{_lambda_.1} parent=0 // pred_region
    _
  $region251: #{_lambda_.1} parent=0 // pred_fallthru
    _
  // Predicated region
  $region252: #{_lambda_.1} parent=0 // pred_check
    _
  $region253: #{_lambda_.1} parent=0 // pred_check_branch
    %10337 = sbr.rel (0) target = $region255
  $region254: #{_lambda_.1} parent=0 // pred_region
    _
  $region255: #{_lambda_.1} parent=0 // pred_fallthru
    _
  %10338 = vsyncmov [#allocation10]
  %s10339 = vpop.sfrf %10338
  %p10340 = scmp.eq.s32.totalorder %s10339, 0
  %p10341 = pneg %p10340
  %10343 = shalt.err (%p10341)
  %s10344 = scalar_lea.sflag [#allocation10], 1
  %10345 = vsyncmov %s10344
  %s10346 = vpop.sfrf %10345
  %p10347 = scmp.eq.s32.totalorder %s10346, 0
  %p10348 = pneg %p10347
  %10350 = shalt.err (%p10348)
  %s10351 = scalar_lea.sflag [#allocation10], 2
  %10352 = vsyncmov %s10351
  %s10353 = vpop.sfrf %10352
  %p10354 = scmp.eq.s32.totalorder %s10353, 0
  %p10355 = pneg %p10354
  %10357 = shalt.err (%p10355)
  %s10358 = scalar_lea.sflag [#allocation10], 3
  %10359 = vsyncmov %s10358
  %s10360 = vpop.sfrf %10359
  %p10361 = scmp.eq.s32.totalorder %s10360, 0
  %p10362 = pneg %p10361
  %10364 = shalt.err (%p10362)
  %s10365 = scalar_lea.sflag [#allocation10], 4
  %10366 = vsyncmov %s10365
  %s10367 = vpop.sfrf %10366
  %p10368 = scmp.eq.s32.totalorder %s10367, 0
  %p10369 = pneg %p10368
  %10371 = shalt.err (%p10369)
  %s10372 = scalar_lea.sflag [#allocation10], 5
  %10373 = vsyncmov %s10372
  %s10374 = vpop.sfrf %10373
  %p10375 = scmp.eq.s32.totalorder %s10374, 0
  %p10376 = pneg %p10375
  %10378 = shalt.err (%p10376)
  %s10379 = scalar_lea.sflag [#allocation10], 6
  %10380 = vsyncmov %s10379
  %s10381 = vpop.sfrf %10380
  %p10382 = scmp.eq.s32.totalorder %s10381, 0
  %p10383 = pneg %p10382
  %10385 = shalt.err (%p10383)

</llo_original>
